<compile_context>
chip_gen: v7x
topology: tpu7x:2x2x1
jax: 0.10.0
libtpu: 0.0.40
codegen_flags: <defaults>
</compile_context>

<pallas_src>
import functools

import jax
import jax.numpy as jnp
from jax import lax
from jax.experimental import pallas as pl
from jax.experimental.pallas import tpu as pltpu


VMEM_LIMIT_BYTES = 32 * 1024 * 1024   # safe on v5e/v6e/v7x scoped-VMEM budgets
ROW_BLOCK = 2048                      # big row tiles amortize grid-step overhead
LSTM_BATCH_CAP = 128                  # keep h/c/gates inside the 64-vreg file
LSTM_VMEM_BUDGET = 24 << 20           # xp/hseq scratch + double-buffered blocks
RECURRENCE_UNROLL_T = 8               # full unroll for short chunks, fori_loop else
MIN_SPLIT_ROWS = 64                   # give v7x's 2 TensorCores >= 2 blocks


def _round8(v):
    return max(8, ((v + 7) // 8) * 8)


def _cparams(n_grid_axes=1):
    return pltpu.CompilerParams(
        dimension_semantics=("parallel",) * n_grid_axes,
        vmem_limit_bytes=VMEM_LIMIT_BYTES,
    )


def _row_block(m, cap=ROW_BLOCK):
    """Row block for mem-bound row-tiled kernels.  Full array if small, a
    multiple-of-8 half if medium (>=2 blocks so both v7x TCs get work), cap
    otherwise.  Partial last blocks are masked on writeback by Pallas."""
    if m > cap:
        return cap
    if m >= MIN_SPLIT_ROWS:
        return _round8((m + 1) // 2)
    return m


# ----------------------------------------------------------------------------
# Row-tiled elementwise / matmul kernels
# ----------------------------------------------------------------------------
def _matmul_bias_kernel(x_ref, w_ref, b_ref, o_ref, *, relu_input):
    x = x_ref[...]
    if relu_input:
        x = jnp.maximum(x, 0.0)
    o_ref[...] = (
        jnp.dot(x, w_ref[...], preferred_element_type=jnp.float32) + b_ref[...]
    )


def matmul_bias(x, w, b, relu_input=False):
    """Row-tiled  x:[M,K] @ w:[K,N] + b:[N]  (optionally ReLU applied to x)."""
    M, K = x.shape
    N = w.shape[1]
    bm = _row_block(M)
    return pl.pallas_call(
        functools.partial(_matmul_bias_kernel, relu_input=relu_input),
        grid=(pl.cdiv(M, bm),),
        in_specs=[
            pl.BlockSpec((bm, K), lambda i: (i, 0)),
            pl.BlockSpec((K, N), lambda i: (0, 0)),
            pl.BlockSpec((1, N), lambda i: (0, 0)),
        ],
        out_specs=pl.BlockSpec((bm, N), lambda i: (i, 0)),
        out_shape=jax.ShapeDtypeStruct((M, N), jnp.float32),
        compiler_params=_cparams(),
    )(x, w, b.reshape(1, -1))


def _fe_norm_kernel(p_ref, w_ref, b_ref, g_ref, be_ref, feat_ref, mask_ref):
    feat = (
        jnp.dot(p_ref[...], w_ref[...], preferred_element_type=jnp.float32)
        + b_ref[...]
    )
    feat_ref[...] = feat
    mean = jnp.mean(feat, axis=-1, keepdims=True)
    xc = feat - mean
    var = jnp.mean(xc * xc, axis=-1, keepdims=True)
    mask_ref[...] = xc * lax.rsqrt(var + 1e-5) * g_ref[...] + be_ref[...]


def fe_norm(patches, w, b, gamma, beta):
    """Feature-extractor matmul fused with the following LayerNorm.
    patches:[M,k] -> (features:[M,N], layernorm(features):[M,N]).
    TODO(synk): form the k taps in-kernel from raw mix rows (pltpu.roll)."""
    M, K = patches.shape
    N = w.shape[1]
    bm = _row_block(M)
    row = pl.BlockSpec((bm, N), lambda i: (i, 0))
    return pl.pallas_call(
        _fe_norm_kernel,
        grid=(pl.cdiv(M, bm),),
        in_specs=[
            pl.BlockSpec((bm, K), lambda i: (i, 0)),
            pl.BlockSpec((K, N), lambda i: (0, 0)),
            pl.BlockSpec((1, N), lambda i: (0, 0)),
            pl.BlockSpec((1, N), lambda i: (0, 0)),
            pl.BlockSpec((1, N), lambda i: (0, 0)),
        ],
        out_specs=(row, row),
        out_shape=(
            jax.ShapeDtypeStruct((M, N), jnp.float32),
            jax.ShapeDtypeStruct((M, N), jnp.float32),
        ),
        compiler_params=_cparams(),
    )(patches, w, b.reshape(1, -1), gamma.reshape(1, -1), beta.reshape(1, -1))


def _gate_dec_kernel(x_ref, mix_ref, wg_ref, bg_ref, wd_ref, o_ref):
    x = x_ref[...]
    n = x.shape[1]
    pre = jnp.dot(x, wg_ref[...], preferred_element_type=jnp.float32) + bg_ref[...]
    sg = jax.nn.sigmoid(pre)                    # one full-width EUP pass
    gm = jnp.maximum(pre[:, :n] * sg[:, n:], 0.0)
    o_ref[...] = jnp.dot(
        gm * mix_ref[...], wd_ref[...], preferred_element_type=jnp.float32
    )


def gate_decoder(x, mix, wg, bg, wd):
    """Fused Gate (two 1x1 convs + sigmoid + product + ReLU) then
    (gated*mix) @ W_dec.  x,mix:[M,N], wg:[N,2N], wd:[N,k]."""
    M, N = x.shape
    k = wd.shape[1]
    bm = _row_block(M)
    return pl.pallas_call(
        _gate_dec_kernel,
        grid=(pl.cdiv(M, bm),),
        in_specs=[
            pl.BlockSpec((bm, N), lambda i: (i, 0)),
            pl.BlockSpec((bm, N), lambda i: (i, 0)),
            pl.BlockSpec((N, 2 * N), lambda i: (0, 0)),
            pl.BlockSpec((1, 2 * N), lambda i: (0, 0)),
            pl.BlockSpec((N, k), lambda i: (0, 0)),
        ],
        out_specs=pl.BlockSpec((bm, k), lambda i: (i, 0)),
        out_shape=jax.ShapeDtypeStruct((M, k), jnp.float32),
        compiler_params=_cparams(),
    )(x, mix, wg, bg.reshape(1, -1), wd)


# ----------------------------------------------------------------------------
# Fused DPRNN pass: input projection + BiLSTM recurrence + Linear + LN + res
# ----------------------------------------------------------------------------
def _dprnn_pass_kernel(x_ref, wpair_ref, bih_ref, whh_ref, wout_ref, bout_ref,
                       g_ref, be_ref, o_ref, xp_ref, hseq_ref, *, T, H, N):
    # x_ref   : (bb, T*N)  lane-dense input (also the residual)
    # wpair_ref: (2N, 8H)  packed [x_t | x_{T-1-t}] projection (gate-interleaved
    #            columns [i_f,i_b,f_f,f_b,g_f,g_b,o_f,o_b]; b_ih+b_hh folded)
    # whh_ref : (2H, 8H)   block-structured recurrent weights (rows 0:H fwd)
    # wout_ref: (2H, N)    Linear(2H->N) weight transposed
    # o_ref   : (bb, T*N)  lane-dense output
    # xp_ref  : (T, bb, 8H) scratch, bwd half already time-reversed
    # hseq_ref: (T, bb, 2H) scratch, hidden states in recurrence-time order
    bb = x_ref.shape[0]
    H2 = 2 * H

    def x_at(t):                      # [bb, N] static lane slice of the input
        return x_ref[:, t * N:(t + 1) * N]

    # ---- phase 1: input projections for BOTH directions.  The bwd gates are
    # produced already time-reversed via the packed [x_t | x_{T-1-t}] form, so
    # the recurrence below loads one dense xp row per step (no select).
    wpair = wpair_ref[...]
    bih = bih_ref[...]
    # TODO(synk): for very long T switch the fill and epilogue static loops to
    # lax.fori_loop to bound trace size.
    for t in range(T):
        xpair = jnp.concatenate([x_at(t), x_at(T - 1 - t)], axis=-1)
        xp_ref[t] = (
            jnp.dot(xpair, wpair, preferred_element_type=jnp.float32) + bih
        )

    # ---- phase 2: fused fwd+bwd recurrence.  State is [bb, 2H] (fwd | bwd);
    # gates come from ONE [bb,2H]@[2H,8H] MXU matmul (128-lane output for
    # H=16).  sigmoid / tanh are evaluated once full-width (2 EUP passes) and
    # individual gates picked with contiguous 2H slices.
    whh = whh_ref[...]

    def step(t, carry):
        h, c = carry
        gates = xp_ref[t] + jnp.dot(h, whh, preferred_element_type=jnp.float32)
        sg = jax.nn.sigmoid(gates)
        th = jnp.tanh(gates)
        i = sg[:, 0:H2]
        f = sg[:, H2:2 * H2]
        g = th[:, 2 * H2:3 * H2]
        o = sg[:, 3 * H2:4 * H2]
        c = f * c + i * g
        h = o * jnp.tanh(c)
        hseq_ref[t] = h
        return h, c

    carry = (jnp.zeros((bb, H2), jnp.float32),
             jnp.zeros((bb, H2), jnp.float32))
    if T <= RECURRENCE_UNROLL_T:
        for t in range(T):               # short chunks: full unroll (LLO vis.)
            carry = step(t, carry)
    else:
        carry = lax.fori_loop(0, T, step, carry)   # long seq: bounded liveness

    # ---- phase 3: Linear(2H->N) + LayerNorm + residual, emitted as ONE
    # lane-dense [bb, T*N] store (no per-timestep 16-lane masked HBM stores).
    wout = wout_ref[...]
    bout = bout_ref[...]
    gam = g_ref[...]
    bet = be_ref[...]
    cols = []
    for t in range(T):
        # fwd hidden of time t is at recurrence step t; bwd hidden of time t
        # is at recurrence step T-1-t (bwd inputs were pre-reversed).
        hcat = jnp.concatenate(
            [hseq_ref[t][:, :H], hseq_ref[T - 1 - t][:, H:]], axis=-1)
        lin = jnp.dot(hcat, wout, preferred_element_type=jnp.float32) + bout
        mean = jnp.mean(lin, axis=-1, keepdims=True)
        xc = lin - mean
        var = jnp.mean(xc * xc, axis=-1, keepdims=True)
        cols.append(xc * lax.rsqrt(var + 1e-5) * gam + bet + x_at(t))
    o_ref[...] = jnp.concatenate(cols, axis=-1)


def _lstm_batch_block(Bb, T, N, H, cap=LSTM_BATCH_CAP, budget=LSTM_VMEM_BUDGET):
    """Batch block for the fused pass kernel, sized by T against the VMEM
    budget (double-buffered x/out blocks + xp + hseq scratch)."""
    per_row = 4 * T * (4 * N + 10 * H)
    fit = max(8, (budget // max(per_row, 1)) // 8 * 8)
    bb = min(cap, fit)
    if Bb <= bb:
        if Bb >= MIN_SPLIT_ROWS:
            return _round8((Bb + 1) // 2)    # >= 2 blocks for v7x megacore
        return Bb
    return bb


def dprnn_pass(x, p):
    """One fused DPRNN direction pass over x:[Bb,T,N]: BiLSTM input
    projection + fwd/bwd recurrence + Linear(2H->N) + LayerNorm + residual,
    all in a single pallas_call (xp / hidden sequences never touch HBM)."""
    Bb, T, N = x.shape
    H = p["w_hh_big"].shape[0] // 2
    bb = _lstm_batch_block(Bb, T, N, H)
    out = pl.pallas_call(
        functools.partial(_dprnn_pass_kernel, T=T, H=H, N=N),
        grid=(pl.cdiv(Bb, bb),),
        in_specs=[
            pl.BlockSpec((bb, T * N), lambda i: (i, 0)),
            pl.BlockSpec((2 * N, 8 * H), lambda i: (0, 0)),
            pl.BlockSpec((1, 8 * H), lambda i: (0, 0)),
            pl.BlockSpec((2 * H, 8 * H), lambda i: (0, 0)),
            pl.BlockSpec((2 * H, N), lambda i: (0, 0)),
            pl.BlockSpec((1, N), lambda i: (0, 0)),
            pl.BlockSpec((1, N), lambda i: (0, 0)),
            pl.BlockSpec((1, N), lambda i: (0, 0)),
        ],
        out_specs=pl.BlockSpec((bb, T * N), lambda i: (i, 0)),
        out_shape=jax.ShapeDtypeStruct((Bb, T * N), jnp.float32),
        scratch_shapes=[
            pltpu.VMEM((T, bb, 8 * H), jnp.float32),   # xp (bwd pre-reversed)
            pltpu.VMEM((T, bb, 2 * H), jnp.float32),   # hidden sequence
        ],
        compiler_params=_cparams(),
    )(x.reshape(Bb, T * N), p["w_in_pair"], p["b_big"].reshape(1, -1),
      p["w_hh_big"], p["w_out"], p["b_out"].reshape(1, -1),
      p["gamma"].reshape(1, -1), p["beta"].reshape(1, -1))
    return out.reshape(Bb, T, N)


# ----------------------------------------------------------------------------
# Model building blocks (glue around the kernels)
# ----------------------------------------------------------------------------
def dprnn_block(state, p):
    """One DPRNNBlock on the canonical feature-last [B,S,K,N] layout."""
    B, S, K, N = state.shape
    # intra-chunk path: sequences over K, batch B*S
    intra = dprnn_pass(state.reshape(B * S, K, N), p["intra"]).reshape(B, S, K, N)
    # inter-chunk path: sequences over S, batch B*K
    # TODO(synk): fold this permute into the inter-pass BlockSpec index_map.
    xk = jnp.transpose(intra, (0, 2, 1, 3))                  # [B,K,S,N]
    inter = dprnn_pass(xk.reshape(B * K, S, N), p["inter"]).reshape(B, K, S, N)
    return jnp.transpose(inter, (0, 2, 1, 3))                # back to [B,S,K,N]


def extract_patches(mix, k, s):
    """Conv1d(1->N, kernel=k, stride=s) input patches.  mix:[B,L] -> [B,Lout,k]."""
    B, L = mix.shape
    Lout = (L - k) // s + 1
    idx = jnp.arange(Lout)[:, None] * s + jnp.arange(k)[None, :]
    return mix[:, idx], Lout


def split_chunks(x, chunks_length, hop_size):
    """[B,Lp,N] -> [B,S,K,N]  (DPRNNModel._split_input, feature-last layout)."""
    B, Lp, N = x.shape
    pad = chunks_length - hop_size
    xpad = jnp.pad(x, ((0, 0), (pad, pad), (0, 0)))
    S = Lp // hop_size + (chunks_length // hop_size - 1)
    idx = hop_size * jnp.arange(S)[:, None] + jnp.arange(chunks_length)[None, :]
    return xpad[:, idx, :]


def overlap_add_rows(y, B, S, K, N, spk, hop_size):
    """Embedding rows [B*S*K, N*spk] -> per-speaker masks [spk*B, Lp, N] via
    one scatter-add (overlap-add)."""
    pad = K - hop_size
    Lfull = hop_size * S + pad
    y5 = y.reshape(B, S, K, N, spk)          # channel c = n*spk+sp (PyTorch view)
    y5 = jnp.transpose(y5, (4, 0, 1, 2, 3)).reshape(spk * B, S * K, N)
    idx = (hop_size * jnp.arange(S)[:, None] + jnp.arange(K)[None, :]).reshape(-1)
    out = jnp.zeros((spk * B, Lfull, N), jnp.float32).at[:, idx, :].add(y5)
    return out[:, pad:Lfull - pad, :]


def decoder_taps_overlap(z, stride, k, output_padding, b_dec):
    """ConvTranspose1d stride-s tap overlap-add.  z:[R,Lm,k] -> [R,Lout]."""
    R, Lm, _ = z.shape
    Lout = (Lm - 1) * stride + k + output_padding
    idx = (stride * jnp.arange(Lm)[:, None] + jnp.arange(k)[None, :]).reshape(-1)
    out = jnp.zeros((R, Lout), jnp.float32).at[:, idx].add(z.reshape(R, Lm * k))
    return out + b_dec[0]


# ----------------------------------------------------------------------------
# Full forward pass
# ----------------------------------------------------------------------------
def dprnn_forward(mix, params, cfg):
    k_fe, s_fe = cfg["fe_kernel"], cfg["fe_stride"]
    K, hop = cfg["chunks_length"], cfg["hop_size"]
    spk = cfg["num_of_speakers"]
    B, _ = mix.shape

    # feature extractor + LayerNorm, fused (audio-only path: no video embeds)
    patches, Lp = extract_patches(mix, k_fe, s_fe)
    feat, mask = fe_norm(patches.reshape(B * Lp, k_fe),
                         params["fe_w"], params["fe_b"],
                         params["norm_g"], params["norm_b"])
    N = feat.shape[-1]
    mix_feat = feat.reshape(B, Lp, N)                         # pre-norm features

    # chunk split + DPRNN blocks (canonical [B,S,K,N] feature-last layout)
    state = split_chunks(mask.reshape(B, Lp, N), K, hop)
    for blk in params["blocks"]:
        state = dprnn_block(state, blk)
    S = state.shape[1]

    # ReLU + 1x1 Conv2d embedding expansion (ReLU fused into the matmul kernel)
    y = matmul_bias(state.reshape(B * S * K, N), params["emb_w"],
                    params["emb_b"], relu_input=True)
    masks = overlap_add_rows(y, B, S, K, N, spk, hop)         # [spk*B, Lp, N]

    # Gate + (relu(gated)*mix) @ W_dec; speakers batched into the row dimension
    x_rows = masks.reshape(spk * B * Lp, N)
    mix_rows = jnp.broadcast_to(mix_feat[None], (spk, B, Lp, N)).reshape(
        spk * B * Lp, N)
    z = gate_decoder(x_rows, mix_rows, params["gate_w"], params["gate_b"],
                     params["dec_w"]).reshape(spk * B, Lp, k_fe)

    # ConvTranspose1d stride-s overlap-add of the taps (+ bias)
    audio = decoder_taps_overlap(z, s_fe, k_fe, 1, params["dec_b"])
    return audio.reshape(spk, B, -1)                          # [spk, B, Lout]


# ----------------------------------------------------------------------------
# Deterministic parameter init (+ packing into the fused-kernel layouts)
# ----------------------------------------------------------------------------
def _interleave_gates(a, b, H):
    """Interleave per-direction gate columns: two [..,4H] -> [..,8H] laid out
    as [i_f,i_b,f_f,f_b,g_f,g_b,o_f,o_b] (each slice H wide)."""
    lead = a.shape[:-1]
    a4 = a.reshape(lead + (4, H))
    b4 = b.reshape(lead + (4, H))
    return jnp.stack([a4, b4], axis=-2).reshape(lead + (8 * H,))


def init_params(key, N, H, spk, num_layers, k_fe):
    keys = iter(jax.random.split(key, 2048))

    def nrm(shape, scale=0.1):
        return scale * jax.random.normal(next(keys), shape, jnp.float32)

    def pass_params():
        # Per-direction PyTorch-convention weights (already transposed,
        # b = b_ih + b_hh), packed into the fused bidirectional layouts.
        wih_f, whh_f, b_f = nrm((N, 4 * H)), nrm((H, 4 * H)), nrm((4 * H,))
        wih_b, whh_b, b_b = nrm((N, 4 * H)), nrm((H, 4 * H)), nrm((4 * H,))
        z_ih = jnp.zeros_like(wih_f)
        z_hh = jnp.zeros_like(whh_f)
        return {
            # packed [x_t | x_{T-1-t}] projection: rows 0:N fwd, N:2N bwd
            "w_in_pair": jnp.concatenate(
                [_interleave_gates(wih_f, z_ih, H),
                 _interleave_gates(z_ih, wih_b, H)], axis=0),    # [2N, 8H]
            "w_hh_big": jnp.concatenate(
                [_interleave_gates(whh_f, z_hh, H),
                 _interleave_gates(z_hh, whh_b, H)], axis=0),    # [2H, 8H]
            "b_big": _interleave_gates(b_f, b_b, H),             # [8H]
            # Linear(2H->N) weight W^T (rows 0:H fwd, H:2H bwd) + LayerNorm
            "w_out": nrm((2 * H, N)),
            "b_out": nrm((N,)),
            "gamma": jnp.ones((N,), jnp.float32),
            "beta": jnp.zeros((N,), jnp.float32),
        }

    params = {
        "fe_w": nrm((k_fe, N)),           # Conv1d(1->N,k) weight [N,1,k] as [k,N]
        "fe_b": nrm((N,)),
        "norm_g": jnp.ones((N,), jnp.float32),
        "norm_b": jnp.zeros((N,), jnp.float32),
        "blocks": [],
        # Gate: the two 1x1 convs packed into a single [N, 2N] weight
        "gate_w": jnp.concatenate([nrm((N, N)), nrm((N, N))], axis=1),
        "gate_b": jnp.concatenate([nrm((N,)), nrm((N,))]),
        "emb_w": nrm((N, N * spk)),       # Conv2d(N -> N*spk, 1x1), c = n*spk+sp
        "emb_b": nrm((N * spk,)),
        "dec_w": nrm((N, k_fe)),          # ConvTranspose1d weight [N,1,k] as [N,k]
        "dec_b": nrm((1,)),
    }
    for _ in range(num_layers):
        params["blocks"].append({"intra": pass_params(), "inter": pass_params()})
    return params


# ----------------------------------------------------------------------------
if __name__ == "__main__":
    # Small, self-consistent config:
    #   L=66, Conv1d(k=4, s=2) -> Lp=32, split(K=8, P=4) -> S=9
    #   feature_dim N=16, hidden H=16, 2 speakers, 2 DPRNN layers
    # (intra pass T=K=8 exercises the unrolled recurrence, inter pass T=S=9
    #  exercises the fori_loop recurrence path.)
    cfg = {
        "fe_kernel": 4,
        "fe_stride": 2,
        "chunks_length": 8,
        "hop_size": 4,
        "num_of_speakers": 2,
    }
    B, L = 2, 66
    N, H = 16, 16
    num_layers = 2

    key = jax.random.PRNGKey(0)
    k_params, k_mix = jax.random.split(key)
    params = init_params(k_params, N, H, cfg["num_of_speakers"], num_layers,
                         cfg["fe_kernel"])
    mix = jax.random.normal(k_mix, (B, L), jnp.float32)

    fwd = jax.jit(functools.partial(dprnn_forward, cfg=cfg))
    out = jax.block_until_ready(fwd(mix, params))

    Lp = (L - cfg["fe_kernel"]) // cfg["fe_stride"] + 1
    Lout = (Lp - 1) * cfg["fe_stride"] + cfg["fe_kernel"] + 1  # output_padding=1
    assert out.shape == (cfg["num_of_speakers"], B, Lout), out.shape
    assert bool(jnp.all(jnp.isfinite(out)))
    print("KERNEL_OK")
</pallas_src>

<mosaic_0001>
module attributes {stable_mosaic.version = 11 : i64} {
  func.func @_fe_norm_kernel(%arg0: i32, %arg1: memref<32x4xf32, #tpu.memory_space<vmem>>, %arg2: memref<4x16xf32, #tpu.memory_space<vmem>>, %arg3: memref<1x16xf32, #tpu.memory_space<vmem>>, %arg4: memref<1x16xf32, #tpu.memory_space<vmem>>, %arg5: memref<1x16xf32, #tpu.memory_space<vmem>>, %arg6: memref<32x16xf32, #tpu.memory_space<vmem>>, %arg7: memref<32x16xf32, #tpu.memory_space<vmem>>) attributes {dimension_semantics = [#tpu.dimension_semantics<parallel>], iteration_bounds = array<i64: 2>, scalar_prefetch = 0 : i64, scratch_operands = 0 : i64, tpu.core_type = #tpu.core_type<tc>, window_params = [{transform_indices = @transform_0, window_bounds = array<i64: 32, 4>}, {pipeline_mode = #tpu.pipeline_mode<synchronous>, transform_indices = @transform_1, window_bounds = array<i64: 4, 16>}, {pipeline_mode = #tpu.pipeline_mode<synchronous>, transform_indices = @transform_2, window_bounds = array<i64: 1, 16>}, {pipeline_mode = #tpu.pipeline_mode<synchronous>, transform_indices = @transform_3, window_bounds = array<i64: 1, 16>}, {pipeline_mode = #tpu.pipeline_mode<synchronous>, transform_indices = @transform_4, window_bounds = array<i64: 1, 16>}, {transform_indices = @transform_5, window_bounds = array<i64: 32, 16>}, {transform_indices = @transform_6, window_bounds = array<i64: 32, 16>}]} {
    %c0 = arith.constant 0 : index
    %c0_0 = arith.constant 0 : index
    %0 = vector.load %arg1[%c0, %c0_0] : memref<32x4xf32, #tpu.memory_space<vmem>>, vector<32x4xf32>
    %c0_1 = arith.constant 0 : index
    %c0_2 = arith.constant 0 : index
    %1 = vector.load %arg2[%c0_1, %c0_2] : memref<4x16xf32, #tpu.memory_space<vmem>>, vector<4x16xf32>
    %cst = arith.constant dense<0.000000e+00> : vector<32x16xf32>
    %2 = tpu.matmul %0, %1, %cst {dimension_numbers = #tpu.dot_dimension_numbers<[1], [0], [0], [1], [0, 0, 1, 1], [], []>} : vector<32x4xf32>, vector<4x16xf32>, vector<32x16xf32> -> vector<32x16xf32>
    %c0_3 = arith.constant 0 : index
    %c0_4 = arith.constant 0 : index
    %3 = vector.load %arg3[%c0_3, %c0_4] : memref<1x16xf32, #tpu.memory_space<vmem>>, vector<1x16xf32>
    %4 = vector.broadcast %3 : vector<1x16xf32> to vector<32x16xf32>
    %5 = arith.addf %2, %4 : vector<32x16xf32>
    %c0_5 = arith.constant 0 : index
    %c0_6 = arith.constant 0 : index
    %6 = vector.load %arg6[%c0_5, %c0_6] : memref<32x16xf32, #tpu.memory_space<vmem>>, vector<32x16xf32>
    tpu.vector_store %arg6[%c0_5, %c0_6], %5 {strides = array<i32>} : memref<32x16xf32, #tpu.memory_space<vmem>>, vector<32x16xf32>,
    %cst_7 = arith.constant dense<0.000000e+00> : vector<32xf32>
    %7 = vector.multi_reduction <add>, %5, %cst_7 [1] : vector<32x16xf32> to vector<32xf32>
    %8 = vector.shape_cast %7 : vector<32xf32> to vector<32x1xf32>
    %cst_8 = arith.constant 1.600000e+01 : f32
    %9 = vector.broadcast %cst_8 : f32 to vector<32x1xf32>
    %10 = arith.divf %8, %9 : vector<32x1xf32>
    %11 = vector.broadcast %10 : vector<32x1xf32> to vector<32x16xf32>
    %12 = arith.subf %5, %11 : vector<32x16xf32>
    %13 = arith.mulf %12, %12 : vector<32x16xf32>
    %cst_9 = arith.constant dense<0.000000e+00> : vector<32xf32>
    %14 = vector.multi_reduction <add>, %13, %cst_9 [1] : vector<32x16xf32> to vector<32xf32>
    %15 = vector.shape_cast %14 : vector<32xf32> to vector<32x1xf32>
    %cst_10 = arith.constant 1.600000e+01 : f32
    %16 = vector.broadcast %cst_10 : f32 to vector<32x1xf32>
    %17 = arith.divf %15, %16 : vector<32x1xf32>
    %cst_11 = arith.constant 9.99999974E-6 : f32
    %18 = vector.broadcast %cst_11 : f32 to vector<32x1xf32>
    %19 = arith.addf %17, %18 : vector<32x1xf32>
    %20 = math.rsqrt %19 : vector<32x1xf32>
    %21 = vector.broadcast %20 : vector<32x1xf32> to vector<32x16xf32>
    %22 = arith.mulf %12, %21 : vector<32x16xf32>
    %c0_12 = arith.constant 0 : index
    %c0_13 = arith.constant 0 : index
    %23 = vector.load %arg4[%c0_12, %c0_13] : memref<1x16xf32, #tpu.memory_space<vmem>>, vector<1x16xf32>
    %24 = vector.broadcast %23 : vector<1x16xf32> to vector<32x16xf32>
    %25 = arith.mulf %22, %24 : vector<32x16xf32>
    %c0_14 = arith.constant 0 : index
    %c0_15 = arith.constant 0 : index
    %26 = vector.load %arg5[%c0_14, %c0_15] : memref<1x16xf32, #tpu.memory_space<vmem>>, vector<1x16xf32>
    %27 = vector.broadcast %26 : vector<1x16xf32> to vector<32x16xf32>
    %28 = arith.addf %25, %27 : vector<32x16xf32>
    %c0_16 = arith.constant 0 : index
    %c0_17 = arith.constant 0 : index
    %29 = vector.load %arg7[%c0_16, %c0_17] : memref<32x16xf32, #tpu.memory_space<vmem>>, vector<32x16xf32>
    tpu.vector_store %arg7[%c0_16, %c0_17], %28 {strides = array<i32>} : memref<32x16xf32, #tpu.memory_space<vmem>>, vector<32x16xf32>,
    return
  }
  func.func @transform_0(%arg0: i32) -> (i32, i32) {
    %c0_i32 = arith.constant 0 : i32
    %c0_i32_0 = arith.constant 0 : i32
    return %arg0, %c0_i32 : i32, i32
  }
  func.func @transform_1(%arg0: i32) -> (i32, i32) {
    %c0_i32 = arith.constant 0 : i32
    %c0_i32_0 = arith.constant 0 : i32
    %c0_i32_1 = arith.constant 0 : i32
    return %c0_i32, %c0_i32_0 : i32, i32
  }
  func.func @transform_2(%arg0: i32) -> (i32, i32) {
    %c0_i32 = arith.constant 0 : i32
    %c0_i32_0 = arith.constant 0 : i32
    %c0_i32_1 = arith.constant 0 : i32
    return %c0_i32, %c0_i32_0 : i32, i32
  }
  func.func @transform_3(%arg0: i32) -> (i32, i32) {
    %c0_i32 = arith.constant 0 : i32
    %c0_i32_0 = arith.constant 0 : i32
    %c0_i32_1 = arith.constant 0 : i32
    return %c0_i32, %c0_i32_0 : i32, i32
  }
  func.func @transform_4(%arg0: i32) -> (i32, i32) {
    %c0_i32 = arith.constant 0 : i32
    %c0_i32_0 = arith.constant 0 : i32
    %c0_i32_1 = arith.constant 0 : i32
    return %c0_i32, %c0_i32_0 : i32, i32
  }
  func.func @transform_5(%arg0: i32) -> (i32, i32) {
    %c0_i32 = arith.constant 0 : i32
    %c0_i32_0 = arith.constant 0 : i32
    return %arg0, %c0_i32 : i32, i32
  }
  func.func @transform_6(%arg0: i32) -> (i32, i32) {
    %c0_i32 = arith.constant 0 : i32
    %c0_i32_0 = arith.constant 0 : i32
    return %arg0, %c0_i32 : i32, i32
  }
}

module attributes {stable_mosaic.version = 11 : i64} {
  func.func @_dprnn_pass_kernel(%arg0: i32, %arg1: memref<18x128xf32, #tpu.memory_space<vmem>>, %arg2: memref<32x128xf32, #tpu.memory_space<vmem>>, %arg3: memref<1x128xf32, #tpu.memory_space<vmem>>, %arg4: memref<32x128xf32, #tpu.memory_space<vmem>>, %arg5: memref<32x16xf32, #tpu.memory_space<vmem>>, %arg6: memref<1x16xf32, #tpu.memory_space<vmem>>, %arg7: memref<1x16xf32, #tpu.memory_space<vmem>>, %arg8: memref<1x16xf32, #tpu.memory_space<vmem>>, %arg9: memref<18x128xf32, #tpu.memory_space<vmem>>, %arg10: memref<8x18x128xf32, #tpu.memory_space<vmem>>, %arg11: memref<8x18x32xf32, #tpu.memory_space<vmem>>) attributes {dimension_semantics = [#tpu.dimension_semantics<parallel>], iteration_bounds = array<i64: 1>, scalar_prefetch = 0 : i64, scratch_operands = 2 : i64, tpu.core_type = #tpu.core_type<tc>, window_params = [{transform_indices = @transform_0, window_bounds = array<i64: 18, 128>}, {pipeline_mode = #tpu.pipeline_mode<synchronous>, transform_indices = @transform_1, window_bounds = array<i64: 32, 128>}, {pipeline_mode = #tpu.pipeline_mode<synchronous>, transform_indices = @transform_2, window_bounds = array<i64: 1, 128>}, {pipeline_mode = #tpu.pipeline_mode<synchronous>, transform_indices = @transform_3, window_bounds = array<i64: 32, 128>}, {pipeline_mode = #tpu.pipeline_mode<synchronous>, transform_indices = @transform_4, window_bounds = array<i64: 32, 16>}, {pipeline_mode = #tpu.pipeline_mode<synchronous>, transform_indices = @transform_5, window_bounds = array<i64: 1, 16>}, {pipeline_mode = #tpu.pipeline_mode<synchronous>, transform_indices = @transform_6, window_bounds = array<i64: 1, 16>}, {pipeline_mode = #tpu.pipeline_mode<synchronous>, transform_indices = @transform_7, window_bounds = array<i64: 1, 16>}, {transform_indices = @transform_8, window_bounds = array<i64: 18, 128>}]} {
    %c0 = arith.constant 0 : index
    %c0_0 = arith.constant 0 : index
    %0 = vector.load %arg2[%c0, %c0_0] : memref<32x128xf32, #tpu.memory_space<vmem>>, vector<32x128xf32>
    %c0_1 = arith.constant 0 : index
    %c0_2 = arith.constant 0 : index
    %1 = vector.load %arg3[%c0_1, %c0_2] : memref<1x128xf32, #tpu.memory_space<vmem>>, vector<1x128xf32>
    %c0_3 = arith.constant 0 : index
    %c0_4 = arith.constant 0 : index
    %2 = vector.load %arg1[%c0_3, %c0_4] : memref<18x128xf32, #tpu.memory_space<vmem>>, vector<18x16xf32>
    %c0_5 = arith.constant 0 : index
    %c112 = arith.constant 112 : index
    %3 = vector.load %arg1[%c0_5, %c112] : memref<18x128xf32, #tpu.memory_space<vmem>>, vector<18x16xf32>
    %4 = tpu.concatenate %2, %3 in 1 : vector<18x16xf32>, vector<18x16xf32> -> vector<18x32xf32>
    %cst = arith.constant dense<0.000000e+00> : vector<18x128xf32>
    %5 = tpu.matmul %4, %0, %cst {dimension_numbers = #tpu.dot_dimension_numbers<[1], [0], [0], [1], [0, 0, 1, 1], [], []>} : vector<18x32xf32>, vector<32x128xf32>, vector<18x128xf32> -> vector<18x128xf32>
    %6 = vector.broadcast %1 : vector<1x128xf32> to vector<18x128xf32>
    %7 = arith.addf %5, %6 : vector<18x128xf32>
    %c0_6 = arith.constant 0 : index
    %c0_7 = arith.constant 0 : index
    %c0_8 = arith.constant 0 : index
    %8 = vector.load %arg10[%c0_6, %c0_7, %c0_8] : memref<8x18x128xf32, #tpu.memory_space<vmem>>, vector<1x18x128xf32>
    %9 = vector.shape_cast %8 : vector<1x18x128xf32> to vector<18x128xf32>
    %10 = vector.shape_cast %7 : vector<18x128xf32> to vector<1x18x128xf32>
    tpu.vector_store %arg10[%c0_6, %c0_7, %c0_8], %10 {strides = array<i32>} : memref<8x18x128xf32, #tpu.memory_space<vmem>>, vector<1x18x128xf32>,
    %c0_9 = arith.constant 0 : index
    %c16 = arith.constant 16 : index
    %11 = vector.load %arg1[%c0_9, %c16] : memref<18x128xf32, #tpu.memory_space<vmem>>, vector<18x16xf32>
    %c0_10 = arith.constant 0 : index
    %c96 = arith.constant 96 : index
    %12 = vector.load %arg1[%c0_10, %c96] : memref<18x128xf32, #tpu.memory_space<vmem>>, vector<18x16xf32>
    %13 = tpu.concatenate %11, %12 in 1 : vector<18x16xf32>, vector<18x16xf32> -> vector<18x32xf32>
    %cst_11 = arith.constant dense<0.000000e+00> : vector<18x128xf32>
    %14 = tpu.matmul %13, %0, %cst_11 {dimension_numbers = #tpu.dot_dimension_numbers<[1], [0], [0], [1], [0, 0, 1, 1], [], []>} : vector<18x32xf32>, vector<32x128xf32>, vector<18x128xf32> -> vector<18x128xf32>
    %15 = vector.broadcast %1 : vector<1x128xf32> to vector<18x128xf32>
    %16 = arith.addf %14, %15 : vector<18x128xf32>
    %c1 = arith.constant 1 : index
    %c0_12 = arith.constant 0 : index
    %c0_13 = arith.constant 0 : index
    %17 = vector.load %arg10[%c1, %c0_12, %c0_13] : memref<8x18x128xf32, #tpu.memory_space<vmem>>, vector<1x18x128xf32>
    %18 = vector.shape_cast %17 : vector<1x18x128xf32> to vector<18x128xf32>
    %19 = vector.shape_cast %16 : vector<18x128xf32> to vector<1x18x128xf32>
    tpu.vector_store %arg10[%c1, %c0_12, %c0_13], %19 {strides = array<i32>} : memref<8x18x128xf32, #tpu.memory_space<vmem>>, vector<1x18x128xf32>,
    %c0_14 = arith.constant 0 : index
    %c32 = arith.constant 32 : index
    %20 = vector.load %arg1[%c0_14, %c32] : memref<18x128xf32, #tpu.memory_space<vmem>>, vector<18x16xf32>
    %c0_15 = arith.constant 0 : index
    %c80 = arith.constant 80 : index
    %21 = vector.load %arg1[%c0_15, %c80] : memref<18x128xf32, #tpu.memory_space<vmem>>, vector<18x16xf32>
    %22 = tpu.concatenate %20, %21 in 1 : vector<18x16xf32>, vector<18x16xf32> -> vector<18x32xf32>
    %cst_16 = arith.constant dense<0.000000e+00> : vector<18x128xf32>
    %23 = tpu.matmul %22, %0, %cst_16 {dimension_numbers = #tpu.dot_dimension_numbers<[1], [0], [0], [1], [0, 0, 1, 1], [], []>} : vector<18x32xf32>, vector<32x128xf32>, vector<18x128xf32> -> vector<18x128xf32>
    %24 = vector.broadcast %1 : vector<1x128xf32> to vector<18x128xf32>
    %25 = arith.addf %23, %24 : vector<18x128xf32>
    %c2 = arith.constant 2 : index
    %c0_17 = arith.constant 0 : index
    %c0_18 = arith.constant 0 : index
    %26 = vector.load %arg10[%c2, %c0_17, %c0_18] : memref<8x18x128xf32, #tpu.memory_space<vmem>>, vector<1x18x128xf32>
    %27 = vector.shape_cast %26 : vector<1x18x128xf32> to vector<18x128xf32>
    %28 = vector.shape_cast %25 : vector<18x128xf32> to vector<1x18x128xf32>
    tpu.vector_store %arg10[%c2, %c0_17, %c0_18], %28 {strides = array<i32>} : memref<8x18x128xf32, #tpu.memory_space<vmem>>, vector<1x18x128xf32>,
    %c0_19 = arith.constant 0 : index
    %c48 = arith.constant 48 : index
    %29 = vector.load %arg1[%c0_19, %c48] : memref<18x128xf32, #tpu.memory_space<vmem>>, vector<18x16xf32>
    %c0_20 = arith.constant 0 : index
    %c64 = arith.constant 64 : index
    %30 = vector.load %arg1[%c0_20, %c64] : memref<18x128xf32, #tpu.memory_space<vmem>>, vector<18x16xf32>
    %31 = tpu.concatenate %29, %30 in 1 : vector<18x16xf32>, vector<18x16xf32> -> vector<18x32xf32>
    %cst_21 = arith.constant dense<0.000000e+00> : vector<18x128xf32>
    %32 = tpu.matmul %31, %0, %cst_21 {dimension_numbers = #tpu.dot_dimension_numbers<[1], [0], [0], [1], [0, 0, 1, 1], [], []>} : vector<18x32xf32>, vector<32x128xf32>, vector<18x128xf32> -> vector<18x128xf32>
    %33 = vector.broadcast %1 : vector<1x128xf32> to vector<18x128xf32>
    %34 = arith.addf %32, %33 : vector<18x128xf32>
    %c3 = arith.constant 3 : index
    %c0_22 = arith.constant 0 : index
    %c0_23 = arith.constant 0 : index
    %35 = vector.load %arg10[%c3, %c0_22, %c0_23] : memref<8x18x128xf32, #tpu.memory_space<vmem>>, vector<1x18x128xf32>
    %36 = vector.shape_cast %35 : vector<1x18x128xf32> to vector<18x128xf32>
    %37 = vector.shape_cast %34 : vector<18x128xf32> to vector<1x18x128xf32>
    tpu.vector_store %arg10[%c3, %c0_22, %c0_23], %37 {strides = array<i32>} : memref<8x18x128xf32, #tpu.memory_space<vmem>>, vector<1x18x128xf32>,
    %c0_24 = arith.constant 0 : index
    %c64_25 = arith.constant 64 : index
    %38 = vector.load %arg1[%c0_24, %c64_25] : memref<18x128xf32, #tpu.memory_space<vmem>>, vector<18x16xf32>
    %c0_26 = arith.constant 0 : index
    %c48_27 = arith.constant 48 : index
    %39 = vector.load %arg1[%c0_26, %c48_27] : memref<18x128xf32, #tpu.memory_space<vmem>>, vector<18x16xf32>
    %40 = tpu.concatenate %38, %39 in 1 : vector<18x16xf32>, vector<18x16xf32> -> vector<18x32xf32>
    %cst_28 = arith.constant dense<0.000000e+00> : vector<18x128xf32>
    %41 = tpu.matmul %40, %0, %cst_28 {dimension_numbers = #tpu.dot_dimension_numbers<[1], [0], [0], [1], [0, 0, 1, 1], [], []>} : vector<18x32xf32>, vector<32x128xf32>, vector<18x128xf32> -> vector<18x128xf32>
    %42 = vector.broadcast %1 : vector<1x128xf32> to vector<18x128xf32>
    %43 = arith.addf %41, %42 : vector<18x128xf32>
    %c4 = arith.constant 4 : index
    %c0_29 = arith.constant 0 : index
    %c0_30 = arith.constant 0 : index
    %44 = vector.load %arg10[%c4, %c0_29, %c0_30] : memref<8x18x128xf32, #tpu.memory_space<vmem>>, vector<1x18x128xf32>
    %45 = vector.shape_cast %44 : vector<1x18x128xf32> to vector<18x128xf32>
    %46 = vector.shape_cast %43 : vector<18x128xf32> to vector<1x18x128xf32>
    tpu.vector_store %arg10[%c4, %c0_29, %c0_30], %46 {strides = array<i32>} : memref<8x18x128xf32, #tpu.memory_space<vmem>>, vector<1x18x128xf32>,
    %c0_31 = arith.constant 0 : index
    %c80_32 = arith.constant 80 : index
    %47 = vector.load %arg1[%c0_31, %c80_32] : memref<18x128xf32, #tpu.memory_space<vmem>>, vector<18x16xf32>
    %c0_33 = arith.constant 0 : index
    %c32_34 = arith.constant 32 : index
    %48 = vector.load %arg1[%c0_33, %c32_34] : memref<18x128xf32, #tpu.memory_space<vmem>>, vector<18x16xf32>
    %49 = tpu.concatenate %47, %48 in 1 : vector<18x16xf32>, vector<18x16xf32> -> vector<18x32xf32>
    %cst_35 = arith.constant dense<0.000000e+00> : vector<18x128xf32>
    %50 = tpu.matmul %49, %0, %cst_35 {dimension_numbers = #tpu.dot_dimension_numbers<[1], [0], [0], [1], [0, 0, 1, 1], [], []>} : vector<18x32xf32>, vector<32x128xf32>, vector<18x128xf32> -> vector<18x128xf32>
    %51 = vector.broadcast %1 : vector<1x128xf32> to vector<18x128xf32>
    %52 = arith.addf %50, %51 : vector<18x128xf32>
    %c5 = arith.constant 5 : index
    %c0_36 = arith.constant 0 : index
    %c0_37 = arith.constant 0 : index
    %53 = vector.load %arg10[%c5, %c0_36, %c0_37] : memref<8x18x128xf32, #tpu.memory_space<vmem>>, vector<1x18x128xf32>
    %54 = vector.shape_cast %53 : vector<1x18x128xf32> to vector<18x128xf32>
    %55 = vector.shape_cast %52 : vector<18x128xf32> to vector<1x18x128xf32>
    tpu.vector_store %arg10[%c5, %c0_36, %c0_37], %55 {strides = array<i32>} : memref<8x18x128xf32, #tpu.memory_space<vmem>>, vector<1x18x128xf32>,
    %c0_38 = arith.constant 0 : index
    %c96_39 = arith.constant 96 : index
    %56 = vector.load %arg1[%c0_38, %c96_39] : memref<18x128xf32, #tpu.memory_space<vmem>>, vector<18x16xf32>
    %c0_40 = arith.constant 0 : index
    %c16_41 = arith.constant 16 : index
    %57 = vector.load %arg1[%c0_40, %c16_41] : memref<18x128xf32, #tpu.memory_space<vmem>>, vector<18x16xf32>
    %58 = tpu.concatenate %56, %57 in 1 : vector<18x16xf32>, vector<18x16xf32> -> vector<18x32xf32>
    %cst_42 = arith.constant dense<0.000000e+00> : vector<18x128xf32>
    %59 = tpu.matmul %58, %0, %cst_42 {dimension_numbers = #tpu.dot_dimension_numbers<[1], [0], [0], [1], [0, 0, 1, 1], [], []>} : vector<18x32xf32>, vector<32x128xf32>, vector<18x128xf32> -> vector<18x128xf32>
    %60 = vector.broadcast %1 : vector<1x128xf32> to vector<18x128xf32>
    %61 = arith.addf %59, %60 : vector<18x128xf32>
    %c6 = arith.constant 6 : index
    %c0_43 = arith.constant 0 : index
    %c0_44 = arith.constant 0 : index
    %62 = vector.load %arg10[%c6, %c0_43, %c0_44] : memref<8x18x128xf32, #tpu.memory_space<vmem>>, vector<1x18x128xf32>
    %63 = vector.shape_cast %62 : vector<1x18x128xf32> to vector<18x128xf32>
    %64 = vector.shape_cast %61 : vector<18x128xf32> to vector<1x18x128xf32>
    tpu.vector_store %arg10[%c6, %c0_43, %c0_44], %64 {strides = array<i32>} : memref<8x18x128xf32, #tpu.memory_space<vmem>>, vector<1x18x128xf32>,
    %c0_45 = arith.constant 0 : index
    %c112_46 = arith.constant 112 : index
    %65 = vector.load %arg1[%c0_45, %c112_46] : memref<18x128xf32, #tpu.memory_space<vmem>>, vector<18x16xf32>
    %c0_47 = arith.constant 0 : index
    %c0_48 = arith.constant 0 : index
    %66 = vector.load %arg1[%c0_47, %c0_48] : memref<18x128xf32, #tpu.memory_space<vmem>>, vector<18x16xf32>
    %67 = tpu.concatenate %65, %66 in 1 : vector<18x16xf32>, vector<18x16xf32> -> vector<18x32xf32>
    %cst_49 = arith.constant dense<0.000000e+00> : vector<18x128xf32>
    %68 = tpu.matmul %67, %0, %cst_49 {dimension_numbers = #tpu.dot_dimension_numbers<[1], [0], [0], [1], [0, 0, 1, 1], [], []>} : vector<18x32xf32>, vector<32x128xf32>, vector<18x128xf32> -> vector<18x128xf32>
    %69 = vector.broadcast %1 : vector<1x128xf32> to vector<18x128xf32>
    %70 = arith.addf %68, %69 : vector<18x128xf32>
    %c7 = arith.constant 7 : index
    %c0_50 = arith.constant 0 : index
    %c0_51 = arith.constant 0 : index
    %71 = vector.load %arg10[%c7, %c0_50, %c0_51] : memref<8x18x128xf32, #tpu.memory_space<vmem>>, vector<1x18x128xf32>
    %72 = vector.shape_cast %71 : vector<1x18x128xf32> to vector<18x128xf32>
    %73 = vector.shape_cast %70 : vector<18x128xf32> to vector<1x18x128xf32>
    tpu.vector_store %arg10[%c7, %c0_50, %c0_51], %73 {strides = array<i32>} : memref<8x18x128xf32, #tpu.memory_space<vmem>>, vector<1x18x128xf32>,
    %c0_52 = arith.constant 0 : index
    %c0_53 = arith.constant 0 : index
    %74 = vector.load %arg4[%c0_52, %c0_53] : memref<32x128xf32, #tpu.memory_space<vmem>>, vector<32x128xf32>
    %cst_54 = arith.constant 0.000000e+00 : f32
    %75 = vector.broadcast %cst_54 : f32 to vector<18x32xf32>
    %cst_55 = arith.constant 0.000000e+00 : f32
    %76 = vector.broadcast %cst_55 : f32 to vector<18x32xf32>
    %c0_56 = arith.constant 0 : index
    %c0_57 = arith.constant 0 : index
    %c0_58 = arith.constant 0 : index
    %77 = vector.load %arg10[%c0_56, %c0_57, %c0_58] : memref<8x18x128xf32, #tpu.memory_space<vmem>>, vector<1x18x128xf32>
    %78 = vector.shape_cast %77 : vector<1x18x128xf32> to vector<18x128xf32>
    %cst_59 = arith.constant dense<0.000000e+00> : vector<18x128xf32>
    %79 = tpu.matmul %75, %74, %cst_59 {dimension_numbers = #tpu.dot_dimension_numbers<[1], [0], [0], [1], [0, 0, 1, 1], [], []>} : vector<18x32xf32>, vector<32x128xf32>, vector<18x128xf32> -> vector<18x128xf32>
    %80 = arith.addf %78, %79 : vector<18x128xf32>
    %81 = arith.negf %80 : vector<18x128xf32>
    %82 = math.exp %81 : vector<18x128xf32>
    %cst_60 = arith.constant 1.000000e+00 : f32
    %83 = vector.broadcast %cst_60 : f32 to vector<18x128xf32>
    %84 = arith.addf %83, %82 : vector<18x128xf32>
    %85 = arith.divf %83, %84 : vector<18x128xf32>
    %86 = math.tanh %80 : vector<18x128xf32>
    %87 = vector.extract_strided_slice %85 {offsets = [0, 0], sizes = [18, 32], strides = [1, 1]} : vector<18x128xf32> to vector<18x32xf32>
    %88 = vector.extract_strided_slice %85 {offsets = [0, 32], sizes = [18, 32], strides = [1, 1]} : vector<18x128xf32> to vector<18x32xf32>
    %89 = vector.extract_strided_slice %86 {offsets = [0, 64], sizes = [18, 32], strides = [1, 1]} : vector<18x128xf32> to vector<18x32xf32>
    %90 = vector.extract_strided_slice %85 {offsets = [0, 96], sizes = [18, 32], strides = [1, 1]} : vector<18x128xf32> to vector<18x32xf32>
    %91 = arith.mulf %88, %76 : vector<18x32xf32>
    %92 = arith.mulf %87, %89 : vector<18x32xf32>
    %93 = arith.addf %91, %92 : vector<18x32xf32>
    %94 = math.tanh %93 : vector<18x32xf32>
    %95 = arith.mulf %90, %94 : vector<18x32xf32>
    %c0_61 = arith.constant 0 : index
    %c0_62 = arith.constant 0 : index
    %c0_63 = arith.constant 0 : index
    %96 = vector.load %arg11[%c0_61, %c0_62, %c0_63] : memref<8x18x32xf32, #tpu.memory_space<vmem>>, vector<1x18x32xf32>
    %97 = vector.shape_cast %96 : vector<1x18x32xf32> to vector<18x32xf32>
    %98 = vector.shape_cast %95 : vector<18x32xf32> to vector<1x18x32xf32>
    tpu.vector_store %arg11[%c0_61, %c0_62, %c0_63], %98 {strides = array<i32>} : memref<8x18x32xf32, #tpu.memory_space<vmem>>, vector<1x18x32xf32>,
    %c1_64 = arith.constant 1 : index
    %c0_65 = arith.constant 0 : index
    %c0_66 = arith.constant 0 : index
    %99 = vector.load %arg10[%c1_64, %c0_65, %c0_66] : memref<8x18x128xf32, #tpu.memory_space<vmem>>, vector<1x18x128xf32>
    %100 = vector.shape_cast %99 : vector<1x18x128xf32> to vector<18x128xf32>
    %cst_67 = arith.constant dense<0.000000e+00> : vector<18x128xf32>
    %101 = tpu.matmul %95, %74, %cst_67 {dimension_numbers = #tpu.dot_dimension_numbers<[1], [0], [0], [1], [0, 0, 1, 1], [], []>} : vector<18x32xf32>, vector<32x128xf32>, vector<18x128xf32> -> vector<18x128xf32>
    %102 = arith.addf %100, %101 : vector<18x128xf32>
    %103 = arith.negf %102 : vector<18x128xf32>
    %104 = math.exp %103 : vector<18x128xf32>
    %cst_68 = arith.constant 1.000000e+00 : f32
    %105 = vector.broadcast %cst_68 : f32 to vector<18x128xf32>
    %106 = arith.addf %105, %104 : vector<18x128xf32>
    %107 = arith.divf %105, %106 : vector<18x128xf32>
    %108 = math.tanh %102 : vector<18x128xf32>
    %109 = vector.extract_strided_slice %107 {offsets = [0, 0], sizes = [18, 32], strides = [1, 1]} : vector<18x128xf32> to vector<18x32xf32>
    %110 = vector.extract_strided_slice %107 {offsets = [0, 32], sizes = [18, 32], strides = [1, 1]} : vector<18x128xf32> to vector<18x32xf32>
    %111 = vector.extract_strided_slice %108 {offsets = [0, 64], sizes = [18, 32], strides = [1, 1]} : vector<18x128xf32> to vector<18x32xf32>
    %112 = vector.extract_strided_slice %107 {offsets = [0, 96], sizes = [18, 32], strides = [1, 1]} : vector<18x128xf32> to vector<18x32xf32>
    %113 = arith.mulf %110, %93 : vector<18x32xf32>
    %114 = arith.mulf %109, %111 : vector<18x32xf32>
    %115 = arith.addf %113, %114 : vector<18x32xf32>
    %116 = math.tanh %115 : vector<18x32xf32>
    %117 = arith.mulf %112, %116 : vector<18x32xf32>
    %c1_69 = arith.constant 1 : index
    %c0_70 = arith.constant 0 : index
    %c0_71 = arith.constant 0 : index
    %118 = vector.load %arg11[%c1_69, %c0_70, %c0_71] : memref<8x18x32xf32, #tpu.memory_space<vmem>>, vector<1x18x32xf32>
    %119 = vector.shape_cast %118 : vector<1x18x32xf32> to vector<18x32xf32>
    %120 = vector.shape_cast %117 : vector<18x32xf32> to vector<1x18x32xf32>
    tpu.vector_store %arg11[%c1_69, %c0_70, %c0_71], %120 {strides = array<i32>} : memref<8x18x32xf32, #tpu.memory_space<vmem>>, vector<1x18x32xf32>,
    %c2_72 = arith.constant 2 : index
    %c0_73 = arith.constant 0 : index
    %c0_74 = arith.constant 0 : index
    %121 = vector.load %arg10[%c2_72, %c0_73, %c0_74] : memref<8x18x128xf32, #tpu.memory_space<vmem>>, vector<1x18x128xf32>
    %122 = vector.shape_cast %121 : vector<1x18x128xf32> to vector<18x128xf32>
    %cst_75 = arith.constant dense<0.000000e+00> : vector<18x128xf32>
    %123 = tpu.matmul %117, %74, %cst_75 {dimension_numbers = #tpu.dot_dimension_numbers<[1], [0], [0], [1], [0, 0, 1, 1], [], []>} : vector<18x32xf32>, vector<32x128xf32>, vector<18x128xf32> -> vector<18x128xf32>
    %124 = arith.addf %122, %123 : vector<18x128xf32>
    %125 = arith.negf %124 : vector<18x128xf32>
    %126 = math.exp %125 : vector<18x128xf32>
    %cst_76 = arith.constant 1.000000e+00 : f32
    %127 = vector.broadcast %cst_76 : f32 to vector<18x128xf32>
    %128 = arith.addf %127, %126 : vector<18x128xf32>
    %129 = arith.divf %127, %128 : vector<18x128xf32>
    %130 = math.tanh %124 : vector<18x128xf32>
    %131 = vector.extract_strided_slice %129 {offsets = [0, 0], sizes = [18, 32], strides = [1, 1]} : vector<18x128xf32> to vector<18x32xf32>
    %132 = vector.extract_strided_slice %129 {offsets = [0, 32], sizes = [18, 32], strides = [1, 1]} : vector<18x128xf32> to vector<18x32xf32>
    %133 = vector.extract_strided_slice %130 {offsets = [0, 64], sizes = [18, 32], strides = [1, 1]} : vector<18x128xf32> to vector<18x32xf32>
    %134 = vector.extract_strided_slice %129 {offsets = [0, 96], sizes = [18, 32], strides = [1, 1]} : vector<18x128xf32> to vector<18x32xf32>
    %135 = arith.mulf %132, %115 : vector<18x32xf32>
    %136 = arith.mulf %131, %133 : vector<18x32xf32>
    %137 = arith.addf %135, %136 : vector<18x32xf32>
    %138 = math.tanh %137 : vector<18x32xf32>
    %139 = arith.mulf %134, %138 : vector<18x32xf32>
    %c2_77 = arith.constant 2 : index
    %c0_78 = arith.constant 0 : index
    %c0_79 = arith.constant 0 : index
    %140 = vector.load %arg11[%c2_77, %c0_78, %c0_79] : memref<8x18x32xf32, #tpu.memory_space<vmem>>, vector<1x18x32xf32>
    %141 = vector.shape_cast %140 : vector<1x18x32xf32> to vector<18x32xf32>
    %142 = vector.shape_cast %139 : vector<18x32xf32> to vector<1x18x32xf32>
    tpu.vector_store %arg11[%c2_77, %c0_78, %c0_79], %142 {strides = array<i32>} : memref<8x18x32xf32, #tpu.memory_space<vmem>>, vector<1x18x32xf32>,
    %c3_80 = arith.constant 3 : index
    %c0_81 = arith.constant 0 : index
    %c0_82 = arith.constant 0 : index
    %143 = vector.load %arg10[%c3_80, %c0_81, %c0_82] : memref<8x18x128xf32, #tpu.memory_space<vmem>>, vector<1x18x128xf32>
    %144 = vector.shape_cast %143 : vector<1x18x128xf32> to vector<18x128xf32>
    %cst_83 = arith.constant dense<0.000000e+00> : vector<18x128xf32>
    %145 = tpu.matmul %139, %74, %cst_83 {dimension_numbers = #tpu.dot_dimension_numbers<[1], [0], [0], [1], [0, 0, 1, 1], [], []>} : vector<18x32xf32>, vector<32x128xf32>, vector<18x128xf32> -> vector<18x128xf32>
    %146 = arith.addf %144, %145 : vector<18x128xf32>
    %147 = arith.negf %146 : vector<18x128xf32>
    %148 = math.exp %147 : vector<18x128xf32>
    %cst_84 = arith.constant 1.000000e+00 : f32
    %149 = vector.broadcast %cst_84 : f32 to vector<18x128xf32>
    %150 = arith.addf %149, %148 : vector<18x128xf32>
    %151 = arith.divf %149, %150 : vector<18x128xf32>
    %152 = math.tanh %146 : vector<18x128xf32>
    %153 = vector.extract_strided_slice %151 {offsets = [0, 0], sizes = [18, 32], strides = [1, 1]} : vector<18x128xf32> to vector<18x32xf32>
    %154 = vector.extract_strided_slice %151 {offsets = [0, 32], sizes = [18, 32], strides = [1, 1]} : vector<18x128xf32> to vector<18x32xf32>
    %155 = vector.extract_strided_slice %152 {offsets = [0, 64], sizes = [18, 32], strides = [1, 1]} : vector<18x128xf32> to vector<18x32xf32>
    %156 = vector.extract_strided_slice %151 {offsets = [0, 96], sizes = [18, 32], strides = [1, 1]} : vector<18x128xf32> to vector<18x32xf32>
    %157 = arith.mulf %154, %137 : vector<18x32xf32>
    %158 = arith.mulf %153, %155 : vector<18x32xf32>
    %159 = arith.addf %157, %158 : vector<18x32xf32>
    %160 = math.tanh %159 : vector<18x32xf32>
    %161 = arith.mulf %156, %160 : vector<18x32xf32>
    %c3_85 = arith.constant 3 : index
    %c0_86 = arith.constant 0 : index
    %c0_87 = arith.constant 0 : index
    %162 = vector.load %arg11[%c3_85, %c0_86, %c0_87] : memref<8x18x32xf32, #tpu.memory_space<vmem>>, vector<1x18x32xf32>
    %163 = vector.shape_cast %162 : vector<1x18x32xf32> to vector<18x32xf32>
    %164 = vector.shape_cast %161 : vector<18x32xf32> to vector<1x18x32xf32>
    tpu.vector_store %arg11[%c3_85, %c0_86, %c0_87], %164 {strides = array<i32>} : memref<8x18x32xf32, #tpu.memory_space<vmem>>, vector<1x18x32xf32>,
    %c4_88 = arith.constant 4 : index
    %c0_89 = arith.constant 0 : index
    %c0_90 = arith.constant 0 : index
    %165 = vector.load %arg10[%c4_88, %c0_89, %c0_90] : memref<8x18x128xf32, #tpu.memory_space<vmem>>, vector<1x18x128xf32>
    %166 = vector.shape_cast %165 : vector<1x18x128xf32> to vector<18x128xf32>
    %cst_91 = arith.constant dense<0.000000e+00> : vector<18x128xf32>
    %167 = tpu.matmul %161, %74, %cst_91 {dimension_numbers = #tpu.dot_dimension_numbers<[1], [0], [0], [1], [0, 0, 1, 1], [], []>} : vector<18x32xf32>, vector<32x128xf32>, vector<18x128xf32> -> vector<18x128xf32>
    %168 = arith.addf %166, %167 : vector<18x128xf32>
    %169 = arith.negf %168 : vector<18x128xf32>
    %170 = math.exp %169 : vector<18x128xf32>
    %cst_92 = arith.constant 1.000000e+00 : f32
    %171 = vector.broadcast %cst_92 : f32 to vector<18x128xf32>
    %172 = arith.addf %171, %170 : vector<18x128xf32>
    %173 = arith.divf %171, %172 : vector<18x128xf32>
    %174 = math.tanh %168 : vector<18x128xf32>
    %175 = vector.extract_strided_slice %173 {offsets = [0, 0], sizes = [18, 32], strides = [1, 1]} : vector<18x128xf32> to vector<18x32xf32>
    %176 = vector.extract_strided_slice %173 {offsets = [0, 32], sizes = [18, 32], strides = [1, 1]} : vector<18x128xf32> to vector<18x32xf32>
    %177 = vector.extract_strided_slice %174 {offsets = [0, 64], sizes = [18, 32], strides = [1, 1]} : vector<18x128xf32> to vector<18x32xf32>
    %178 = vector.extract_strided_slice %173 {offsets = [0, 96], sizes = [18, 32], strides = [1, 1]} : vector<18x128xf32> to vector<18x32xf32>
    %179 = arith.mulf %176, %159 : vector<18x32xf32>
    %180 = arith.mulf %175, %177 : vector<18x32xf32>
    %181 = arith.addf %179, %180 : vector<18x32xf32>
    %182 = math.tanh %181 : vector<18x32xf32>
    %183 = arith.mulf %178, %182 : vector<18x32xf32>
    %c4_93 = arith.constant 4 : index
    %c0_94 = arith.constant 0 : index
    %c0_95 = arith.constant 0 : index
    %184 = vector.load %arg11[%c4_93, %c0_94, %c0_95] : memref<8x18x32xf32, #tpu.memory_space<vmem>>, vector<1x18x32xf32>
    %185 = vector.shape_cast %184 : vector<1x18x32xf32> to vector<18x32xf32>
    %186 = vector.shape_cast %183 : vector<18x32xf32> to vector<1x18x32xf32>
    tpu.vector_store %arg11[%c4_93, %c0_94, %c0_95], %186 {strides = array<i32>} : memref<8x18x32xf32, #tpu.memory_space<vmem>>, vector<1x18x32xf32>,
    %c5_96 = arith.constant 5 : index
    %c0_97 = arith.constant 0 : index
    %c0_98 = arith.constant 0 : index
    %187 = vector.load %arg10[%c5_96, %c0_97, %c0_98] : memref<8x18x128xf32, #tpu.memory_space<vmem>>, vector<1x18x128xf32>
    %188 = vector.shape_cast %187 : vector<1x18x128xf32> to vector<18x128xf32>
    %cst_99 = arith.constant dense<0.000000e+00> : vector<18x128xf32>
    %189 = tpu.matmul %183, %74, %cst_99 {dimension_numbers = #tpu.dot_dimension_numbers<[1], [0], [0], [1], [0, 0, 1, 1], [], []>} : vector<18x32xf32>, vector<32x128xf32>, vector<18x128xf32> -> vector<18x128xf32>
    %190 = arith.addf %188, %189 : vector<18x128xf32>
    %191 = arith.negf %190 : vector<18x128xf32>
    %192 = math.exp %191 : vector<18x128xf32>
    %cst_100 = arith.constant 1.000000e+00 : f32
    %193 = vector.broadcast %cst_100 : f32 to vector<18x128xf32>
    %194 = arith.addf %193, %192 : vector<18x128xf32>
    %195 = arith.divf %193, %194 : vector<18x128xf32>
    %196 = math.tanh %190 : vector<18x128xf32>
    %197 = vector.extract_strided_slice %195 {offsets = [0, 0], sizes = [18, 32], strides = [1, 1]} : vector<18x128xf32> to vector<18x32xf32>
    %198 = vector.extract_strided_slice %195 {offsets = [0, 32], sizes = [18, 32], strides = [1, 1]} : vector<18x128xf32> to vector<18x32xf32>
    %199 = vector.extract_strided_slice %196 {offsets = [0, 64], sizes = [18, 32], strides = [1, 1]} : vector<18x128xf32> to vector<18x32xf32>
    %200 = vector.extract_strided_slice %195 {offsets = [0, 96], sizes = [18, 32], strides = [1, 1]} : vector<18x128xf32> to vector<18x32xf32>
    %201 = arith.mulf %198, %181 : vector<18x32xf32>
    %202 = arith.mulf %197, %199 : vector<18x32xf32>
    %203 = arith.addf %201, %202 : vector<18x32xf32>
    %204 = math.tanh %203 : vector<18x32xf32>
    %205 = arith.mulf %200, %204 : vector<18x32xf32>
    %c5_101 = arith.constant 5 : index
    %c0_102 = arith.constant 0 : index
    %c0_103 = arith.constant 0 : index
    %206 = vector.load %arg11[%c5_101, %c0_102, %c0_103] : memref<8x18x32xf32, #tpu.memory_space<vmem>>, vector<1x18x32xf32>
    %207 = vector.shape_cast %206 : vector<1x18x32xf32> to vector<18x32xf32>
    %208 = vector.shape_cast %205 : vector<18x32xf32> to vector<1x18x32xf32>
    tpu.vector_store %arg11[%c5_101, %c0_102, %c0_103], %208 {strides = array<i32>} : memref<8x18x32xf32, #tpu.memory_space<vmem>>, vector<1x18x32xf32>,
    %c6_104 = arith.constant 6 : index
    %c0_105 = arith.constant 0 : index
    %c0_106 = arith.constant 0 : index
    %209 = vector.load %arg10[%c6_104, %c0_105, %c0_106] : memref<8x18x128xf32, #tpu.memory_space<vmem>>, vector<1x18x128xf32>
    %210 = vector.shape_cast %209 : vector<1x18x128xf32> to vector<18x128xf32>
    %cst_107 = arith.constant dense<0.000000e+00> : vector<18x128xf32>
    %211 = tpu.matmul %205, %74, %cst_107 {dimension_numbers = #tpu.dot_dimension_numbers<[1], [0], [0], [1], [0, 0, 1, 1], [], []>} : vector<18x32xf32>, vector<32x128xf32>, vector<18x128xf32> -> vector<18x128xf32>
    %212 = arith.addf %210, %211 : vector<18x128xf32>
    %213 = arith.negf %212 : vector<18x128xf32>
    %214 = math.exp %213 : vector<18x128xf32>
    %cst_108 = arith.constant 1.000000e+00 : f32
    %215 = vector.broadcast %cst_108 : f32 to vector<18x128xf32>
    %216 = arith.addf %215, %214 : vector<18x128xf32>
    %217 = arith.divf %215, %216 : vector<18x128xf32>
    %218 = math.tanh %212 : vector<18x128xf32>
    %219 = vector.extract_strided_slice %217 {offsets = [0, 0], sizes = [18, 32], strides = [1, 1]} : vector<18x128xf32> to vector<18x32xf32>
    %220 = vector.extract_strided_slice %217 {offsets = [0, 32], sizes = [18, 32], strides = [1, 1]} : vector<18x128xf32> to vector<18x32xf32>
    %221 = vector.extract_strided_slice %218 {offsets = [0, 64], sizes = [18, 32], strides = [1, 1]} : vector<18x128xf32> to vector<18x32xf32>
    %222 = vector.extract_strided_slice %217 {offsets = [0, 96], sizes = [18, 32], strides = [1, 1]} : vector<18x128xf32> to vector<18x32xf32>
    %223 = arith.mulf %220, %203 : vector<18x32xf32>
    %224 = arith.mulf %219, %221 : vector<18x32xf32>
    %225 = arith.addf %223, %224 : vector<18x32xf32>
    %226 = math.tanh %225 : vector<18x32xf32>
    %227 = arith.mulf %222, %226 : vector<18x32xf32>
    %c6_109 = arith.constant 6 : index
    %c0_110 = arith.constant 0 : index
    %c0_111 = arith.constant 0 : index
    %228 = vector.load %arg11[%c6_109, %c0_110, %c0_111] : memref<8x18x32xf32, #tpu.memory_space<vmem>>, vector<1x18x32xf32>
    %229 = vector.shape_cast %228 : vector<1x18x32xf32> to vector<18x32xf32>
    %230 = vector.shape_cast %227 : vector<18x32xf32> to vector<1x18x32xf32>
    tpu.vector_store %arg11[%c6_109, %c0_110, %c0_111], %230 {strides = array<i32>} : memref<8x18x32xf32, #tpu.memory_space<vmem>>, vector<1x18x32xf32>,
    %c7_112 = arith.constant 7 : index
    %c0_113 = arith.constant 0 : index
    %c0_114 = arith.constant 0 : index
    %231 = vector.load %arg10[%c7_112, %c0_113, %c0_114] : memref<8x18x128xf32, #tpu.memory_space<vmem>>, vector<1x18x128xf32>
    %232 = vector.shape_cast %231 : vector<1x18x128xf32> to vector<18x128xf32>
    %cst_115 = arith.constant dense<0.000000e+00> : vector<18x128xf32>
    %233 = tpu.matmul %227, %74, %cst_115 {dimension_numbers = #tpu.dot_dimension_numbers<[1], [0], [0], [1], [0, 0, 1, 1], [], []>} : vector<18x32xf32>, vector<32x128xf32>, vector<18x128xf32> -> vector<18x128xf32>
    %234 = arith.addf %232, %233 : vector<18x128xf32>
    %235 = arith.negf %234 : vector<18x128xf32>
    %236 = math.exp %235 : vector<18x128xf32>
    %cst_116 = arith.constant 1.000000e+00 : f32
    %237 = vector.broadcast %cst_116 : f32 to vector<18x128xf32>
    %238 = arith.addf %237, %236 : vector<18x128xf32>
    %239 = arith.divf %237, %238 : vector<18x128xf32>
    %240 = math.tanh %234 : vector<18x128xf32>
    %241 = vector.extract_strided_slice %239 {offsets = [0, 0], sizes = [18, 32], strides = [1, 1]} : vector<18x128xf32> to vector<18x32xf32>
    %242 = vector.extract_strided_slice %239 {offsets = [0, 32], sizes = [18, 32], strides = [1, 1]} : vector<18x128xf32> to vector<18x32xf32>
    %243 = vector.extract_strided_slice %240 {offsets = [0, 64], sizes = [18, 32], strides = [1, 1]} : vector<18x128xf32> to vector<18x32xf32>
    %244 = vector.extract_strided_slice %239 {offsets = [0, 96], sizes = [18, 32], strides = [1, 1]} : vector<18x128xf32> to vector<18x32xf32>
    %245 = arith.mulf %242, %225 : vector<18x32xf32>
    %246 = arith.mulf %241, %243 : vector<18x32xf32>
    %247 = arith.addf %245, %246 : vector<18x32xf32>
    %248 = math.tanh %247 : vector<18x32xf32>
    %249 = arith.mulf %244, %248 : vector<18x32xf32>
    %c7_117 = arith.constant 7 : index
    %c0_118 = arith.constant 0 : index
    %c0_119 = arith.constant 0 : index
    %250 = vector.load %arg11[%c7_117, %c0_118, %c0_119] : memref<8x18x32xf32, #tpu.memory_space<vmem>>, vector<1x18x32xf32>
    %251 = vector.shape_cast %250 : vector<1x18x32xf32> to vector<18x32xf32>
    %252 = vector.shape_cast %249 : vector<18x32xf32> to vector<1x18x32xf32>
    tpu.vector_store %arg11[%c7_117, %c0_118, %c0_119], %252 {strides = array<i32>} : memref<8x18x32xf32, #tpu.memory_space<vmem>>, vector<1x18x32xf32>,
    %c0_120 = arith.constant 0 : index
    %c0_121 = arith.constant 0 : index
    %253 = vector.load %arg5[%c0_120, %c0_121] : memref<32x16xf32, #tpu.memory_space<vmem>>, vector<32x16xf32>
    %c0_122 = arith.constant 0 : index
    %c0_123 = arith.constant 0 : index
    %254 = vector.load %arg6[%c0_122, %c0_123] : memref<1x16xf32, #tpu.memory_space<vmem>>, vector<1x16xf32>
    %c0_124 = arith.constant 0 : index
    %c0_125 = arith.constant 0 : index
    %255 = vector.load %arg7[%c0_124, %c0_125] : memref<1x16xf32, #tpu.memory_space<vmem>>, vector<1x16xf32>
    %c0_126 = arith.constant 0 : index
    %c0_127 = arith.constant 0 : index
    %256 = vector.load %arg8[%c0_126, %c0_127] : memref<1x16xf32, #tpu.memory_space<vmem>>, vector<1x16xf32>
    %c0_128 = arith.constant 0 : index
    %c0_129 = arith.constant 0 : index
    %c0_130 = arith.constant 0 : index
    %257 = vector.load %arg11[%c0_128, %c0_129, %c0_130] : memref<8x18x32xf32, #tpu.memory_space<vmem>>, vector<1x18x32xf32>
    %258 = vector.shape_cast %257 : vector<1x18x32xf32> to vector<18x32xf32>
    %259 = vector.extract_strided_slice %258 {offsets = [0, 0], sizes = [18, 16], strides = [1, 1]} : vector<18x32xf32> to vector<18x16xf32>
    %c7_131 = arith.constant 7 : index
    %c0_132 = arith.constant 0 : index
    %c0_133 = arith.constant 0 : index
    %260 = vector.load %arg11[%c7_131, %c0_132, %c0_133] : memref<8x18x32xf32, #tpu.memory_space<vmem>>, vector<1x18x32xf32>
    %261 = vector.shape_cast %260 : vector<1x18x32xf32> to vector<18x32xf32>
    %262 = vector.extract_strided_slice %261 {offsets = [0, 16], sizes = [18, 16], strides = [1, 1]} : vector<18x32xf32> to vector<18x16xf32>
    %263 = tpu.concatenate %259, %262 in 1 : vector<18x16xf32>, vector<18x16xf32> -> vector<18x32xf32>
    %cst_134 = arith.constant dense<0.000000e+00> : vector<18x16xf32>
    %264 = tpu.matmul %263, %253, %cst_134 {dimension_numbers = #tpu.dot_dimension_numbers<[1], [0], [0], [1], [0, 0, 1, 1], [], []>} : vector<18x32xf32>, vector<32x16xf32>, vector<18x16xf32> -> vector<18x16xf32>
    %265 = vector.broadcast %254 : vector<1x16xf32> to vector<18x16xf32>
    %266 = arith.addf %264, %265 : vector<18x16xf32>
    %cst_135 = arith.constant dense<0.000000e+00> : vector<18xf32>
    %267 = vector.multi_reduction <add>, %266, %cst_135 [1] : vector<18x16xf32> to vector<18xf32>
    %268 = vector.shape_cast %267 : vector<18xf32> to vector<18x1xf32>
    %cst_136 = arith.constant 1.600000e+01 : f32
    %269 = vector.broadcast %cst_136 : f32 to vector<18x1xf32>
    %270 = arith.divf %268, %269 : vector<18x1xf32>
    %271 = vector.broadcast %270 : vector<18x1xf32> to vector<18x16xf32>
    %272 = arith.subf %266, %271 : vector<18x16xf32>
    %273 = arith.mulf %272, %272 : vector<18x16xf32>
    %cst_137 = arith.constant dense<0.000000e+00> : vector<18xf32>
    %274 = vector.multi_reduction <add>, %273, %cst_137 [1] : vector<18x16xf32> to vector<18xf32>
    %275 = vector.shape_cast %274 : vector<18xf32> to vector<18x1xf32>
    %cst_138 = arith.constant 1.600000e+01 : f32
    %276 = vector.broadcast %cst_138 : f32 to vector<18x1xf32>
    %277 = arith.divf %275, %276 : vector<18x1xf32>
    %cst_139 = arith.constant 9.99999974E-6 : f32
    %278 = vector.broadcast %cst_139 : f32 to vector<18x1xf32>
    %279 = arith.addf %277, %278 : vector<18x1xf32>
    %280 = math.rsqrt %279 : vector<18x1xf32>
    %281 = vector.broadcast %280 : vector<18x1xf32> to vector<18x16xf32>
    %282 = arith.mulf %272, %281 : vector<18x16xf32>
    %283 = vector.broadcast %255 : vector<1x16xf32> to vector<18x16xf32>
    %284 = arith.mulf %282, %283 : vector<18x16xf32>
    %285 = vector.broadcast %256 : vector<1x16xf32> to vector<18x16xf32>
    %286 = arith.addf %284, %285 : vector<18x16xf32>
    %c0_140 = arith.constant 0 : index
    %c0_141 = arith.constant 0 : index
    %287 = vector.load %arg1[%c0_140, %c0_141] : memref<18x128xf32, #tpu.memory_space<vmem>>, vector<18x16xf32>
    %288 = arith.addf %286, %287 : vector<18x16xf32>
    %c1_142 = arith.constant 1 : index
    %c0_143 = arith.constant 0 : index
    %c0_144 = arith.constant 0 : index
    %289 = vector.load %arg11[%c1_142, %c0_143, %c0_144] : memref<8x18x32xf32, #tpu.memory_space<vmem>>, vector<1x18x32xf32>
    %290 = vector.shape_cast %289 : vector<1x18x32xf32> to vector<18x32xf32>
    %291 = vector.extract_strided_slice %290 {offsets = [0, 0], sizes = [18, 16], strides = [1, 1]} : vector<18x32xf32> to vector<18x16xf32>
    %c6_145 = arith.constant 6 : index
    %c0_146 = arith.constant 0 : index
    %c0_147 = arith.constant 0 : index
    %292 = vector.load %arg11[%c6_145, %c0_146, %c0_147] : memref<8x18x32xf32, #tpu.memory_space<vmem>>, vector<1x18x32xf32>
    %293 = vector.shape_cast %292 : vector<1x18x32xf32> to vector<18x32xf32>
    %294 = vector.extract_strided_slice %293 {offsets = [0, 16], sizes = [18, 16], strides = [1, 1]} : vector<18x32xf32> to vector<18x16xf32>
    %295 = tpu.concatenate %291, %294 in 1 : vector<18x16xf32>, vector<18x16xf32> -> vector<18x32xf32>
    %cst_148 = arith.constant dense<0.000000e+00> : vector<18x16xf32>
    %296 = tpu.matmul %295, %253, %cst_148 {dimension_numbers = #tpu.dot_dimension_numbers<[1], [0], [0], [1], [0, 0, 1, 1], [], []>} : vector<18x32xf32>, vector<32x16xf32>, vector<18x16xf32> -> vector<18x16xf32>
    %297 = vector.broadcast %254 : vector<1x16xf32> to vector<18x16xf32>
    %298 = arith.addf %296, %297 : vector<18x16xf32>
    %cst_149 = arith.constant dense<0.000000e+00> : vector<18xf32>
    %299 = vector.multi_reduction <add>, %298, %cst_149 [1] : vector<18x16xf32> to vector<18xf32>
    %300 = vector.shape_cast %299 : vector<18xf32> to vector<18x1xf32>
    %cst_150 = arith.constant 1.600000e+01 : f32
    %301 = vector.broadcast %cst_150 : f32 to vector<18x1xf32>
    %302 = arith.divf %300, %301 : vector<18x1xf32>
    %303 = vector.broadcast %302 : vector<18x1xf32> to vector<18x16xf32>
    %304 = arith.subf %298, %303 : vector<18x16xf32>
    %305 = arith.mulf %304, %304 : vector<18x16xf32>
    %cst_151 = arith.constant dense<0.000000e+00> : vector<18xf32>
    %306 = vector.multi_reduction <add>, %305, %cst_151 [1] : vector<18x16xf32> to vector<18xf32>
    %307 = vector.shape_cast %306 : vector<18xf32> to vector<18x1xf32>
    %cst_152 = arith.constant 1.600000e+01 : f32
    %308 = vector.broadcast %cst_152 : f32 to vector<18x1xf32>
    %309 = arith.divf %307, %308 : vector<18x1xf32>
    %cst_153 = arith.constant 9.99999974E-6 : f32
    %310 = vector.broadcast %cst_153 : f32 to vector<18x1xf32>
    %311 = arith.addf %309, %310 : vector<18x1xf32>
    %312 = math.rsqrt %311 : vector<18x1xf32>
    %313 = vector.broadcast %312 : vector<18x1xf32> to vector<18x16xf32>
    %314 = arith.mulf %304, %313 : vector<18x16xf32>
    %315 = vector.broadcast %255 : vector<1x16xf32> to vector<18x16xf32>
    %316 = arith.mulf %314, %315 : vector<18x16xf32>
    %317 = vector.broadcast %256 : vector<1x16xf32> to vector<18x16xf32>
    %318 = arith.addf %316, %317 : vector<18x16xf32>
    %c0_154 = arith.constant 0 : index
    %c16_155 = arith.constant 16 : index
    %319 = vector.load %arg1[%c0_154, %c16_155] : memref<18x128xf32, #tpu.memory_space<vmem>>, vector<18x16xf32>
    %320 = arith.addf %318, %319 : vector<18x16xf32>
    %c2_156 = arith.constant 2 : index
    %c0_157 = arith.constant 0 : index
    %c0_158 = arith.constant 0 : index
    %321 = vector.load %arg11[%c2_156, %c0_157, %c0_158] : memref<8x18x32xf32, #tpu.memory_space<vmem>>, vector<1x18x32xf32>
    %322 = vector.shape_cast %321 : vector<1x18x32xf32> to vector<18x32xf32>
    %323 = vector.extract_strided_slice %322 {offsets = [0, 0], sizes = [18, 16], strides = [1, 1]} : vector<18x32xf32> to vector<18x16xf32>
    %c5_159 = arith.constant 5 : index
    %c0_160 = arith.constant 0 : index
    %c0_161 = arith.constant 0 : index
    %324 = vector.load %arg11[%c5_159, %c0_160, %c0_161] : memref<8x18x32xf32, #tpu.memory_space<vmem>>, vector<1x18x32xf32>
    %325 = vector.shape_cast %324 : vector<1x18x32xf32> to vector<18x32xf32>
    %326 = vector.extract_strided_slice %325 {offsets = [0, 16], sizes = [18, 16], strides = [1, 1]} : vector<18x32xf32> to vector<18x16xf32>
    %327 = tpu.concatenate %323, %326 in 1 : vector<18x16xf32>, vector<18x16xf32> -> vector<18x32xf32>
    %cst_162 = arith.constant dense<0.000000e+00> : vector<18x16xf32>
    %328 = tpu.matmul %327, %253, %cst_162 {dimension_numbers = #tpu.dot_dimension_numbers<[1], [0], [0], [1], [0, 0, 1, 1], [], []>} : vector<18x32xf32>, vector<32x16xf32>, vector<18x16xf32> -> vector<18x16xf32>
    %329 = vector.broadcast %254 : vector<1x16xf32> to vector<18x16xf32>
    %330 = arith.addf %328, %329 : vector<18x16xf32>
    %cst_163 = arith.constant dense<0.000000e+00> : vector<18xf32>
    %331 = vector.multi_reduction <add>, %330, %cst_163 [1] : vector<18x16xf32> to vector<18xf32>
    %332 = vector.shape_cast %331 : vector<18xf32> to vector<18x1xf32>
    %cst_164 = arith.constant 1.600000e+01 : f32
    %333 = vector.broadcast %cst_164 : f32 to vector<18x1xf32>
    %334 = arith.divf %332, %333 : vector<18x1xf32>
    %335 = vector.broadcast %334 : vector<18x1xf32> to vector<18x16xf32>
    %336 = arith.subf %330, %335 : vector<18x16xf32>
    %337 = arith.mulf %336, %336 : vector<18x16xf32>
    %cst_165 = arith.constant dense<0.000000e+00> : vector<18xf32>
    %338 = vector.multi_reduction <add>, %337, %cst_165 [1] : vector<18x16xf32> to vector<18xf32>
    %339 = vector.shape_cast %338 : vector<18xf32> to vector<18x1xf32>
    %cst_166 = arith.constant 1.600000e+01 : f32
    %340 = vector.broadcast %cst_166 : f32 to vector<18x1xf32>
    %341 = arith.divf %339, %340 : vector<18x1xf32>
    %cst_167 = arith.constant 9.99999974E-6 : f32
    %342 = vector.broadcast %cst_167 : f32 to vector<18x1xf32>
    %343 = arith.addf %341, %342 : vector<18x1xf32>
    %344 = math.rsqrt %343 : vector<18x1xf32>
    %345 = vector.broadcast %344 : vector<18x1xf32> to vector<18x16xf32>
    %346 = arith.mulf %336, %345 : vector<18x16xf32>
    %347 = vector.broadcast %255 : vector<1x16xf32> to vector<18x16xf32>
    %348 = arith.mulf %346, %347 : vector<18x16xf32>
    %349 = vector.broadcast %256 : vector<1x16xf32> to vector<18x16xf32>
    %350 = arith.addf %348, %349 : vector<18x16xf32>
    %c0_168 = arith.constant 0 : index
    %c32_169 = arith.constant 32 : index
    %351 = vector.load %arg1[%c0_168, %c32_169] : memref<18x128xf32, #tpu.memory_space<vmem>>, vector<18x16xf32>
    %352 = arith.addf %350, %351 : vector<18x16xf32>
    %c3_170 = arith.constant 3 : index
    %c0_171 = arith.constant 0 : index
    %c0_172 = arith.constant 0 : index
    %353 = vector.load %arg11[%c3_170, %c0_171, %c0_172] : memref<8x18x32xf32, #tpu.memory_space<vmem>>, vector<1x18x32xf32>
    %354 = vector.shape_cast %353 : vector<1x18x32xf32> to vector<18x32xf32>
    %355 = vector.extract_strided_slice %354 {offsets = [0, 0], sizes = [18, 16], strides = [1, 1]} : vector<18x32xf32> to vector<18x16xf32>
    %c4_173 = arith.constant 4 : index
    %c0_174 = arith.constant 0 : index
    %c0_175 = arith.constant 0 : index
    %356 = vector.load %arg11[%c4_173, %c0_174, %c0_175] : memref<8x18x32xf32, #tpu.memory_space<vmem>>, vector<1x18x32xf32>
    %357 = vector.shape_cast %356 : vector<1x18x32xf32> to vector<18x32xf32>
    %358 = vector.extract_strided_slice %357 {offsets = [0, 16], sizes = [18, 16], strides = [1, 1]} : vector<18x32xf32> to vector<18x16xf32>
    %359 = tpu.concatenate %355, %358 in 1 : vector<18x16xf32>, vector<18x16xf32> -> vector<18x32xf32>
    %cst_176 = arith.constant dense<0.000000e+00> : vector<18x16xf32>
    %360 = tpu.matmul %359, %253, %cst_176 {dimension_numbers = #tpu.dot_dimension_numbers<[1], [0], [0], [1], [0, 0, 1, 1], [], []>} : vector<18x32xf32>, vector<32x16xf32>, vector<18x16xf32> -> vector<18x16xf32>
    %361 = vector.broadcast %254 : vector<1x16xf32> to vector<18x16xf32>
    %362 = arith.addf %360, %361 : vector<18x16xf32>
    %cst_177 = arith.constant dense<0.000000e+00> : vector<18xf32>
    %363 = vector.multi_reduction <add>, %362, %cst_177 [1] : vector<18x16xf32> to vector<18xf32>
    %364 = vector.shape_cast %363 : vector<18xf32> to vector<18x1xf32>
    %cst_178 = arith.constant 1.600000e+01 : f32
    %365 = vector.broadcast %cst_178 : f32 to vector<18x1xf32>
    %366 = arith.divf %364, %365 : vector<18x1xf32>
    %367 = vector.broadcast %366 : vector<18x1xf32> to vector<18x16xf32>
    %368 = arith.subf %362, %367 : vector<18x16xf32>
    %369 = arith.mulf %368, %368 : vector<18x16xf32>
    %cst_179 = arith.constant dense<0.000000e+00> : vector<18xf32>
    %370 = vector.multi_reduction <add>, %369, %cst_179 [1] : vector<18x16xf32> to vector<18xf32>
    %371 = vector.shape_cast %370 : vector<18xf32> to vector<18x1xf32>
    %cst_180 = arith.constant 1.600000e+01 : f32
    %372 = vector.broadcast %cst_180 : f32 to vector<18x1xf32>
    %373 = arith.divf %371, %372 : vector<18x1xf32>
    %cst_181 = arith.constant 9.99999974E-6 : f32
    %374 = vector.broadcast %cst_181 : f32 to vector<18x1xf32>
    %375 = arith.addf %373, %374 : vector<18x1xf32>
    %376 = math.rsqrt %375 : vector<18x1xf32>
    %377 = vector.broadcast %376 : vector<18x1xf32> to vector<18x16xf32>
    %378 = arith.mulf %368, %377 : vector<18x16xf32>
    %379 = vector.broadcast %255 : vector<1x16xf32> to vector<18x16xf32>
    %380 = arith.mulf %378, %379 : vector<18x16xf32>
    %381 = vector.broadcast %256 : vector<1x16xf32> to vector<18x16xf32>
    %382 = arith.addf %380, %381 : vector<18x16xf32>
    %c0_182 = arith.constant 0 : index
    %c48_183 = arith.constant 48 : index
    %383 = vector.load %arg1[%c0_182, %c48_183] : memref<18x128xf32, #tpu.memory_space<vmem>>, vector<18x16xf32>
    %384 = arith.addf %382, %383 : vector<18x16xf32>
    %c4_184 = arith.constant 4 : index
    %c0_185 = arith.constant 0 : index
    %c0_186 = arith.constant 0 : index
    %385 = vector.load %arg11[%c4_184, %c0_185, %c0_186] : memref<8x18x32xf32, #tpu.memory_space<vmem>>, vector<1x18x32xf32>
    %386 = vector.shape_cast %385 : vector<1x18x32xf32> to vector<18x32xf32>
    %387 = vector.extract_strided_slice %386 {offsets = [0, 0], sizes = [18, 16], strides = [1, 1]} : vector<18x32xf32> to vector<18x16xf32>
    %c3_187 = arith.constant 3 : index
    %c0_188 = arith.constant 0 : index
    %c0_189 = arith.constant 0 : index
    %388 = vector.load %arg11[%c3_187, %c0_188, %c0_189] : memref<8x18x32xf32, #tpu.memory_space<vmem>>, vector<1x18x32xf32>
    %389 = vector.shape_cast %388 : vector<1x18x32xf32> to vector<18x32xf32>
    %390 = vector.extract_strided_slice %389 {offsets = [0, 16], sizes = [18, 16], strides = [1, 1]} : vector<18x32xf32> to vector<18x16xf32>
    %391 = tpu.concatenate %387, %390 in 1 : vector<18x16xf32>, vector<18x16xf32> -> vector<18x32xf32>
    %cst_190 = arith.constant dense<0.000000e+00> : vector<18x16xf32>
    %392 = tpu.matmul %391, %253, %cst_190 {dimension_numbers = #tpu.dot_dimension_numbers<[1], [0], [0], [1], [0, 0, 1, 1], [], []>} : vector<18x32xf32>, vector<32x16xf32>, vector<18x16xf32> -> vector<18x16xf32>
    %393 = vector.broadcast %254 : vector<1x16xf32> to vector<18x16xf32>
    %394 = arith.addf %392, %393 : vector<18x16xf32>
    %cst_191 = arith.constant dense<0.000000e+00> : vector<18xf32>
    %395 = vector.multi_reduction <add>, %394, %cst_191 [1] : vector<18x16xf32> to vector<18xf32>
    %396 = vector.shape_cast %395 : vector<18xf32> to vector<18x1xf32>
    %cst_192 = arith.constant 1.600000e+01 : f32
    %397 = vector.broadcast %cst_192 : f32 to vector<18x1xf32>
    %398 = arith.divf %396, %397 : vector<18x1xf32>
    %399 = vector.broadcast %398 : vector<18x1xf32> to vector<18x16xf32>
    %400 = arith.subf %394, %399 : vector<18x16xf32>
    %401 = arith.mulf %400, %400 : vector<18x16xf32>
    %cst_193 = arith.constant dense<0.000000e+00> : vector<18xf32>
    %402 = vector.multi_reduction <add>, %401, %cst_193 [1] : vector<18x16xf32> to vector<18xf32>
    %403 = vector.shape_cast %402 : vector<18xf32> to vector<18x1xf32>
    %cst_194 = arith.constant 1.600000e+01 : f32
    %404 = vector.broadcast %cst_194 : f32 to vector<18x1xf32>
    %405 = arith.divf %403, %404 : vector<18x1xf32>
    %cst_195 = arith.constant 9.99999974E-6 : f32
    %406 = vector.broadcast %cst_195 : f32 to vector<18x1xf32>
    %407 = arith.addf %405, %406 : vector<18x1xf32>
    %408 = math.rsqrt %407 : vector<18x1xf32>
    %409 = vector.broadcast %408 : vector<18x1xf32> to vector<18x16xf32>
    %410 = arith.mulf %400, %409 : vector<18x16xf32>
    %411 = vector.broadcast %255 : vector<1x16xf32> to vector<18x16xf32>
    %412 = arith.mulf %410, %411 : vector<18x16xf32>
    %413 = vector.broadcast %256 : vector<1x16xf32> to vector<18x16xf32>
    %414 = arith.addf %412, %413 : vector<18x16xf32>
    %c0_196 = arith.constant 0 : index
    %c64_197 = arith.constant 64 : index
    %415 = vector.load %arg1[%c0_196, %c64_197] : memref<18x128xf32, #tpu.memory_space<vmem>>, vector<18x16xf32>
    %416 = arith.addf %414, %415 : vector<18x16xf32>
    %c5_198 = arith.constant 5 : index
    %c0_199 = arith.constant 0 : index
    %c0_200 = arith.constant 0 : index
    %417 = vector.load %arg11[%c5_198, %c0_199, %c0_200] : memref<8x18x32xf32, #tpu.memory_space<vmem>>, vector<1x18x32xf32>
    %418 = vector.shape_cast %417 : vector<1x18x32xf32> to vector<18x32xf32>
    %419 = vector.extract_strided_slice %418 {offsets = [0, 0], sizes = [18, 16], strides = [1, 1]} : vector<18x32xf32> to vector<18x16xf32>
    %c2_201 = arith.constant 2 : index
    %c0_202 = arith.constant 0 : index
    %c0_203 = arith.constant 0 : index
    %420 = vector.load %arg11[%c2_201, %c0_202, %c0_203] : memref<8x18x32xf32, #tpu.memory_space<vmem>>, vector<1x18x32xf32>
    %421 = vector.shape_cast %420 : vector<1x18x32xf32> to vector<18x32xf32>
    %422 = vector.extract_strided_slice %421 {offsets = [0, 16], sizes = [18, 16], strides = [1, 1]} : vector<18x32xf32> to vector<18x16xf32>
    %423 = tpu.concatenate %419, %422 in 1 : vector<18x16xf32>, vector<18x16xf32> -> vector<18x32xf32>
    %cst_204 = arith.constant dense<0.000000e+00> : vector<18x16xf32>
    %424 = tpu.matmul %423, %253, %cst_204 {dimension_numbers = #tpu.dot_dimension_numbers<[1], [0], [0], [1], [0, 0, 1, 1], [], []>} : vector<18x32xf32>, vector<32x16xf32>, vector<18x16xf32> -> vector<18x16xf32>
    %425 = vector.broadcast %254 : vector<1x16xf32> to vector<18x16xf32>
    %426 = arith.addf %424, %425 : vector<18x16xf32>
    %cst_205 = arith.constant dense<0.000000e+00> : vector<18xf32>
    %427 = vector.multi_reduction <add>, %426, %cst_205 [1] : vector<18x16xf32> to vector<18xf32>
    %428 = vector.shape_cast %427 : vector<18xf32> to vector<18x1xf32>
    %cst_206 = arith.constant 1.600000e+01 : f32
    %429 = vector.broadcast %cst_206 : f32 to vector<18x1xf32>
    %430 = arith.divf %428, %429 : vector<18x1xf32>
    %431 = vector.broadcast %430 : vector<18x1xf32> to vector<18x16xf32>
    %432 = arith.subf %426, %431 : vector<18x16xf32>
    %433 = arith.mulf %432, %432 : vector<18x16xf32>
    %cst_207 = arith.constant dense<0.000000e+00> : vector<18xf32>
    %434 = vector.multi_reduction <add>, %433, %cst_207 [1] : vector<18x16xf32> to vector<18xf32>
    %435 = vector.shape_cast %434 : vector<18xf32> to vector<18x1xf32>
    %cst_208 = arith.constant 1.600000e+01 : f32
    %436 = vector.broadcast %cst_208 : f32 to vector<18x1xf32>
    %437 = arith.divf %435, %436 : vector<18x1xf32>
    %cst_209 = arith.constant 9.99999974E-6 : f32
    %438 = vector.broadcast %cst_209 : f32 to vector<18x1xf32>
    %439 = arith.addf %437, %438 : vector<18x1xf32>
    %440 = math.rsqrt %439 : vector<18x1xf32>
    %441 = vector.broadcast %440 : vector<18x1xf32> to vector<18x16xf32>
    %442 = arith.mulf %432, %441 : vector<18x16xf32>
    %443 = vector.broadcast %255 : vector<1x16xf32> to vector<18x16xf32>
    %444 = arith.mulf %442, %443 : vector<18x16xf32>
    %445 = vector.broadcast %256 : vector<1x16xf32> to vector<18x16xf32>
    %446 = arith.addf %444, %445 : vector<18x16xf32>
    %c0_210 = arith.constant 0 : index
    %c80_211 = arith.constant 80 : index
    %447 = vector.load %arg1[%c0_210, %c80_211] : memref<18x128xf32, #tpu.memory_space<vmem>>, vector<18x16xf32>
    %448 = arith.addf %446, %447 : vector<18x16xf32>
    %c6_212 = arith.constant 6 : index
    %c0_213 = arith.constant 0 : index
    %c0_214 = arith.constant 0 : index
    %449 = vector.load %arg11[%c6_212, %c0_213, %c0_214] : memref<8x18x32xf32, #tpu.memory_space<vmem>>, vector<1x18x32xf32>
    %450 = vector.shape_cast %449 : vector<1x18x32xf32> to vector<18x32xf32>
    %451 = vector.extract_strided_slice %450 {offsets = [0, 0], sizes = [18, 16], strides = [1, 1]} : vector<18x32xf32> to vector<18x16xf32>
    %c1_215 = arith.constant 1 : index
    %c0_216 = arith.constant 0 : index
    %c0_217 = arith.constant 0 : index
    %452 = vector.load %arg11[%c1_215, %c0_216, %c0_217] : memref<8x18x32xf32, #tpu.memory_space<vmem>>, vector<1x18x32xf32>
    %453 = vector.shape_cast %452 : vector<1x18x32xf32> to vector<18x32xf32>
    %454 = vector.extract_strided_slice %453 {offsets = [0, 16], sizes = [18, 16], strides = [1, 1]} : vector<18x32xf32> to vector<18x16xf32>
    %455 = tpu.concatenate %451, %454 in 1 : vector<18x16xf32>, vector<18x16xf32> -> vector<18x32xf32>
    %cst_218 = arith.constant dense<0.000000e+00> : vector<18x16xf32>
    %456 = tpu.matmul %455, %253, %cst_218 {dimension_numbers = #tpu.dot_dimension_numbers<[1], [0], [0], [1], [0, 0, 1, 1], [], []>} : vector<18x32xf32>, vector<32x16xf32>, vector<18x16xf32> -> vector<18x16xf32>
    %457 = vector.broadcast %254 : vector<1x16xf32> to vector<18x16xf32>
    %458 = arith.addf %456, %457 : vector<18x16xf32>
    %cst_219 = arith.constant dense<0.000000e+00> : vector<18xf32>
    %459 = vector.multi_reduction <add>, %458, %cst_219 [1] : vector<18x16xf32> to vector<18xf32>
    %460 = vector.shape_cast %459 : vector<18xf32> to vector<18x1xf32>
    %cst_220 = arith.constant 1.600000e+01 : f32
    %461 = vector.broadcast %cst_220 : f32 to vector<18x1xf32>
    %462 = arith.divf %460, %461 : vector<18x1xf32>
    %463 = vector.broadcast %462 : vector<18x1xf32> to vector<18x16xf32>
    %464 = arith.subf %458, %463 : vector<18x16xf32>
    %465 = arith.mulf %464, %464 : vector<18x16xf32>
    %cst_221 = arith.constant dense<0.000000e+00> : vector<18xf32>
    %466 = vector.multi_reduction <add>, %465, %cst_221 [1] : vector<18x16xf32> to vector<18xf32>
    %467 = vector.shape_cast %466 : vector<18xf32> to vector<18x1xf32>
    %cst_222 = arith.constant 1.600000e+01 : f32
    %468 = vector.broadcast %cst_222 : f32 to vector<18x1xf32>
    %469 = arith.divf %467, %468 : vector<18x1xf32>
    %cst_223 = arith.constant 9.99999974E-6 : f32
    %470 = vector.broadcast %cst_223 : f32 to vector<18x1xf32>
    %471 = arith.addf %469, %470 : vector<18x1xf32>
    %472 = math.rsqrt %471 : vector<18x1xf32>
    %473 = vector.broadcast %472 : vector<18x1xf32> to vector<18x16xf32>
    %474 = arith.mulf %464, %473 : vector<18x16xf32>
    %475 = vector.broadcast %255 : vector<1x16xf32> to vector<18x16xf32>
    %476 = arith.mulf %474, %475 : vector<18x16xf32>
    %477 = vector.broadcast %256 : vector<1x16xf32> to vector<18x16xf32>
    %478 = arith.addf %476, %477 : vector<18x16xf32>
    %c0_224 = arith.constant 0 : index
    %c96_225 = arith.constant 96 : index
    %479 = vector.load %arg1[%c0_224, %c96_225] : memref<18x128xf32, #tpu.memory_space<vmem>>, vector<18x16xf32>
    %480 = arith.addf %478, %479 : vector<18x16xf32>
    %c7_226 = arith.constant 7 : index
    %c0_227 = arith.constant 0 : index
    %c0_228 = arith.constant 0 : index
    %481 = vector.load %arg11[%c7_226, %c0_227, %c0_228] : memref<8x18x32xf32, #tpu.memory_space<vmem>>, vector<1x18x32xf32>
    %482 = vector.shape_cast %481 : vector<1x18x32xf32> to vector<18x32xf32>
    %483 = vector.extract_strided_slice %482 {offsets = [0, 0], sizes = [18, 16], strides = [1, 1]} : vector<18x32xf32> to vector<18x16xf32>
    %c0_229 = arith.constant 0 : index
    %c0_230 = arith.constant 0 : index
    %c0_231 = arith.constant 0 : index
    %484 = vector.load %arg11[%c0_229, %c0_230, %c0_231] : memref<8x18x32xf32, #tpu.memory_space<vmem>>, vector<1x18x32xf32>
    %485 = vector.shape_cast %484 : vector<1x18x32xf32> to vector<18x32xf32>
    %486 = vector.extract_strided_slice %485 {offsets = [0, 16], sizes = [18, 16], strides = [1, 1]} : vector<18x32xf32> to vector<18x16xf32>
    %487 = tpu.concatenate %483, %486 in 1 : vector<18x16xf32>, vector<18x16xf32> -> vector<18x32xf32>
    %cst_232 = arith.constant dense<0.000000e+00> : vector<18x16xf32>
    %488 = tpu.matmul %487, %253, %cst_232 {dimension_numbers = #tpu.dot_dimension_numbers<[1], [0], [0], [1], [0, 0, 1, 1], [], []>} : vector<18x32xf32>, vector<32x16xf32>, vector<18x16xf32> -> vector<18x16xf32>
    %489 = vector.broadcast %254 : vector<1x16xf32> to vector<18x16xf32>
    %490 = arith.addf %488, %489 : vector<18x16xf32>
    %cst_233 = arith.constant dense<0.000000e+00> : vector<18xf32>
    %491 = vector.multi_reduction <add>, %490, %cst_233 [1] : vector<18x16xf32> to vector<18xf32>
    %492 = vector.shape_cast %491 : vector<18xf32> to vector<18x1xf32>
    %cst_234 = arith.constant 1.600000e+01 : f32
    %493 = vector.broadcast %cst_234 : f32 to vector<18x1xf32>
    %494 = arith.divf %492, %493 : vector<18x1xf32>
    %495 = vector.broadcast %494 : vector<18x1xf32> to vector<18x16xf32>
    %496 = arith.subf %490, %495 : vector<18x16xf32>
    %497 = arith.mulf %496, %496 : vector<18x16xf32>
    %cst_235 = arith.constant dense<0.000000e+00> : vector<18xf32>
    %498 = vector.multi_reduction <add>, %497, %cst_235 [1] : vector<18x16xf32> to vector<18xf32>
    %499 = vector.shape_cast %498 : vector<18xf32> to vector<18x1xf32>
    %cst_236 = arith.constant 1.600000e+01 : f32
    %500 = vector.broadcast %cst_236 : f32 to vector<18x1xf32>
    %501 = arith.divf %499, %500 : vector<18x1xf32>
    %cst_237 = arith.constant 9.99999974E-6 : f32
    %502 = vector.broadcast %cst_237 : f32 to vector<18x1xf32>
    %503 = arith.addf %501, %502 : vector<18x1xf32>
    %504 = math.rsqrt %503 : vector<18x1xf32>
    %505 = vector.broadcast %504 : vector<18x1xf32> to vector<18x16xf32>
    %506 = arith.mulf %496, %505 : vector<18x16xf32>
    %507 = vector.broadcast %255 : vector<1x16xf32> to vector<18x16xf32>
    %508 = arith.mulf %506, %507 : vector<18x16xf32>
    %509 = vector.broadcast %256 : vector<1x16xf32> to vector<18x16xf32>
    %510 = arith.addf %508, %509 : vector<18x16xf32>
    %c0_238 = arith.constant 0 : index
    %c112_239 = arith.constant 112 : index
    %511 = vector.load %arg1[%c0_238, %c112_239] : memref<18x128xf32, #tpu.memory_space<vmem>>, vector<18x16xf32>
    %512 = arith.addf %510, %511 : vector<18x16xf32>
    %513 = tpu.concatenate %288, %320, %352, %384, %416, %448, %480, %512 in 1 : vector<18x16xf32>, vector<18x16xf32>, vector<18x16xf32>, vector<18x16xf32>, vector<18x16xf32>, vector<18x16xf32>, vector<18x16xf32>, vector<18x16xf32> -> vector<18x128xf32>
    %c0_240 = arith.constant 0 : index
    %c0_241 = arith.constant 0 : index
    %514 = vector.load %arg9[%c0_240, %c0_241] : memref<18x128xf32, #tpu.memory_space<vmem>>, vector<18x128xf32>
    tpu.vector_store %arg9[%c0_240, %c0_241], %513 {strides = array<i32>} : memref<18x128xf32, #tpu.memory_space<vmem>>, vector<18x128xf32>,
    return
  }
  func.func @transform_0(%arg0: i32) -> (i32, i32) {
    %c0_i32 = arith.constant 0 : i32
    %c0_i32_0 = arith.constant 0 : i32
    return %arg0, %c0_i32 : i32, i32
  }
  func.func @transform_1(%arg0: i32) -> (i32, i32) {
    %c0_i32 = arith.constant 0 : i32
    %c0_i32_0 = arith.constant 0 : i32
    %c0_i32_1 = arith.constant 0 : i32
    return %c0_i32, %c0_i32_0 : i32, i32
  }
  func.func @transform_2(%arg0: i32) -> (i32, i32) {
    %c0_i32 = arith.constant 0 : i32
    %c0_i32_0 = arith.constant 0 : i32
    %c0_i32_1 = arith.constant 0 : i32
    return %c0_i32, %c0_i32_0 : i32, i32
  }
  func.func @transform_3(%arg0: i32) -> (i32, i32) {
    %c0_i32 = arith.constant 0 : i32
    %c0_i32_0 = arith.constant 0 : i32
    %c0_i32_1 = arith.constant 0 : i32
    return %c0_i32, %c0_i32_0 : i32, i32
  }
  func.func @transform_4(%arg0: i32) -> (i32, i32) {
    %c0_i32 = arith.constant 0 : i32
    %c0_i32_0 = arith.constant 0 : i32
    %c0_i32_1 = arith.constant 0 : i32
    return %c0_i32, %c0_i32_0 : i32, i32
  }
  func.func @transform_5(%arg0: i32) -> (i32, i32) {
    %c0_i32 = arith.constant 0 : i32
    %c0_i32_0 = arith.constant 0 : i32
    %c0_i32_1 = arith.constant 0 : i32
    return %c0_i32, %c0_i32_0 : i32, i32
  }
  func.func @transform_6(%arg0: i32) -> (i32, i32) {
    %c0_i32 = arith.constant 0 : i32
    %c0_i32_0 = arith.constant 0 : i32
    %c0_i32_1 = arith.constant 0 : i32
    return %c0_i32, %c0_i32_0 : i32, i32
  }
  func.func @transform_7(%arg0: i32) -> (i32, i32) {
    %c0_i32 = arith.constant 0 : i32
    %c0_i32_0 = arith.constant 0 : i32
    %c0_i32_1 = arith.constant 0 : i32
    return %c0_i32, %c0_i32_0 : i32, i32
  }
  func.func @transform_8(%arg0: i32) -> (i32, i32) {
    %c0_i32 = arith.constant 0 : i32
    %c0_i32_0 = arith.constant 0 : i32
    return %arg0, %c0_i32 : i32, i32
  }
}

module attributes {stable_mosaic.version = 11 : i64} {
  func.func @_dprnn_pass_kernel(%arg0: i32, %arg1: memref<16x144xf32, #tpu.memory_space<vmem>>, %arg2: memref<32x128xf32, #tpu.memory_space<vmem>>, %arg3: memref<1x128xf32, #tpu.memory_space<vmem>>, %arg4: memref<32x128xf32, #tpu.memory_space<vmem>>, %arg5: memref<32x16xf32, #tpu.memory_space<vmem>>, %arg6: memref<1x16xf32, #tpu.memory_space<vmem>>, %arg7: memref<1x16xf32, #tpu.memory_space<vmem>>, %arg8: memref<1x16xf32, #tpu.memory_space<vmem>>, %arg9: memref<16x144xf32, #tpu.memory_space<vmem>>, %arg10: memref<9x16x128xf32, #tpu.memory_space<vmem>>, %arg11: memref<9x16x32xf32, #tpu.memory_space<vmem>>) attributes {dimension_semantics = [#tpu.dimension_semantics<parallel>], iteration_bounds = array<i64: 1>, scalar_prefetch = 0 : i64, scratch_operands = 2 : i64, tpu.core_type = #tpu.core_type<tc>, window_params = [{transform_indices = @transform_0, window_bounds = array<i64: 16, 144>}, {pipeline_mode = #tpu.pipeline_mode<synchronous>, transform_indices = @transform_1, window_bounds = array<i64: 32, 128>}, {pipeline_mode = #tpu.pipeline_mode<synchronous>, transform_indices = @transform_2, window_bounds = array<i64: 1, 128>}, {pipeline_mode = #tpu.pipeline_mode<synchronous>, transform_indices = @transform_3, window_bounds = array<i64: 32, 128>}, {pipeline_mode = #tpu.pipeline_mode<synchronous>, transform_indices = @transform_4, window_bounds = array<i64: 32, 16>}, {pipeline_mode = #tpu.pipeline_mode<synchronous>, transform_indices = @transform_5, window_bounds = array<i64: 1, 16>}, {pipeline_mode = #tpu.pipeline_mode<synchronous>, transform_indices = @transform_6, window_bounds = array<i64: 1, 16>}, {pipeline_mode = #tpu.pipeline_mode<synchronous>, transform_indices = @transform_7, window_bounds = array<i64: 1, 16>}, {transform_indices = @transform_8, window_bounds = array<i64: 16, 144>}]} {
    %c0 = arith.constant 0 : index
    %c0_0 = arith.constant 0 : index
    %0 = vector.load %arg2[%c0, %c0_0] : memref<32x128xf32, #tpu.memory_space<vmem>>, vector<32x128xf32>
    %c0_1 = arith.constant 0 : index
    %c0_2 = arith.constant 0 : index
    %1 = vector.load %arg3[%c0_1, %c0_2] : memref<1x128xf32, #tpu.memory_space<vmem>>, vector<1x128xf32>
    %c0_3 = arith.constant 0 : index
    %c0_4 = arith.constant 0 : index
    %2 = vector.load %arg1[%c0_3, %c0_4] : memref<16x144xf32, #tpu.memory_space<vmem>>, vector<16x16xf32>
    %c0_5 = arith.constant 0 : index
    %c128 = arith.constant 128 : index
    %3 = vector.load %arg1[%c0_5, %c128] : memref<16x144xf32, #tpu.memory_space<vmem>>, vector<16x16xf32>
    %4 = tpu.concatenate %2, %3 in 1 : vector<16x16xf32>, vector<16x16xf32> -> vector<16x32xf32>
    %cst = arith.constant dense<0.000000e+00> : vector<16x128xf32>
    %5 = tpu.matmul %4, %0, %cst {dimension_numbers = #tpu.dot_dimension_numbers<[1], [0], [0], [1], [0, 0, 1, 1], [], []>} : vector<16x32xf32>, vector<32x128xf32>, vector<16x128xf32> -> vector<16x128xf32>
    %6 = vector.broadcast %1 : vector<1x128xf32> to vector<16x128xf32>
    %7 = arith.addf %5, %6 : vector<16x128xf32>
    %c0_6 = arith.constant 0 : index
    %c0_7 = arith.constant 0 : index
    %c0_8 = arith.constant 0 : index
    %8 = vector.load %arg10[%c0_6, %c0_7, %c0_8] : memref<9x16x128xf32, #tpu.memory_space<vmem>>, vector<1x16x128xf32>
    %9 = vector.shape_cast %8 : vector<1x16x128xf32> to vector<16x128xf32>
    %10 = vector.shape_cast %7 : vector<16x128xf32> to vector<1x16x128xf32>
    tpu.vector_store %arg10[%c0_6, %c0_7, %c0_8], %10 {strides = array<i32>} : memref<9x16x128xf32, #tpu.memory_space<vmem>>, vector<1x16x128xf32>,
    %c0_9 = arith.constant 0 : index
    %c16 = arith.constant 16 : index
    %11 = vector.load %arg1[%c0_9, %c16] : memref<16x144xf32, #tpu.memory_space<vmem>>, vector<16x16xf32>
    %c0_10 = arith.constant 0 : index
    %c112 = arith.constant 112 : index
    %12 = vector.load %arg1[%c0_10, %c112] : memref<16x144xf32, #tpu.memory_space<vmem>>, vector<16x16xf32>
    %13 = tpu.concatenate %11, %12 in 1 : vector<16x16xf32>, vector<16x16xf32> -> vector<16x32xf32>
    %cst_11 = arith.constant dense<0.000000e+00> : vector<16x128xf32>
    %14 = tpu.matmul %13, %0, %cst_11 {dimension_numbers = #tpu.dot_dimension_numbers<[1], [0], [0], [1], [0, 0, 1, 1], [], []>} : vector<16x32xf32>, vector<32x128xf32>, vector<16x128xf32> -> vector<16x128xf32>
    %15 = vector.broadcast %1 : vector<1x128xf32> to vector<16x128xf32>
    %16 = arith.addf %14, %15 : vector<16x128xf32>
    %c1 = arith.constant 1 : index
    %c0_12 = arith.constant 0 : index
    %c0_13 = arith.constant 0 : index
    %17 = vector.load %arg10[%c1, %c0_12, %c0_13] : memref<9x16x128xf32, #tpu.memory_space<vmem>>, vector<1x16x128xf32>
    %18 = vector.shape_cast %17 : vector<1x16x128xf32> to vector<16x128xf32>
    %19 = vector.shape_cast %16 : vector<16x128xf32> to vector<1x16x128xf32>
    tpu.vector_store %arg10[%c1, %c0_12, %c0_13], %19 {strides = array<i32>} : memref<9x16x128xf32, #tpu.memory_space<vmem>>, vector<1x16x128xf32>,
    %c0_14 = arith.constant 0 : index
    %c32 = arith.constant 32 : index
    %20 = vector.load %arg1[%c0_14, %c32] : memref<16x144xf32, #tpu.memory_space<vmem>>, vector<16x16xf32>
    %c0_15 = arith.constant 0 : index
    %c96 = arith.constant 96 : index
    %21 = vector.load %arg1[%c0_15, %c96] : memref<16x144xf32, #tpu.memory_space<vmem>>, vector<16x16xf32>
    %22 = tpu.concatenate %20, %21 in 1 : vector<16x16xf32>, vector<16x16xf32> -> vector<16x32xf32>
    %cst_16 = arith.constant dense<0.000000e+00> : vector<16x128xf32>
    %23 = tpu.matmul %22, %0, %cst_16 {dimension_numbers = #tpu.dot_dimension_numbers<[1], [0], [0], [1], [0, 0, 1, 1], [], []>} : vector<16x32xf32>, vector<32x128xf32>, vector<16x128xf32> -> vector<16x128xf32>
    %24 = vector.broadcast %1 : vector<1x128xf32> to vector<16x128xf32>
    %25 = arith.addf %23, %24 : vector<16x128xf32>
    %c2 = arith.constant 2 : index
    %c0_17 = arith.constant 0 : index
    %c0_18 = arith.constant 0 : index
    %26 = vector.load %arg10[%c2, %c0_17, %c0_18] : memref<9x16x128xf32, #tpu.memory_space<vmem>>, vector<1x16x128xf32>
    %27 = vector.shape_cast %26 : vector<1x16x128xf32> to vector<16x128xf32>
    %28 = vector.shape_cast %25 : vector<16x128xf32> to vector<1x16x128xf32>
    tpu.vector_store %arg10[%c2, %c0_17, %c0_18], %28 {strides = array<i32>} : memref<9x16x128xf32, #tpu.memory_space<vmem>>, vector<1x16x128xf32>,
    %c0_19 = arith.constant 0 : index
    %c48 = arith.constant 48 : index
    %29 = vector.load %arg1[%c0_19, %c48] : memref<16x144xf32, #tpu.memory_space<vmem>>, vector<16x16xf32>
    %c0_20 = arith.constant 0 : index
    %c80 = arith.constant 80 : index
    %30 = vector.load %arg1[%c0_20, %c80] : memref<16x144xf32, #tpu.memory_space<vmem>>, vector<16x16xf32>
    %31 = tpu.concatenate %29, %30 in 1 : vector<16x16xf32>, vector<16x16xf32> -> vector<16x32xf32>
    %cst_21 = arith.constant dense<0.000000e+00> : vector<16x128xf32>
    %32 = tpu.matmul %31, %0, %cst_21 {dimension_numbers = #tpu.dot_dimension_numbers<[1], [0], [0], [1], [0, 0, 1, 1], [], []>} : vector<16x32xf32>, vector<32x128xf32>, vector<16x128xf32> -> vector<16x128xf32>
    %33 = vector.broadcast %1 : vector<1x128xf32> to vector<16x128xf32>
    %34 = arith.addf %32, %33 : vector<16x128xf32>
    %c3 = arith.constant 3 : index
    %c0_22 = arith.constant 0 : index
    %c0_23 = arith.constant 0 : index
    %35 = vector.load %arg10[%c3, %c0_22, %c0_23] : memref<9x16x128xf32, #tpu.memory_space<vmem>>, vector<1x16x128xf32>
    %36 = vector.shape_cast %35 : vector<1x16x128xf32> to vector<16x128xf32>
    %37 = vector.shape_cast %34 : vector<16x128xf32> to vector<1x16x128xf32>
    tpu.vector_store %arg10[%c3, %c0_22, %c0_23], %37 {strides = array<i32>} : memref<9x16x128xf32, #tpu.memory_space<vmem>>, vector<1x16x128xf32>,
    %c0_24 = arith.constant 0 : index
    %c64 = arith.constant 64 : index
    %38 = vector.load %arg1[%c0_24, %c64] : memref<16x144xf32, #tpu.memory_space<vmem>>, vector<16x16xf32>
    %c0_25 = arith.constant 0 : index
    %c64_26 = arith.constant 64 : index
    %39 = vector.load %arg1[%c0_25, %c64_26] : memref<16x144xf32, #tpu.memory_space<vmem>>, vector<16x16xf32>
    %40 = tpu.concatenate %38, %39 in 1 : vector<16x16xf32>, vector<16x16xf32> -> vector<16x32xf32>
    %cst_27 = arith.constant dense<0.000000e+00> : vector<16x128xf32>
    %41 = tpu.matmul %40, %0, %cst_27 {dimension_numbers = #tpu.dot_dimension_numbers<[1], [0], [0], [1], [0, 0, 1, 1], [], []>} : vector<16x32xf32>, vector<32x128xf32>, vector<16x128xf32> -> vector<16x128xf32>
    %42 = vector.broadcast %1 : vector<1x128xf32> to vector<16x128xf32>
    %43 = arith.addf %41, %42 : vector<16x128xf32>
    %c4 = arith.constant 4 : index
    %c0_28 = arith.constant 0 : index
    %c0_29 = arith.constant 0 : index
    %44 = vector.load %arg10[%c4, %c0_28, %c0_29] : memref<9x16x128xf32, #tpu.memory_space<vmem>>, vector<1x16x128xf32>
    %45 = vector.shape_cast %44 : vector<1x16x128xf32> to vector<16x128xf32>
    %46 = vector.shape_cast %43 : vector<16x128xf32> to vector<1x16x128xf32>
    tpu.vector_store %arg10[%c4, %c0_28, %c0_29], %46 {strides = array<i32>} : memref<9x16x128xf32, #tpu.memory_space<vmem>>, vector<1x16x128xf32>,
    %c0_30 = arith.constant 0 : index
    %c80_31 = arith.constant 80 : index
    %47 = vector.load %arg1[%c0_30, %c80_31] : memref<16x144xf32, #tpu.memory_space<vmem>>, vector<16x16xf32>
    %c0_32 = arith.constant 0 : index
    %c48_33 = arith.constant 48 : index
    %48 = vector.load %arg1[%c0_32, %c48_33] : memref<16x144xf32, #tpu.memory_space<vmem>>, vector<16x16xf32>
    %49 = tpu.concatenate %47, %48 in 1 : vector<16x16xf32>, vector<16x16xf32> -> vector<16x32xf32>
    %cst_34 = arith.constant dense<0.000000e+00> : vector<16x128xf32>
    %50 = tpu.matmul %49, %0, %cst_34 {dimension_numbers = #tpu.dot_dimension_numbers<[1], [0], [0], [1], [0, 0, 1, 1], [], []>} : vector<16x32xf32>, vector<32x128xf32>, vector<16x128xf32> -> vector<16x128xf32>
    %51 = vector.broadcast %1 : vector<1x128xf32> to vector<16x128xf32>
    %52 = arith.addf %50, %51 : vector<16x128xf32>
    %c5 = arith.constant 5 : index
    %c0_35 = arith.constant 0 : index
    %c0_36 = arith.constant 0 : index
    %53 = vector.load %arg10[%c5, %c0_35, %c0_36] : memref<9x16x128xf32, #tpu.memory_space<vmem>>, vector<1x16x128xf32>
    %54 = vector.shape_cast %53 : vector<1x16x128xf32> to vector<16x128xf32>
    %55 = vector.shape_cast %52 : vector<16x128xf32> to vector<1x16x128xf32>
    tpu.vector_store %arg10[%c5, %c0_35, %c0_36], %55 {strides = array<i32>} : memref<9x16x128xf32, #tpu.memory_space<vmem>>, vector<1x16x128xf32>,
    %c0_37 = arith.constant 0 : index
    %c96_38 = arith.constant 96 : index
    %56 = vector.load %arg1[%c0_37, %c96_38] : memref<16x144xf32, #tpu.memory_space<vmem>>, vector<16x16xf32>
    %c0_39 = arith.constant 0 : index
    %c32_40 = arith.constant 32 : index
    %57 = vector.load %arg1[%c0_39, %c32_40] : memref<16x144xf32, #tpu.memory_space<vmem>>, vector<16x16xf32>
    %58 = tpu.concatenate %56, %57 in 1 : vector<16x16xf32>, vector<16x16xf32> -> vector<16x32xf32>
    %cst_41 = arith.constant dense<0.000000e+00> : vector<16x128xf32>
    %59 = tpu.matmul %58, %0, %cst_41 {dimension_numbers = #tpu.dot_dimension_numbers<[1], [0], [0], [1], [0, 0, 1, 1], [], []>} : vector<16x32xf32>, vector<32x128xf32>, vector<16x128xf32> -> vector<16x128xf32>
    %60 = vector.broadcast %1 : vector<1x128xf32> to vector<16x128xf32>
    %61 = arith.addf %59, %60 : vector<16x128xf32>
    %c6 = arith.constant 6 : index
    %c0_42 = arith.constant 0 : index
    %c0_43 = arith.constant 0 : index
    %62 = vector.load %arg10[%c6, %c0_42, %c0_43] : memref<9x16x128xf32, #tpu.memory_space<vmem>>, vector<1x16x128xf32>
    %63 = vector.shape_cast %62 : vector<1x16x128xf32> to vector<16x128xf32>
    %64 = vector.shape_cast %61 : vector<16x128xf32> to vector<1x16x128xf32>
    tpu.vector_store %arg10[%c6, %c0_42, %c0_43], %64 {strides = array<i32>} : memref<9x16x128xf32, #tpu.memory_space<vmem>>, vector<1x16x128xf32>,
    %c0_44 = arith.constant 0 : index
    %c112_45 = arith.constant 112 : index
    %65 = vector.load %arg1[%c0_44, %c112_45] : memref<16x144xf32, #tpu.memory_space<vmem>>, vector<16x16xf32>
    %c0_46 = arith.constant 0 : index
    %c16_47 = arith.constant 16 : index
    %66 = vector.load %arg1[%c0_46, %c16_47] : memref<16x144xf32, #tpu.memory_space<vmem>>, vector<16x16xf32>
    %67 = tpu.concatenate %65, %66 in 1 : vector<16x16xf32>, vector<16x16xf32> -> vector<16x32xf32>
    %cst_48 = arith.constant dense<0.000000e+00> : vector<16x128xf32>
    %68 = tpu.matmul %67, %0, %cst_48 {dimension_numbers = #tpu.dot_dimension_numbers<[1], [0], [0], [1], [0, 0, 1, 1], [], []>} : vector<16x32xf32>, vector<32x128xf32>, vector<16x128xf32> -> vector<16x128xf32>
    %69 = vector.broadcast %1 : vector<1x128xf32> to vector<16x128xf32>
    %70 = arith.addf %68, %69 : vector<16x128xf32>
    %c7 = arith.constant 7 : index
    %c0_49 = arith.constant 0 : index
    %c0_50 = arith.constant 0 : index
    %71 = vector.load %arg10[%c7, %c0_49, %c0_50] : memref<9x16x128xf32, #tpu.memory_space<vmem>>, vector<1x16x128xf32>
    %72 = vector.shape_cast %71 : vector<1x16x128xf32> to vector<16x128xf32>
    %73 = vector.shape_cast %70 : vector<16x128xf32> to vector<1x16x128xf32>
    tpu.vector_store %arg10[%c7, %c0_49, %c0_50], %73 {strides = array<i32>} : memref<9x16x128xf32, #tpu.memory_space<vmem>>, vector<1x16x128xf32>,
    %c0_51 = arith.constant 0 : index
    %c128_52 = arith.constant 128 : index
    %74 = vector.load %arg1[%c0_51, %c128_52] : memref<16x144xf32, #tpu.memory_space<vmem>>, vector<16x16xf32>
    %c0_53 = arith.constant 0 : index
    %c0_54 = arith.constant 0 : index
    %75 = vector.load %arg1[%c0_53, %c0_54] : memref<16x144xf32, #tpu.memory_space<vmem>>, vector<16x16xf32>
    %76 = tpu.concatenate %74, %75 in 1 : vector<16x16xf32>, vector<16x16xf32> -> vector<16x32xf32>
    %cst_55 = arith.constant dense<0.000000e+00> : vector<16x128xf32>
    %77 = tpu.matmul %76, %0, %cst_55 {dimension_numbers = #tpu.dot_dimension_numbers<[1], [0], [0], [1], [0, 0, 1, 1], [], []>} : vector<16x32xf32>, vector<32x128xf32>, vector<16x128xf32> -> vector<16x128xf32>
    %78 = vector.broadcast %1 : vector<1x128xf32> to vector<16x128xf32>
    %79 = arith.addf %77, %78 : vector<16x128xf32>
    %c8 = arith.constant 8 : index
    %c0_56 = arith.constant 0 : index
    %c0_57 = arith.constant 0 : index
    %80 = vector.load %arg10[%c8, %c0_56, %c0_57] : memref<9x16x128xf32, #tpu.memory_space<vmem>>, vector<1x16x128xf32>
    %81 = vector.shape_cast %80 : vector<1x16x128xf32> to vector<16x128xf32>
    %82 = vector.shape_cast %79 : vector<16x128xf32> to vector<1x16x128xf32>
    tpu.vector_store %arg10[%c8, %c0_56, %c0_57], %82 {strides = array<i32>} : memref<9x16x128xf32, #tpu.memory_space<vmem>>, vector<1x16x128xf32>,
    %c0_58 = arith.constant 0 : index
    %c0_59 = arith.constant 0 : index
    %83 = vector.load %arg4[%c0_58, %c0_59] : memref<32x128xf32, #tpu.memory_space<vmem>>, vector<32x128xf32>
    %cst_60 = arith.constant 0.000000e+00 : f32
    %84 = vector.broadcast %cst_60 : f32 to vector<16x32xf32>
    %cst_61 = arith.constant 0.000000e+00 : f32
    %85 = vector.broadcast %cst_61 : f32 to vector<16x32xf32>
    %c0_i32 = arith.constant 0 : i32
    %c9_i32 = arith.constant 9 : i32
    %86 = arith.addi %c0_i32, %c9_i32 : i32
    %c1_i32 = arith.constant 1 : i32
    %87:2 = scf.for %arg12 = %c0_i32 to %86 step %c1_i32 iter_args(%arg13 = %84, %arg14 = %85) -> (vector<16x32xf32>, vector<16x32xf32>)  : i32 {
      %382 = arith.index_cast %arg12 : i32 to index
      %c0_199 = arith.constant 0 : index
      %c0_200 = arith.constant 0 : index
      %383 = vector.load %arg10[%382, %c0_199, %c0_200] : memref<9x16x128xf32, #tpu.memory_space<vmem>>, vector<1x16x128xf32>
      %384 = vector.shape_cast %383 : vector<1x16x128xf32> to vector<16x128xf32>
      %cst_201 = arith.constant dense<0.000000e+00> : vector<16x128xf32>
      %385 = tpu.matmul %arg13, %83, %cst_201 {dimension_numbers = #tpu.dot_dimension_numbers<[1], [0], [0], [1], [0, 0, 1, 1], [], []>} : vector<16x32xf32>, vector<32x128xf32>, vector<16x128xf32> -> vector<16x128xf32>
      %386 = arith.addf %384, %385 : vector<16x128xf32>
      %387 = arith.negf %386 : vector<16x128xf32>
      %388 = math.exp %387 : vector<16x128xf32>
      %cst_202 = arith.constant 1.000000e+00 : f32
      %389 = vector.broadcast %cst_202 : f32 to vector<16x128xf32>
      %390 = arith.addf %389, %388 : vector<16x128xf32>
      %391 = arith.divf %389, %390 : vector<16x128xf32>
      %392 = math.tanh %386 : vector<16x128xf32>
      %393 = vector.extract_strided_slice %391 {offsets = [0, 0], sizes = [16, 32], strides = [1, 1]} : vector<16x128xf32> to vector<16x32xf32>
      %394 = vector.extract_strided_slice %391 {offsets = [0, 32], sizes = [16, 32], strides = [1, 1]} : vector<16x128xf32> to vector<16x32xf32>
      %395 = vector.extract_strided_slice %392 {offsets = [0, 64], sizes = [16, 32], strides = [1, 1]} : vector<16x128xf32> to vector<16x32xf32>
      %396 = vector.extract_strided_slice %391 {offsets = [0, 96], sizes = [16, 32], strides = [1, 1]} : vector<16x128xf32> to vector<16x32xf32>
      %397 = arith.mulf %394, %arg14 : vector<16x32xf32>
      %398 = arith.mulf %393, %395 : vector<16x32xf32>
      %399 = arith.addf %397, %398 : vector<16x32xf32>
      %400 = math.tanh %399 : vector<16x32xf32>
      %401 = arith.mulf %396, %400 : vector<16x32xf32>
      %402 = arith.index_cast %arg12 : i32 to index
      %c0_203 = arith.constant 0 : index
      %c0_204 = arith.constant 0 : index
      %403 = vector.load %arg11[%402, %c0_203, %c0_204] : memref<9x16x32xf32, #tpu.memory_space<vmem>>, vector<1x16x32xf32>
      %404 = vector.shape_cast %403 : vector<1x16x32xf32> to vector<16x32xf32>
      %405 = vector.shape_cast %401 : vector<16x32xf32> to vector<1x16x32xf32>
      tpu.vector_store %arg11[%402, %c0_203, %c0_204], %405 {strides = array<i32>} : memref<9x16x32xf32, #tpu.memory_space<vmem>>, vector<1x16x32xf32>,
      scf.yield %401, %399 : vector<16x32xf32>, vector<16x32xf32>
    }
    %c9_i32_62 = arith.constant 9 : i32
    %c0_63 = arith.constant 0 : index
    %c0_64 = arith.constant 0 : index
    %88 = vector.load %arg5[%c0_63, %c0_64] : memref<32x16xf32, #tpu.memory_space<vmem>>, vector<32x16xf32>
    %c0_65 = arith.constant 0 : index
    %c0_66 = arith.constant 0 : index
    %89 = vector.load %arg6[%c0_65, %c0_66] : memref<1x16xf32, #tpu.memory_space<vmem>>, vector<1x16xf32>
    %c0_67 = arith.constant 0 : index
    %c0_68 = arith.constant 0 : index
    %90 = vector.load %arg7[%c0_67, %c0_68] : memref<1x16xf32, #tpu.memory_space<vmem>>, vector<1x16xf32>
    %c0_69 = arith.constant 0 : index
    %c0_70 = arith.constant 0 : index
    %91 = vector.load %arg8[%c0_69, %c0_70] : memref<1x16xf32, #tpu.memory_space<vmem>>, vector<1x16xf32>
    %c0_71 = arith.constant 0 : index
    %c0_72 = arith.constant 0 : index
    %c0_73 = arith.constant 0 : index
    %92 = vector.load %arg11[%c0_71, %c0_72, %c0_73] : memref<9x16x32xf32, #tpu.memory_space<vmem>>, vector<1x16x32xf32>
    %93 = vector.shape_cast %92 : vector<1x16x32xf32> to vector<16x32xf32>
    %94 = vector.extract_strided_slice %93 {offsets = [0, 0], sizes = [16, 16], strides = [1, 1]} : vector<16x32xf32> to vector<16x16xf32>
    %c8_74 = arith.constant 8 : index
    %c0_75 = arith.constant 0 : index
    %c0_76 = arith.constant 0 : index
    %95 = vector.load %arg11[%c8_74, %c0_75, %c0_76] : memref<9x16x32xf32, #tpu.memory_space<vmem>>, vector<1x16x32xf32>
    %96 = vector.shape_cast %95 : vector<1x16x32xf32> to vector<16x32xf32>
    %97 = vector.extract_strided_slice %96 {offsets = [0, 16], sizes = [16, 16], strides = [1, 1]} : vector<16x32xf32> to vector<16x16xf32>
    %98 = tpu.concatenate %94, %97 in 1 : vector<16x16xf32>, vector<16x16xf32> -> vector<16x32xf32>
    %cst_77 = arith.constant dense<0.000000e+00> : vector<16x16xf32>
    %99 = tpu.matmul %98, %88, %cst_77 {dimension_numbers = #tpu.dot_dimension_numbers<[1], [0], [0], [1], [0, 0, 1, 1], [], []>} : vector<16x32xf32>, vector<32x16xf32>, vector<16x16xf32> -> vector<16x16xf32>
    %100 = vector.broadcast %89 : vector<1x16xf32> to vector<16x16xf32>
    %101 = arith.addf %99, %100 : vector<16x16xf32>
    %cst_78 = arith.constant dense<0.000000e+00> : vector<16xf32>
    %102 = vector.multi_reduction <add>, %101, %cst_78 [1] : vector<16x16xf32> to vector<16xf32>
    %103 = vector.shape_cast %102 : vector<16xf32> to vector<16x1xf32>
    %cst_79 = arith.constant 1.600000e+01 : f32
    %104 = vector.broadcast %cst_79 : f32 to vector<16x1xf32>
    %105 = arith.divf %103, %104 : vector<16x1xf32>
    %106 = vector.broadcast %105 : vector<16x1xf32> to vector<16x16xf32>
    %107 = arith.subf %101, %106 : vector<16x16xf32>
    %108 = arith.mulf %107, %107 : vector<16x16xf32>
    %cst_80 = arith.constant dense<0.000000e+00> : vector<16xf32>
    %109 = vector.multi_reduction <add>, %108, %cst_80 [1] : vector<16x16xf32> to vector<16xf32>
    %110 = vector.shape_cast %109 : vector<16xf32> to vector<16x1xf32>
    %cst_81 = arith.constant 1.600000e+01 : f32
    %111 = vector.broadcast %cst_81 : f32 to vector<16x1xf32>
    %112 = arith.divf %110, %111 : vector<16x1xf32>
    %cst_82 = arith.constant 9.99999974E-6 : f32
    %113 = vector.broadcast %cst_82 : f32 to vector<16x1xf32>
    %114 = arith.addf %112, %113 : vector<16x1xf32>
    %115 = math.rsqrt %114 : vector<16x1xf32>
    %116 = vector.broadcast %115 : vector<16x1xf32> to vector<16x16xf32>
    %117 = arith.mulf %107, %116 : vector<16x16xf32>
    %118 = vector.broadcast %90 : vector<1x16xf32> to vector<16x16xf32>
    %119 = arith.mulf %117, %118 : vector<16x16xf32>
    %120 = vector.broadcast %91 : vector<1x16xf32> to vector<16x16xf32>
    %121 = arith.addf %119, %120 : vector<16x16xf32>
    %c0_83 = arith.constant 0 : index
    %c0_84 = arith.constant 0 : index
    %122 = vector.load %arg1[%c0_83, %c0_84] : memref<16x144xf32, #tpu.memory_space<vmem>>, vector<16x16xf32>
    %123 = arith.addf %121, %122 : vector<16x16xf32>
    %c1_85 = arith.constant 1 : index
    %c0_86 = arith.constant 0 : index
    %c0_87 = arith.constant 0 : index
    %124 = vector.load %arg11[%c1_85, %c0_86, %c0_87] : memref<9x16x32xf32, #tpu.memory_space<vmem>>, vector<1x16x32xf32>
    %125 = vector.shape_cast %124 : vector<1x16x32xf32> to vector<16x32xf32>
    %126 = vector.extract_strided_slice %125 {offsets = [0, 0], sizes = [16, 16], strides = [1, 1]} : vector<16x32xf32> to vector<16x16xf32>
    %c7_88 = arith.constant 7 : index
    %c0_89 = arith.constant 0 : index
    %c0_90 = arith.constant 0 : index
    %127 = vector.load %arg11[%c7_88, %c0_89, %c0_90] : memref<9x16x32xf32, #tpu.memory_space<vmem>>, vector<1x16x32xf32>
    %128 = vector.shape_cast %127 : vector<1x16x32xf32> to vector<16x32xf32>
    %129 = vector.extract_strided_slice %128 {offsets = [0, 16], sizes = [16, 16], strides = [1, 1]} : vector<16x32xf32> to vector<16x16xf32>
    %130 = tpu.concatenate %126, %129 in 1 : vector<16x16xf32>, vector<16x16xf32> -> vector<16x32xf32>
    %cst_91 = arith.constant dense<0.000000e+00> : vector<16x16xf32>
    %131 = tpu.matmul %130, %88, %cst_91 {dimension_numbers = #tpu.dot_dimension_numbers<[1], [0], [0], [1], [0, 0, 1, 1], [], []>} : vector<16x32xf32>, vector<32x16xf32>, vector<16x16xf32> -> vector<16x16xf32>
    %132 = vector.broadcast %89 : vector<1x16xf32> to vector<16x16xf32>
    %133 = arith.addf %131, %132 : vector<16x16xf32>
    %cst_92 = arith.constant dense<0.000000e+00> : vector<16xf32>
    %134 = vector.multi_reduction <add>, %133, %cst_92 [1] : vector<16x16xf32> to vector<16xf32>
    %135 = vector.shape_cast %134 : vector<16xf32> to vector<16x1xf32>
    %cst_93 = arith.constant 1.600000e+01 : f32
    %136 = vector.broadcast %cst_93 : f32 to vector<16x1xf32>
    %137 = arith.divf %135, %136 : vector<16x1xf32>
    %138 = vector.broadcast %137 : vector<16x1xf32> to vector<16x16xf32>
    %139 = arith.subf %133, %138 : vector<16x16xf32>
    %140 = arith.mulf %139, %139 : vector<16x16xf32>
    %cst_94 = arith.constant dense<0.000000e+00> : vector<16xf32>
    %141 = vector.multi_reduction <add>, %140, %cst_94 [1] : vector<16x16xf32> to vector<16xf32>
    %142 = vector.shape_cast %141 : vector<16xf32> to vector<16x1xf32>
    %cst_95 = arith.constant 1.600000e+01 : f32
    %143 = vector.broadcast %cst_95 : f32 to vector<16x1xf32>
    %144 = arith.divf %142, %143 : vector<16x1xf32>
    %cst_96 = arith.constant 9.99999974E-6 : f32
    %145 = vector.broadcast %cst_96 : f32 to vector<16x1xf32>
    %146 = arith.addf %144, %145 : vector<16x1xf32>
    %147 = math.rsqrt %146 : vector<16x1xf32>
    %148 = vector.broadcast %147 : vector<16x1xf32> to vector<16x16xf32>
    %149 = arith.mulf %139, %148 : vector<16x16xf32>
    %150 = vector.broadcast %90 : vector<1x16xf32> to vector<16x16xf32>
    %151 = arith.mulf %149, %150 : vector<16x16xf32>
    %152 = vector.broadcast %91 : vector<1x16xf32> to vector<16x16xf32>
    %153 = arith.addf %151, %152 : vector<16x16xf32>
    %c0_97 = arith.constant 0 : index
    %c16_98 = arith.constant 16 : index
    %154 = vector.load %arg1[%c0_97, %c16_98] : memref<16x144xf32, #tpu.memory_space<vmem>>, vector<16x16xf32>
    %155 = arith.addf %153, %154 : vector<16x16xf32>
    %c2_99 = arith.constant 2 : index
    %c0_100 = arith.constant 0 : index
    %c0_101 = arith.constant 0 : index
    %156 = vector.load %arg11[%c2_99, %c0_100, %c0_101] : memref<9x16x32xf32, #tpu.memory_space<vmem>>, vector<1x16x32xf32>
    %157 = vector.shape_cast %156 : vector<1x16x32xf32> to vector<16x32xf32>
    %158 = vector.extract_strided_slice %157 {offsets = [0, 0], sizes = [16, 16], strides = [1, 1]} : vector<16x32xf32> to vector<16x16xf32>
    %c6_102 = arith.constant 6 : index
    %c0_103 = arith.constant 0 : index
    %c0_104 = arith.constant 0 : index
    %159 = vector.load %arg11[%c6_102, %c0_103, %c0_104] : memref<9x16x32xf32, #tpu.memory_space<vmem>>, vector<1x16x32xf32>
    %160 = vector.shape_cast %159 : vector<1x16x32xf32> to vector<16x32xf32>
    %161 = vector.extract_strided_slice %160 {offsets = [0, 16], sizes = [16, 16], strides = [1, 1]} : vector<16x32xf32> to vector<16x16xf32>
    %162 = tpu.concatenate %158, %161 in 1 : vector<16x16xf32>, vector<16x16xf32> -> vector<16x32xf32>
    %cst_105 = arith.constant dense<0.000000e+00> : vector<16x16xf32>
    %163 = tpu.matmul %162, %88, %cst_105 {dimension_numbers = #tpu.dot_dimension_numbers<[1], [0], [0], [1], [0, 0, 1, 1], [], []>} : vector<16x32xf32>, vector<32x16xf32>, vector<16x16xf32> -> vector<16x16xf32>
    %164 = vector.broadcast %89 : vector<1x16xf32> to vector<16x16xf32>
    %165 = arith.addf %163, %164 : vector<16x16xf32>
    %cst_106 = arith.constant dense<0.000000e+00> : vector<16xf32>
    %166 = vector.multi_reduction <add>, %165, %cst_106 [1] : vector<16x16xf32> to vector<16xf32>
    %167 = vector.shape_cast %166 : vector<16xf32> to vector<16x1xf32>
    %cst_107 = arith.constant 1.600000e+01 : f32
    %168 = vector.broadcast %cst_107 : f32 to vector<16x1xf32>
    %169 = arith.divf %167, %168 : vector<16x1xf32>
    %170 = vector.broadcast %169 : vector<16x1xf32> to vector<16x16xf32>
    %171 = arith.subf %165, %170 : vector<16x16xf32>
    %172 = arith.mulf %171, %171 : vector<16x16xf32>
    %cst_108 = arith.constant dense<0.000000e+00> : vector<16xf32>
    %173 = vector.multi_reduction <add>, %172, %cst_108 [1] : vector<16x16xf32> to vector<16xf32>
    %174 = vector.shape_cast %173 : vector<16xf32> to vector<16x1xf32>
    %cst_109 = arith.constant 1.600000e+01 : f32
    %175 = vector.broadcast %cst_109 : f32 to vector<16x1xf32>
    %176 = arith.divf %174, %175 : vector<16x1xf32>
    %cst_110 = arith.constant 9.99999974E-6 : f32
    %177 = vector.broadcast %cst_110 : f32 to vector<16x1xf32>
    %178 = arith.addf %176, %177 : vector<16x1xf32>
    %179 = math.rsqrt %178 : vector<16x1xf32>
    %180 = vector.broadcast %179 : vector<16x1xf32> to vector<16x16xf32>
    %181 = arith.mulf %171, %180 : vector<16x16xf32>
    %182 = vector.broadcast %90 : vector<1x16xf32> to vector<16x16xf32>
    %183 = arith.mulf %181, %182 : vector<16x16xf32>
    %184 = vector.broadcast %91 : vector<1x16xf32> to vector<16x16xf32>
    %185 = arith.addf %183, %184 : vector<16x16xf32>
    %c0_111 = arith.constant 0 : index
    %c32_112 = arith.constant 32 : index
    %186 = vector.load %arg1[%c0_111, %c32_112] : memref<16x144xf32, #tpu.memory_space<vmem>>, vector<16x16xf32>
    %187 = arith.addf %185, %186 : vector<16x16xf32>
    %c3_113 = arith.constant 3 : index
    %c0_114 = arith.constant 0 : index
    %c0_115 = arith.constant 0 : index
    %188 = vector.load %arg11[%c3_113, %c0_114, %c0_115] : memref<9x16x32xf32, #tpu.memory_space<vmem>>, vector<1x16x32xf32>
    %189 = vector.shape_cast %188 : vector<1x16x32xf32> to vector<16x32xf32>
    %190 = vector.extract_strided_slice %189 {offsets = [0, 0], sizes = [16, 16], strides = [1, 1]} : vector<16x32xf32> to vector<16x16xf32>
    %c5_116 = arith.constant 5 : index
    %c0_117 = arith.constant 0 : index
    %c0_118 = arith.constant 0 : index
    %191 = vector.load %arg11[%c5_116, %c0_117, %c0_118] : memref<9x16x32xf32, #tpu.memory_space<vmem>>, vector<1x16x32xf32>
    %192 = vector.shape_cast %191 : vector<1x16x32xf32> to vector<16x32xf32>
    %193 = vector.extract_strided_slice %192 {offsets = [0, 16], sizes = [16, 16], strides = [1, 1]} : vector<16x32xf32> to vector<16x16xf32>
    %194 = tpu.concatenate %190, %193 in 1 : vector<16x16xf32>, vector<16x16xf32> -> vector<16x32xf32>
    %cst_119 = arith.constant dense<0.000000e+00> : vector<16x16xf32>
    %195 = tpu.matmul %194, %88, %cst_119 {dimension_numbers = #tpu.dot_dimension_numbers<[1], [0], [0], [1], [0, 0, 1, 1], [], []>} : vector<16x32xf32>, vector<32x16xf32>, vector<16x16xf32> -> vector<16x16xf32>
    %196 = vector.broadcast %89 : vector<1x16xf32> to vector<16x16xf32>
    %197 = arith.addf %195, %196 : vector<16x16xf32>
    %cst_120 = arith.constant dense<0.000000e+00> : vector<16xf32>
    %198 = vector.multi_reduction <add>, %197, %cst_120 [1] : vector<16x16xf32> to vector<16xf32>
    %199 = vector.shape_cast %198 : vector<16xf32> to vector<16x1xf32>
    %cst_121 = arith.constant 1.600000e+01 : f32
    %200 = vector.broadcast %cst_121 : f32 to vector<16x1xf32>
    %201 = arith.divf %199, %200 : vector<16x1xf32>
    %202 = vector.broadcast %201 : vector<16x1xf32> to vector<16x16xf32>
    %203 = arith.subf %197, %202 : vector<16x16xf32>
    %204 = arith.mulf %203, %203 : vector<16x16xf32>
    %cst_122 = arith.constant dense<0.000000e+00> : vector<16xf32>
    %205 = vector.multi_reduction <add>, %204, %cst_122 [1] : vector<16x16xf32> to vector<16xf32>
    %206 = vector.shape_cast %205 : vector<16xf32> to vector<16x1xf32>
    %cst_123 = arith.constant 1.600000e+01 : f32
    %207 = vector.broadcast %cst_123 : f32 to vector<16x1xf32>
    %208 = arith.divf %206, %207 : vector<16x1xf32>
    %cst_124 = arith.constant 9.99999974E-6 : f32
    %209 = vector.broadcast %cst_124 : f32 to vector<16x1xf32>
    %210 = arith.addf %208, %209 : vector<16x1xf32>
    %211 = math.rsqrt %210 : vector<16x1xf32>
    %212 = vector.broadcast %211 : vector<16x1xf32> to vector<16x16xf32>
    %213 = arith.mulf %203, %212 : vector<16x16xf32>
    %214 = vector.broadcast %90 : vector<1x16xf32> to vector<16x16xf32>
    %215 = arith.mulf %213, %214 : vector<16x16xf32>
    %216 = vector.broadcast %91 : vector<1x16xf32> to vector<16x16xf32>
    %217 = arith.addf %215, %216 : vector<16x16xf32>
    %c0_125 = arith.constant 0 : index
    %c48_126 = arith.constant 48 : index
    %218 = vector.load %arg1[%c0_125, %c48_126] : memref<16x144xf32, #tpu.memory_space<vmem>>, vector<16x16xf32>
    %219 = arith.addf %217, %218 : vector<16x16xf32>
    %c4_127 = arith.constant 4 : index
    %c0_128 = arith.constant 0 : index
    %c0_129 = arith.constant 0 : index
    %220 = vector.load %arg11[%c4_127, %c0_128, %c0_129] : memref<9x16x32xf32, #tpu.memory_space<vmem>>, vector<1x16x32xf32>
    %221 = vector.shape_cast %220 : vector<1x16x32xf32> to vector<16x32xf32>
    %222 = vector.extract_strided_slice %221 {offsets = [0, 0], sizes = [16, 16], strides = [1, 1]} : vector<16x32xf32> to vector<16x16xf32>
    %c4_130 = arith.constant 4 : index
    %c0_131 = arith.constant 0 : index
    %c0_132 = arith.constant 0 : index
    %223 = vector.load %arg11[%c4_130, %c0_131, %c0_132] : memref<9x16x32xf32, #tpu.memory_space<vmem>>, vector<1x16x32xf32>
    %224 = vector.shape_cast %223 : vector<1x16x32xf32> to vector<16x32xf32>
    %225 = vector.extract_strided_slice %224 {offsets = [0, 16], sizes = [16, 16], strides = [1, 1]} : vector<16x32xf32> to vector<16x16xf32>
    %226 = tpu.concatenate %222, %225 in 1 : vector<16x16xf32>, vector<16x16xf32> -> vector<16x32xf32>
    %cst_133 = arith.constant dense<0.000000e+00> : vector<16x16xf32>
    %227 = tpu.matmul %226, %88, %cst_133 {dimension_numbers = #tpu.dot_dimension_numbers<[1], [0], [0], [1], [0, 0, 1, 1], [], []>} : vector<16x32xf32>, vector<32x16xf32>, vector<16x16xf32> -> vector<16x16xf32>
    %228 = vector.broadcast %89 : vector<1x16xf32> to vector<16x16xf32>
    %229 = arith.addf %227, %228 : vector<16x16xf32>
    %cst_134 = arith.constant dense<0.000000e+00> : vector<16xf32>
    %230 = vector.multi_reduction <add>, %229, %cst_134 [1] : vector<16x16xf32> to vector<16xf32>
    %231 = vector.shape_cast %230 : vector<16xf32> to vector<16x1xf32>
    %cst_135 = arith.constant 1.600000e+01 : f32
    %232 = vector.broadcast %cst_135 : f32 to vector<16x1xf32>
    %233 = arith.divf %231, %232 : vector<16x1xf32>
    %234 = vector.broadcast %233 : vector<16x1xf32> to vector<16x16xf32>
    %235 = arith.subf %229, %234 : vector<16x16xf32>
    %236 = arith.mulf %235, %235 : vector<16x16xf32>
    %cst_136 = arith.constant dense<0.000000e+00> : vector<16xf32>
    %237 = vector.multi_reduction <add>, %236, %cst_136 [1] : vector<16x16xf32> to vector<16xf32>
    %238 = vector.shape_cast %237 : vector<16xf32> to vector<16x1xf32>
    %cst_137 = arith.constant 1.600000e+01 : f32
    %239 = vector.broadcast %cst_137 : f32 to vector<16x1xf32>
    %240 = arith.divf %238, %239 : vector<16x1xf32>
    %cst_138 = arith.constant 9.99999974E-6 : f32
    %241 = vector.broadcast %cst_138 : f32 to vector<16x1xf32>
    %242 = arith.addf %240, %241 : vector<16x1xf32>
    %243 = math.rsqrt %242 : vector<16x1xf32>
    %244 = vector.broadcast %243 : vector<16x1xf32> to vector<16x16xf32>
    %245 = arith.mulf %235, %244 : vector<16x16xf32>
    %246 = vector.broadcast %90 : vector<1x16xf32> to vector<16x16xf32>
    %247 = arith.mulf %245, %246 : vector<16x16xf32>
    %248 = vector.broadcast %91 : vector<1x16xf32> to vector<16x16xf32>
    %249 = arith.addf %247, %248 : vector<16x16xf32>
    %c0_139 = arith.constant 0 : index
    %c64_140 = arith.constant 64 : index
    %250 = vector.load %arg1[%c0_139, %c64_140] : memref<16x144xf32, #tpu.memory_space<vmem>>, vector<16x16xf32>
    %251 = arith.addf %249, %250 : vector<16x16xf32>
    %c5_141 = arith.constant 5 : index
    %c0_142 = arith.constant 0 : index
    %c0_143 = arith.constant 0 : index
    %252 = vector.load %arg11[%c5_141, %c0_142, %c0_143] : memref<9x16x32xf32, #tpu.memory_space<vmem>>, vector<1x16x32xf32>
    %253 = vector.shape_cast %252 : vector<1x16x32xf32> to vector<16x32xf32>
    %254 = vector.extract_strided_slice %253 {offsets = [0, 0], sizes = [16, 16], strides = [1, 1]} : vector<16x32xf32> to vector<16x16xf32>
    %c3_144 = arith.constant 3 : index
    %c0_145 = arith.constant 0 : index
    %c0_146 = arith.constant 0 : index
    %255 = vector.load %arg11[%c3_144, %c0_145, %c0_146] : memref<9x16x32xf32, #tpu.memory_space<vmem>>, vector<1x16x32xf32>
    %256 = vector.shape_cast %255 : vector<1x16x32xf32> to vector<16x32xf32>
    %257 = vector.extract_strided_slice %256 {offsets = [0, 16], sizes = [16, 16], strides = [1, 1]} : vector<16x32xf32> to vector<16x16xf32>
    %258 = tpu.concatenate %254, %257 in 1 : vector<16x16xf32>, vector<16x16xf32> -> vector<16x32xf32>
    %cst_147 = arith.constant dense<0.000000e+00> : vector<16x16xf32>
    %259 = tpu.matmul %258, %88, %cst_147 {dimension_numbers = #tpu.dot_dimension_numbers<[1], [0], [0], [1], [0, 0, 1, 1], [], []>} : vector<16x32xf32>, vector<32x16xf32>, vector<16x16xf32> -> vector<16x16xf32>
    %260 = vector.broadcast %89 : vector<1x16xf32> to vector<16x16xf32>
    %261 = arith.addf %259, %260 : vector<16x16xf32>
    %cst_148 = arith.constant dense<0.000000e+00> : vector<16xf32>
    %262 = vector.multi_reduction <add>, %261, %cst_148 [1] : vector<16x16xf32> to vector<16xf32>
    %263 = vector.shape_cast %262 : vector<16xf32> to vector<16x1xf32>
    %cst_149 = arith.constant 1.600000e+01 : f32
    %264 = vector.broadcast %cst_149 : f32 to vector<16x1xf32>
    %265 = arith.divf %263, %264 : vector<16x1xf32>
    %266 = vector.broadcast %265 : vector<16x1xf32> to vector<16x16xf32>
    %267 = arith.subf %261, %266 : vector<16x16xf32>
    %268 = arith.mulf %267, %267 : vector<16x16xf32>
    %cst_150 = arith.constant dense<0.000000e+00> : vector<16xf32>
    %269 = vector.multi_reduction <add>, %268, %cst_150 [1] : vector<16x16xf32> to vector<16xf32>
    %270 = vector.shape_cast %269 : vector<16xf32> to vector<16x1xf32>
    %cst_151 = arith.constant 1.600000e+01 : f32
    %271 = vector.broadcast %cst_151 : f32 to vector<16x1xf32>
    %272 = arith.divf %270, %271 : vector<16x1xf32>
    %cst_152 = arith.constant 9.99999974E-6 : f32
    %273 = vector.broadcast %cst_152 : f32 to vector<16x1xf32>
    %274 = arith.addf %272, %273 : vector<16x1xf32>
    %275 = math.rsqrt %274 : vector<16x1xf32>
    %276 = vector.broadcast %275 : vector<16x1xf32> to vector<16x16xf32>
    %277 = arith.mulf %267, %276 : vector<16x16xf32>
    %278 = vector.broadcast %90 : vector<1x16xf32> to vector<16x16xf32>
    %279 = arith.mulf %277, %278 : vector<16x16xf32>
    %280 = vector.broadcast %91 : vector<1x16xf32> to vector<16x16xf32>
    %281 = arith.addf %279, %280 : vector<16x16xf32>
    %c0_153 = arith.constant 0 : index
    %c80_154 = arith.constant 80 : index
    %282 = vector.load %arg1[%c0_153, %c80_154] : memref<16x144xf32, #tpu.memory_space<vmem>>, vector<16x16xf32>
    %283 = arith.addf %281, %282 : vector<16x16xf32>
    %c6_155 = arith.constant 6 : index
    %c0_156 = arith.constant 0 : index
    %c0_157 = arith.constant 0 : index
    %284 = vector.load %arg11[%c6_155, %c0_156, %c0_157] : memref<9x16x32xf32, #tpu.memory_space<vmem>>, vector<1x16x32xf32>
    %285 = vector.shape_cast %284 : vector<1x16x32xf32> to vector<16x32xf32>
    %286 = vector.extract_strided_slice %285 {offsets = [0, 0], sizes = [16, 16], strides = [1, 1]} : vector<16x32xf32> to vector<16x16xf32>
    %c2_158 = arith.constant 2 : index
    %c0_159 = arith.constant 0 : index
    %c0_160 = arith.constant 0 : index
    %287 = vector.load %arg11[%c2_158, %c0_159, %c0_160] : memref<9x16x32xf32, #tpu.memory_space<vmem>>, vector<1x16x32xf32>
    %288 = vector.shape_cast %287 : vector<1x16x32xf32> to vector<16x32xf32>
    %289 = vector.extract_strided_slice %288 {offsets = [0, 16], sizes = [16, 16], strides = [1, 1]} : vector<16x32xf32> to vector<16x16xf32>
    %290 = tpu.concatenate %286, %289 in 1 : vector<16x16xf32>, vector<16x16xf32> -> vector<16x32xf32>
    %cst_161 = arith.constant dense<0.000000e+00> : vector<16x16xf32>
    %291 = tpu.matmul %290, %88, %cst_161 {dimension_numbers = #tpu.dot_dimension_numbers<[1], [0], [0], [1], [0, 0, 1, 1], [], []>} : vector<16x32xf32>, vector<32x16xf32>, vector<16x16xf32> -> vector<16x16xf32>
    %292 = vector.broadcast %89 : vector<1x16xf32> to vector<16x16xf32>
    %293 = arith.addf %291, %292 : vector<16x16xf32>
    %cst_162 = arith.constant dense<0.000000e+00> : vector<16xf32>
    %294 = vector.multi_reduction <add>, %293, %cst_162 [1] : vector<16x16xf32> to vector<16xf32>
    %295 = vector.shape_cast %294 : vector<16xf32> to vector<16x1xf32>
    %cst_163 = arith.constant 1.600000e+01 : f32
    %296 = vector.broadcast %cst_163 : f32 to vector<16x1xf32>
    %297 = arith.divf %295, %296 : vector<16x1xf32>
    %298 = vector.broadcast %297 : vector<16x1xf32> to vector<16x16xf32>
    %299 = arith.subf %293, %298 : vector<16x16xf32>
    %300 = arith.mulf %299, %299 : vector<16x16xf32>
    %cst_164 = arith.constant dense<0.000000e+00> : vector<16xf32>
    %301 = vector.multi_reduction <add>, %300, %cst_164 [1] : vector<16x16xf32> to vector<16xf32>
    %302 = vector.shape_cast %301 : vector<16xf32> to vector<16x1xf32>
    %cst_165 = arith.constant 1.600000e+01 : f32
    %303 = vector.broadcast %cst_165 : f32 to vector<16x1xf32>
    %304 = arith.divf %302, %303 : vector<16x1xf32>
    %cst_166 = arith.constant 9.99999974E-6 : f32
    %305 = vector.broadcast %cst_166 : f32 to vector<16x1xf32>
    %306 = arith.addf %304, %305 : vector<16x1xf32>
    %307 = math.rsqrt %306 : vector<16x1xf32>
    %308 = vector.broadcast %307 : vector<16x1xf32> to vector<16x16xf32>
    %309 = arith.mulf %299, %308 : vector<16x16xf32>
    %310 = vector.broadcast %90 : vector<1x16xf32> to vector<16x16xf32>
    %311 = arith.mulf %309, %310 : vector<16x16xf32>
    %312 = vector.broadcast %91 : vector<1x16xf32> to vector<16x16xf32>
    %313 = arith.addf %311, %312 : vector<16x16xf32>
    %c0_167 = arith.constant 0 : index
    %c96_168 = arith.constant 96 : index
    %314 = vector.load %arg1[%c0_167, %c96_168] : memref<16x144xf32, #tpu.memory_space<vmem>>, vector<16x16xf32>
    %315 = arith.addf %313, %314 : vector<16x16xf32>
    %c7_169 = arith.constant 7 : index
    %c0_170 = arith.constant 0 : index
    %c0_171 = arith.constant 0 : index
    %316 = vector.load %arg11[%c7_169, %c0_170, %c0_171] : memref<9x16x32xf32, #tpu.memory_space<vmem>>, vector<1x16x32xf32>
    %317 = vector.shape_cast %316 : vector<1x16x32xf32> to vector<16x32xf32>
    %318 = vector.extract_strided_slice %317 {offsets = [0, 0], sizes = [16, 16], strides = [1, 1]} : vector<16x32xf32> to vector<16x16xf32>
    %c1_172 = arith.constant 1 : index
    %c0_173 = arith.constant 0 : index
    %c0_174 = arith.constant 0 : index
    %319 = vector.load %arg11[%c1_172, %c0_173, %c0_174] : memref<9x16x32xf32, #tpu.memory_space<vmem>>, vector<1x16x32xf32>
    %320 = vector.shape_cast %319 : vector<1x16x32xf32> to vector<16x32xf32>
    %321 = vector.extract_strided_slice %320 {offsets = [0, 16], sizes = [16, 16], strides = [1, 1]} : vector<16x32xf32> to vector<16x16xf32>
    %322 = tpu.concatenate %318, %321 in 1 : vector<16x16xf32>, vector<16x16xf32> -> vector<16x32xf32>
    %cst_175 = arith.constant dense<0.000000e+00> : vector<16x16xf32>
    %323 = tpu.matmul %322, %88, %cst_175 {dimension_numbers = #tpu.dot_dimension_numbers<[1], [0], [0], [1], [0, 0, 1, 1], [], []>} : vector<16x32xf32>, vector<32x16xf32>, vector<16x16xf32> -> vector<16x16xf32>
    %324 = vector.broadcast %89 : vector<1x16xf32> to vector<16x16xf32>
    %325 = arith.addf %323, %324 : vector<16x16xf32>
    %cst_176 = arith.constant dense<0.000000e+00> : vector<16xf32>
    %326 = vector.multi_reduction <add>, %325, %cst_176 [1] : vector<16x16xf32> to vector<16xf32>
    %327 = vector.shape_cast %326 : vector<16xf32> to vector<16x1xf32>
    %cst_177 = arith.constant 1.600000e+01 : f32
    %328 = vector.broadcast %cst_177 : f32 to vector<16x1xf32>
    %329 = arith.divf %327, %328 : vector<16x1xf32>
    %330 = vector.broadcast %329 : vector<16x1xf32> to vector<16x16xf32>
    %331 = arith.subf %325, %330 : vector<16x16xf32>
    %332 = arith.mulf %331, %331 : vector<16x16xf32>
    %cst_178 = arith.constant dense<0.000000e+00> : vector<16xf32>
    %333 = vector.multi_reduction <add>, %332, %cst_178 [1] : vector<16x16xf32> to vector<16xf32>
    %334 = vector.shape_cast %333 : vector<16xf32> to vector<16x1xf32>
    %cst_179 = arith.constant 1.600000e+01 : f32
    %335 = vector.broadcast %cst_179 : f32 to vector<16x1xf32>
    %336 = arith.divf %334, %335 : vector<16x1xf32>
    %cst_180 = arith.constant 9.99999974E-6 : f32
    %337 = vector.broadcast %cst_180 : f32 to vector<16x1xf32>
    %338 = arith.addf %336, %337 : vector<16x1xf32>
    %339 = math.rsqrt %338 : vector<16x1xf32>
    %340 = vector.broadcast %339 : vector<16x1xf32> to vector<16x16xf32>
    %341 = arith.mulf %331, %340 : vector<16x16xf32>
    %342 = vector.broadcast %90 : vector<1x16xf32> to vector<16x16xf32>
    %343 = arith.mulf %341, %342 : vector<16x16xf32>
    %344 = vector.broadcast %91 : vector<1x16xf32> to vector<16x16xf32>
    %345 = arith.addf %343, %344 : vector<16x16xf32>
    %c0_181 = arith.constant 0 : index
    %c112_182 = arith.constant 112 : index
    %346 = vector.load %arg1[%c0_181, %c112_182] : memref<16x144xf32, #tpu.memory_space<vmem>>, vector<16x16xf32>
    %347 = arith.addf %345, %346 : vector<16x16xf32>
    %c8_183 = arith.constant 8 : index
    %c0_184 = arith.constant 0 : index
    %c0_185 = arith.constant 0 : index
    %348 = vector.load %arg11[%c8_183, %c0_184, %c0_185] : memref<9x16x32xf32, #tpu.memory_space<vmem>>, vector<1x16x32xf32>
    %349 = vector.shape_cast %348 : vector<1x16x32xf32> to vector<16x32xf32>
    %350 = vector.extract_strided_slice %349 {offsets = [0, 0], sizes = [16, 16], strides = [1, 1]} : vector<16x32xf32> to vector<16x16xf32>
    %c0_186 = arith.constant 0 : index
    %c0_187 = arith.constant 0 : index
    %c0_188 = arith.constant 0 : index
    %351 = vector.load %arg11[%c0_186, %c0_187, %c0_188] : memref<9x16x32xf32, #tpu.memory_space<vmem>>, vector<1x16x32xf32>
    %352 = vector.shape_cast %351 : vector<1x16x32xf32> to vector<16x32xf32>
    %353 = vector.extract_strided_slice %352 {offsets = [0, 16], sizes = [16, 16], strides = [1, 1]} : vector<16x32xf32> to vector<16x16xf32>
    %354 = tpu.concatenate %350, %353 in 1 : vector<16x16xf32>, vector<16x16xf32> -> vector<16x32xf32>
    %cst_189 = arith.constant dense<0.000000e+00> : vector<16x16xf32>
    %355 = tpu.matmul %354, %88, %cst_189 {dimension_numbers = #tpu.dot_dimension_numbers<[1], [0], [0], [1], [0, 0, 1, 1], [], []>} : vector<16x32xf32>, vector<32x16xf32>, vector<16x16xf32> -> vector<16x16xf32>
    %356 = vector.broadcast %89 : vector<1x16xf32> to vector<16x16xf32>
    %357 = arith.addf %355, %356 : vector<16x16xf32>
    %cst_190 = arith.constant dense<0.000000e+00> : vector<16xf32>
    %358 = vector.multi_reduction <add>, %357, %cst_190 [1] : vector<16x16xf32> to vector<16xf32>
    %359 = vector.shape_cast %358 : vector<16xf32> to vector<16x1xf32>
    %cst_191 = arith.constant 1.600000e+01 : f32
    %360 = vector.broadcast %cst_191 : f32 to vector<16x1xf32>
    %361 = arith.divf %359, %360 : vector<16x1xf32>
    %362 = vector.broadcast %361 : vector<16x1xf32> to vector<16x16xf32>
    %363 = arith.subf %357, %362 : vector<16x16xf32>
    %364 = arith.mulf %363, %363 : vector<16x16xf32>
    %cst_192 = arith.constant dense<0.000000e+00> : vector<16xf32>
    %365 = vector.multi_reduction <add>, %364, %cst_192 [1] : vector<16x16xf32> to vector<16xf32>
    %366 = vector.shape_cast %365 : vector<16xf32> to vector<16x1xf32>
    %cst_193 = arith.constant 1.600000e+01 : f32
    %367 = vector.broadcast %cst_193 : f32 to vector<16x1xf32>
    %368 = arith.divf %366, %367 : vector<16x1xf32>
    %cst_194 = arith.constant 9.99999974E-6 : f32
    %369 = vector.broadcast %cst_194 : f32 to vector<16x1xf32>
    %370 = arith.addf %368, %369 : vector<16x1xf32>
    %371 = math.rsqrt %370 : vector<16x1xf32>
    %372 = vector.broadcast %371 : vector<16x1xf32> to vector<16x16xf32>
    %373 = arith.mulf %363, %372 : vector<16x16xf32>
    %374 = vector.broadcast %90 : vector<1x16xf32> to vector<16x16xf32>
    %375 = arith.mulf %373, %374 : vector<16x16xf32>
    %376 = vector.broadcast %91 : vector<1x16xf32> to vector<16x16xf32>
    %377 = arith.addf %375, %376 : vector<16x16xf32>
    %c0_195 = arith.constant 0 : index
    %c128_196 = arith.constant 128 : index
    %378 = vector.load %arg1[%c0_195, %c128_196] : memref<16x144xf32, #tpu.memory_space<vmem>>, vector<16x16xf32>
    %379 = arith.addf %377, %378 : vector<16x16xf32>
    %380 = tpu.concatenate %123, %155, %187, %219, %251, %283, %315, %347, %379 in 1 : vector<16x16xf32>, vector<16x16xf32>, vector<16x16xf32>, vector<16x16xf32>, vector<16x16xf32>, vector<16x16xf32>, vector<16x16xf32>, vector<16x16xf32>, vector<16x16xf32> -> vector<16x144xf32>
    %c0_197 = arith.constant 0 : index
    %c0_198 = arith.constant 0 : index
    %381 = vector.load %arg9[%c0_197, %c0_198] : memref<16x144xf32, #tpu.memory_space<vmem>>, vector<16x144xf32>
    tpu.vector_store %arg9[%c0_197, %c0_198], %380 {strides = array<i32>} : memref<16x144xf32, #tpu.memory_space<vmem>>, vector<16x144xf32>,
    return
  }
  func.func @transform_0(%arg0: i32) -> (i32, i32) {
    %c0_i32 = arith.constant 0 : i32
    %c0_i32_0 = arith.constant 0 : i32
    return %arg0, %c0_i32 : i32, i32
  }
  func.func @transform_1(%arg0: i32) -> (i32, i32) {
    %c0_i32 = arith.constant 0 : i32
    %c0_i32_0 = arith.constant 0 : i32
    %c0_i32_1 = arith.constant 0 : i32
    return %c0_i32, %c0_i32_0 : i32, i32
  }
  func.func @transform_2(%arg0: i32) -> (i32, i32) {
    %c0_i32 = arith.constant 0 : i32
    %c0_i32_0 = arith.constant 0 : i32
    %c0_i32_1 = arith.constant 0 : i32
    return %c0_i32, %c0_i32_0 : i32, i32
  }
  func.func @transform_3(%arg0: i32) -> (i32, i32) {
    %c0_i32 = arith.constant 0 : i32
    %c0_i32_0 = arith.constant 0 : i32
    %c0_i32_1 = arith.constant 0 : i32
    return %c0_i32, %c0_i32_0 : i32, i32
  }
  func.func @transform_4(%arg0: i32) -> (i32, i32) {
    %c0_i32 = arith.constant 0 : i32
    %c0_i32_0 = arith.constant 0 : i32
    %c0_i32_1 = arith.constant 0 : i32
    return %c0_i32, %c0_i32_0 : i32, i32
  }
  func.func @transform_5(%arg0: i32) -> (i32, i32) {
    %c0_i32 = arith.constant 0 : i32
    %c0_i32_0 = arith.constant 0 : i32
    %c0_i32_1 = arith.constant 0 : i32
    return %c0_i32, %c0_i32_0 : i32, i32
  }
  func.func @transform_6(%arg0: i32) -> (i32, i32) {
    %c0_i32 = arith.constant 0 : i32
    %c0_i32_0 = arith.constant 0 : i32
    %c0_i32_1 = arith.constant 0 : i32
    return %c0_i32, %c0_i32_0 : i32, i32
  }
  func.func @transform_7(%arg0: i32) -> (i32, i32) {
    %c0_i32 = arith.constant 0 : i32
    %c0_i32_0 = arith.constant 0 : i32
    %c0_i32_1 = arith.constant 0 : i32
    return %c0_i32, %c0_i32_0 : i32, i32
  }
  func.func @transform_8(%arg0: i32) -> (i32, i32) {
    %c0_i32 = arith.constant 0 : i32
    %c0_i32_0 = arith.constant 0 : i32
    return %arg0, %c0_i32 : i32, i32
  }
}

module attributes {stable_mosaic.version = 11 : i64} {
  func.func @_matmul_bias_kernel(%arg0: i32, %arg1: memref<72x16xf32, #tpu.memory_space<vmem>>, %arg2: memref<16x32xf32, #tpu.memory_space<vmem>>, %arg3: memref<1x32xf32, #tpu.memory_space<vmem>>, %arg4: memref<72x32xf32, #tpu.memory_space<vmem>>) attributes {dimension_semantics = [#tpu.dimension_semantics<parallel>], iteration_bounds = array<i64: 2>, scalar_prefetch = 0 : i64, scratch_operands = 0 : i64, tpu.core_type = #tpu.core_type<tc>, window_params = [{transform_indices = @transform_0, window_bounds = array<i64: 72, 16>}, {pipeline_mode = #tpu.pipeline_mode<synchronous>, transform_indices = @transform_1, window_bounds = array<i64: 16, 32>}, {pipeline_mode = #tpu.pipeline_mode<synchronous>, transform_indices = @transform_2, window_bounds = array<i64: 1, 32>}, {transform_indices = @transform_3, window_bounds = array<i64: 72, 32>}]} {
    %c0 = arith.constant 0 : index
    %c0_0 = arith.constant 0 : index
    %0 = vector.load %arg1[%c0, %c0_0] : memref<72x16xf32, #tpu.memory_space<vmem>>, vector<72x16xf32>
    %cst = arith.constant 0.000000e+00 : f32
    %1 = vector.broadcast %cst : f32 to vector<72x16xf32>
    %2 = arith.maximumf %0, %1 : vector<72x16xf32>
    %c0_1 = arith.constant 0 : index
    %c0_2 = arith.constant 0 : index
    %3 = vector.load %arg2[%c0_1, %c0_2] : memref<16x32xf32, #tpu.memory_space<vmem>>, vector<16x32xf32>
    %cst_3 = arith.constant dense<0.000000e+00> : vector<72x32xf32>
    %4 = tpu.matmul %2, %3, %cst_3 {dimension_numbers = #tpu.dot_dimension_numbers<[1], [0], [0], [1], [0, 0, 1, 1], [], []>} : vector<72x16xf32>, vector<16x32xf32>, vector<72x32xf32> -> vector<72x32xf32>
    %c0_4 = arith.constant 0 : index
    %c0_5 = arith.constant 0 : index
    %5 = vector.load %arg3[%c0_4, %c0_5] : memref<1x32xf32, #tpu.memory_space<vmem>>, vector<1x32xf32>
    %6 = vector.broadcast %5 : vector<1x32xf32> to vector<72x32xf32>
    %7 = arith.addf %4, %6 : vector<72x32xf32>
    %c0_6 = arith.constant 0 : index
    %c0_7 = arith.constant 0 : index
    %8 = vector.load %arg4[%c0_6, %c0_7] : memref<72x32xf32, #tpu.memory_space<vmem>>, vector<72x32xf32>
    tpu.vector_store %arg4[%c0_6, %c0_7], %7 {strides = array<i32>} : memref<72x32xf32, #tpu.memory_space<vmem>>, vector<72x32xf32>,
    return
  }
  func.func @transform_0(%arg0: i32) -> (i32, i32) {
    %c0_i32 = arith.constant 0 : i32
    %c0_i32_0 = arith.constant 0 : i32
    return %arg0, %c0_i32 : i32, i32
  }
  func.func @transform_1(%arg0: i32) -> (i32, i32) {
    %c0_i32 = arith.constant 0 : i32
    %c0_i32_0 = arith.constant 0 : i32
    %c0_i32_1 = arith.constant 0 : i32
    return %c0_i32, %c0_i32_0 : i32, i32
  }
  func.func @transform_2(%arg0: i32) -> (i32, i32) {
    %c0_i32 = arith.constant 0 : i32
    %c0_i32_0 = arith.constant 0 : i32
    %c0_i32_1 = arith.constant 0 : i32
    return %c0_i32, %c0_i32_0 : i32, i32
  }
  func.func @transform_3(%arg0: i32) -> (i32, i32) {
    %c0_i32 = arith.constant 0 : i32
    %c0_i32_0 = arith.constant 0 : i32
    return %arg0, %c0_i32 : i32, i32
  }
}

module attributes {stable_mosaic.version = 11 : i64} {
  func.func @_gate_dec_kernel(%arg0: i32, %arg1: memref<64x16xf32, #tpu.memory_space<vmem>>, %arg2: memref<64x16xf32, #tpu.memory_space<vmem>>, %arg3: memref<16x32xf32, #tpu.memory_space<vmem>>, %arg4: memref<1x32xf32, #tpu.memory_space<vmem>>, %arg5: memref<16x4xf32, #tpu.memory_space<vmem>>, %arg6: memref<64x4xf32, #tpu.memory_space<vmem>>) attributes {dimension_semantics = [#tpu.dimension_semantics<parallel>], iteration_bounds = array<i64: 2>, scalar_prefetch = 0 : i64, scratch_operands = 0 : i64, tpu.core_type = #tpu.core_type<tc>, window_params = [{transform_indices = @transform_0, window_bounds = array<i64: 64, 16>}, {transform_indices = @transform_1, window_bounds = array<i64: 64, 16>}, {pipeline_mode = #tpu.pipeline_mode<synchronous>, transform_indices = @transform_2, window_bounds = array<i64: 16, 32>}, {pipeline_mode = #tpu.pipeline_mode<synchronous>, transform_indices = @transform_3, window_bounds = array<i64: 1, 32>}, {pipeline_mode = #tpu.pipeline_mode<synchronous>, transform_indices = @transform_4, window_bounds = array<i64: 16, 4>}, {transform_indices = @transform_5, window_bounds = array<i64: 64, 4>}]} {
    %c0 = arith.constant 0 : index
    %c0_0 = arith.constant 0 : index
    %0 = vector.load %arg1[%c0, %c0_0] : memref<64x16xf32, #tpu.memory_space<vmem>>, vector<64x16xf32>
    %c0_1 = arith.constant 0 : index
    %c0_2 = arith.constant 0 : index
    %1 = vector.load %arg3[%c0_1, %c0_2] : memref<16x32xf32, #tpu.memory_space<vmem>>, vector<16x32xf32>
    %cst = arith.constant dense<0.000000e+00> : vector<64x32xf32>
    %2 = tpu.matmul %0, %1, %cst {dimension_numbers = #tpu.dot_dimension_numbers<[1], [0], [0], [1], [0, 0, 1, 1], [], []>} : vector<64x16xf32>, vector<16x32xf32>, vector<64x32xf32> -> vector<64x32xf32>
    %c0_3 = arith.constant 0 : index
    %c0_4 = arith.constant 0 : index
    %3 = vector.load %arg4[%c0_3, %c0_4] : memref<1x32xf32, #tpu.memory_space<vmem>>, vector<1x32xf32>
    %4 = vector.broadcast %3 : vector<1x32xf32> to vector<64x32xf32>
    %5 = arith.addf %2, %4 : vector<64x32xf32>
    %6 = arith.negf %5 : vector<64x32xf32>
    %7 = math.exp %6 : vector<64x32xf32>
    %cst_5 = arith.constant 1.000000e+00 : f32
    %8 = vector.broadcast %cst_5 : f32 to vector<64x32xf32>
    %9 = arith.addf %8, %7 : vector<64x32xf32>
    %10 = arith.divf %8, %9 : vector<64x32xf32>
    %11 = vector.extract_strided_slice %5 {offsets = [0, 0], sizes = [64, 16], strides = [1, 1]} : vector<64x32xf32> to vector<64x16xf32>
    %12 = vector.extract_strided_slice %10 {offsets = [0, 16], sizes = [64, 16], strides = [1, 1]} : vector<64x32xf32> to vector<64x16xf32>
    %13 = arith.mulf %11, %12 : vector<64x16xf32>
    %cst_6 = arith.constant 0.000000e+00 : f32
    %14 = vector.broadcast %cst_6 : f32 to vector<64x16xf32>
    %15 = arith.maximumf %13, %14 : vector<64x16xf32>
    %c0_7 = arith.constant 0 : index
    %c0_8 = arith.constant 0 : index
    %16 = vector.load %arg2[%c0_7, %c0_8] : memref<64x16xf32, #tpu.memory_space<vmem>>, vector<64x16xf32>
    %17 = arith.mulf %15, %16 : vector<64x16xf32>
    %c0_9 = arith.constant 0 : index
    %c0_10 = arith.constant 0 : index
    %18 = vector.load %arg5[%c0_9, %c0_10] : memref<16x4xf32, #tpu.memory_space<vmem>>, vector<16x4xf32>
    %cst_11 = arith.constant dense<0.000000e+00> : vector<64x4xf32>
    %19 = tpu.matmul %17, %18, %cst_11 {dimension_numbers = #tpu.dot_dimension_numbers<[1], [0], [0], [1], [0, 0, 1, 1], [], []>} : vector<64x16xf32>, vector<16x4xf32>, vector<64x4xf32> -> vector<64x4xf32>
    %c0_12 = arith.constant 0 : index
    %c0_13 = arith.constant 0 : index
    %20 = vector.load %arg6[%c0_12, %c0_13] : memref<64x4xf32, #tpu.memory_space<vmem>>, vector<64x4xf32>
    tpu.vector_store %arg6[%c0_12, %c0_13], %19 {strides = array<i32>} : memref<64x4xf32, #tpu.memory_space<vmem>>, vector<64x4xf32>,
    return
  }
  func.func @transform_0(%arg0: i32) -> (i32, i32) {
    %c0_i32 = arith.constant 0 : i32
    %c0_i32_0 = arith.constant 0 : i32
    return %arg0, %c0_i32 : i32, i32
  }
  func.func @transform_1(%arg0: i32) -> (i32, i32) {
    %c0_i32 = arith.constant 0 : i32
    %c0_i32_0 = arith.constant 0 : i32
    return %arg0, %c0_i32 : i32, i32
  }
  func.func @transform_2(%arg0: i32) -> (i32, i32) {
    %c0_i32 = arith.constant 0 : i32
    %c0_i32_0 = arith.constant 0 : i32
    %c0_i32_1 = arith.constant 0 : i32
    return %c0_i32, %c0_i32_0 : i32, i32
  }
  func.func @transform_3(%arg0: i32) -> (i32, i32) {
    %c0_i32 = arith.constant 0 : i32
    %c0_i32_0 = arith.constant 0 : i32
    %c0_i32_1 = arith.constant 0 : i32
    return %c0_i32, %c0_i32_0 : i32, i32
  }
  func.func @transform_4(%arg0: i32) -> (i32, i32) {
    %c0_i32 = arith.constant 0 : i32
    %c0_i32_0 = arith.constant 0 : i32
    %c0_i32_1 = arith.constant 0 : i32
    return %c0_i32, %c0_i32_0 : i32, i32
  }
  func.func @transform_5(%arg0: i32) -> (i32, i32) {
    %c0_i32 = arith.constant 0 : i32
    %c0_i32_0 = arith.constant 0 : i32
    return %arg0, %c0_i32 : i32, i32
  }
}

</mosaic_0001>

<llo_original>
// kernel: dprnn_forward.7
$region0: #{dprnn_forward.7}
  #allocation0 [shape = 'u32[]', space=smem, size = 0x4, offset = 0x4, fixed_abs, tag = 'smem constant byte address 0x4 - core index']
  #allocation1 [shape = 'u32[144,128]{1,0:T(1,128)}', space=vmem, size = 0x12000, scoped, tag = 'internal scratch']
  %s0 = inlined_call_operand.vmem [shape: f32[64,4], index: 0, kind: input, shape index: {}]
  %s1 = inlined_call_operand.vmem [shape: f32[4,16], index: 1, kind: input, shape index: {}]
  %s2 = inlined_call_operand.vmem [shape: f32[1,16], index: 2, kind: input, shape index: {}]
  %s3 = inlined_call_operand.vmem [shape: f32[1,16], index: 3, kind: input, shape index: {}]
  %s4 = inlined_call_operand.vmem [shape: f32[1,16], index: 4, kind: input, shape index: {}]
  %s5 = inlined_call_operand.vmem [shape: f32[64,16], index: 5, kind: output, shape index: {0}]
  %s6 = inlined_call_operand.vmem [shape: f32[64,16], index: 6, kind: output, shape index: {1}]
  %7 = xla_tuple %s5, %s6
  %s8 = sld [smem:[#allocation0]]
  $region61: #{dprnn_forward.7} parent=0
    _
  %s10 = ssub.s32 1, %s8
  %s11 = scalar_select 0, %s10, %s8
  loop: start=0, step=1, limit=4
  $region2: #{dprnn_forward.7} parent=0 // loop_pre_header
    _
  $region3: #{dprnn_forward.7} parent=0 // loop_header
    %s13 = sphi 0, %s17
    %p14 = scmp.ge.s32.totalorder %s13, 4
    %s23 = sphi 0, %s25
    %s26 = sphi 0, %s23
    %s27 = sphi 0, %s26
    %s43 = sphi 0, %s27
    %s47 = sphi 0, %s47
    %s49 = sphi 0, %s47
    %s50 = sphi 0, %s49
    %s64 = sphi 0, %s50
    %s68 = sphi 0, %s68
    %s70 = sphi 0, %s68
    %s71 = sphi 0, %s70
    %s85 = sphi 0, %s71
    %s89 = sphi 0, %s89
    %s91 = sphi 0, %s89
    %s92 = sphi 0, %s91
    %s106 = sphi 0, %s92
    %s110 = sphi 0, %s110
    %s112 = sphi 0, %s110
    %s113 = sphi 0, %s112
    %s127 = sphi 0, %s113
    %s133 = sphi 0, %s135
    %s136 = sphi 0, %s133
    %s137 = sphi 0, %s136
    %s153 = sphi 0, %s137
    %s159 = sphi 0, %s161
    %s162 = sphi 0, %s159
    %s163 = sphi 0, %s162
    %s179 = sphi 0, %s163
  $region4: #{dprnn_forward.7} parent=0 // loop_header_branch
    %16 = sbr.rel (%p14) target = $region8
  $region5: #{dprnn_forward.7} parent=0 // loop_body
    %s18 = ssub.s32 %s13, 1
    %s19 = ssub.s32 %s13, 2
    %s20 = sadd.s32 %s13, 1
    %s21 = ssub.s32 %s13, %s20
    %p22 = scmp.eq.s32.totalorder %s21, 0
    %s24 = sadd.s32 %s23, 1
    %s25 = scalar_select %p22, %s23, %s24
    %p28 = pneg %p22
    %p29 = scmp.eq.s32.totalorder %s13, 1
    %p30 = por %p28, %p29
    %p31 = scmp.ne.s32.totalorder %s23, %s26
    %p32 = scmp.eq.s32.totalorder %s13, 0
    %p33 = por %p31, %p32
    %p34 = scmp.ne.s32.totalorder %s23, %s26
    %p35 = scmp.eq.s32.totalorder %s18, 1
    %p36 = por %p34, %p35
    %p37 = scmp.ne.s32.totalorder %s26, %s27
    %p38 = scmp.eq.s32.totalorder %s18, 0
    %p39 = por %p37, %p38
    %p40 = scmp.ne.s32.totalorder %s26, %s27
    %p41 = scmp.eq.s32.totalorder %s19, 1
    %p42 = por %p40, %p41
    %p44 = scmp.ne.s32.totalorder %s27, %s43
    %p45 = scmp.eq.s32.totalorder %s19, 0
    %p46 = por %p44, %p45
    %s48 = sadd.s32 %s47, 1
    %p51 = scmp.eq.s32.totalorder %s13, 1
    %p52 = scmp.ne.s32.totalorder %s47, %s49
    %p53 = scmp.eq.s32.totalorder %s13, 0
    %p54 = por %p52, %p53
    %p55 = scmp.ne.s32.totalorder %s47, %s49
    %p56 = scmp.eq.s32.totalorder %s18, 1
    %p57 = por %p55, %p56
    %p58 = scmp.ne.s32.totalorder %s49, %s50
    %p59 = scmp.eq.s32.totalorder %s18, 0
    %p60 = por %p58, %p59
    %p61 = scmp.ne.s32.totalorder %s49, %s50
    %p62 = scmp.eq.s32.totalorder %s19, 1
    %p63 = por %p61, %p62
    %p65 = scmp.ne.s32.totalorder %s50, %s64
    %p66 = scmp.eq.s32.totalorder %s19, 0
    %p67 = por %p65, %p66
    %s69 = sadd.s32 %s68, 1
    %p72 = scmp.eq.s32.totalorder %s13, 1
    %p73 = scmp.ne.s32.totalorder %s68, %s70
    %p74 = scmp.eq.s32.totalorder %s13, 0
    %p75 = por %p73, %p74
    %p76 = scmp.ne.s32.totalorder %s68, %s70
    %p77 = scmp.eq.s32.totalorder %s18, 1
    %p78 = por %p76, %p77
    %p79 = scmp.ne.s32.totalorder %s70, %s71
    %p80 = scmp.eq.s32.totalorder %s18, 0
    %p81 = por %p79, %p80
    %p82 = scmp.ne.s32.totalorder %s70, %s71
    %p83 = scmp.eq.s32.totalorder %s19, 1
    %p84 = por %p82, %p83
    %p86 = scmp.ne.s32.totalorder %s71, %s85
    %p87 = scmp.eq.s32.totalorder %s19, 0
    %p88 = por %p86, %p87
    %s90 = sadd.s32 %s89, 1
    %p93 = scmp.eq.s32.totalorder %s13, 1
    %p94 = scmp.ne.s32.totalorder %s89, %s91
    %p95 = scmp.eq.s32.totalorder %s13, 0
    %p96 = por %p94, %p95
    %p97 = scmp.ne.s32.totalorder %s89, %s91
    %p98 = scmp.eq.s32.totalorder %s18, 1
    %p99 = por %p97, %p98
    %p100 = scmp.ne.s32.totalorder %s91, %s92
    %p101 = scmp.eq.s32.totalorder %s18, 0
    %p102 = por %p100, %p101
    %p103 = scmp.ne.s32.totalorder %s91, %s92
    %p104 = scmp.eq.s32.totalorder %s19, 1
    %p105 = por %p103, %p104
    %p107 = scmp.ne.s32.totalorder %s92, %s106
    %p108 = scmp.eq.s32.totalorder %s19, 0
    %p109 = por %p107, %p108
    %s111 = sadd.s32 %s110, 1
    %p114 = scmp.eq.s32.totalorder %s13, 1
    %p115 = scmp.ne.s32.totalorder %s110, %s112
    %p116 = scmp.eq.s32.totalorder %s13, 0
    %p117 = por %p115, %p116
    %p118 = scmp.ne.s32.totalorder %s110, %s112
    %p119 = scmp.eq.s32.totalorder %s18, 1
    %p120 = por %p118, %p119
    %p121 = scmp.ne.s32.totalorder %s112, %s113
    %p122 = scmp.eq.s32.totalorder %s18, 0
    %p123 = por %p121, %p122
    %p124 = scmp.ne.s32.totalorder %s112, %s113
    %p125 = scmp.eq.s32.totalorder %s19, 1
    %p126 = por %p124, %p125
    %p128 = scmp.ne.s32.totalorder %s113, %s127
    %p129 = scmp.eq.s32.totalorder %s19, 0
    %p130 = por %p128, %p129
    %s131 = ssub.s32 %s13, %s20
    %p132 = scmp.eq.s32.totalorder %s131, 0
    %s134 = sadd.s32 %s133, 1
    %s135 = scalar_select %p132, %s133, %s134
    %p138 = pneg %p132
    %p139 = scmp.eq.s32.totalorder %s13, 1
    %p140 = por %p138, %p139
    %p141 = scmp.ne.s32.totalorder %s133, %s136
    %p142 = scmp.eq.s32.totalorder %s13, 0
    %p143 = por %p141, %p142
    %p144 = scmp.ne.s32.totalorder %s133, %s136
    %p145 = scmp.eq.s32.totalorder %s18, 1
    %p146 = por %p144, %p145
    %p147 = scmp.ne.s32.totalorder %s136, %s137
    %p148 = scmp.eq.s32.totalorder %s18, 0
    %p149 = por %p147, %p148
    %p150 = scmp.ne.s32.totalorder %s136, %s137
    %p151 = scmp.eq.s32.totalorder %s19, 1
    %p152 = por %p150, %p151
    %p154 = scmp.ne.s32.totalorder %s137, %s153
    %p155 = scmp.eq.s32.totalorder %s19, 0
    %p156 = por %p154, %p155
    %s157 = ssub.s32 %s13, %s20
    %p158 = scmp.eq.s32.totalorder %s157, 0
    %s160 = sadd.s32 %s159, 1
    %s161 = scalar_select %p158, %s159, %s160
    %p164 = pneg %p158
    %p165 = scmp.eq.s32.totalorder %s13, 1
    %p166 = por %p164, %p165
    %p167 = scmp.ne.s32.totalorder %s159, %s162
    %p168 = scmp.eq.s32.totalorder %s13, 0
    %p169 = por %p167, %p168
    %p170 = scmp.ne.s32.totalorder %s159, %s162
    %p171 = scmp.eq.s32.totalorder %s18, 1
    %p172 = por %p170, %p171
    %p173 = scmp.ne.s32.totalorder %s162, %s163
    %p174 = scmp.eq.s32.totalorder %s18, 0
    %p175 = por %p173, %p174
    %p176 = scmp.ne.s32.totalorder %s162, %s163
    %p177 = scmp.eq.s32.totalorder %s19, 1
    %p178 = por %p176, %p177
    %p180 = scmp.ne.s32.totalorder %s163, %s179
    %p181 = scmp.eq.s32.totalorder %s19, 0
    %p182 = por %p180, %p181
    %p183 = scmp.le.s32.totalorder 1, %s13
    %p184 = scmp.lt.s32.totalorder %s13, 3
    %p185 = pnand %p183, %p184
    %p186 = pneg %p185
    // Predicated region
    $region9: #{dprnn_forward.7} parent=5 // pred_check
      _
    $region10: #{dprnn_forward.7} parent=5 // pred_check_branch
      %188 = sbr.rel (%p185) target = $region12
    $region11: #{dprnn_forward.7} parent=5 // pred_region
      %s189 = ssub.s32 %s13, 1
      // Predicated region
      $region13: #{dprnn_forward.7} parent=11 // pred_check
        %p190 = pneg %p60
      $region14: #{dprnn_forward.7} parent=11 // pred_check_branch
        %192 = sbr.rel (%p190) target = $region16
      $region15: #{dprnn_forward.7} parent=11 // pred_region
        _
      $region16: #{dprnn_forward.7} parent=11 // pred_fallthru
        _
      // Predicated region
      $region17: #{dprnn_forward.7} parent=11 // pred_check
        %p193 = pneg %p81
      $region18: #{dprnn_forward.7} parent=11 // pred_check_branch
        %195 = sbr.rel (%p193) target = $region20
      $region19: #{dprnn_forward.7} parent=11 // pred_region
        _
      $region20: #{dprnn_forward.7} parent=11 // pred_fallthru
        _
      // Predicated region
      $region21: #{dprnn_forward.7} parent=11 // pred_check
        %p196 = pneg %p102
      $region22: #{dprnn_forward.7} parent=11 // pred_check_branch
        %198 = sbr.rel (%p196) target = $region24
      $region23: #{dprnn_forward.7} parent=11 // pred_region
        _
      $region24: #{dprnn_forward.7} parent=11 // pred_fallthru
        _
      // Predicated region
      $region25: #{dprnn_forward.7} parent=11 // pred_check
        %p199 = pneg %p123
      $region26: #{dprnn_forward.7} parent=11 // pred_check_branch
        %201 = sbr.rel (%p199) target = $region28
      $region27: #{dprnn_forward.7} parent=11 // pred_region
        _
      $region28: #{dprnn_forward.7} parent=11 // pred_fallthru
        _
    $region12: #{dprnn_forward.7} parent=5 // pred_fallthru
      _
    %p202 = scmp.lt.s32.totalorder %s13, 2
    // Predicated region
    $region29: #{dprnn_forward.7} parent=5 // pred_check
      %p203 = pneg %p202
    $region30: #{dprnn_forward.7} parent=5 // pred_check_branch
      %205 = sbr.rel (%p203) target = $region32
    $region31: #{dprnn_forward.7} parent=5 // pred_region
      // Predicated region
      $region33: #{dprnn_forward.7} parent=31 // pred_check
        %p206 = pneg %p33
      $region34: #{dprnn_forward.7} parent=31 // pred_check_branch
        %208 = sbr.rel (%p206) target = $region36
      $region35: #{dprnn_forward.7} parent=31 // pred_region
        %s209 = smul.u32 4, %s13
        %p210 = scmp.lt.s32.totalorder %s209, 7
        %s211 = scalar_select %p210, %s209, 7
        %s212 = smul.addr %s211, 8
        %s213 = scalar_lea.vmem %s0, %s212
        %s214 = smul.u32 4, %s13
      $region36: #{dprnn_forward.7} parent=31 // pred_fallthru
        _
    $region32: #{dprnn_forward.7} parent=5 // pred_fallthru
      _
    %p215 = scmp.le.s32.totalorder 1, %s13
    %p216 = scmp.lt.s32.totalorder %s13, 3
    %p217 = pnand %p215, %p216
    %p218 = pneg %p217
    // Predicated region
    $region37: #{dprnn_forward.7} parent=5 // pred_check
      _
    $region38: #{dprnn_forward.7} parent=5 // pred_check_branch
      %220 = sbr.rel (%p217) target = $region40
    $region39: #{dprnn_forward.7} parent=5 // pred_region
      %s221 = ssub.s32 %s13, 1
      %s222 = smul.u32 4, %s18
      %p223 = scmp.lt.s32.totalorder %s222, 7
      %s224 = scalar_select %p223, %s222, 7
      %s225 = smul.addr %s224, 8
      %s226 = scalar_lea.vmem %s0, %s225
      %p227 = pneg %p39
      %p228 = pneg %p36
      %p229 = pneg %p60
      %p230 = pneg %p57
      %p231 = pneg %p81
      %p232 = pneg %p78
      %p233 = pneg %p102
      %p234 = pneg %p99
      %p235 = pneg %p123
      %p236 = pneg %p120
      %p237 = pneg %p149
      %p238 = pneg %p146
      %s239 = smul.u32 4, %s18
      %p240 = scmp.lt.s32.totalorder %s239, 7
      %s241 = scalar_select %p240, %s239, 7
      %s242 = smul.addr %s241, 8
      %s243 = scalar_lea.vmem %s5, %s242
      %p244 = pneg %p175
      %p245 = pneg %p172
      %s246 = smul.u32 4, %s18
      %p247 = scmp.lt.s32.totalorder %s246, 7
      %s248 = scalar_select %p247, %s246, 7
      %s249 = smul.addr %s248, 8
      %s250 = scalar_lea.vmem %s6, %s249
      %s251 = smul.u32 4, %s18
      %p252 = scmp.lt.s32.totalorder %s251, 7
      %s253 = scalar_select %p252, %s251, 7
      %s254 = smul.addr %s253, 8
      %s255 = scalar_lea.vmem %s0, %s254
      %s256 = smul.u32 4, %s18
      %s257 = smul.u32 4, %s18
      %p258 = scmp.lt.s32.totalorder %s257, 7
      %s259 = scalar_select %p258, %s257, 7
      %s260 = smul.addr %s259, 8
      %s261 = scalar_lea.vmem %s5, %s260
      %s262 = smul.u32 4, %s18
      %s263 = smul.u32 4, %s18
      %p264 = scmp.lt.s32.totalorder %s263, 7
      %s265 = scalar_select %p264, %s263, 7
      %s266 = smul.addr %s265, 8
      %s267 = scalar_lea.vmem %s6, %s266
      %s268 = smul.u32 4, %s18
      %v269 = vld [vmem:[%s255] sm:$0xff]
      %v270 = vld [vmem:[%s255 + $0x8] sm:$0xff]
      %v271 = vld [vmem:[%s255 + $0x10] sm:$0xff]
      %v272 = vld [vmem:[%s255 + $0x18] sm:$0xff]
      %v273 = vld [vmem:[%s1] sm:$0xf]
      %v274 = vld [vmem:[%s2] sm:$0x1]
      %v276 = vlaneseq
      %v277 = vshrl.u32 %v276, 7
      %v278 = vsub.s32 0, %v277
      %v279 = vrot.slane %v274, %v278
      %vm281 = vcmask 31744
      %v283 = vsel %vm281, %v269, 0
      %v286 = vsel %vm281, %v270, 0
      %v289 = vsel %vm281, %v271, 0
      %v292 = vsel %vm281, %v272, 0
      %vm294 = vcmask 1043456
      %v296 = vsel %vm294, %v273, 0
      %298 = vmatprep.subr.mxu0 0.0
      %299 = vmatpush1.msra.mxu0 %v296
      %300 = vmatprep.subr.mxu0 0.0
      %301 = vmatpush1.msra.mxu0 0.0
      %302 = vmatprep.subr.mxu0 0.0
      %303 = vmatpush1.msra.mxu0 0.0
      %304 = vmatprep.subr.mxu0 0.0
      %305 = vmatpush1.msra.mxu0 0.0
      %306 = vmatprep.subr.mxu0 0.0
      %307 = vmatpush1.msra.mxu0 0.0
      %308 = vmatprep.subr.mxu0 0.0
      %309 = vmatpush1.msra.mxu0 0.0
      %310 = vmatprep.subr.mxu0 0.0
      %311 = vmatpush1.msra.mxu0 0.0
      %312 = vmatprep.subr.mxu0 0.0
      %313 = vmatpush1.msra.mxu0 0.0
      %314 = vmatprep.subr.mxu0 0.0
      %315 = vmatpush1.msra.mxu0 0.0
      %316 = vmatprep.subr.mxu0 0.0
      %317 = vmatpush1.msra.mxu0 0.0
      %318 = vmatprep.subr.mxu0 0.0
      %319 = vmatpush1.msra.mxu0 0.0
      %320 = vmatprep.subr.mxu0 0.0
      %321 = vmatpush1.msra.mxu0 0.0
      %322 = vmatprep.subr.mxu0 0.0
      %323 = vmatpush1.msra.mxu0 0.0
      %324 = vmatprep.subr.mxu0 0.0
      %325 = vmatpush1.msra.mxu0 0.0
      %326 = vmatprep.subr.mxu0 0.0
      %327 = vmatpush1.msra.mxu0 0.0
      %328 = vmatprep.subr.mxu0 0.0
      %329 = vmatpush1.msra.mxu0 0.0
      %330 = vmatprep.subr.mxu0 0.0
      %331 = vmatpush1.msra.mxu0 0.0
      %332 = vmatprep.subr.mxu0 0.0
      %333 = vmatpush1.msra.mxu0 0.0
      %334 = vmatprep.subr.mxu0 0.0
      %335 = vmatpush1.msra.mxu0 0.0
      %336 = vmatprep.subr.mxu0 0.0
      %337 = vmatpush1.msra.mxu0 0.0
      %338 = vmatprep.subr.mxu0 0.0
      %339 = vmatpush1.msra.mxu0 0.0
      %340 = vmatprep.subr.mxu0 0.0
      %341 = vmatpush1.msra.mxu0 0.0
      %342 = vmatprep.subr.mxu0 0.0
      %343 = vmatpush1.msra.mxu0 0.0
      %344 = vmatprep.subr.mxu0 0.0
      %345 = vmatpush1.msra.mxu0 0.0
      %346 = vmatprep.subr.mxu0 0.0
      %347 = vmatpush1.msra.mxu0 0.0
      %348 = vmatprep.subr.mxu0 0.0
      %349 = vmatpush1.msra.mxu0 0.0
      %350 = vmatprep.subr.mxu0 0.0
      %351 = vmatpush1.msra.mxu0 0.0
      %352 = vmatprep.subr.mxu0 0.0
      %353 = vmatpush1.msra.mxu0 0.0
      %354 = vmatprep.subr.mxu0 0.0
      %355 = vmatpush1.msra.mxu0 0.0
      %356 = vmatprep.subr.mxu0 0.0
      %357 = vmatpush1.msra.mxu0 0.0
      %358 = vmatprep.subr.mxu0 0.0
      %359 = vmatpush1.msra.mxu0 0.0
      %360 = vmatprep.subr.mxu0 0.0
      %361 = vmatpush1.msra.mxu0 0.0
      %362 = vmatprep.mubr.f32.mxu0 0.0
      %363 = vmatmul.mubr.f32.gmra.mrb[0].mxu0 %v283
      %v364 = vpop.f32.mrb[0].mxu0
      %v365 = vadd.f32 %v279, %v364
      %v366 = vpop.f32.mrb[0].mxu0
      %367 = vmatprep.mubr.f32.mxu0 0.0
      %368 = vmatmul.mubr.f32.gmra.mrb[0].mxu0 %v286
      %v369 = vpop.f32.mrb[0].mxu0
      %v370 = vadd.f32 %v279, %v369
      %v371 = vpop.f32.mrb[0].mxu0
      %372 = vmatprep.mubr.f32.mxu0 0.0
      %373 = vmatmul.mubr.f32.gmra.mrb[0].mxu0 %v289
      %v374 = vpop.f32.mrb[0].mxu0
      %v375 = vadd.f32 %v279, %v374
      %v376 = vpop.f32.mrb[0].mxu0
      %377 = vmatprep.mubr.f32.mxu0 0.0
      %378 = vmatmul.mubr.f32.gmra.mrb[0].mxu0 %v292
      %v379 = vpop.f32.mrb[0].mxu0
      %v380 = vadd.f32 %v279, %v379
      %v381 = vpop.f32.mrb[0].mxu0
      %382 = vdwg.mxu0
      %vm383 = vcmask 130048
      %384 = vst.msk [vmem:[%s261] sm:$0xff] %vm383, %v365
      %385 = vst.msk [vmem:[%s261 + $0x8] sm:$0xff] %vm383, %v370
      %386 = vst.msk [vmem:[%s261 + $0x10] sm:$0xff] %vm383, %v375
      %387 = vst.msk [vmem:[%s261 + $0x18] sm:$0xff] %vm383, %v380
      %v388 = vsel %vm383, %v365, 0.0
      %389 = vadd.xlane.f32.xlu0 %v388
      %v390 = vpop.xlane.xlu0 %389
      %v391 = vsel %vm383, %v370, 0.0
      %392 = vadd.xlane.f32.xlu0 %v391
      %v393 = vpop.xlane.xlu0 %392
      %v394 = vsel %vm383, %v375, 0.0
      %395 = vadd.xlane.f32.xlu0 %v394
      %v396 = vpop.xlane.xlu0 %395
      %v397 = vsel %vm383, %v380, 0.0
      %398 = vadd.xlane.f32.xlu0 %v397
      %v399 = vpop.xlane.xlu0 %398
      %v400 = vrcp.pop 16.0
      %v401 = vmul.f32 %v390, %v400
      %v402 = vmul.f32 %v393, %v400
      %v403 = vmul.f32 %v396, %v400
      %v404 = vmul.f32 %v399, %v400
      %v405 = vsub.f32 %v365, %v401
      %v406 = vsub.f32 %v370, %v402
      %v407 = vsub.f32 %v375, %v403
      %v408 = vsub.f32 %v380, %v404
      %v409 = vmul.f32 %v405, %v405
      %v410 = vmul.f32 %v406, %v406
      %v411 = vmul.f32 %v407, %v407
      %v412 = vmul.f32 %v408, %v408
      %v413 = vsel %vm383, %v409, 0.0
      %414 = vadd.xlane.f32.xlu0 %v413
      %v415 = vpop.xlane.xlu0 %414
      %v416 = vsel %vm383, %v410, 0.0
      %417 = vadd.xlane.f32.xlu0 %v416
      %v418 = vpop.xlane.xlu0 %417
      %v419 = vsel %vm383, %v411, 0.0
      %420 = vadd.xlane.f32.xlu0 %v419
      %v421 = vpop.xlane.xlu0 %420
      %v422 = vsel %vm383, %v412, 0.0
      %423 = vadd.xlane.f32.xlu0 %v422
      %v424 = vpop.xlane.xlu0 %423
      %v425 = vmul.f32 %v415, %v400
      %v426 = vmul.f32 %v418, %v400
      %v427 = vmul.f32 %v421, %v400
      %v428 = vmul.f32 %v424, %v400
      %v429 = vadd.f32 %v425, 1e-05
      %v430 = vadd.f32 %v426, 1e-05
      %v431 = vadd.f32 %v427, 1e-05
      %v432 = vadd.f32 %v428, 1e-05
      %v433 = vrsqrt.pop %v429
      %v434 = vrsqrt.pop %v430
      %v435 = vrsqrt.pop %v431
      %v436 = vrsqrt.pop %v432
      %v437 = vmul.f32 %v405, %v433
      %v438 = vmul.f32 %v406, %v434
      %v439 = vmul.f32 %v407, %v435
      %v440 = vmul.f32 %v408, %v436
      %v441 = vld [vmem:[%s3] sm:$0x1]
      %v443 = vlaneseq
      %v444 = vshrl.u32 %v443, 7
      %v445 = vsub.s32 0, %v444
      %v446 = vrot.slane %v441, %v445
      %v448 = vmul.f32 %v437, %v446
      %v449 = vmul.f32 %v438, %v446
      %v450 = vmul.f32 %v439, %v446
      %v451 = vmul.f32 %v440, %v446
      %v452 = vld [vmem:[%s4] sm:$0x1]
      %v454 = vlaneseq
      %v455 = vshrl.u32 %v454, 7
      %v456 = vsub.s32 0, %v455
      %v457 = vrot.slane %v452, %v456
      %v459 = vadd.f32 %v448, %v457
      %v460 = vadd.f32 %v449, %v457
      %v461 = vadd.f32 %v450, %v457
      %v462 = vadd.f32 %v451, %v457
      %463 = vst.msk [vmem:[%s267] sm:$0xff] %vm383, %v459
      %464 = vst.msk [vmem:[%s267 + $0x8] sm:$0xff] %vm383, %v460
      %465 = vst.msk [vmem:[%s267 + $0x10] sm:$0xff] %vm383, %v461
      %466 = vst.msk [vmem:[%s267 + $0x18] sm:$0xff] %vm383, %v462
      %s467 = smul.u32 4, %s18
      %p468 = scmp.lt.s32.totalorder %s467, 7
      %s469 = scalar_select %p468, %s467, 7
      %s470 = smul.addr %s469, 8
      %s471 = scalar_lea.vmem %s5, %s470
      %s472 = smul.u32 4, %s18
      %p473 = scmp.lt.s32.totalorder %s472, 7
      %s474 = scalar_select %p473, %s472, 7
      %s475 = smul.addr %s474, 8
      %s476 = scalar_lea.vmem %s6, %s475
      // Predicated region
      $region41: #{dprnn_forward.7} parent=39 // pred_check
        %p477 = pneg %p146
      $region42: #{dprnn_forward.7} parent=39 // pred_check_branch
        %479 = sbr.rel (%p477) target = $region44
      $region43: #{dprnn_forward.7} parent=39 // pred_region
        %s480 = smul.u32 4, %s18
      $region44: #{dprnn_forward.7} parent=39 // pred_fallthru
        _
      // Predicated region
      $region45: #{dprnn_forward.7} parent=39 // pred_check
        %p481 = pneg %p172
      $region46: #{dprnn_forward.7} parent=39 // pred_check_branch
        %483 = sbr.rel (%p481) target = $region48
      $region47: #{dprnn_forward.7} parent=39 // pred_region
        %s484 = smul.u32 4, %s18
      $region48: #{dprnn_forward.7} parent=39 // pred_fallthru
        _
    $region40: #{dprnn_forward.7} parent=5 // pred_fallthru
      _
    %p485 = scmp.le.s32.totalorder 2, %s13
    // Predicated region
    $region49: #{dprnn_forward.7} parent=5 // pred_check
      %p486 = pneg %p485
    $region50: #{dprnn_forward.7} parent=5 // pred_check_branch
      %488 = sbr.rel (%p486) target = $region52
    $region51: #{dprnn_forward.7} parent=5 // pred_region
      %s489 = ssub.s32 %s13, 2
      // Predicated region
      $region53: #{dprnn_forward.7} parent=51 // pred_check
        %p490 = pneg %p152
      $region54: #{dprnn_forward.7} parent=51 // pred_check_branch
        %492 = sbr.rel (%p490) target = $region56
      $region55: #{dprnn_forward.7} parent=51 // pred_region
        %s493 = smul.u32 4, %s19
        %p494 = scmp.lt.s32.totalorder %s493, 7
        %s495 = scalar_select %p494, %s493, 7
        %s496 = smul.addr %s495, 8
        %s497 = scalar_lea.vmem %s5, %s496
      $region56: #{dprnn_forward.7} parent=51 // pred_fallthru
        _
      // Predicated region
      $region57: #{dprnn_forward.7} parent=51 // pred_check
        %p498 = pneg %p178
      $region58: #{dprnn_forward.7} parent=51 // pred_check_branch
        %500 = sbr.rel (%p498) target = $region60
      $region59: #{dprnn_forward.7} parent=51 // pred_region
        %s501 = smul.u32 4, %s19
        %p502 = scmp.lt.s32.totalorder %s501, 7
        %s503 = scalar_select %p502, %s501, 7
        %s504 = smul.addr %s503, 8
        %s505 = scalar_lea.vmem %s6, %s504
      $region60: #{dprnn_forward.7} parent=51 // pred_fallthru
        _
    $region52: #{dprnn_forward.7} parent=5 // pred_fallthru
      _
  $region6: #{dprnn_forward.7} parent=0 // loop_footer
    %s17 = sadd.s32 1, %s13
  $region7: #{dprnn_forward.7} parent=0 // loop_footer_branch
    %12 = sbr.rel target = $region3
  $region8: #{dprnn_forward.7} parent=0 // loop_exit
    _

// kernel: dprnn_forward.12
$region0: #{dprnn_forward.12}
  #allocation0 [shape = 'u32[]', space=smem, size = 0x4, offset = 0x4, fixed_abs, tag = 'smem constant byte address 0x4 - core index']
  #allocation1 [shape = 'u32[144,128]{1,0:T(1,128)}', space=vmem, size = 0x12000, scoped, tag = 'internal scratch']
  %s0 = inlined_call_operand.vmem [shape: f32[144,16], index: 0, kind: input, shape index: {}]
  %s1 = inlined_call_operand.vmem [shape: f32[16,32], index: 1, kind: input, shape index: {}]
  %s2 = inlined_call_operand.vmem [shape: f32[1,32], index: 2, kind: input, shape index: {}]
  %s3 = inlined_call_operand.vmem [shape: f32[144,32], index: 3, kind: output, shape index: {}]
  %s4 = sld [smem:[#allocation0]]
  $region45: #{dprnn_forward.12} parent=0
    _
  %s6 = ssub.s32 1, %s4
  %s7 = scalar_select 0, %s6, %s4
  loop: start=0, step=1, limit=4
  $region2: #{dprnn_forward.12} parent=0 // loop_pre_header
    _
  $region3: #{dprnn_forward.12} parent=0 // loop_header
    %s9 = sphi 0, %s13
    %p10 = scmp.ge.s32.totalorder %s9, 4
    %s19 = sphi 0, %s21
    %s22 = sphi 0, %s19
    %s23 = sphi 0, %s22
    %s39 = sphi 0, %s23
    %s43 = sphi 0, %s43
    %s45 = sphi 0, %s43
    %s46 = sphi 0, %s45
    %s60 = sphi 0, %s46
    %s64 = sphi 0, %s64
    %s66 = sphi 0, %s64
    %s67 = sphi 0, %s66
    %s81 = sphi 0, %s67
    %s87 = sphi 0, %s89
    %s90 = sphi 0, %s87
    %s91 = sphi 0, %s90
    %s107 = sphi 0, %s91
  $region4: #{dprnn_forward.12} parent=0 // loop_header_branch
    %12 = sbr.rel (%p10) target = $region8
  $region5: #{dprnn_forward.12} parent=0 // loop_body
    %s14 = ssub.s32 %s9, 1
    %s15 = ssub.s32 %s9, 2
    %s16 = sadd.s32 %s9, 1
    %s17 = ssub.s32 %s9, %s16
    %p18 = scmp.eq.s32.totalorder %s17, 0
    %s20 = sadd.s32 %s19, 1
    %s21 = scalar_select %p18, %s19, %s20
    %p24 = pneg %p18
    %p25 = scmp.eq.s32.totalorder %s9, 1
    %p26 = por %p24, %p25
    %p27 = scmp.ne.s32.totalorder %s19, %s22
    %p28 = scmp.eq.s32.totalorder %s9, 0
    %p29 = por %p27, %p28
    %p30 = scmp.ne.s32.totalorder %s19, %s22
    %p31 = scmp.eq.s32.totalorder %s14, 1
    %p32 = por %p30, %p31
    %p33 = scmp.ne.s32.totalorder %s22, %s23
    %p34 = scmp.eq.s32.totalorder %s14, 0
    %p35 = por %p33, %p34
    %p36 = scmp.ne.s32.totalorder %s22, %s23
    %p37 = scmp.eq.s32.totalorder %s15, 1
    %p38 = por %p36, %p37
    %p40 = scmp.ne.s32.totalorder %s23, %s39
    %p41 = scmp.eq.s32.totalorder %s15, 0
    %p42 = por %p40, %p41
    %s44 = sadd.s32 %s43, 1
    %p47 = scmp.eq.s32.totalorder %s9, 1
    %p48 = scmp.ne.s32.totalorder %s43, %s45
    %p49 = scmp.eq.s32.totalorder %s9, 0
    %p50 = por %p48, %p49
    %p51 = scmp.ne.s32.totalorder %s43, %s45
    %p52 = scmp.eq.s32.totalorder %s14, 1
    %p53 = por %p51, %p52
    %p54 = scmp.ne.s32.totalorder %s45, %s46
    %p55 = scmp.eq.s32.totalorder %s14, 0
    %p56 = por %p54, %p55
    %p57 = scmp.ne.s32.totalorder %s45, %s46
    %p58 = scmp.eq.s32.totalorder %s15, 1
    %p59 = por %p57, %p58
    %p61 = scmp.ne.s32.totalorder %s46, %s60
    %p62 = scmp.eq.s32.totalorder %s15, 0
    %p63 = por %p61, %p62
    %s65 = sadd.s32 %s64, 1
    %p68 = scmp.eq.s32.totalorder %s9, 1
    %p69 = scmp.ne.s32.totalorder %s64, %s66
    %p70 = scmp.eq.s32.totalorder %s9, 0
    %p71 = por %p69, %p70
    %p72 = scmp.ne.s32.totalorder %s64, %s66
    %p73 = scmp.eq.s32.totalorder %s14, 1
    %p74 = por %p72, %p73
    %p75 = scmp.ne.s32.totalorder %s66, %s67
    %p76 = scmp.eq.s32.totalorder %s14, 0
    %p77 = por %p75, %p76
    %p78 = scmp.ne.s32.totalorder %s66, %s67
    %p79 = scmp.eq.s32.totalorder %s15, 1
    %p80 = por %p78, %p79
    %p82 = scmp.ne.s32.totalorder %s67, %s81
    %p83 = scmp.eq.s32.totalorder %s15, 0
    %p84 = por %p82, %p83
    %s85 = ssub.s32 %s9, %s16
    %p86 = scmp.eq.s32.totalorder %s85, 0
    %s88 = sadd.s32 %s87, 1
    %s89 = scalar_select %p86, %s87, %s88
    %p92 = pneg %p86
    %p93 = scmp.eq.s32.totalorder %s9, 1
    %p94 = por %p92, %p93
    %p95 = scmp.ne.s32.totalorder %s87, %s90
    %p96 = scmp.eq.s32.totalorder %s9, 0
    %p97 = por %p95, %p96
    %p98 = scmp.ne.s32.totalorder %s87, %s90
    %p99 = scmp.eq.s32.totalorder %s14, 1
    %p100 = por %p98, %p99
    %p101 = scmp.ne.s32.totalorder %s90, %s91
    %p102 = scmp.eq.s32.totalorder %s14, 0
    %p103 = por %p101, %p102
    %p104 = scmp.ne.s32.totalorder %s90, %s91
    %p105 = scmp.eq.s32.totalorder %s15, 1
    %p106 = por %p104, %p105
    %p108 = scmp.ne.s32.totalorder %s91, %s107
    %p109 = scmp.eq.s32.totalorder %s15, 0
    %p110 = por %p108, %p109
    %p111 = scmp.le.s32.totalorder 1, %s9
    %p112 = scmp.lt.s32.totalorder %s9, 3
    %p113 = pnand %p111, %p112
    %p114 = pneg %p113
    // Predicated region
    $region9: #{dprnn_forward.12} parent=5 // pred_check
      _
    $region10: #{dprnn_forward.12} parent=5 // pred_check_branch
      %116 = sbr.rel (%p113) target = $region12
    $region11: #{dprnn_forward.12} parent=5 // pred_region
      %s117 = ssub.s32 %s9, 1
      // Predicated region
      $region13: #{dprnn_forward.12} parent=11 // pred_check
        %p118 = pneg %p56
      $region14: #{dprnn_forward.12} parent=11 // pred_check_branch
        %120 = sbr.rel (%p118) target = $region16
      $region15: #{dprnn_forward.12} parent=11 // pred_region
        _
      $region16: #{dprnn_forward.12} parent=11 // pred_fallthru
        _
      // Predicated region
      $region17: #{dprnn_forward.12} parent=11 // pred_check
        %p121 = pneg %p77
      $region18: #{dprnn_forward.12} parent=11 // pred_check_branch
        %123 = sbr.rel (%p121) target = $region20
      $region19: #{dprnn_forward.12} parent=11 // pred_region
        _
      $region20: #{dprnn_forward.12} parent=11 // pred_fallthru
        _
    $region12: #{dprnn_forward.12} parent=5 // pred_fallthru
      _
    %p124 = scmp.lt.s32.totalorder %s9, 2
    // Predicated region
    $region21: #{dprnn_forward.12} parent=5 // pred_check
      %p125 = pneg %p124
    $region22: #{dprnn_forward.12} parent=5 // pred_check_branch
      %127 = sbr.rel (%p125) target = $region24
    $region23: #{dprnn_forward.12} parent=5 // pred_region
      // Predicated region
      $region25: #{dprnn_forward.12} parent=23 // pred_check
        %p128 = pneg %p29
      $region26: #{dprnn_forward.12} parent=23 // pred_check_branch
        %130 = sbr.rel (%p128) target = $region28
      $region27: #{dprnn_forward.12} parent=23 // pred_region
        %s131 = smul.u32 9, %s9
        %p132 = scmp.lt.s32.totalorder %s131, 17
        %s133 = scalar_select %p132, %s131, 17
        %s134 = smul.addr %s133, 8
        %s135 = scalar_lea.vmem %s0, %s134
        %s136 = smul.u32 9, %s9
      $region28: #{dprnn_forward.12} parent=23 // pred_fallthru
        _
    $region24: #{dprnn_forward.12} parent=5 // pred_fallthru
      _
    %p137 = scmp.le.s32.totalorder 1, %s9
    %p138 = scmp.lt.s32.totalorder %s9, 3
    %p139 = pnand %p137, %p138
    %p140 = pneg %p139
    // Predicated region
    $region29: #{dprnn_forward.12} parent=5 // pred_check
      _
    $region30: #{dprnn_forward.12} parent=5 // pred_check_branch
      %142 = sbr.rel (%p139) target = $region32
    $region31: #{dprnn_forward.12} parent=5 // pred_region
      %s143 = ssub.s32 %s9, 1
      %s144 = smul.u32 9, %s14
      %p145 = scmp.lt.s32.totalorder %s144, 17
      %s146 = scalar_select %p145, %s144, 17
      %s147 = smul.addr %s146, 8
      %s148 = scalar_lea.vmem %s0, %s147
      %p149 = pneg %p35
      %p150 = pneg %p32
      %p151 = pneg %p56
      %p152 = pneg %p53
      %p153 = pneg %p77
      %p154 = pneg %p74
      %p155 = pneg %p103
      %p156 = pneg %p100
      %s157 = smul.u32 9, %s14
      %p158 = scmp.lt.s32.totalorder %s157, 17
      %s159 = scalar_select %p158, %s157, 17
      %s160 = smul.addr %s159, 8
      %s161 = scalar_lea.vmem %s3, %s160
      %s162 = smul.u32 9, %s14
      %p163 = scmp.lt.s32.totalorder %s162, 17
      %s164 = scalar_select %p163, %s162, 17
      %s165 = smul.addr %s164, 8
      %s166 = scalar_lea.vmem %s0, %s165
      %s167 = smul.u32 9, %s14
      %s168 = smul.u32 9, %s14
      %p169 = scmp.lt.s32.totalorder %s168, 17
      %s170 = scalar_select %p169, %s168, 17
      %s171 = smul.addr %s170, 8
      %s172 = scalar_lea.vmem %s3, %s171
      %s173 = smul.u32 9, %s14
      %v174 = vld [vmem:[%s166] sm:$0xff]
      %v175 = vld [vmem:[%s166 + $0x8] sm:$0xff]
      %v176 = vld [vmem:[%s166 + $0x10] sm:$0xff]
      %v177 = vld [vmem:[%s166 + $0x18] sm:$0xff]
      %v178 = vld [vmem:[%s166 + $0x20] sm:$0xff]
      %v179 = vld [vmem:[%s166 + $0x28] sm:$0xff]
      %v180 = vld [vmem:[%s166 + $0x30] sm:$0xff]
      %v181 = vld [vmem:[%s166 + $0x38] sm:$0xff]
      %v182 = vld [vmem:[%s166 + $0x40] sm:$0xff]
      %v183 = vmax.f32 %v174, 0.0
      %v184 = vmax.f32 %v175, 0.0
      %v185 = vmax.f32 %v176, 0.0
      %v186 = vmax.f32 %v177, 0.0
      %v187 = vmax.f32 %v178, 0.0
      %v188 = vmax.f32 %v179, 0.0
      %v189 = vmax.f32 %v180, 0.0
      %v190 = vmax.f32 %v181, 0.0
      %v191 = vmax.f32 %v182, 0.0
      %v192 = vld [vmem:[%s1] sm:$0xff]
      %v193 = vld [vmem:[%s1 + $0x8] sm:$0xff]
      %v194 = vld [vmem:[%s2] sm:$0x1]
      %v196 = vlaneseq
      %v197 = vshrl.u32 %v196, 7
      %v198 = vsub.s32 0, %v197
      %v199 = vrot.slane %v194, %v198
      %vm201 = vcmask 130048
      %v203 = vsel %vm201, %v183, 0
      %v206 = vsel %vm201, %v184, 0
      %v209 = vsel %vm201, %v185, 0
      %v212 = vsel %vm201, %v186, 0
      %v215 = vsel %vm201, %v187, 0
      %v218 = vsel %vm201, %v188, 0
      %v221 = vsel %vm201, %v189, 0
      %v224 = vsel %vm201, %v190, 0
      %v227 = vsel %vm201, %v191, 0
      %229 = vmatprep.subr.mxu0 0.0
      %230 = vmatpush1.msra.mxu0 %v192
      %231 = vmatprep.subr.mxu0 0.0
      %232 = vmatpush1.msra.mxu0 %v193
      %233 = vmatprep.subr.mxu0 0.0
      %234 = vmatpush1.msra.mxu0 0.0
      %235 = vmatprep.subr.mxu0 0.0
      %236 = vmatpush1.msra.mxu0 0.0
      %237 = vmatprep.subr.mxu0 0.0
      %238 = vmatpush1.msra.mxu0 0.0
      %239 = vmatprep.subr.mxu0 0.0
      %240 = vmatpush1.msra.mxu0 0.0
      %241 = vmatprep.subr.mxu0 0.0
      %242 = vmatpush1.msra.mxu0 0.0
      %243 = vmatprep.subr.mxu0 0.0
      %244 = vmatpush1.msra.mxu0 0.0
      %245 = vmatprep.subr.mxu0 0.0
      %246 = vmatpush1.msra.mxu0 0.0
      %247 = vmatprep.subr.mxu0 0.0
      %248 = vmatpush1.msra.mxu0 0.0
      %249 = vmatprep.subr.mxu0 0.0
      %250 = vmatpush1.msra.mxu0 0.0
      %251 = vmatprep.subr.mxu0 0.0
      %252 = vmatpush1.msra.mxu0 0.0
      %253 = vmatprep.subr.mxu0 0.0
      %254 = vmatpush1.msra.mxu0 0.0
      %255 = vmatprep.subr.mxu0 0.0
      %256 = vmatpush1.msra.mxu0 0.0
      %257 = vmatprep.subr.mxu0 0.0
      %258 = vmatpush1.msra.mxu0 0.0
      %259 = vmatprep.subr.mxu0 0.0
      %260 = vmatpush1.msra.mxu0 0.0
      %261 = vmatprep.subr.mxu0 0.0
      %262 = vmatpush1.msra.mxu0 0.0
      %263 = vmatprep.subr.mxu0 0.0
      %264 = vmatpush1.msra.mxu0 0.0
      %265 = vmatprep.subr.mxu0 0.0
      %266 = vmatpush1.msra.mxu0 0.0
      %267 = vmatprep.subr.mxu0 0.0
      %268 = vmatpush1.msra.mxu0 0.0
      %269 = vmatprep.subr.mxu0 0.0
      %270 = vmatpush1.msra.mxu0 0.0
      %271 = vmatprep.subr.mxu0 0.0
      %272 = vmatpush1.msra.mxu0 0.0
      %273 = vmatprep.subr.mxu0 0.0
      %274 = vmatpush1.msra.mxu0 0.0
      %275 = vmatprep.subr.mxu0 0.0
      %276 = vmatpush1.msra.mxu0 0.0
      %277 = vmatprep.subr.mxu0 0.0
      %278 = vmatpush1.msra.mxu0 0.0
      %279 = vmatprep.subr.mxu0 0.0
      %280 = vmatpush1.msra.mxu0 0.0
      %281 = vmatprep.subr.mxu0 0.0
      %282 = vmatpush1.msra.mxu0 0.0
      %283 = vmatprep.subr.mxu0 0.0
      %284 = vmatpush1.msra.mxu0 0.0
      %285 = vmatprep.subr.mxu0 0.0
      %286 = vmatpush1.msra.mxu0 0.0
      %287 = vmatprep.subr.mxu0 0.0
      %288 = vmatpush1.msra.mxu0 0.0
      %289 = vmatprep.subr.mxu0 0.0
      %290 = vmatpush1.msra.mxu0 0.0
      %291 = vmatprep.subr.mxu0 0.0
      %292 = vmatpush1.msra.mxu0 0.0
      %293 = vmatprep.mubr.f32.mxu0 0.0
      %294 = vmatmul.mubr.f32.gmra.mrb[0].mxu0 %v203
      %v295 = vpop.f32.mrb[0].mxu0
      %v296 = vadd.f32 %v199, %v295
      %v297 = vpop.f32.mrb[0].mxu0
      %298 = vmatprep.mubr.f32.mxu0 0.0
      %299 = vmatmul.mubr.f32.gmra.mrb[0].mxu0 %v206
      %v300 = vpop.f32.mrb[0].mxu0
      %v301 = vadd.f32 %v199, %v300
      %v302 = vpop.f32.mrb[0].mxu0
      %303 = vmatprep.mubr.f32.mxu0 0.0
      %304 = vmatmul.mubr.f32.gmra.mrb[0].mxu0 %v209
      %v305 = vpop.f32.mrb[0].mxu0
      %v306 = vadd.f32 %v199, %v305
      %v307 = vpop.f32.mrb[0].mxu0
      %308 = vmatprep.mubr.f32.mxu0 0.0
      %309 = vmatmul.mubr.f32.gmra.mrb[0].mxu0 %v212
      %v310 = vpop.f32.mrb[0].mxu0
      %v311 = vadd.f32 %v199, %v310
      %v312 = vpop.f32.mrb[0].mxu0
      %313 = vmatprep.mubr.f32.mxu0 0.0
      %314 = vmatmul.mubr.f32.gmra.mrb[0].mxu0 %v215
      %v315 = vpop.f32.mrb[0].mxu0
      %v316 = vadd.f32 %v199, %v315
      %v317 = vpop.f32.mrb[0].mxu0
      %318 = vmatprep.mubr.f32.mxu0 0.0
      %319 = vmatmul.mubr.f32.gmra.mrb[0].mxu0 %v218
      %v320 = vpop.f32.mrb[0].mxu0
      %v321 = vadd.f32 %v199, %v320
      %v322 = vpop.f32.mrb[0].mxu0
      %323 = vmatprep.mubr.f32.mxu0 0.0
      %324 = vmatmul.mubr.f32.gmra.mrb[0].mxu0 %v221
      %v325 = vpop.f32.mrb[0].mxu0
      %v326 = vadd.f32 %v199, %v325
      %v327 = vpop.f32.mrb[0].mxu0
      %328 = vmatprep.mubr.f32.mxu0 0.0
      %329 = vmatmul.mubr.f32.gmra.mrb[0].mxu0 %v224
      %v330 = vpop.f32.mrb[0].mxu0
      %v331 = vadd.f32 %v199, %v330
      %v332 = vpop.f32.mrb[0].mxu0
      %333 = vmatprep.mubr.f32.mxu0 0.0
      %334 = vmatmul.mubr.f32.gmra.mrb[0].mxu0 %v227
      %v335 = vpop.f32.mrb[0].mxu0
      %v336 = vadd.f32 %v199, %v335
      %v337 = vpop.f32.mrb[0].mxu0
      %338 = vdwg.mxu0
      %vm339 = vcmask 261120
      %340 = vst.msk [vmem:[%s172] sm:$0xff] %vm339, %v296
      %341 = vst.msk [vmem:[%s172 + $0x8] sm:$0xff] %vm339, %v301
      %342 = vst.msk [vmem:[%s172 + $0x10] sm:$0xff] %vm339, %v306
      %343 = vst.msk [vmem:[%s172 + $0x18] sm:$0xff] %vm339, %v311
      %344 = vst.msk [vmem:[%s172 + $0x20] sm:$0xff] %vm339, %v316
      %345 = vst.msk [vmem:[%s172 + $0x28] sm:$0xff] %vm339, %v321
      %346 = vst.msk [vmem:[%s172 + $0x30] sm:$0xff] %vm339, %v326
      %347 = vst.msk [vmem:[%s172 + $0x38] sm:$0xff] %vm339, %v331
      %348 = vst.msk [vmem:[%s172 + $0x40] sm:$0xff] %vm339, %v336
      %s349 = smul.u32 9, %s14
      %p350 = scmp.lt.s32.totalorder %s349, 17
      %s351 = scalar_select %p350, %s349, 17
      %s352 = smul.addr %s351, 8
      %s353 = scalar_lea.vmem %s3, %s352
      // Predicated region
      $region33: #{dprnn_forward.12} parent=31 // pred_check
        %p354 = pneg %p100
      $region34: #{dprnn_forward.12} parent=31 // pred_check_branch
        %356 = sbr.rel (%p354) target = $region36
      $region35: #{dprnn_forward.12} parent=31 // pred_region
        %s357 = smul.u32 9, %s14
      $region36: #{dprnn_forward.12} parent=31 // pred_fallthru
        _
    $region32: #{dprnn_forward.12} parent=5 // pred_fallthru
      _
    %p358 = scmp.le.s32.totalorder 2, %s9
    // Predicated region
    $region37: #{dprnn_forward.12} parent=5 // pred_check
      %p359 = pneg %p358
    $region38: #{dprnn_forward.12} parent=5 // pred_check_branch
      %361 = sbr.rel (%p359) target = $region40
    $region39: #{dprnn_forward.12} parent=5 // pred_region
      %s362 = ssub.s32 %s9, 2
      // Predicated region
      $region41: #{dprnn_forward.12} parent=39 // pred_check
        %p363 = pneg %p106
      $region42: #{dprnn_forward.12} parent=39 // pred_check_branch
        %365 = sbr.rel (%p363) target = $region44
      $region43: #{dprnn_forward.12} parent=39 // pred_region
        %s366 = smul.u32 9, %s15
        %p367 = scmp.lt.s32.totalorder %s366, 17
        %s368 = scalar_select %p367, %s366, 17
        %s369 = smul.addr %s368, 8
        %s370 = scalar_lea.vmem %s3, %s369
      $region44: #{dprnn_forward.12} parent=39 // pred_fallthru
        _
    $region40: #{dprnn_forward.12} parent=5 // pred_fallthru
      _
  $region6: #{dprnn_forward.12} parent=0 // loop_footer
    %s13 = sadd.s32 1, %s9
  $region7: #{dprnn_forward.12} parent=0 // loop_footer_branch
    %8 = sbr.rel target = $region3
  $region8: #{dprnn_forward.12} parent=0 // loop_exit
    _

// kernel: dprnn_forward.9
$region0: #{dprnn_forward.9}
  #allocation0 [shape = 'u32[]', space=smem, size = 0x4, offset = 0x4, fixed_abs, tag = 'smem constant byte address 0x4 - core index']
  #allocation1 [shape = 'u32[144,128]{1,0:T(1,128)}', space=vmem, size = 0x12000, scoped, tag = 'internal scratch']
  #allocation2 [shape = 'f32[9,16,128]{2,1,0:T(8,128)}', space=vmem, size = 0x12000, scoped, tag = 'scratch operand']
  #allocation3 [shape = 'f32[9,16,32]{2,1,0:T(8,128)}', space=vmem, size = 0x12000, scoped, tag = 'scratch operand']
  %s0 = inlined_call_operand.vmem [shape: f32[16,144], index: 0, kind: input, shape index: {}]
  %s1 = inlined_call_operand.vmem [shape: f32[32,128], index: 1, kind: input, shape index: {}]
  %s2 = inlined_call_operand.vmem [shape: f32[1,128], index: 2, kind: input, shape index: {}]
  %s3 = inlined_call_operand.vmem [shape: f32[32,128], index: 3, kind: input, shape index: {}]
  %s4 = inlined_call_operand.vmem [shape: f32[32,16], index: 4, kind: input, shape index: {}]
  %s5 = inlined_call_operand.vmem [shape: f32[1,16], index: 5, kind: input, shape index: {}]
  %s6 = inlined_call_operand.vmem [shape: f32[1,16], index: 6, kind: input, shape index: {}]
  %s7 = inlined_call_operand.vmem [shape: f32[1,16], index: 7, kind: input, shape index: {}]
  %s8 = inlined_call_operand.vmem [shape: f32[16,144], index: 8, kind: output, shape index: {}]
  %s9 = sld [smem:[#allocation0]]
  $region49: #{dprnn_forward.9} parent=0
    _
  %s11 = ssub.s32 1, %s9
  %s12 = scalar_select 0, %s11, %s9
  // Predicated region
  $region2: #{dprnn_forward.9} parent=0 // pred_check
    _
  $region3: #{dprnn_forward.9} parent=0 // pred_check_branch
    %14 = sbr.rel (0) target = $region5
  $region4: #{dprnn_forward.9} parent=0 // pred_region
    _
  $region5: #{dprnn_forward.9} parent=0 // pred_fallthru
    _
  // Predicated region
  $region6: #{dprnn_forward.9} parent=0 // pred_check
    _
  $region7: #{dprnn_forward.9} parent=0 // pred_check_branch
    %16 = sbr.rel (0) target = $region9
  $region8: #{dprnn_forward.9} parent=0 // pred_region
    _
  $region9: #{dprnn_forward.9} parent=0 // pred_fallthru
    _
  // Predicated region
  $region10: #{dprnn_forward.9} parent=0 // pred_check
    _
  $region11: #{dprnn_forward.9} parent=0 // pred_check_branch
    %18 = sbr.rel (0) target = $region13
  $region12: #{dprnn_forward.9} parent=0 // pred_region
    _
  $region13: #{dprnn_forward.9} parent=0 // pred_fallthru
    _
  // Predicated region
  $region14: #{dprnn_forward.9} parent=0 // pred_check
    _
  $region15: #{dprnn_forward.9} parent=0 // pred_check_branch
    %20 = sbr.rel (0) target = $region17
  $region16: #{dprnn_forward.9} parent=0 // pred_region
    _
  $region17: #{dprnn_forward.9} parent=0 // pred_fallthru
    _
  // Predicated region
  $region18: #{dprnn_forward.9} parent=0 // pred_check
    _
  $region19: #{dprnn_forward.9} parent=0 // pred_check_branch
    %22 = sbr.rel (0) target = $region21
  $region20: #{dprnn_forward.9} parent=0 // pred_region
    _
  $region21: #{dprnn_forward.9} parent=0 // pred_fallthru
    _
  // Predicated region
  $region22: #{dprnn_forward.9} parent=0 // pred_check
    _
  $region23: #{dprnn_forward.9} parent=0 // pred_check_branch
    %24 = sbr.rel (0) target = $region25
  $region24: #{dprnn_forward.9} parent=0 // pred_region
    _
  $region25: #{dprnn_forward.9} parent=0 // pred_fallthru
    _
  // Predicated region
  $region26: #{dprnn_forward.9} parent=0 // pred_check
    _
  $region27: #{dprnn_forward.9} parent=0 // pred_check_branch
    %26 = sbr.rel (0) target = $region29
  $region28: #{dprnn_forward.9} parent=0 // pred_region
    _
  $region29: #{dprnn_forward.9} parent=0 // pred_fallthru
    _
  // Predicated region
  $region30: #{dprnn_forward.9} parent=0 // pred_check
    _
  $region31: #{dprnn_forward.9} parent=0 // pred_check_branch
    %28 = sbr.rel (0) target = $region33
  $region32: #{dprnn_forward.9} parent=0 // pred_region
    _
  $region33: #{dprnn_forward.9} parent=0 // pred_fallthru
    _
  %v29 = vld [vmem:[%s1] sm:$0xff]
  %v30 = vld [vmem:[%s1 + $0x8] sm:$0xff]
  %v31 = vld [vmem:[%s1 + $0x10] sm:$0xff]
  %v32 = vld [vmem:[%s1 + $0x18] sm:$0xff]
  %v33 = vld [vmem:[%s2] sm:$0x1]
  %v34 = vld [vmem:[%s0] sm:$0xff]
  %v35 = vld [vmem:[%s0 + $0x10] sm:$0xff]
  %v36 = vld [vmem:[%s0 + $0x8] sm:$0xff]
  %v37 = vld [vmem:[%s0 + $0x18] sm:$0xff]
  %40 = vrot.lane.b32.xlu0 %v36, 16
  %v41 = vpop.permute.xlu0 %40
  %42 = vrot.lane.b32.xlu0 %v37, 16
  %v43 = vpop.permute.xlu0 %42
  %vm46 = vcmask 130048
  %v47 = vsel %vm46, %v34, %v41
  %v48 = vsel %vm46, %v35, %v43
  %v50 = vlaneseq
  %v51 = vshrl.u32 %v50, 7
  %v52 = vsub.s32 0, %v51
  %v53 = vrot.slane %v33, %v52
  %vm55 = vcmask 261120
  %v57 = vsel %vm55, %v47, 0
  %v60 = vsel %vm55, %v48, 0
  %62 = vmatprep.subr.mxu0 0.0
  %63 = vmatpush1.msra.mxu0 %v29
  %64 = vmatprep.subr.mxu0 0.0
  %65 = vmatpush1.msra.mxu0 %v30
  %66 = vmatprep.subr.mxu0 0.0
  %67 = vmatpush1.msra.mxu0 %v31
  %68 = vmatprep.subr.mxu0 0.0
  %69 = vmatpush1.msra.mxu0 %v32
  %70 = vmatprep.subr.mxu0 0.0
  %71 = vmatpush1.msra.mxu0 0.0
  %72 = vmatprep.subr.mxu0 0.0
  %73 = vmatpush1.msra.mxu0 0.0
  %74 = vmatprep.subr.mxu0 0.0
  %75 = vmatpush1.msra.mxu0 0.0
  %76 = vmatprep.subr.mxu0 0.0
  %77 = vmatpush1.msra.mxu0 0.0
  %78 = vmatprep.subr.mxu0 0.0
  %79 = vmatpush1.msra.mxu0 0.0
  %80 = vmatprep.subr.mxu0 0.0
  %81 = vmatpush1.msra.mxu0 0.0
  %82 = vmatprep.subr.mxu0 0.0
  %83 = vmatpush1.msra.mxu0 0.0
  %84 = vmatprep.subr.mxu0 0.0
  %85 = vmatpush1.msra.mxu0 0.0
  %86 = vmatprep.subr.mxu0 0.0
  %87 = vmatpush1.msra.mxu0 0.0
  %88 = vmatprep.subr.mxu0 0.0
  %89 = vmatpush1.msra.mxu0 0.0
  %90 = vmatprep.subr.mxu0 0.0
  %91 = vmatpush1.msra.mxu0 0.0
  %92 = vmatprep.subr.mxu0 0.0
  %93 = vmatpush1.msra.mxu0 0.0
  %94 = vmatprep.subr.mxu0 0.0
  %95 = vmatpush1.msra.mxu0 0.0
  %96 = vmatprep.subr.mxu0 0.0
  %97 = vmatpush1.msra.mxu0 0.0
  %98 = vmatprep.subr.mxu0 0.0
  %99 = vmatpush1.msra.mxu0 0.0
  %100 = vmatprep.subr.mxu0 0.0
  %101 = vmatpush1.msra.mxu0 0.0
  %102 = vmatprep.subr.mxu0 0.0
  %103 = vmatpush1.msra.mxu0 0.0
  %104 = vmatprep.subr.mxu0 0.0
  %105 = vmatpush1.msra.mxu0 0.0
  %106 = vmatprep.subr.mxu0 0.0
  %107 = vmatpush1.msra.mxu0 0.0
  %108 = vmatprep.subr.mxu0 0.0
  %109 = vmatpush1.msra.mxu0 0.0
  %110 = vmatprep.subr.mxu0 0.0
  %111 = vmatpush1.msra.mxu0 0.0
  %112 = vmatprep.subr.mxu0 0.0
  %113 = vmatpush1.msra.mxu0 0.0
  %114 = vmatprep.subr.mxu0 0.0
  %115 = vmatpush1.msra.mxu0 0.0
  %116 = vmatprep.subr.mxu0 0.0
  %117 = vmatpush1.msra.mxu0 0.0
  %118 = vmatprep.subr.mxu0 0.0
  %119 = vmatpush1.msra.mxu0 0.0
  %120 = vmatprep.subr.mxu0 0.0
  %121 = vmatpush1.msra.mxu0 0.0
  %122 = vmatprep.subr.mxu0 0.0
  %123 = vmatpush1.msra.mxu0 0.0
  %124 = vmatprep.subr.mxu0 0.0
  %125 = vmatpush1.msra.mxu0 0.0
  %126 = vmatprep.mubr.f32.mxu0 0.0
  %127 = vmatmul.mubr.f32.gmra.mrb[0].mxu0 %v57
  %v128 = vpop.f32.mrb[0].mxu0
  %v129 = vadd.f32 %v53, %v128
  %v130 = vpop.f32.mrb[0].mxu0
  %131 = vmatprep.mubr.f32.mxu0 0.0
  %132 = vmatmul.mubr.f32.gmra.mrb[0].mxu0 %v60
  %v133 = vpop.f32.mrb[0].mxu0
  %v134 = vadd.f32 %v53, %v133
  %v135 = vpop.f32.mrb[0].mxu0
  %136 = vdwg.mxu0
  %137 = vst [vmem:[#allocation2] sm:$0xff] %v129
  %138 = vst [vmem:[#allocation2 + $0x8] sm:$0xff] %v134
  %v139 = vld [vmem:[%s0] sm:$0xff]
  %v140 = vld [vmem:[%s0 + $0x10] sm:$0xff]
  %143 = vrot.lane.b32.xlu0 %v139, 112
  %v144 = vpop.permute.xlu0 %143
  %145 = vrot.lane.b32.xlu0 %v140, 112
  %v146 = vpop.permute.xlu0 %145
  %149 = vrot.lane.b32.xlu0 %v139, 32
  %v150 = vpop.permute.xlu0 %149
  %151 = vrot.lane.b32.xlu0 %v140, 32
  %v152 = vpop.permute.xlu0 %151
  %v155 = vsel %vm46, %v144, %v150
  %v156 = vsel %vm46, %v146, %v152
  %v158 = vsel %vm55, %v155, 0
  %v161 = vsel %vm55, %v156, 0
  %163 = vmatprep.subr.mxu0 0.0
  %164 = vmatpush1.msra.mxu0 %v29
  %165 = vmatprep.subr.mxu0 0.0
  %166 = vmatpush1.msra.mxu0 %v30
  %167 = vmatprep.subr.mxu0 0.0
  %168 = vmatpush1.msra.mxu0 %v31
  %169 = vmatprep.subr.mxu0 0.0
  %170 = vmatpush1.msra.mxu0 %v32
  %171 = vmatprep.subr.mxu0 0.0
  %172 = vmatpush1.msra.mxu0 0.0
  %173 = vmatprep.subr.mxu0 0.0
  %174 = vmatpush1.msra.mxu0 0.0
  %175 = vmatprep.subr.mxu0 0.0
  %176 = vmatpush1.msra.mxu0 0.0
  %177 = vmatprep.subr.mxu0 0.0
  %178 = vmatpush1.msra.mxu0 0.0
  %179 = vmatprep.subr.mxu0 0.0
  %180 = vmatpush1.msra.mxu0 0.0
  %181 = vmatprep.subr.mxu0 0.0
  %182 = vmatpush1.msra.mxu0 0.0
  %183 = vmatprep.subr.mxu0 0.0
  %184 = vmatpush1.msra.mxu0 0.0
  %185 = vmatprep.subr.mxu0 0.0
  %186 = vmatpush1.msra.mxu0 0.0
  %187 = vmatprep.subr.mxu0 0.0
  %188 = vmatpush1.msra.mxu0 0.0
  %189 = vmatprep.subr.mxu0 0.0
  %190 = vmatpush1.msra.mxu0 0.0
  %191 = vmatprep.subr.mxu0 0.0
  %192 = vmatpush1.msra.mxu0 0.0
  %193 = vmatprep.subr.mxu0 0.0
  %194 = vmatpush1.msra.mxu0 0.0
  %195 = vmatprep.subr.mxu0 0.0
  %196 = vmatpush1.msra.mxu0 0.0
  %197 = vmatprep.subr.mxu0 0.0
  %198 = vmatpush1.msra.mxu0 0.0
  %199 = vmatprep.subr.mxu0 0.0
  %200 = vmatpush1.msra.mxu0 0.0
  %201 = vmatprep.subr.mxu0 0.0
  %202 = vmatpush1.msra.mxu0 0.0
  %203 = vmatprep.subr.mxu0 0.0
  %204 = vmatpush1.msra.mxu0 0.0
  %205 = vmatprep.subr.mxu0 0.0
  %206 = vmatpush1.msra.mxu0 0.0
  %207 = vmatprep.subr.mxu0 0.0
  %208 = vmatpush1.msra.mxu0 0.0
  %209 = vmatprep.subr.mxu0 0.0
  %210 = vmatpush1.msra.mxu0 0.0
  %211 = vmatprep.subr.mxu0 0.0
  %212 = vmatpush1.msra.mxu0 0.0
  %213 = vmatprep.subr.mxu0 0.0
  %214 = vmatpush1.msra.mxu0 0.0
  %215 = vmatprep.subr.mxu0 0.0
  %216 = vmatpush1.msra.mxu0 0.0
  %217 = vmatprep.subr.mxu0 0.0
  %218 = vmatpush1.msra.mxu0 0.0
  %219 = vmatprep.subr.mxu0 0.0
  %220 = vmatpush1.msra.mxu0 0.0
  %221 = vmatprep.subr.mxu0 0.0
  %222 = vmatpush1.msra.mxu0 0.0
  %223 = vmatprep.subr.mxu0 0.0
  %224 = vmatpush1.msra.mxu0 0.0
  %225 = vmatprep.subr.mxu0 0.0
  %226 = vmatpush1.msra.mxu0 0.0
  %227 = vmatprep.mubr.f32.mxu0 0.0
  %228 = vmatmul.mubr.f32.gmra.mrb[0].mxu0 %v158
  %v229 = vpop.f32.mrb[0].mxu0
  %v230 = vadd.f32 %v53, %v229
  %v231 = vpop.f32.mrb[0].mxu0
  %232 = vmatprep.mubr.f32.mxu0 0.0
  %233 = vmatmul.mubr.f32.gmra.mrb[0].mxu0 %v161
  %v234 = vpop.f32.mrb[0].mxu0
  %v235 = vadd.f32 %v53, %v234
  %v236 = vpop.f32.mrb[0].mxu0
  %237 = vdwg.mxu0
  %s238 = scalar_lea.vmem [#allocation2], 16
  %239 = vst [vmem:[%s238] sm:$0xff] %v230
  %240 = vst [vmem:[%s238 + $0x8] sm:$0xff] %v235
  %v241 = vld [vmem:[%s0] sm:$0xff]
  %v242 = vld [vmem:[%s0 + $0x10] sm:$0xff]
  %245 = vrot.lane.b32.xlu0 %v241, 96
  %v246 = vpop.permute.xlu0 %245
  %247 = vrot.lane.b32.xlu0 %v242, 96
  %v248 = vpop.permute.xlu0 %247
  %251 = vrot.lane.b32.xlu0 %v241, 48
  %v252 = vpop.permute.xlu0 %251
  %253 = vrot.lane.b32.xlu0 %v242, 48
  %v254 = vpop.permute.xlu0 %253
  %v257 = vsel %vm46, %v246, %v252
  %v258 = vsel %vm46, %v248, %v254
  %v260 = vsel %vm55, %v257, 0
  %v263 = vsel %vm55, %v258, 0
  %265 = vmatprep.subr.mxu0 0.0
  %266 = vmatpush1.msra.mxu0 %v29
  %267 = vmatprep.subr.mxu0 0.0
  %268 = vmatpush1.msra.mxu0 %v30
  %269 = vmatprep.subr.mxu0 0.0
  %270 = vmatpush1.msra.mxu0 %v31
  %271 = vmatprep.subr.mxu0 0.0
  %272 = vmatpush1.msra.mxu0 %v32
  %273 = vmatprep.subr.mxu0 0.0
  %274 = vmatpush1.msra.mxu0 0.0
  %275 = vmatprep.subr.mxu0 0.0
  %276 = vmatpush1.msra.mxu0 0.0
  %277 = vmatprep.subr.mxu0 0.0
  %278 = vmatpush1.msra.mxu0 0.0
  %279 = vmatprep.subr.mxu0 0.0
  %280 = vmatpush1.msra.mxu0 0.0
  %281 = vmatprep.subr.mxu0 0.0
  %282 = vmatpush1.msra.mxu0 0.0
  %283 = vmatprep.subr.mxu0 0.0
  %284 = vmatpush1.msra.mxu0 0.0
  %285 = vmatprep.subr.mxu0 0.0
  %286 = vmatpush1.msra.mxu0 0.0
  %287 = vmatprep.subr.mxu0 0.0
  %288 = vmatpush1.msra.mxu0 0.0
  %289 = vmatprep.subr.mxu0 0.0
  %290 = vmatpush1.msra.mxu0 0.0
  %291 = vmatprep.subr.mxu0 0.0
  %292 = vmatpush1.msra.mxu0 0.0
  %293 = vmatprep.subr.mxu0 0.0
  %294 = vmatpush1.msra.mxu0 0.0
  %295 = vmatprep.subr.mxu0 0.0
  %296 = vmatpush1.msra.mxu0 0.0
  %297 = vmatprep.subr.mxu0 0.0
  %298 = vmatpush1.msra.mxu0 0.0
  %299 = vmatprep.subr.mxu0 0.0
  %300 = vmatpush1.msra.mxu0 0.0
  %301 = vmatprep.subr.mxu0 0.0
  %302 = vmatpush1.msra.mxu0 0.0
  %303 = vmatprep.subr.mxu0 0.0
  %304 = vmatpush1.msra.mxu0 0.0
  %305 = vmatprep.subr.mxu0 0.0
  %306 = vmatpush1.msra.mxu0 0.0
  %307 = vmatprep.subr.mxu0 0.0
  %308 = vmatpush1.msra.mxu0 0.0
  %309 = vmatprep.subr.mxu0 0.0
  %310 = vmatpush1.msra.mxu0 0.0
  %311 = vmatprep.subr.mxu0 0.0
  %312 = vmatpush1.msra.mxu0 0.0
  %313 = vmatprep.subr.mxu0 0.0
  %314 = vmatpush1.msra.mxu0 0.0
  %315 = vmatprep.subr.mxu0 0.0
  %316 = vmatpush1.msra.mxu0 0.0
  %317 = vmatprep.subr.mxu0 0.0
  %318 = vmatpush1.msra.mxu0 0.0
  %319 = vmatprep.subr.mxu0 0.0
  %320 = vmatpush1.msra.mxu0 0.0
  %321 = vmatprep.subr.mxu0 0.0
  %322 = vmatpush1.msra.mxu0 0.0
  %323 = vmatprep.subr.mxu0 0.0
  %324 = vmatpush1.msra.mxu0 0.0
  %325 = vmatprep.subr.mxu0 0.0
  %326 = vmatpush1.msra.mxu0 0.0
  %327 = vmatprep.subr.mxu0 0.0
  %328 = vmatpush1.msra.mxu0 0.0
  %329 = vmatprep.mubr.f32.mxu0 0.0
  %330 = vmatmul.mubr.f32.gmra.mrb[0].mxu0 %v260
  %v331 = vpop.f32.mrb[0].mxu0
  %v332 = vadd.f32 %v53, %v331
  %v333 = vpop.f32.mrb[0].mxu0
  %334 = vmatprep.mubr.f32.mxu0 0.0
  %335 = vmatmul.mubr.f32.gmra.mrb[0].mxu0 %v263
  %v336 = vpop.f32.mrb[0].mxu0
  %v337 = vadd.f32 %v53, %v336
  %v338 = vpop.f32.mrb[0].mxu0
  %339 = vdwg.mxu0
  %s340 = scalar_lea.vmem [#allocation2], 32
  %341 = vst [vmem:[%s340] sm:$0xff] %v332
  %342 = vst [vmem:[%s340 + $0x8] sm:$0xff] %v337
  %v343 = vld [vmem:[%s0] sm:$0xff]
  %v344 = vld [vmem:[%s0 + $0x10] sm:$0xff]
  %347 = vrot.lane.b32.xlu0 %v343, 80
  %v348 = vpop.permute.xlu0 %347
  %349 = vrot.lane.b32.xlu0 %v344, 80
  %v350 = vpop.permute.xlu0 %349
  %353 = vrot.lane.b32.xlu0 %v343, 64
  %v354 = vpop.permute.xlu0 %353
  %355 = vrot.lane.b32.xlu0 %v344, 64
  %v356 = vpop.permute.xlu0 %355
  %v359 = vsel %vm46, %v348, %v354
  %v360 = vsel %vm46, %v350, %v356
  %v362 = vsel %vm55, %v359, 0
  %v365 = vsel %vm55, %v360, 0
  %367 = vmatprep.subr.mxu0 0.0
  %368 = vmatpush1.msra.mxu0 %v29
  %369 = vmatprep.subr.mxu0 0.0
  %370 = vmatpush1.msra.mxu0 %v30
  %371 = vmatprep.subr.mxu0 0.0
  %372 = vmatpush1.msra.mxu0 %v31
  %373 = vmatprep.subr.mxu0 0.0
  %374 = vmatpush1.msra.mxu0 %v32
  %375 = vmatprep.subr.mxu0 0.0
  %376 = vmatpush1.msra.mxu0 0.0
  %377 = vmatprep.subr.mxu0 0.0
  %378 = vmatpush1.msra.mxu0 0.0
  %379 = vmatprep.subr.mxu0 0.0
  %380 = vmatpush1.msra.mxu0 0.0
  %381 = vmatprep.subr.mxu0 0.0
  %382 = vmatpush1.msra.mxu0 0.0
  %383 = vmatprep.subr.mxu0 0.0
  %384 = vmatpush1.msra.mxu0 0.0
  %385 = vmatprep.subr.mxu0 0.0
  %386 = vmatpush1.msra.mxu0 0.0
  %387 = vmatprep.subr.mxu0 0.0
  %388 = vmatpush1.msra.mxu0 0.0
  %389 = vmatprep.subr.mxu0 0.0
  %390 = vmatpush1.msra.mxu0 0.0
  %391 = vmatprep.subr.mxu0 0.0
  %392 = vmatpush1.msra.mxu0 0.0
  %393 = vmatprep.subr.mxu0 0.0
  %394 = vmatpush1.msra.mxu0 0.0
  %395 = vmatprep.subr.mxu0 0.0
  %396 = vmatpush1.msra.mxu0 0.0
  %397 = vmatprep.subr.mxu0 0.0
  %398 = vmatpush1.msra.mxu0 0.0
  %399 = vmatprep.subr.mxu0 0.0
  %400 = vmatpush1.msra.mxu0 0.0
  %401 = vmatprep.subr.mxu0 0.0
  %402 = vmatpush1.msra.mxu0 0.0
  %403 = vmatprep.subr.mxu0 0.0
  %404 = vmatpush1.msra.mxu0 0.0
  %405 = vmatprep.subr.mxu0 0.0
  %406 = vmatpush1.msra.mxu0 0.0
  %407 = vmatprep.subr.mxu0 0.0
  %408 = vmatpush1.msra.mxu0 0.0
  %409 = vmatprep.subr.mxu0 0.0
  %410 = vmatpush1.msra.mxu0 0.0
  %411 = vmatprep.subr.mxu0 0.0
  %412 = vmatpush1.msra.mxu0 0.0
  %413 = vmatprep.subr.mxu0 0.0
  %414 = vmatpush1.msra.mxu0 0.0
  %415 = vmatprep.subr.mxu0 0.0
  %416 = vmatpush1.msra.mxu0 0.0
  %417 = vmatprep.subr.mxu0 0.0
  %418 = vmatpush1.msra.mxu0 0.0
  %419 = vmatprep.subr.mxu0 0.0
  %420 = vmatpush1.msra.mxu0 0.0
  %421 = vmatprep.subr.mxu0 0.0
  %422 = vmatpush1.msra.mxu0 0.0
  %423 = vmatprep.subr.mxu0 0.0
  %424 = vmatpush1.msra.mxu0 0.0
  %425 = vmatprep.subr.mxu0 0.0
  %426 = vmatpush1.msra.mxu0 0.0
  %427 = vmatprep.subr.mxu0 0.0
  %428 = vmatpush1.msra.mxu0 0.0
  %429 = vmatprep.subr.mxu0 0.0
  %430 = vmatpush1.msra.mxu0 0.0
  %431 = vmatprep.mubr.f32.mxu0 0.0
  %432 = vmatmul.mubr.f32.gmra.mrb[0].mxu0 %v362
  %v433 = vpop.f32.mrb[0].mxu0
  %v434 = vadd.f32 %v53, %v433
  %v435 = vpop.f32.mrb[0].mxu0
  %436 = vmatprep.mubr.f32.mxu0 0.0
  %437 = vmatmul.mubr.f32.gmra.mrb[0].mxu0 %v365
  %v438 = vpop.f32.mrb[0].mxu0
  %v439 = vadd.f32 %v53, %v438
  %v440 = vpop.f32.mrb[0].mxu0
  %441 = vdwg.mxu0
  %s442 = scalar_lea.vmem [#allocation2], 48
  %443 = vst [vmem:[%s442] sm:$0xff] %v434
  %444 = vst [vmem:[%s442 + $0x8] sm:$0xff] %v439
  %v445 = vld [vmem:[%s0] sm:$0xff]
  %v446 = vld [vmem:[%s0 + $0x10] sm:$0xff]
  %449 = vrot.lane.b32.xlu0 %v445, 64
  %v450 = vpop.permute.xlu0 %449
  %451 = vrot.lane.b32.xlu0 %v446, 64
  %v452 = vpop.permute.xlu0 %451
  %455 = vrot.lane.b32.xlu0 %v445, 80
  %v456 = vpop.permute.xlu0 %455
  %457 = vrot.lane.b32.xlu0 %v446, 80
  %v458 = vpop.permute.xlu0 %457
  %v461 = vsel %vm46, %v450, %v456
  %v462 = vsel %vm46, %v452, %v458
  %v464 = vsel %vm55, %v461, 0
  %v467 = vsel %vm55, %v462, 0
  %469 = vmatprep.subr.mxu0 0.0
  %470 = vmatpush1.msra.mxu0 %v29
  %471 = vmatprep.subr.mxu0 0.0
  %472 = vmatpush1.msra.mxu0 %v30
  %473 = vmatprep.subr.mxu0 0.0
  %474 = vmatpush1.msra.mxu0 %v31
  %475 = vmatprep.subr.mxu0 0.0
  %476 = vmatpush1.msra.mxu0 %v32
  %477 = vmatprep.subr.mxu0 0.0
  %478 = vmatpush1.msra.mxu0 0.0
  %479 = vmatprep.subr.mxu0 0.0
  %480 = vmatpush1.msra.mxu0 0.0
  %481 = vmatprep.subr.mxu0 0.0
  %482 = vmatpush1.msra.mxu0 0.0
  %483 = vmatprep.subr.mxu0 0.0
  %484 = vmatpush1.msra.mxu0 0.0
  %485 = vmatprep.subr.mxu0 0.0
  %486 = vmatpush1.msra.mxu0 0.0
  %487 = vmatprep.subr.mxu0 0.0
  %488 = vmatpush1.msra.mxu0 0.0
  %489 = vmatprep.subr.mxu0 0.0
  %490 = vmatpush1.msra.mxu0 0.0
  %491 = vmatprep.subr.mxu0 0.0
  %492 = vmatpush1.msra.mxu0 0.0
  %493 = vmatprep.subr.mxu0 0.0
  %494 = vmatpush1.msra.mxu0 0.0
  %495 = vmatprep.subr.mxu0 0.0
  %496 = vmatpush1.msra.mxu0 0.0
  %497 = vmatprep.subr.mxu0 0.0
  %498 = vmatpush1.msra.mxu0 0.0
  %499 = vmatprep.subr.mxu0 0.0
  %500 = vmatpush1.msra.mxu0 0.0
  %501 = vmatprep.subr.mxu0 0.0
  %502 = vmatpush1.msra.mxu0 0.0
  %503 = vmatprep.subr.mxu0 0.0
  %504 = vmatpush1.msra.mxu0 0.0
  %505 = vmatprep.subr.mxu0 0.0
  %506 = vmatpush1.msra.mxu0 0.0
  %507 = vmatprep.subr.mxu0 0.0
  %508 = vmatpush1.msra.mxu0 0.0
  %509 = vmatprep.subr.mxu0 0.0
  %510 = vmatpush1.msra.mxu0 0.0
  %511 = vmatprep.subr.mxu0 0.0
  %512 = vmatpush1.msra.mxu0 0.0
  %513 = vmatprep.subr.mxu0 0.0
  %514 = vmatpush1.msra.mxu0 0.0
  %515 = vmatprep.subr.mxu0 0.0
  %516 = vmatpush1.msra.mxu0 0.0
  %517 = vmatprep.subr.mxu0 0.0
  %518 = vmatpush1.msra.mxu0 0.0
  %519 = vmatprep.subr.mxu0 0.0
  %520 = vmatpush1.msra.mxu0 0.0
  %521 = vmatprep.subr.mxu0 0.0
  %522 = vmatpush1.msra.mxu0 0.0
  %523 = vmatprep.subr.mxu0 0.0
  %524 = vmatpush1.msra.mxu0 0.0
  %525 = vmatprep.subr.mxu0 0.0
  %526 = vmatpush1.msra.mxu0 0.0
  %527 = vmatprep.subr.mxu0 0.0
  %528 = vmatpush1.msra.mxu0 0.0
  %529 = vmatprep.subr.mxu0 0.0
  %530 = vmatpush1.msra.mxu0 0.0
  %531 = vmatprep.subr.mxu0 0.0
  %532 = vmatpush1.msra.mxu0 0.0
  %533 = vmatprep.mubr.f32.mxu0 0.0
  %534 = vmatmul.mubr.f32.gmra.mrb[0].mxu0 %v464
  %v535 = vpop.f32.mrb[0].mxu0
  %v536 = vadd.f32 %v53, %v535
  %v537 = vpop.f32.mrb[0].mxu0
  %538 = vmatprep.mubr.f32.mxu0 0.0
  %539 = vmatmul.mubr.f32.gmra.mrb[0].mxu0 %v467
  %v540 = vpop.f32.mrb[0].mxu0
  %v541 = vadd.f32 %v53, %v540
  %v542 = vpop.f32.mrb[0].mxu0
  %543 = vdwg.mxu0
  %s544 = scalar_lea.vmem [#allocation2], 64
  %545 = vst [vmem:[%s544] sm:$0xff] %v536
  %546 = vst [vmem:[%s544 + $0x8] sm:$0xff] %v541
  %v547 = vld [vmem:[%s0] sm:$0xff]
  %v548 = vld [vmem:[%s0 + $0x10] sm:$0xff]
  %551 = vrot.lane.b32.xlu0 %v547, 48
  %v552 = vpop.permute.xlu0 %551
  %553 = vrot.lane.b32.xlu0 %v548, 48
  %v554 = vpop.permute.xlu0 %553
  %557 = vrot.lane.b32.xlu0 %v547, 96
  %v558 = vpop.permute.xlu0 %557
  %559 = vrot.lane.b32.xlu0 %v548, 96
  %v560 = vpop.permute.xlu0 %559
  %v563 = vsel %vm46, %v552, %v558
  %v564 = vsel %vm46, %v554, %v560
  %v566 = vsel %vm55, %v563, 0
  %v569 = vsel %vm55, %v564, 0
  %571 = vmatprep.subr.mxu0 0.0
  %572 = vmatpush1.msra.mxu0 %v29
  %573 = vmatprep.subr.mxu0 0.0
  %574 = vmatpush1.msra.mxu0 %v30
  %575 = vmatprep.subr.mxu0 0.0
  %576 = vmatpush1.msra.mxu0 %v31
  %577 = vmatprep.subr.mxu0 0.0
  %578 = vmatpush1.msra.mxu0 %v32
  %579 = vmatprep.subr.mxu0 0.0
  %580 = vmatpush1.msra.mxu0 0.0
  %581 = vmatprep.subr.mxu0 0.0
  %582 = vmatpush1.msra.mxu0 0.0
  %583 = vmatprep.subr.mxu0 0.0
  %584 = vmatpush1.msra.mxu0 0.0
  %585 = vmatprep.subr.mxu0 0.0
  %586 = vmatpush1.msra.mxu0 0.0
  %587 = vmatprep.subr.mxu0 0.0
  %588 = vmatpush1.msra.mxu0 0.0
  %589 = vmatprep.subr.mxu0 0.0
  %590 = vmatpush1.msra.mxu0 0.0
  %591 = vmatprep.subr.mxu0 0.0
  %592 = vmatpush1.msra.mxu0 0.0
  %593 = vmatprep.subr.mxu0 0.0
  %594 = vmatpush1.msra.mxu0 0.0
  %595 = vmatprep.subr.mxu0 0.0
  %596 = vmatpush1.msra.mxu0 0.0
  %597 = vmatprep.subr.mxu0 0.0
  %598 = vmatpush1.msra.mxu0 0.0
  %599 = vmatprep.subr.mxu0 0.0
  %600 = vmatpush1.msra.mxu0 0.0
  %601 = vmatprep.subr.mxu0 0.0
  %602 = vmatpush1.msra.mxu0 0.0
  %603 = vmatprep.subr.mxu0 0.0
  %604 = vmatpush1.msra.mxu0 0.0
  %605 = vmatprep.subr.mxu0 0.0
  %606 = vmatpush1.msra.mxu0 0.0
  %607 = vmatprep.subr.mxu0 0.0
  %608 = vmatpush1.msra.mxu0 0.0
  %609 = vmatprep.subr.mxu0 0.0
  %610 = vmatpush1.msra.mxu0 0.0
  %611 = vmatprep.subr.mxu0 0.0
  %612 = vmatpush1.msra.mxu0 0.0
  %613 = vmatprep.subr.mxu0 0.0
  %614 = vmatpush1.msra.mxu0 0.0
  %615 = vmatprep.subr.mxu0 0.0
  %616 = vmatpush1.msra.mxu0 0.0
  %617 = vmatprep.subr.mxu0 0.0
  %618 = vmatpush1.msra.mxu0 0.0
  %619 = vmatprep.subr.mxu0 0.0
  %620 = vmatpush1.msra.mxu0 0.0
  %621 = vmatprep.subr.mxu0 0.0
  %622 = vmatpush1.msra.mxu0 0.0
  %623 = vmatprep.subr.mxu0 0.0
  %624 = vmatpush1.msra.mxu0 0.0
  %625 = vmatprep.subr.mxu0 0.0
  %626 = vmatpush1.msra.mxu0 0.0
  %627 = vmatprep.subr.mxu0 0.0
  %628 = vmatpush1.msra.mxu0 0.0
  %629 = vmatprep.subr.mxu0 0.0
  %630 = vmatpush1.msra.mxu0 0.0
  %631 = vmatprep.subr.mxu0 0.0
  %632 = vmatpush1.msra.mxu0 0.0
  %633 = vmatprep.subr.mxu0 0.0
  %634 = vmatpush1.msra.mxu0 0.0
  %635 = vmatprep.mubr.f32.mxu0 0.0
  %636 = vmatmul.mubr.f32.gmra.mrb[0].mxu0 %v566
  %v637 = vpop.f32.mrb[0].mxu0
  %v638 = vadd.f32 %v53, %v637
  %v639 = vpop.f32.mrb[0].mxu0
  %640 = vmatprep.mubr.f32.mxu0 0.0
  %641 = vmatmul.mubr.f32.gmra.mrb[0].mxu0 %v569
  %v642 = vpop.f32.mrb[0].mxu0
  %v643 = vadd.f32 %v53, %v642
  %v644 = vpop.f32.mrb[0].mxu0
  %645 = vdwg.mxu0
  %s646 = scalar_lea.vmem [#allocation2], 80
  %647 = vst [vmem:[%s646] sm:$0xff] %v638
  %648 = vst [vmem:[%s646 + $0x8] sm:$0xff] %v643
  %v649 = vld [vmem:[%s0] sm:$0xff]
  %v650 = vld [vmem:[%s0 + $0x10] sm:$0xff]
  %653 = vrot.lane.b32.xlu0 %v649, 32
  %v654 = vpop.permute.xlu0 %653
  %655 = vrot.lane.b32.xlu0 %v650, 32
  %v656 = vpop.permute.xlu0 %655
  %659 = vrot.lane.b32.xlu0 %v649, 112
  %v660 = vpop.permute.xlu0 %659
  %661 = vrot.lane.b32.xlu0 %v650, 112
  %v662 = vpop.permute.xlu0 %661
  %v665 = vsel %vm46, %v654, %v660
  %v666 = vsel %vm46, %v656, %v662
  %v668 = vsel %vm55, %v665, 0
  %v671 = vsel %vm55, %v666, 0
  %673 = vmatprep.subr.mxu0 0.0
  %674 = vmatpush1.msra.mxu0 %v29
  %675 = vmatprep.subr.mxu0 0.0
  %676 = vmatpush1.msra.mxu0 %v30
  %677 = vmatprep.subr.mxu0 0.0
  %678 = vmatpush1.msra.mxu0 %v31
  %679 = vmatprep.subr.mxu0 0.0
  %680 = vmatpush1.msra.mxu0 %v32
  %681 = vmatprep.subr.mxu0 0.0
  %682 = vmatpush1.msra.mxu0 0.0
  %683 = vmatprep.subr.mxu0 0.0
  %684 = vmatpush1.msra.mxu0 0.0
  %685 = vmatprep.subr.mxu0 0.0
  %686 = vmatpush1.msra.mxu0 0.0
  %687 = vmatprep.subr.mxu0 0.0
  %688 = vmatpush1.msra.mxu0 0.0
  %689 = vmatprep.subr.mxu0 0.0
  %690 = vmatpush1.msra.mxu0 0.0
  %691 = vmatprep.subr.mxu0 0.0
  %692 = vmatpush1.msra.mxu0 0.0
  %693 = vmatprep.subr.mxu0 0.0
  %694 = vmatpush1.msra.mxu0 0.0
  %695 = vmatprep.subr.mxu0 0.0
  %696 = vmatpush1.msra.mxu0 0.0
  %697 = vmatprep.subr.mxu0 0.0
  %698 = vmatpush1.msra.mxu0 0.0
  %699 = vmatprep.subr.mxu0 0.0
  %700 = vmatpush1.msra.mxu0 0.0
  %701 = vmatprep.subr.mxu0 0.0
  %702 = vmatpush1.msra.mxu0 0.0
  %703 = vmatprep.subr.mxu0 0.0
  %704 = vmatpush1.msra.mxu0 0.0
  %705 = vmatprep.subr.mxu0 0.0
  %706 = vmatpush1.msra.mxu0 0.0
  %707 = vmatprep.subr.mxu0 0.0
  %708 = vmatpush1.msra.mxu0 0.0
  %709 = vmatprep.subr.mxu0 0.0
  %710 = vmatpush1.msra.mxu0 0.0
  %711 = vmatprep.subr.mxu0 0.0
  %712 = vmatpush1.msra.mxu0 0.0
  %713 = vmatprep.subr.mxu0 0.0
  %714 = vmatpush1.msra.mxu0 0.0
  %715 = vmatprep.subr.mxu0 0.0
  %716 = vmatpush1.msra.mxu0 0.0
  %717 = vmatprep.subr.mxu0 0.0
  %718 = vmatpush1.msra.mxu0 0.0
  %719 = vmatprep.subr.mxu0 0.0
  %720 = vmatpush1.msra.mxu0 0.0
  %721 = vmatprep.subr.mxu0 0.0
  %722 = vmatpush1.msra.mxu0 0.0
  %723 = vmatprep.subr.mxu0 0.0
  %724 = vmatpush1.msra.mxu0 0.0
  %725 = vmatprep.subr.mxu0 0.0
  %726 = vmatpush1.msra.mxu0 0.0
  %727 = vmatprep.subr.mxu0 0.0
  %728 = vmatpush1.msra.mxu0 0.0
  %729 = vmatprep.subr.mxu0 0.0
  %730 = vmatpush1.msra.mxu0 0.0
  %731 = vmatprep.subr.mxu0 0.0
  %732 = vmatpush1.msra.mxu0 0.0
  %733 = vmatprep.subr.mxu0 0.0
  %734 = vmatpush1.msra.mxu0 0.0
  %735 = vmatprep.subr.mxu0 0.0
  %736 = vmatpush1.msra.mxu0 0.0
  %737 = vmatprep.mubr.f32.mxu0 0.0
  %738 = vmatmul.mubr.f32.gmra.mrb[0].mxu0 %v668
  %v739 = vpop.f32.mrb[0].mxu0
  %v740 = vadd.f32 %v53, %v739
  %v741 = vpop.f32.mrb[0].mxu0
  %742 = vmatprep.mubr.f32.mxu0 0.0
  %743 = vmatmul.mubr.f32.gmra.mrb[0].mxu0 %v671
  %v744 = vpop.f32.mrb[0].mxu0
  %v745 = vadd.f32 %v53, %v744
  %v746 = vpop.f32.mrb[0].mxu0
  %747 = vdwg.mxu0
  %s748 = scalar_lea.vmem [#allocation2], 96
  %749 = vst [vmem:[%s748] sm:$0xff] %v740
  %750 = vst [vmem:[%s748 + $0x8] sm:$0xff] %v745
  %v751 = vld [vmem:[%s0] sm:$0xff]
  %v752 = vld [vmem:[%s0 + $0x10] sm:$0xff]
  %755 = vrot.lane.b32.xlu0 %v751, 16
  %v756 = vpop.permute.xlu0 %755
  %757 = vrot.lane.b32.xlu0 %v752, 16
  %v758 = vpop.permute.xlu0 %757
  %v761 = vsel %vm46, %v756, %v751
  %v762 = vsel %vm46, %v758, %v752
  %v764 = vsel %vm55, %v761, 0
  %v767 = vsel %vm55, %v762, 0
  %769 = vmatprep.subr.mxu0 0.0
  %770 = vmatpush1.msra.mxu0 %v29
  %771 = vmatprep.subr.mxu0 0.0
  %772 = vmatpush1.msra.mxu0 %v30
  %773 = vmatprep.subr.mxu0 0.0
  %774 = vmatpush1.msra.mxu0 %v31
  %775 = vmatprep.subr.mxu0 0.0
  %776 = vmatpush1.msra.mxu0 %v32
  %777 = vmatprep.subr.mxu0 0.0
  %778 = vmatpush1.msra.mxu0 0.0
  %779 = vmatprep.subr.mxu0 0.0
  %780 = vmatpush1.msra.mxu0 0.0
  %781 = vmatprep.subr.mxu0 0.0
  %782 = vmatpush1.msra.mxu0 0.0
  %783 = vmatprep.subr.mxu0 0.0
  %784 = vmatpush1.msra.mxu0 0.0
  %785 = vmatprep.subr.mxu0 0.0
  %786 = vmatpush1.msra.mxu0 0.0
  %787 = vmatprep.subr.mxu0 0.0
  %788 = vmatpush1.msra.mxu0 0.0
  %789 = vmatprep.subr.mxu0 0.0
  %790 = vmatpush1.msra.mxu0 0.0
  %791 = vmatprep.subr.mxu0 0.0
  %792 = vmatpush1.msra.mxu0 0.0
  %793 = vmatprep.subr.mxu0 0.0
  %794 = vmatpush1.msra.mxu0 0.0
  %795 = vmatprep.subr.mxu0 0.0
  %796 = vmatpush1.msra.mxu0 0.0
  %797 = vmatprep.subr.mxu0 0.0
  %798 = vmatpush1.msra.mxu0 0.0
  %799 = vmatprep.subr.mxu0 0.0
  %800 = vmatpush1.msra.mxu0 0.0
  %801 = vmatprep.subr.mxu0 0.0
  %802 = vmatpush1.msra.mxu0 0.0
  %803 = vmatprep.subr.mxu0 0.0
  %804 = vmatpush1.msra.mxu0 0.0
  %805 = vmatprep.subr.mxu0 0.0
  %806 = vmatpush1.msra.mxu0 0.0
  %807 = vmatprep.subr.mxu0 0.0
  %808 = vmatpush1.msra.mxu0 0.0
  %809 = vmatprep.subr.mxu0 0.0
  %810 = vmatpush1.msra.mxu0 0.0
  %811 = vmatprep.subr.mxu0 0.0
  %812 = vmatpush1.msra.mxu0 0.0
  %813 = vmatprep.subr.mxu0 0.0
  %814 = vmatpush1.msra.mxu0 0.0
  %815 = vmatprep.subr.mxu0 0.0
  %816 = vmatpush1.msra.mxu0 0.0
  %817 = vmatprep.subr.mxu0 0.0
  %818 = vmatpush1.msra.mxu0 0.0
  %819 = vmatprep.subr.mxu0 0.0
  %820 = vmatpush1.msra.mxu0 0.0
  %821 = vmatprep.subr.mxu0 0.0
  %822 = vmatpush1.msra.mxu0 0.0
  %823 = vmatprep.subr.mxu0 0.0
  %824 = vmatpush1.msra.mxu0 0.0
  %825 = vmatprep.subr.mxu0 0.0
  %826 = vmatpush1.msra.mxu0 0.0
  %827 = vmatprep.subr.mxu0 0.0
  %828 = vmatpush1.msra.mxu0 0.0
  %829 = vmatprep.subr.mxu0 0.0
  %830 = vmatpush1.msra.mxu0 0.0
  %831 = vmatprep.subr.mxu0 0.0
  %832 = vmatpush1.msra.mxu0 0.0
  %833 = vmatprep.mubr.f32.mxu0 0.0
  %834 = vmatmul.mubr.f32.gmra.mrb[0].mxu0 %v764
  %v835 = vpop.f32.mrb[0].mxu0
  %v836 = vadd.f32 %v53, %v835
  %v837 = vpop.f32.mrb[0].mxu0
  %838 = vmatprep.mubr.f32.mxu0 0.0
  %839 = vmatmul.mubr.f32.gmra.mrb[0].mxu0 %v767
  %v840 = vpop.f32.mrb[0].mxu0
  %v841 = vadd.f32 %v53, %v840
  %v842 = vpop.f32.mrb[0].mxu0
  %843 = vdwg.mxu0
  %s844 = scalar_lea.vmem [#allocation2], 112
  %845 = vst [vmem:[%s844] sm:$0xff] %v836
  %846 = vst [vmem:[%s844 + $0x8] sm:$0xff] %v841
  %v847 = vld [vmem:[%s0 + $0x8] sm:$0xff]
  %v848 = vld [vmem:[%s0 + $0x18] sm:$0xff]
  %v849 = vld [vmem:[%s0] sm:$0xff]
  %v850 = vld [vmem:[%s0 + $0x10] sm:$0xff]
  %853 = vrot.lane.b32.xlu0 %v849, 16
  %v854 = vpop.permute.xlu0 %853
  %855 = vrot.lane.b32.xlu0 %v850, 16
  %v856 = vpop.permute.xlu0 %855
  %v859 = vsel %vm46, %v847, %v854
  %v860 = vsel %vm46, %v848, %v856
  %v862 = vsel %vm55, %v859, 0
  %v865 = vsel %vm55, %v860, 0
  %867 = vmatprep.subr.mxu0 0.0
  %868 = vmatpush1.msra.mxu0 %v29
  %869 = vmatprep.subr.mxu0 0.0
  %870 = vmatpush1.msra.mxu0 %v30
  %871 = vmatprep.subr.mxu0 0.0
  %872 = vmatpush1.msra.mxu0 %v31
  %873 = vmatprep.subr.mxu0 0.0
  %874 = vmatpush1.msra.mxu0 %v32
  %875 = vmatprep.subr.mxu0 0.0
  %876 = vmatpush1.msra.mxu0 0.0
  %877 = vmatprep.subr.mxu0 0.0
  %878 = vmatpush1.msra.mxu0 0.0
  %879 = vmatprep.subr.mxu0 0.0
  %880 = vmatpush1.msra.mxu0 0.0
  %881 = vmatprep.subr.mxu0 0.0
  %882 = vmatpush1.msra.mxu0 0.0
  %883 = vmatprep.subr.mxu0 0.0
  %884 = vmatpush1.msra.mxu0 0.0
  %885 = vmatprep.subr.mxu0 0.0
  %886 = vmatpush1.msra.mxu0 0.0
  %887 = vmatprep.subr.mxu0 0.0
  %888 = vmatpush1.msra.mxu0 0.0
  %889 = vmatprep.subr.mxu0 0.0
  %890 = vmatpush1.msra.mxu0 0.0
  %891 = vmatprep.subr.mxu0 0.0
  %892 = vmatpush1.msra.mxu0 0.0
  %893 = vmatprep.subr.mxu0 0.0
  %894 = vmatpush1.msra.mxu0 0.0
  %895 = vmatprep.subr.mxu0 0.0
  %896 = vmatpush1.msra.mxu0 0.0
  %897 = vmatprep.subr.mxu0 0.0
  %898 = vmatpush1.msra.mxu0 0.0
  %899 = vmatprep.subr.mxu0 0.0
  %900 = vmatpush1.msra.mxu0 0.0
  %901 = vmatprep.subr.mxu0 0.0
  %902 = vmatpush1.msra.mxu0 0.0
  %903 = vmatprep.subr.mxu0 0.0
  %904 = vmatpush1.msra.mxu0 0.0
  %905 = vmatprep.subr.mxu0 0.0
  %906 = vmatpush1.msra.mxu0 0.0
  %907 = vmatprep.subr.mxu0 0.0
  %908 = vmatpush1.msra.mxu0 0.0
  %909 = vmatprep.subr.mxu0 0.0
  %910 = vmatpush1.msra.mxu0 0.0
  %911 = vmatprep.subr.mxu0 0.0
  %912 = vmatpush1.msra.mxu0 0.0
  %913 = vmatprep.subr.mxu0 0.0
  %914 = vmatpush1.msra.mxu0 0.0
  %915 = vmatprep.subr.mxu0 0.0
  %916 = vmatpush1.msra.mxu0 0.0
  %917 = vmatprep.subr.mxu0 0.0
  %918 = vmatpush1.msra.mxu0 0.0
  %919 = vmatprep.subr.mxu0 0.0
  %920 = vmatpush1.msra.mxu0 0.0
  %921 = vmatprep.subr.mxu0 0.0
  %922 = vmatpush1.msra.mxu0 0.0
  %923 = vmatprep.subr.mxu0 0.0
  %924 = vmatpush1.msra.mxu0 0.0
  %925 = vmatprep.subr.mxu0 0.0
  %926 = vmatpush1.msra.mxu0 0.0
  %927 = vmatprep.subr.mxu0 0.0
  %928 = vmatpush1.msra.mxu0 0.0
  %929 = vmatprep.subr.mxu0 0.0
  %930 = vmatpush1.msra.mxu0 0.0
  %931 = vmatprep.mubr.f32.mxu0 0.0
  %932 = vmatmul.mubr.f32.gmra.mrb[0].mxu0 %v862
  %v933 = vpop.f32.mrb[0].mxu0
  %v934 = vadd.f32 %v53, %v933
  %v935 = vpop.f32.mrb[0].mxu0
  %936 = vmatprep.mubr.f32.mxu0 0.0
  %937 = vmatmul.mubr.f32.gmra.mrb[0].mxu0 %v865
  %v938 = vpop.f32.mrb[0].mxu0
  %v939 = vadd.f32 %v53, %v938
  %v940 = vpop.f32.mrb[0].mxu0
  %941 = vdwg.mxu0
  %s942 = scalar_lea.vmem [#allocation2], 128
  %943 = vst [vmem:[%s942] sm:$0xff] %v934
  %944 = vst [vmem:[%s942 + $0x8] sm:$0xff] %v939
  %v945 = vld [vmem:[%s3] sm:$0xff]
  %v946 = vld [vmem:[%s3 + $0x8] sm:$0xff]
  %v947 = vld [vmem:[%s3 + $0x10] sm:$0xff]
  %v948 = vld [vmem:[%s3 + $0x18] sm:$0xff]
  loop: start=0, step=1, limit=9
  $region34: #{dprnn_forward.9} parent=0 // loop_pre_header
    _
  $region35: #{dprnn_forward.9} parent=0 // loop_header
    %s950 = sphi 0, %s954
    %p951 = scmp.ge.s32.totalorder %s950, 9
    %v955 = vphi 0.0, %v1096
    %v956 = vphi 0.0, %v1097
    %v957 = vphi 0.0, %v1084
    %v958 = vphi 0.0, %v1085
  $region36: #{dprnn_forward.9} parent=0 // loop_header_branch
    %953 = sbr.rel (%p951) target = $region40
  $region37: #{dprnn_forward.9} parent=0 // loop_body
    %s959 = smul.u32 %s950, 16
    %s960 = scalar_lea.vmem [#allocation2], %s959
    %v961 = vld [vmem:[%s960] sm:$0xff]
    %v962 = vld [vmem:[%s960 + $0x8] sm:$0xff]
    %965 = vrot.lane.b32.xlu0 %v955, 32
    %v966 = vpop.permute.xlu0 %965
    %967 = vrot.lane.b32.xlu0 %v956, 32
    %v968 = vpop.permute.xlu0 %967
    %v969 = vsel %vm55, %v966, 0
    %v971 = vsel %vm55, %v968, 0
    %973 = vmatprep.subr.mxu0 0.0
    %974 = vmatpush1.msra.mxu0 %v945
    %975 = vmatprep.subr.mxu0 0.0
    %976 = vmatpush1.msra.mxu0 %v946
    %977 = vmatprep.subr.mxu0 0.0
    %978 = vmatpush1.msra.mxu0 %v947
    %979 = vmatprep.subr.mxu0 0.0
    %980 = vmatpush1.msra.mxu0 %v948
    %981 = vmatprep.subr.mxu0 0.0
    %982 = vmatpush1.msra.mxu0 0.0
    %983 = vmatprep.subr.mxu0 0.0
    %984 = vmatpush1.msra.mxu0 0.0
    %985 = vmatprep.subr.mxu0 0.0
    %986 = vmatpush1.msra.mxu0 0.0
    %987 = vmatprep.subr.mxu0 0.0
    %988 = vmatpush1.msra.mxu0 0.0
    %989 = vmatprep.subr.mxu0 0.0
    %990 = vmatpush1.msra.mxu0 0.0
    %991 = vmatprep.subr.mxu0 0.0
    %992 = vmatpush1.msra.mxu0 0.0
    %993 = vmatprep.subr.mxu0 0.0
    %994 = vmatpush1.msra.mxu0 0.0
    %995 = vmatprep.subr.mxu0 0.0
    %996 = vmatpush1.msra.mxu0 0.0
    %997 = vmatprep.subr.mxu0 0.0
    %998 = vmatpush1.msra.mxu0 0.0
    %999 = vmatprep.subr.mxu0 0.0
    %1000 = vmatpush1.msra.mxu0 0.0
    %1001 = vmatprep.subr.mxu0 0.0
    %1002 = vmatpush1.msra.mxu0 0.0
    %1003 = vmatprep.subr.mxu0 0.0
    %1004 = vmatpush1.msra.mxu0 0.0
    %1005 = vmatprep.subr.mxu0 0.0
    %1006 = vmatpush1.msra.mxu0 0.0
    %1007 = vmatprep.subr.mxu0 0.0
    %1008 = vmatpush1.msra.mxu0 0.0
    %1009 = vmatprep.subr.mxu0 0.0
    %1010 = vmatpush1.msra.mxu0 0.0
    %1011 = vmatprep.subr.mxu0 0.0
    %1012 = vmatpush1.msra.mxu0 0.0
    %1013 = vmatprep.subr.mxu0 0.0
    %1014 = vmatpush1.msra.mxu0 0.0
    %1015 = vmatprep.subr.mxu0 0.0
    %1016 = vmatpush1.msra.mxu0 0.0
    %1017 = vmatprep.subr.mxu0 0.0
    %1018 = vmatpush1.msra.mxu0 0.0
    %1019 = vmatprep.subr.mxu0 0.0
    %1020 = vmatpush1.msra.mxu0 0.0
    %1021 = vmatprep.subr.mxu0 0.0
    %1022 = vmatpush1.msra.mxu0 0.0
    %1023 = vmatprep.subr.mxu0 0.0
    %1024 = vmatpush1.msra.mxu0 0.0
    %1025 = vmatprep.subr.mxu0 0.0
    %1026 = vmatpush1.msra.mxu0 0.0
    %1027 = vmatprep.subr.mxu0 0.0
    %1028 = vmatpush1.msra.mxu0 0.0
    %1029 = vmatprep.subr.mxu0 0.0
    %1030 = vmatpush1.msra.mxu0 0.0
    %1031 = vmatprep.subr.mxu0 0.0
    %1032 = vmatpush1.msra.mxu0 0.0
    %1033 = vmatprep.subr.mxu0 0.0
    %1034 = vmatpush1.msra.mxu0 0.0
    %1035 = vmatprep.subr.mxu0 0.0
    %1036 = vmatpush1.msra.mxu0 0.0
    %1037 = vmatprep.mubr.f32.mxu0 0.0
    %1038 = vmatmul.mubr.f32.gmra.mrb[0].mxu0 %v969
    %v1039 = vpop.f32.mrb[0].mxu0
    %v1040 = vadd.f32 0.0, %v1039
    %v1041 = vpop.f32.mrb[0].mxu0
    %1042 = vmatprep.mubr.f32.mxu0 0.0
    %1043 = vmatmul.mubr.f32.gmra.mrb[0].mxu0 %v971
    %v1044 = vpop.f32.mrb[0].mxu0
    %v1045 = vadd.f32 0.0, %v1044
    %v1046 = vpop.f32.mrb[0].mxu0
    %1047 = vdwg.mxu0
    %v1048 = vadd.f32 %v961, %v1040
    %v1049 = vadd.f32 %v962, %v1045
    %v1050 = vxor.u32 %v1048, 2147483648
    %v1051 = vxor.u32 %v1049, 2147483648
    %v1052 = vmul.f32 %v1050, 1.442695
    %v1053 = vpow.pop %v1052
    %v1054 = vmul.f32 %v1051, 1.442695
    %v1055 = vpow.pop %v1054
    %v1056 = vadd.f32 %v1053, 1.0
    %v1057 = vadd.f32 %v1055, 1.0
    %v1058 = vrcp.pop %v1056
    %v1059 = vmul.f32 1.0, %v1058
    %v1060 = vrcp.pop %v1057
    %v1061 = vmul.f32 1.0, %v1060
    %v1062 = vtanh.pop %v1048
    %v1063 = vtanh.pop %v1049
    %v1064 = vmul.f32 %v1059, %v957
    %v1065 = vmul.f32 %v1061, %v958
    %1068 = vrot.lane.b32.xlu0 %v1062, 64
    %v1069 = vpop.permute.xlu0 %1068
    %1070 = vrot.lane.b32.xlu0 %v1063, 64
    %v1071 = vpop.permute.xlu0 %1070
    %v1074 = vmul.f32 %v1059, %v1069
    %v1075 = vmul.f32 %v1061, %v1071
    %1078 = vrot.lane.b32.xlu0 %v1074, 32
    %v1079 = vpop.permute.xlu0 %1078
    %1080 = vrot.lane.b32.xlu0 %v1075, 32
    %v1081 = vpop.permute.xlu0 %1080
    %v1084 = vadd.f32 %v1064, %v1079
    %v1085 = vadd.f32 %v1065, %v1081
    %v1086 = vtanh.pop %v1084
    %v1087 = vtanh.pop %v1085
    %1090 = vrot.lane.b32.xlu0 %v1086, 64
    %v1091 = vpop.permute.xlu0 %1090
    %1092 = vrot.lane.b32.xlu0 %v1087, 64
    %v1093 = vpop.permute.xlu0 %1092
    %v1096 = vmul.f32 %v1059, %v1091
    %v1097 = vmul.f32 %v1061, %v1093
    %1100 = vrot.lane.b32.xlu0 %v1096, 32
    %v1101 = vpop.permute.xlu0 %1100
    %1102 = vrot.lane.b32.xlu0 %v1097, 32
    %v1103 = vpop.permute.xlu0 %1102
    %s1106 = scalar_lea.vmem [#allocation3], %s959
    %1107 = vst.msk [vmem:[%s1106] sm:$0xff] %vm55, %v1101
    %1108 = vst.msk [vmem:[%s1106 + $0x8] sm:$0xff] %vm55, %v1103
  $region38: #{dprnn_forward.9} parent=0 // loop_footer
    %s954 = sadd.s32 1, %s950
  $region39: #{dprnn_forward.9} parent=0 // loop_footer_branch
    %949 = sbr.rel target = $region35
  $region40: #{dprnn_forward.9} parent=0 // loop_exit
    _
  %v1109 = vld [vmem:[%s4] sm:$0xff]
  %v1110 = vld [vmem:[%s4 + $0x8] sm:$0xff]
  %v1111 = vld [vmem:[%s4 + $0x10] sm:$0xff]
  %v1112 = vld [vmem:[%s4 + $0x18] sm:$0xff]
  %v1113 = vld [vmem:[%s5] sm:$0x1]
  %v1114 = vld [vmem:[%s6] sm:$0x1]
  %v1115 = vld [vmem:[%s7] sm:$0x1]
  %v1116 = vld [vmem:[#allocation3] sm:$0xff]
  %v1117 = vld [vmem:[#allocation3 + $0x8] sm:$0xff]
  %s1118 = scalar_lea.vmem [#allocation3], 128
  %v1119 = vld [vmem:[%s1118] sm:$0xff]
  %v1120 = vld [vmem:[%s1118 + $0x8] sm:$0xff]
  %v1121 = vsel %vm46, %v1116, %v1119
  %v1122 = vsel %vm46, %v1117, %v1120
  %v1124 = vlaneseq
  %v1125 = vshrl.u32 %v1124, 7
  %v1126 = vsub.s32 0, %v1125
  %v1127 = vrot.slane %v1113, %v1126
  %v1130 = vsel %vm55, %v1121, 0
  %v1133 = vsel %vm55, %v1122, 0
  %1135 = vmatprep.subr.mxu0 0.0
  %1136 = vmatpush1.msra.mxu0 %v1109
  %1137 = vmatprep.subr.mxu0 0.0
  %1138 = vmatpush1.msra.mxu0 %v1110
  %1139 = vmatprep.subr.mxu0 0.0
  %1140 = vmatpush1.msra.mxu0 %v1111
  %1141 = vmatprep.subr.mxu0 0.0
  %1142 = vmatpush1.msra.mxu0 %v1112
  %1143 = vmatprep.subr.mxu0 0.0
  %1144 = vmatpush1.msra.mxu0 0.0
  %1145 = vmatprep.subr.mxu0 0.0
  %1146 = vmatpush1.msra.mxu0 0.0
  %1147 = vmatprep.subr.mxu0 0.0
  %1148 = vmatpush1.msra.mxu0 0.0
  %1149 = vmatprep.subr.mxu0 0.0
  %1150 = vmatpush1.msra.mxu0 0.0
  %1151 = vmatprep.subr.mxu0 0.0
  %1152 = vmatpush1.msra.mxu0 0.0
  %1153 = vmatprep.subr.mxu0 0.0
  %1154 = vmatpush1.msra.mxu0 0.0
  %1155 = vmatprep.subr.mxu0 0.0
  %1156 = vmatpush1.msra.mxu0 0.0
  %1157 = vmatprep.subr.mxu0 0.0
  %1158 = vmatpush1.msra.mxu0 0.0
  %1159 = vmatprep.subr.mxu0 0.0
  %1160 = vmatpush1.msra.mxu0 0.0
  %1161 = vmatprep.subr.mxu0 0.0
  %1162 = vmatpush1.msra.mxu0 0.0
  %1163 = vmatprep.subr.mxu0 0.0
  %1164 = vmatpush1.msra.mxu0 0.0
  %1165 = vmatprep.subr.mxu0 0.0
  %1166 = vmatpush1.msra.mxu0 0.0
  %1167 = vmatprep.subr.mxu0 0.0
  %1168 = vmatpush1.msra.mxu0 0.0
  %1169 = vmatprep.subr.mxu0 0.0
  %1170 = vmatpush1.msra.mxu0 0.0
  %1171 = vmatprep.subr.mxu0 0.0
  %1172 = vmatpush1.msra.mxu0 0.0
  %1173 = vmatprep.subr.mxu0 0.0
  %1174 = vmatpush1.msra.mxu0 0.0
  %1175 = vmatprep.subr.mxu0 0.0
  %1176 = vmatpush1.msra.mxu0 0.0
  %1177 = vmatprep.subr.mxu0 0.0
  %1178 = vmatpush1.msra.mxu0 0.0
  %1179 = vmatprep.subr.mxu0 0.0
  %1180 = vmatpush1.msra.mxu0 0.0
  %1181 = vmatprep.subr.mxu0 0.0
  %1182 = vmatpush1.msra.mxu0 0.0
  %1183 = vmatprep.subr.mxu0 0.0
  %1184 = vmatpush1.msra.mxu0 0.0
  %1185 = vmatprep.subr.mxu0 0.0
  %1186 = vmatpush1.msra.mxu0 0.0
  %1187 = vmatprep.subr.mxu0 0.0
  %1188 = vmatpush1.msra.mxu0 0.0
  %1189 = vmatprep.subr.mxu0 0.0
  %1190 = vmatpush1.msra.mxu0 0.0
  %1191 = vmatprep.subr.mxu0 0.0
  %1192 = vmatpush1.msra.mxu0 0.0
  %1193 = vmatprep.subr.mxu0 0.0
  %1194 = vmatpush1.msra.mxu0 0.0
  %1195 = vmatprep.subr.mxu0 0.0
  %1196 = vmatpush1.msra.mxu0 0.0
  %1197 = vmatprep.subr.mxu0 0.0
  %1198 = vmatpush1.msra.mxu0 0.0
  %1199 = vmatprep.mubr.f32.mxu0 0.0
  %1200 = vmatmul.mubr.f32.gmra.mrb[0].mxu0 %v1130
  %v1201 = vpop.f32.mrb[0].mxu0
  %v1202 = vadd.f32 %v1127, %v1201
  %v1203 = vpop.f32.mrb[0].mxu0
  %1204 = vmatprep.mubr.f32.mxu0 0.0
  %1205 = vmatmul.mubr.f32.gmra.mrb[0].mxu0 %v1133
  %v1206 = vpop.f32.mrb[0].mxu0
  %v1207 = vadd.f32 %v1127, %v1206
  %v1208 = vpop.f32.mrb[0].mxu0
  %1209 = vdwg.mxu0
  %v1210 = vsel %vm46, %v1202, 0.0
  %1211 = vadd.xlane.f32.xlu0 %v1210
  %v1212 = vpop.xlane.xlu0 %1211
  %v1213 = vsel %vm46, %v1207, 0.0
  %1214 = vadd.xlane.f32.xlu0 %v1213
  %v1215 = vpop.xlane.xlu0 %1214
  %v1216 = vrcp.pop 16.0
  %v1217 = vmul.f32 %v1212, %v1216
  %v1218 = vmul.f32 %v1215, %v1216
  %v1219 = vsub.f32 %v1202, %v1217
  %v1220 = vsub.f32 %v1207, %v1218
  %v1221 = vmul.f32 %v1219, %v1219
  %v1222 = vmul.f32 %v1220, %v1220
  %v1223 = vsel %vm46, %v1221, 0.0
  %1224 = vadd.xlane.f32.xlu0 %v1223
  %v1225 = vpop.xlane.xlu0 %1224
  %v1226 = vsel %vm46, %v1222, 0.0
  %1227 = vadd.xlane.f32.xlu0 %v1226
  %v1228 = vpop.xlane.xlu0 %1227
  %v1229 = vmul.f32 %v1225, %v1216
  %v1230 = vmul.f32 %v1228, %v1216
  %v1231 = vadd.f32 %v1229, 1e-05
  %v1232 = vadd.f32 %v1230, 1e-05
  %v1233 = vrsqrt.pop %v1231
  %v1234 = vrsqrt.pop %v1232
  %v1235 = vmul.f32 %v1219, %v1233
  %v1236 = vmul.f32 %v1220, %v1234
  %v1238 = vlaneseq
  %v1239 = vshrl.u32 %v1238, 7
  %v1240 = vsub.s32 0, %v1239
  %v1241 = vrot.slane %v1114, %v1240
  %v1243 = vmul.f32 %v1235, %v1241
  %v1244 = vmul.f32 %v1236, %v1241
  %v1246 = vlaneseq
  %v1247 = vshrl.u32 %v1246, 7
  %v1248 = vsub.s32 0, %v1247
  %v1249 = vrot.slane %v1115, %v1248
  %v1251 = vadd.f32 %v1243, %v1249
  %v1252 = vadd.f32 %v1244, %v1249
  %v1253 = vld [vmem:[%s0] sm:$0xff]
  %v1254 = vld [vmem:[%s0 + $0x10] sm:$0xff]
  %v1255 = vadd.f32 %v1251, %v1253
  %v1256 = vadd.f32 %v1252, %v1254
  %s1257 = scalar_lea.vmem [#allocation3], 16
  %v1258 = vld [vmem:[%s1257] sm:$0xff]
  %v1259 = vld [vmem:[%s1257 + $0x8] sm:$0xff]
  %s1260 = scalar_lea.vmem [#allocation3], 112
  %v1261 = vld [vmem:[%s1260] sm:$0xff]
  %v1262 = vld [vmem:[%s1260 + $0x8] sm:$0xff]
  %v1263 = vsel %vm46, %v1258, %v1261
  %v1264 = vsel %vm46, %v1259, %v1262
  %v1266 = vsel %vm55, %v1263, 0
  %v1269 = vsel %vm55, %v1264, 0
  %1271 = vmatprep.subr.mxu0 0.0
  %1272 = vmatpush1.msra.mxu0 %v1109
  %1273 = vmatprep.subr.mxu0 0.0
  %1274 = vmatpush1.msra.mxu0 %v1110
  %1275 = vmatprep.subr.mxu0 0.0
  %1276 = vmatpush1.msra.mxu0 %v1111
  %1277 = vmatprep.subr.mxu0 0.0
  %1278 = vmatpush1.msra.mxu0 %v1112
  %1279 = vmatprep.subr.mxu0 0.0
  %1280 = vmatpush1.msra.mxu0 0.0
  %1281 = vmatprep.subr.mxu0 0.0
  %1282 = vmatpush1.msra.mxu0 0.0
  %1283 = vmatprep.subr.mxu0 0.0
  %1284 = vmatpush1.msra.mxu0 0.0
  %1285 = vmatprep.subr.mxu0 0.0
  %1286 = vmatpush1.msra.mxu0 0.0
  %1287 = vmatprep.subr.mxu0 0.0
  %1288 = vmatpush1.msra.mxu0 0.0
  %1289 = vmatprep.subr.mxu0 0.0
  %1290 = vmatpush1.msra.mxu0 0.0
  %1291 = vmatprep.subr.mxu0 0.0
  %1292 = vmatpush1.msra.mxu0 0.0
  %1293 = vmatprep.subr.mxu0 0.0
  %1294 = vmatpush1.msra.mxu0 0.0
  %1295 = vmatprep.subr.mxu0 0.0
  %1296 = vmatpush1.msra.mxu0 0.0
  %1297 = vmatprep.subr.mxu0 0.0
  %1298 = vmatpush1.msra.mxu0 0.0
  %1299 = vmatprep.subr.mxu0 0.0
  %1300 = vmatpush1.msra.mxu0 0.0
  %1301 = vmatprep.subr.mxu0 0.0
  %1302 = vmatpush1.msra.mxu0 0.0
  %1303 = vmatprep.subr.mxu0 0.0
  %1304 = vmatpush1.msra.mxu0 0.0
  %1305 = vmatprep.subr.mxu0 0.0
  %1306 = vmatpush1.msra.mxu0 0.0
  %1307 = vmatprep.subr.mxu0 0.0
  %1308 = vmatpush1.msra.mxu0 0.0
  %1309 = vmatprep.subr.mxu0 0.0
  %1310 = vmatpush1.msra.mxu0 0.0
  %1311 = vmatprep.subr.mxu0 0.0
  %1312 = vmatpush1.msra.mxu0 0.0
  %1313 = vmatprep.subr.mxu0 0.0
  %1314 = vmatpush1.msra.mxu0 0.0
  %1315 = vmatprep.subr.mxu0 0.0
  %1316 = vmatpush1.msra.mxu0 0.0
  %1317 = vmatprep.subr.mxu0 0.0
  %1318 = vmatpush1.msra.mxu0 0.0
  %1319 = vmatprep.subr.mxu0 0.0
  %1320 = vmatpush1.msra.mxu0 0.0
  %1321 = vmatprep.subr.mxu0 0.0
  %1322 = vmatpush1.msra.mxu0 0.0
  %1323 = vmatprep.subr.mxu0 0.0
  %1324 = vmatpush1.msra.mxu0 0.0
  %1325 = vmatprep.subr.mxu0 0.0
  %1326 = vmatpush1.msra.mxu0 0.0
  %1327 = vmatprep.subr.mxu0 0.0
  %1328 = vmatpush1.msra.mxu0 0.0
  %1329 = vmatprep.subr.mxu0 0.0
  %1330 = vmatpush1.msra.mxu0 0.0
  %1331 = vmatprep.subr.mxu0 0.0
  %1332 = vmatpush1.msra.mxu0 0.0
  %1333 = vmatprep.subr.mxu0 0.0
  %1334 = vmatpush1.msra.mxu0 0.0
  %1335 = vmatprep.mubr.f32.mxu0 0.0
  %1336 = vmatmul.mubr.f32.gmra.mrb[0].mxu0 %v1266
  %v1337 = vpop.f32.mrb[0].mxu0
  %v1338 = vadd.f32 %v1127, %v1337
  %v1339 = vpop.f32.mrb[0].mxu0
  %1340 = vmatprep.mubr.f32.mxu0 0.0
  %1341 = vmatmul.mubr.f32.gmra.mrb[0].mxu0 %v1269
  %v1342 = vpop.f32.mrb[0].mxu0
  %v1343 = vadd.f32 %v1127, %v1342
  %v1344 = vpop.f32.mrb[0].mxu0
  %1345 = vdwg.mxu0
  %v1346 = vsel %vm46, %v1338, 0.0
  %1347 = vadd.xlane.f32.xlu0 %v1346
  %v1348 = vpop.xlane.xlu0 %1347
  %v1349 = vsel %vm46, %v1343, 0.0
  %1350 = vadd.xlane.f32.xlu0 %v1349
  %v1351 = vpop.xlane.xlu0 %1350
  %v1352 = vmul.f32 %v1348, %v1216
  %v1353 = vmul.f32 %v1351, %v1216
  %v1354 = vsub.f32 %v1338, %v1352
  %v1355 = vsub.f32 %v1343, %v1353
  %v1356 = vmul.f32 %v1354, %v1354
  %v1357 = vmul.f32 %v1355, %v1355
  %v1358 = vsel %vm46, %v1356, 0.0
  %1359 = vadd.xlane.f32.xlu0 %v1358
  %v1360 = vpop.xlane.xlu0 %1359
  %v1361 = vsel %vm46, %v1357, 0.0
  %1362 = vadd.xlane.f32.xlu0 %v1361
  %v1363 = vpop.xlane.xlu0 %1362
  %v1364 = vmul.f32 %v1360, %v1216
  %v1365 = vmul.f32 %v1363, %v1216
  %v1366 = vadd.f32 %v1364, 1e-05
  %v1367 = vadd.f32 %v1365, 1e-05
  %v1368 = vrsqrt.pop %v1366
  %v1369 = vrsqrt.pop %v1367
  %v1370 = vmul.f32 %v1354, %v1368
  %v1371 = vmul.f32 %v1355, %v1369
  %v1372 = vmul.f32 %v1370, %v1241
  %v1373 = vmul.f32 %v1371, %v1241
  %v1374 = vadd.f32 %v1372, %v1249
  %v1375 = vadd.f32 %v1373, %v1249
  %1378 = vrot.lane.b32.xlu0 %v1253, 112
  %v1379 = vpop.permute.xlu0 %1378
  %1380 = vrot.lane.b32.xlu0 %v1254, 112
  %v1381 = vpop.permute.xlu0 %1380
  %v1384 = vadd.f32 %v1374, %v1379
  %v1385 = vadd.f32 %v1375, %v1381
  %s1386 = scalar_lea.vmem [#allocation3], 32
  %v1387 = vld [vmem:[%s1386] sm:$0xff]
  %v1388 = vld [vmem:[%s1386 + $0x8] sm:$0xff]
  %s1389 = scalar_lea.vmem [#allocation3], 96
  %v1390 = vld [vmem:[%s1389] sm:$0xff]
  %v1391 = vld [vmem:[%s1389 + $0x8] sm:$0xff]
  %v1392 = vsel %vm46, %v1387, %v1390
  %v1393 = vsel %vm46, %v1388, %v1391
  %v1395 = vsel %vm55, %v1392, 0
  %v1398 = vsel %vm55, %v1393, 0
  %1400 = vmatprep.subr.mxu0 0.0
  %1401 = vmatpush1.msra.mxu0 %v1109
  %1402 = vmatprep.subr.mxu0 0.0
  %1403 = vmatpush1.msra.mxu0 %v1110
  %1404 = vmatprep.subr.mxu0 0.0
  %1405 = vmatpush1.msra.mxu0 %v1111
  %1406 = vmatprep.subr.mxu0 0.0
  %1407 = vmatpush1.msra.mxu0 %v1112
  %1408 = vmatprep.subr.mxu0 0.0
  %1409 = vmatpush1.msra.mxu0 0.0
  %1410 = vmatprep.subr.mxu0 0.0
  %1411 = vmatpush1.msra.mxu0 0.0
  %1412 = vmatprep.subr.mxu0 0.0
  %1413 = vmatpush1.msra.mxu0 0.0
  %1414 = vmatprep.subr.mxu0 0.0
  %1415 = vmatpush1.msra.mxu0 0.0
  %1416 = vmatprep.subr.mxu0 0.0
  %1417 = vmatpush1.msra.mxu0 0.0
  %1418 = vmatprep.subr.mxu0 0.0
  %1419 = vmatpush1.msra.mxu0 0.0
  %1420 = vmatprep.subr.mxu0 0.0
  %1421 = vmatpush1.msra.mxu0 0.0
  %1422 = vmatprep.subr.mxu0 0.0
  %1423 = vmatpush1.msra.mxu0 0.0
  %1424 = vmatprep.subr.mxu0 0.0
  %1425 = vmatpush1.msra.mxu0 0.0
  %1426 = vmatprep.subr.mxu0 0.0
  %1427 = vmatpush1.msra.mxu0 0.0
  %1428 = vmatprep.subr.mxu0 0.0
  %1429 = vmatpush1.msra.mxu0 0.0
  %1430 = vmatprep.subr.mxu0 0.0
  %1431 = vmatpush1.msra.mxu0 0.0
  %1432 = vmatprep.subr.mxu0 0.0
  %1433 = vmatpush1.msra.mxu0 0.0
  %1434 = vmatprep.subr.mxu0 0.0
  %1435 = vmatpush1.msra.mxu0 0.0
  %1436 = vmatprep.subr.mxu0 0.0
  %1437 = vmatpush1.msra.mxu0 0.0
  %1438 = vmatprep.subr.mxu0 0.0
  %1439 = vmatpush1.msra.mxu0 0.0
  %1440 = vmatprep.subr.mxu0 0.0
  %1441 = vmatpush1.msra.mxu0 0.0
  %1442 = vmatprep.subr.mxu0 0.0
  %1443 = vmatpush1.msra.mxu0 0.0
  %1444 = vmatprep.subr.mxu0 0.0
  %1445 = vmatpush1.msra.mxu0 0.0
  %1446 = vmatprep.subr.mxu0 0.0
  %1447 = vmatpush1.msra.mxu0 0.0
  %1448 = vmatprep.subr.mxu0 0.0
  %1449 = vmatpush1.msra.mxu0 0.0
  %1450 = vmatprep.subr.mxu0 0.0
  %1451 = vmatpush1.msra.mxu0 0.0
  %1452 = vmatprep.subr.mxu0 0.0
  %1453 = vmatpush1.msra.mxu0 0.0
  %1454 = vmatprep.subr.mxu0 0.0
  %1455 = vmatpush1.msra.mxu0 0.0
  %1456 = vmatprep.subr.mxu0 0.0
  %1457 = vmatpush1.msra.mxu0 0.0
  %1458 = vmatprep.subr.mxu0 0.0
  %1459 = vmatpush1.msra.mxu0 0.0
  %1460 = vmatprep.subr.mxu0 0.0
  %1461 = vmatpush1.msra.mxu0 0.0
  %1462 = vmatprep.subr.mxu0 0.0
  %1463 = vmatpush1.msra.mxu0 0.0
  %1464 = vmatprep.mubr.f32.mxu0 0.0
  %1465 = vmatmul.mubr.f32.gmra.mrb[0].mxu0 %v1395
  %v1466 = vpop.f32.mrb[0].mxu0
  %v1467 = vadd.f32 %v1127, %v1466
  %v1468 = vpop.f32.mrb[0].mxu0
  %1469 = vmatprep.mubr.f32.mxu0 0.0
  %1470 = vmatmul.mubr.f32.gmra.mrb[0].mxu0 %v1398
  %v1471 = vpop.f32.mrb[0].mxu0
  %v1472 = vadd.f32 %v1127, %v1471
  %v1473 = vpop.f32.mrb[0].mxu0
  %1474 = vdwg.mxu0
  %v1475 = vsel %vm46, %v1467, 0.0
  %1476 = vadd.xlane.f32.xlu0 %v1475
  %v1477 = vpop.xlane.xlu0 %1476
  %v1478 = vsel %vm46, %v1472, 0.0
  %1479 = vadd.xlane.f32.xlu0 %v1478
  %v1480 = vpop.xlane.xlu0 %1479
  %v1481 = vmul.f32 %v1477, %v1216
  %v1482 = vmul.f32 %v1480, %v1216
  %v1483 = vsub.f32 %v1467, %v1481
  %v1484 = vsub.f32 %v1472, %v1482
  %v1485 = vmul.f32 %v1483, %v1483
  %v1486 = vmul.f32 %v1484, %v1484
  %v1487 = vsel %vm46, %v1485, 0.0
  %1488 = vadd.xlane.f32.xlu0 %v1487
  %v1489 = vpop.xlane.xlu0 %1488
  %v1490 = vsel %vm46, %v1486, 0.0
  %1491 = vadd.xlane.f32.xlu0 %v1490
  %v1492 = vpop.xlane.xlu0 %1491
  %v1493 = vmul.f32 %v1489, %v1216
  %v1494 = vmul.f32 %v1492, %v1216
  %v1495 = vadd.f32 %v1493, 1e-05
  %v1496 = vadd.f32 %v1494, 1e-05
  %v1497 = vrsqrt.pop %v1495
  %v1498 = vrsqrt.pop %v1496
  %v1499 = vmul.f32 %v1483, %v1497
  %v1500 = vmul.f32 %v1484, %v1498
  %v1501 = vmul.f32 %v1499, %v1241
  %v1502 = vmul.f32 %v1500, %v1241
  %v1503 = vadd.f32 %v1501, %v1249
  %v1504 = vadd.f32 %v1502, %v1249
  %1505 = vrot.lane.b32.xlu0 %v1253, 96
  %v1506 = vpop.permute.xlu0 %1505
  %1507 = vrot.lane.b32.xlu0 %v1254, 96
  %v1508 = vpop.permute.xlu0 %1507
  %v1511 = vadd.f32 %v1503, %v1506
  %v1512 = vadd.f32 %v1504, %v1508
  %s1513 = scalar_lea.vmem [#allocation3], 48
  %v1514 = vld [vmem:[%s1513] sm:$0xff]
  %v1515 = vld [vmem:[%s1513 + $0x8] sm:$0xff]
  %s1516 = scalar_lea.vmem [#allocation3], 80
  %v1517 = vld [vmem:[%s1516] sm:$0xff]
  %v1518 = vld [vmem:[%s1516 + $0x8] sm:$0xff]
  %v1519 = vsel %vm46, %v1514, %v1517
  %v1520 = vsel %vm46, %v1515, %v1518
  %v1522 = vsel %vm55, %v1519, 0
  %v1525 = vsel %vm55, %v1520, 0
  %1527 = vmatprep.subr.mxu0 0.0
  %1528 = vmatpush1.msra.mxu0 %v1109
  %1529 = vmatprep.subr.mxu0 0.0
  %1530 = vmatpush1.msra.mxu0 %v1110
  %1531 = vmatprep.subr.mxu0 0.0
  %1532 = vmatpush1.msra.mxu0 %v1111
  %1533 = vmatprep.subr.mxu0 0.0
  %1534 = vmatpush1.msra.mxu0 %v1112
  %1535 = vmatprep.subr.mxu0 0.0
  %1536 = vmatpush1.msra.mxu0 0.0
  %1537 = vmatprep.subr.mxu0 0.0
  %1538 = vmatpush1.msra.mxu0 0.0
  %1539 = vmatprep.subr.mxu0 0.0
  %1540 = vmatpush1.msra.mxu0 0.0
  %1541 = vmatprep.subr.mxu0 0.0
  %1542 = vmatpush1.msra.mxu0 0.0
  %1543 = vmatprep.subr.mxu0 0.0
  %1544 = vmatpush1.msra.mxu0 0.0
  %1545 = vmatprep.subr.mxu0 0.0
  %1546 = vmatpush1.msra.mxu0 0.0
  %1547 = vmatprep.subr.mxu0 0.0
  %1548 = vmatpush1.msra.mxu0 0.0
  %1549 = vmatprep.subr.mxu0 0.0
  %1550 = vmatpush1.msra.mxu0 0.0
  %1551 = vmatprep.subr.mxu0 0.0
  %1552 = vmatpush1.msra.mxu0 0.0
  %1553 = vmatprep.subr.mxu0 0.0
  %1554 = vmatpush1.msra.mxu0 0.0
  %1555 = vmatprep.subr.mxu0 0.0
  %1556 = vmatpush1.msra.mxu0 0.0
  %1557 = vmatprep.subr.mxu0 0.0
  %1558 = vmatpush1.msra.mxu0 0.0
  %1559 = vmatprep.subr.mxu0 0.0
  %1560 = vmatpush1.msra.mxu0 0.0
  %1561 = vmatprep.subr.mxu0 0.0
  %1562 = vmatpush1.msra.mxu0 0.0
  %1563 = vmatprep.subr.mxu0 0.0
  %1564 = vmatpush1.msra.mxu0 0.0
  %1565 = vmatprep.subr.mxu0 0.0
  %1566 = vmatpush1.msra.mxu0 0.0
  %1567 = vmatprep.subr.mxu0 0.0
  %1568 = vmatpush1.msra.mxu0 0.0
  %1569 = vmatprep.subr.mxu0 0.0
  %1570 = vmatpush1.msra.mxu0 0.0
  %1571 = vmatprep.subr.mxu0 0.0
  %1572 = vmatpush1.msra.mxu0 0.0
  %1573 = vmatprep.subr.mxu0 0.0
  %1574 = vmatpush1.msra.mxu0 0.0
  %1575 = vmatprep.subr.mxu0 0.0
  %1576 = vmatpush1.msra.mxu0 0.0
  %1577 = vmatprep.subr.mxu0 0.0
  %1578 = vmatpush1.msra.mxu0 0.0
  %1579 = vmatprep.subr.mxu0 0.0
  %1580 = vmatpush1.msra.mxu0 0.0
  %1581 = vmatprep.subr.mxu0 0.0
  %1582 = vmatpush1.msra.mxu0 0.0
  %1583 = vmatprep.subr.mxu0 0.0
  %1584 = vmatpush1.msra.mxu0 0.0
  %1585 = vmatprep.subr.mxu0 0.0
  %1586 = vmatpush1.msra.mxu0 0.0
  %1587 = vmatprep.subr.mxu0 0.0
  %1588 = vmatpush1.msra.mxu0 0.0
  %1589 = vmatprep.subr.mxu0 0.0
  %1590 = vmatpush1.msra.mxu0 0.0
  %1591 = vmatprep.mubr.f32.mxu0 0.0
  %1592 = vmatmul.mubr.f32.gmra.mrb[0].mxu0 %v1522
  %v1593 = vpop.f32.mrb[0].mxu0
  %v1594 = vadd.f32 %v1127, %v1593
  %v1595 = vpop.f32.mrb[0].mxu0
  %1596 = vmatprep.mubr.f32.mxu0 0.0
  %1597 = vmatmul.mubr.f32.gmra.mrb[0].mxu0 %v1525
  %v1598 = vpop.f32.mrb[0].mxu0
  %v1599 = vadd.f32 %v1127, %v1598
  %v1600 = vpop.f32.mrb[0].mxu0
  %1601 = vdwg.mxu0
  %v1602 = vsel %vm46, %v1594, 0.0
  %1603 = vadd.xlane.f32.xlu0 %v1602
  %v1604 = vpop.xlane.xlu0 %1603
  %v1605 = vsel %vm46, %v1599, 0.0
  %1606 = vadd.xlane.f32.xlu0 %v1605
  %v1607 = vpop.xlane.xlu0 %1606
  %v1608 = vmul.f32 %v1604, %v1216
  %v1609 = vmul.f32 %v1607, %v1216
  %v1610 = vsub.f32 %v1594, %v1608
  %v1611 = vsub.f32 %v1599, %v1609
  %v1612 = vmul.f32 %v1610, %v1610
  %v1613 = vmul.f32 %v1611, %v1611
  %v1614 = vsel %vm46, %v1612, 0.0
  %1615 = vadd.xlane.f32.xlu0 %v1614
  %v1616 = vpop.xlane.xlu0 %1615
  %v1617 = vsel %vm46, %v1613, 0.0
  %1618 = vadd.xlane.f32.xlu0 %v1617
  %v1619 = vpop.xlane.xlu0 %1618
  %v1620 = vmul.f32 %v1616, %v1216
  %v1621 = vmul.f32 %v1619, %v1216
  %v1622 = vadd.f32 %v1620, 1e-05
  %v1623 = vadd.f32 %v1621, 1e-05
  %v1624 = vrsqrt.pop %v1622
  %v1625 = vrsqrt.pop %v1623
  %v1626 = vmul.f32 %v1610, %v1624
  %v1627 = vmul.f32 %v1611, %v1625
  %v1628 = vmul.f32 %v1626, %v1241
  %v1629 = vmul.f32 %v1627, %v1241
  %v1630 = vadd.f32 %v1628, %v1249
  %v1631 = vadd.f32 %v1629, %v1249
  %1632 = vrot.lane.b32.xlu0 %v1253, 80
  %v1633 = vpop.permute.xlu0 %1632
  %1634 = vrot.lane.b32.xlu0 %v1254, 80
  %v1635 = vpop.permute.xlu0 %1634
  %v1638 = vadd.f32 %v1630, %v1633
  %v1639 = vadd.f32 %v1631, %v1635
  %s1640 = scalar_lea.vmem [#allocation3], 64
  %v1641 = vld [vmem:[%s1640] sm:$0xff]
  %v1642 = vld [vmem:[%s1640 + $0x8] sm:$0xff]
  %v1644 = vsel %vm55, %v1641, 0
  %v1647 = vsel %vm55, %v1642, 0
  %1649 = vmatprep.subr.mxu0 0.0
  %1650 = vmatpush1.msra.mxu0 %v1109
  %1651 = vmatprep.subr.mxu0 0.0
  %1652 = vmatpush1.msra.mxu0 %v1110
  %1653 = vmatprep.subr.mxu0 0.0
  %1654 = vmatpush1.msra.mxu0 %v1111
  %1655 = vmatprep.subr.mxu0 0.0
  %1656 = vmatpush1.msra.mxu0 %v1112
  %1657 = vmatprep.subr.mxu0 0.0
  %1658 = vmatpush1.msra.mxu0 0.0
  %1659 = vmatprep.subr.mxu0 0.0
  %1660 = vmatpush1.msra.mxu0 0.0
  %1661 = vmatprep.subr.mxu0 0.0
  %1662 = vmatpush1.msra.mxu0 0.0
  %1663 = vmatprep.subr.mxu0 0.0
  %1664 = vmatpush1.msra.mxu0 0.0
  %1665 = vmatprep.subr.mxu0 0.0
  %1666 = vmatpush1.msra.mxu0 0.0
  %1667 = vmatprep.subr.mxu0 0.0
  %1668 = vmatpush1.msra.mxu0 0.0
  %1669 = vmatprep.subr.mxu0 0.0
  %1670 = vmatpush1.msra.mxu0 0.0
  %1671 = vmatprep.subr.mxu0 0.0
  %1672 = vmatpush1.msra.mxu0 0.0
  %1673 = vmatprep.subr.mxu0 0.0
  %1674 = vmatpush1.msra.mxu0 0.0
  %1675 = vmatprep.subr.mxu0 0.0
  %1676 = vmatpush1.msra.mxu0 0.0
  %1677 = vmatprep.subr.mxu0 0.0
  %1678 = vmatpush1.msra.mxu0 0.0
  %1679 = vmatprep.subr.mxu0 0.0
  %1680 = vmatpush1.msra.mxu0 0.0
  %1681 = vmatprep.subr.mxu0 0.0
  %1682 = vmatpush1.msra.mxu0 0.0
  %1683 = vmatprep.subr.mxu0 0.0
  %1684 = vmatpush1.msra.mxu0 0.0
  %1685 = vmatprep.subr.mxu0 0.0
  %1686 = vmatpush1.msra.mxu0 0.0
  %1687 = vmatprep.subr.mxu0 0.0
  %1688 = vmatpush1.msra.mxu0 0.0
  %1689 = vmatprep.subr.mxu0 0.0
  %1690 = vmatpush1.msra.mxu0 0.0
  %1691 = vmatprep.subr.mxu0 0.0
  %1692 = vmatpush1.msra.mxu0 0.0
  %1693 = vmatprep.subr.mxu0 0.0
  %1694 = vmatpush1.msra.mxu0 0.0
  %1695 = vmatprep.subr.mxu0 0.0
  %1696 = vmatpush1.msra.mxu0 0.0
  %1697 = vmatprep.subr.mxu0 0.0
  %1698 = vmatpush1.msra.mxu0 0.0
  %1699 = vmatprep.subr.mxu0 0.0
  %1700 = vmatpush1.msra.mxu0 0.0
  %1701 = vmatprep.subr.mxu0 0.0
  %1702 = vmatpush1.msra.mxu0 0.0
  %1703 = vmatprep.subr.mxu0 0.0
  %1704 = vmatpush1.msra.mxu0 0.0
  %1705 = vmatprep.subr.mxu0 0.0
  %1706 = vmatpush1.msra.mxu0 0.0
  %1707 = vmatprep.subr.mxu0 0.0
  %1708 = vmatpush1.msra.mxu0 0.0
  %1709 = vmatprep.subr.mxu0 0.0
  %1710 = vmatpush1.msra.mxu0 0.0
  %1711 = vmatprep.subr.mxu0 0.0
  %1712 = vmatpush1.msra.mxu0 0.0
  %1713 = vmatprep.mubr.f32.mxu0 0.0
  %1714 = vmatmul.mubr.f32.gmra.mrb[0].mxu0 %v1644
  %v1715 = vpop.f32.mrb[0].mxu0
  %v1716 = vadd.f32 %v1127, %v1715
  %v1717 = vpop.f32.mrb[0].mxu0
  %1718 = vmatprep.mubr.f32.mxu0 0.0
  %1719 = vmatmul.mubr.f32.gmra.mrb[0].mxu0 %v1647
  %v1720 = vpop.f32.mrb[0].mxu0
  %v1721 = vadd.f32 %v1127, %v1720
  %v1722 = vpop.f32.mrb[0].mxu0
  %1723 = vdwg.mxu0
  %v1724 = vsel %vm46, %v1716, 0.0
  %1725 = vadd.xlane.f32.xlu0 %v1724
  %v1726 = vpop.xlane.xlu0 %1725
  %v1727 = vsel %vm46, %v1721, 0.0
  %1728 = vadd.xlane.f32.xlu0 %v1727
  %v1729 = vpop.xlane.xlu0 %1728
  %v1730 = vmul.f32 %v1726, %v1216
  %v1731 = vmul.f32 %v1729, %v1216
  %v1732 = vsub.f32 %v1716, %v1730
  %v1733 = vsub.f32 %v1721, %v1731
  %v1734 = vmul.f32 %v1732, %v1732
  %v1735 = vmul.f32 %v1733, %v1733
  %v1736 = vsel %vm46, %v1734, 0.0
  %1737 = vadd.xlane.f32.xlu0 %v1736
  %v1738 = vpop.xlane.xlu0 %1737
  %v1739 = vsel %vm46, %v1735, 0.0
  %1740 = vadd.xlane.f32.xlu0 %v1739
  %v1741 = vpop.xlane.xlu0 %1740
  %v1742 = vmul.f32 %v1738, %v1216
  %v1743 = vmul.f32 %v1741, %v1216
  %v1744 = vadd.f32 %v1742, 1e-05
  %v1745 = vadd.f32 %v1743, 1e-05
  %v1746 = vrsqrt.pop %v1744
  %v1747 = vrsqrt.pop %v1745
  %v1748 = vmul.f32 %v1732, %v1746
  %v1749 = vmul.f32 %v1733, %v1747
  %v1750 = vmul.f32 %v1748, %v1241
  %v1751 = vmul.f32 %v1749, %v1241
  %v1752 = vadd.f32 %v1750, %v1249
  %v1753 = vadd.f32 %v1751, %v1249
  %1754 = vrot.lane.b32.xlu0 %v1253, 64
  %v1755 = vpop.permute.xlu0 %1754
  %1756 = vrot.lane.b32.xlu0 %v1254, 64
  %v1757 = vpop.permute.xlu0 %1756
  %v1760 = vadd.f32 %v1752, %v1755
  %v1761 = vadd.f32 %v1753, %v1757
  %v1762 = vsel %vm46, %v1517, %v1514
  %v1763 = vsel %vm46, %v1518, %v1515
  %v1765 = vsel %vm55, %v1762, 0
  %v1768 = vsel %vm55, %v1763, 0
  %1770 = vmatprep.subr.mxu0 0.0
  %1771 = vmatpush1.msra.mxu0 %v1109
  %1772 = vmatprep.subr.mxu0 0.0
  %1773 = vmatpush1.msra.mxu0 %v1110
  %1774 = vmatprep.subr.mxu0 0.0
  %1775 = vmatpush1.msra.mxu0 %v1111
  %1776 = vmatprep.subr.mxu0 0.0
  %1777 = vmatpush1.msra.mxu0 %v1112
  %1778 = vmatprep.subr.mxu0 0.0
  %1779 = vmatpush1.msra.mxu0 0.0
  %1780 = vmatprep.subr.mxu0 0.0
  %1781 = vmatpush1.msra.mxu0 0.0
  %1782 = vmatprep.subr.mxu0 0.0
  %1783 = vmatpush1.msra.mxu0 0.0
  %1784 = vmatprep.subr.mxu0 0.0
  %1785 = vmatpush1.msra.mxu0 0.0
  %1786 = vmatprep.subr.mxu0 0.0
  %1787 = vmatpush1.msra.mxu0 0.0
  %1788 = vmatprep.subr.mxu0 0.0
  %1789 = vmatpush1.msra.mxu0 0.0
  %1790 = vmatprep.subr.mxu0 0.0
  %1791 = vmatpush1.msra.mxu0 0.0
  %1792 = vmatprep.subr.mxu0 0.0
  %1793 = vmatpush1.msra.mxu0 0.0
  %1794 = vmatprep.subr.mxu0 0.0
  %1795 = vmatpush1.msra.mxu0 0.0
  %1796 = vmatprep.subr.mxu0 0.0
  %1797 = vmatpush1.msra.mxu0 0.0
  %1798 = vmatprep.subr.mxu0 0.0
  %1799 = vmatpush1.msra.mxu0 0.0
  %1800 = vmatprep.subr.mxu0 0.0
  %1801 = vmatpush1.msra.mxu0 0.0
  %1802 = vmatprep.subr.mxu0 0.0
  %1803 = vmatpush1.msra.mxu0 0.0
  %1804 = vmatprep.subr.mxu0 0.0
  %1805 = vmatpush1.msra.mxu0 0.0
  %1806 = vmatprep.subr.mxu0 0.0
  %1807 = vmatpush1.msra.mxu0 0.0
  %1808 = vmatprep.subr.mxu0 0.0
  %1809 = vmatpush1.msra.mxu0 0.0
  %1810 = vmatprep.subr.mxu0 0.0
  %1811 = vmatpush1.msra.mxu0 0.0
  %1812 = vmatprep.subr.mxu0 0.0
  %1813 = vmatpush1.msra.mxu0 0.0
  %1814 = vmatprep.subr.mxu0 0.0
  %1815 = vmatpush1.msra.mxu0 0.0
  %1816 = vmatprep.subr.mxu0 0.0
  %1817 = vmatpush1.msra.mxu0 0.0
  %1818 = vmatprep.subr.mxu0 0.0
  %1819 = vmatpush1.msra.mxu0 0.0
  %1820 = vmatprep.subr.mxu0 0.0
  %1821 = vmatpush1.msra.mxu0 0.0
  %1822 = vmatprep.subr.mxu0 0.0
  %1823 = vmatpush1.msra.mxu0 0.0
  %1824 = vmatprep.subr.mxu0 0.0
  %1825 = vmatpush1.msra.mxu0 0.0
  %1826 = vmatprep.subr.mxu0 0.0
  %1827 = vmatpush1.msra.mxu0 0.0
  %1828 = vmatprep.subr.mxu0 0.0
  %1829 = vmatpush1.msra.mxu0 0.0
  %1830 = vmatprep.subr.mxu0 0.0
  %1831 = vmatpush1.msra.mxu0 0.0
  %1832 = vmatprep.subr.mxu0 0.0
  %1833 = vmatpush1.msra.mxu0 0.0
  %1834 = vmatprep.mubr.f32.mxu0 0.0
  %1835 = vmatmul.mubr.f32.gmra.mrb[0].mxu0 %v1765
  %v1836 = vpop.f32.mrb[0].mxu0
  %v1837 = vadd.f32 %v1127, %v1836
  %v1838 = vpop.f32.mrb[0].mxu0
  %1839 = vmatprep.mubr.f32.mxu0 0.0
  %1840 = vmatmul.mubr.f32.gmra.mrb[0].mxu0 %v1768
  %v1841 = vpop.f32.mrb[0].mxu0
  %v1842 = vadd.f32 %v1127, %v1841
  %v1843 = vpop.f32.mrb[0].mxu0
  %1844 = vdwg.mxu0
  %v1845 = vsel %vm46, %v1837, 0.0
  %1846 = vadd.xlane.f32.xlu0 %v1845
  %v1847 = vpop.xlane.xlu0 %1846
  %v1848 = vsel %vm46, %v1842, 0.0
  %1849 = vadd.xlane.f32.xlu0 %v1848
  %v1850 = vpop.xlane.xlu0 %1849
  %v1851 = vmul.f32 %v1847, %v1216
  %v1852 = vmul.f32 %v1850, %v1216
  %v1853 = vsub.f32 %v1837, %v1851
  %v1854 = vsub.f32 %v1842, %v1852
  %v1855 = vmul.f32 %v1853, %v1853
  %v1856 = vmul.f32 %v1854, %v1854
  %v1857 = vsel %vm46, %v1855, 0.0
  %1858 = vadd.xlane.f32.xlu0 %v1857
  %v1859 = vpop.xlane.xlu0 %1858
  %v1860 = vsel %vm46, %v1856, 0.0
  %1861 = vadd.xlane.f32.xlu0 %v1860
  %v1862 = vpop.xlane.xlu0 %1861
  %v1863 = vmul.f32 %v1859, %v1216
  %v1864 = vmul.f32 %v1862, %v1216
  %v1865 = vadd.f32 %v1863, 1e-05
  %v1866 = vadd.f32 %v1864, 1e-05
  %v1867 = vrsqrt.pop %v1865
  %v1868 = vrsqrt.pop %v1866
  %v1869 = vmul.f32 %v1853, %v1867
  %v1870 = vmul.f32 %v1854, %v1868
  %v1871 = vmul.f32 %v1869, %v1241
  %v1872 = vmul.f32 %v1870, %v1241
  %v1873 = vadd.f32 %v1871, %v1249
  %v1874 = vadd.f32 %v1872, %v1249
  %1875 = vrot.lane.b32.xlu0 %v1253, 48
  %v1876 = vpop.permute.xlu0 %1875
  %1877 = vrot.lane.b32.xlu0 %v1254, 48
  %v1878 = vpop.permute.xlu0 %1877
  %v1881 = vadd.f32 %v1873, %v1876
  %v1882 = vadd.f32 %v1874, %v1878
  %v1883 = vsel %vm46, %v1390, %v1387
  %v1884 = vsel %vm46, %v1391, %v1388
  %v1886 = vsel %vm55, %v1883, 0
  %v1889 = vsel %vm55, %v1884, 0
  %1891 = vmatprep.subr.mxu0 0.0
  %1892 = vmatpush1.msra.mxu0 %v1109
  %1893 = vmatprep.subr.mxu0 0.0
  %1894 = vmatpush1.msra.mxu0 %v1110
  %1895 = vmatprep.subr.mxu0 0.0
  %1896 = vmatpush1.msra.mxu0 %v1111
  %1897 = vmatprep.subr.mxu0 0.0
  %1898 = vmatpush1.msra.mxu0 %v1112
  %1899 = vmatprep.subr.mxu0 0.0
  %1900 = vmatpush1.msra.mxu0 0.0
  %1901 = vmatprep.subr.mxu0 0.0
  %1902 = vmatpush1.msra.mxu0 0.0
  %1903 = vmatprep.subr.mxu0 0.0
  %1904 = vmatpush1.msra.mxu0 0.0
  %1905 = vmatprep.subr.mxu0 0.0
  %1906 = vmatpush1.msra.mxu0 0.0
  %1907 = vmatprep.subr.mxu0 0.0
  %1908 = vmatpush1.msra.mxu0 0.0
  %1909 = vmatprep.subr.mxu0 0.0
  %1910 = vmatpush1.msra.mxu0 0.0
  %1911 = vmatprep.subr.mxu0 0.0
  %1912 = vmatpush1.msra.mxu0 0.0
  %1913 = vmatprep.subr.mxu0 0.0
  %1914 = vmatpush1.msra.mxu0 0.0
  %1915 = vmatprep.subr.mxu0 0.0
  %1916 = vmatpush1.msra.mxu0 0.0
  %1917 = vmatprep.subr.mxu0 0.0
  %1918 = vmatpush1.msra.mxu0 0.0
  %1919 = vmatprep.subr.mxu0 0.0
  %1920 = vmatpush1.msra.mxu0 0.0
  %1921 = vmatprep.subr.mxu0 0.0
  %1922 = vmatpush1.msra.mxu0 0.0
  %1923 = vmatprep.subr.mxu0 0.0
  %1924 = vmatpush1.msra.mxu0 0.0
  %1925 = vmatprep.subr.mxu0 0.0
  %1926 = vmatpush1.msra.mxu0 0.0
  %1927 = vmatprep.subr.mxu0 0.0
  %1928 = vmatpush1.msra.mxu0 0.0
  %1929 = vmatprep.subr.mxu0 0.0
  %1930 = vmatpush1.msra.mxu0 0.0
  %1931 = vmatprep.subr.mxu0 0.0
  %1932 = vmatpush1.msra.mxu0 0.0
  %1933 = vmatprep.subr.mxu0 0.0
  %1934 = vmatpush1.msra.mxu0 0.0
  %1935 = vmatprep.subr.mxu0 0.0
  %1936 = vmatpush1.msra.mxu0 0.0
  %1937 = vmatprep.subr.mxu0 0.0
  %1938 = vmatpush1.msra.mxu0 0.0
  %1939 = vmatprep.subr.mxu0 0.0
  %1940 = vmatpush1.msra.mxu0 0.0
  %1941 = vmatprep.subr.mxu0 0.0
  %1942 = vmatpush1.msra.mxu0 0.0
  %1943 = vmatprep.subr.mxu0 0.0
  %1944 = vmatpush1.msra.mxu0 0.0
  %1945 = vmatprep.subr.mxu0 0.0
  %1946 = vmatpush1.msra.mxu0 0.0
  %1947 = vmatprep.subr.mxu0 0.0
  %1948 = vmatpush1.msra.mxu0 0.0
  %1949 = vmatprep.subr.mxu0 0.0
  %1950 = vmatpush1.msra.mxu0 0.0
  %1951 = vmatprep.subr.mxu0 0.0
  %1952 = vmatpush1.msra.mxu0 0.0
  %1953 = vmatprep.subr.mxu0 0.0
  %1954 = vmatpush1.msra.mxu0 0.0
  %1955 = vmatprep.mubr.f32.mxu0 0.0
  %1956 = vmatmul.mubr.f32.gmra.mrb[0].mxu0 %v1886
  %v1957 = vpop.f32.mrb[0].mxu0
  %v1958 = vadd.f32 %v1127, %v1957
  %v1959 = vpop.f32.mrb[0].mxu0
  %1960 = vmatprep.mubr.f32.mxu0 0.0
  %1961 = vmatmul.mubr.f32.gmra.mrb[0].mxu0 %v1889
  %v1962 = vpop.f32.mrb[0].mxu0
  %v1963 = vadd.f32 %v1127, %v1962
  %v1964 = vpop.f32.mrb[0].mxu0
  %1965 = vdwg.mxu0
  %v1966 = vsel %vm46, %v1958, 0.0
  %1967 = vadd.xlane.f32.xlu0 %v1966
  %v1968 = vpop.xlane.xlu0 %1967
  %v1969 = vsel %vm46, %v1963, 0.0
  %1970 = vadd.xlane.f32.xlu0 %v1969
  %v1971 = vpop.xlane.xlu0 %1970
  %v1972 = vmul.f32 %v1968, %v1216
  %v1973 = vmul.f32 %v1971, %v1216
  %v1974 = vsub.f32 %v1958, %v1972
  %v1975 = vsub.f32 %v1963, %v1973
  %v1976 = vmul.f32 %v1974, %v1974
  %v1977 = vmul.f32 %v1975, %v1975
  %v1978 = vsel %vm46, %v1976, 0.0
  %1979 = vadd.xlane.f32.xlu0 %v1978
  %v1980 = vpop.xlane.xlu0 %1979
  %v1981 = vsel %vm46, %v1977, 0.0
  %1982 = vadd.xlane.f32.xlu0 %v1981
  %v1983 = vpop.xlane.xlu0 %1982
  %v1984 = vmul.f32 %v1980, %v1216
  %v1985 = vmul.f32 %v1983, %v1216
  %v1986 = vadd.f32 %v1984, 1e-05
  %v1987 = vadd.f32 %v1985, 1e-05
  %v1988 = vrsqrt.pop %v1986
  %v1989 = vrsqrt.pop %v1987
  %v1990 = vmul.f32 %v1974, %v1988
  %v1991 = vmul.f32 %v1975, %v1989
  %v1992 = vmul.f32 %v1990, %v1241
  %v1993 = vmul.f32 %v1991, %v1241
  %v1994 = vadd.f32 %v1992, %v1249
  %v1995 = vadd.f32 %v1993, %v1249
  %1996 = vrot.lane.b32.xlu0 %v1253, 32
  %v1997 = vpop.permute.xlu0 %1996
  %1998 = vrot.lane.b32.xlu0 %v1254, 32
  %v1999 = vpop.permute.xlu0 %1998
  %v2002 = vadd.f32 %v1994, %v1997
  %v2003 = vadd.f32 %v1995, %v1999
  %v2004 = vsel %vm46, %v1261, %v1258
  %v2005 = vsel %vm46, %v1262, %v1259
  %v2007 = vsel %vm55, %v2004, 0
  %v2010 = vsel %vm55, %v2005, 0
  %2012 = vmatprep.subr.mxu0 0.0
  %2013 = vmatpush1.msra.mxu0 %v1109
  %2014 = vmatprep.subr.mxu0 0.0
  %2015 = vmatpush1.msra.mxu0 %v1110
  %2016 = vmatprep.subr.mxu0 0.0
  %2017 = vmatpush1.msra.mxu0 %v1111
  %2018 = vmatprep.subr.mxu0 0.0
  %2019 = vmatpush1.msra.mxu0 %v1112
  %2020 = vmatprep.subr.mxu0 0.0
  %2021 = vmatpush1.msra.mxu0 0.0
  %2022 = vmatprep.subr.mxu0 0.0
  %2023 = vmatpush1.msra.mxu0 0.0
  %2024 = vmatprep.subr.mxu0 0.0
  %2025 = vmatpush1.msra.mxu0 0.0
  %2026 = vmatprep.subr.mxu0 0.0
  %2027 = vmatpush1.msra.mxu0 0.0
  %2028 = vmatprep.subr.mxu0 0.0
  %2029 = vmatpush1.msra.mxu0 0.0
  %2030 = vmatprep.subr.mxu0 0.0
  %2031 = vmatpush1.msra.mxu0 0.0
  %2032 = vmatprep.subr.mxu0 0.0
  %2033 = vmatpush1.msra.mxu0 0.0
  %2034 = vmatprep.subr.mxu0 0.0
  %2035 = vmatpush1.msra.mxu0 0.0
  %2036 = vmatprep.subr.mxu0 0.0
  %2037 = vmatpush1.msra.mxu0 0.0
  %2038 = vmatprep.subr.mxu0 0.0
  %2039 = vmatpush1.msra.mxu0 0.0
  %2040 = vmatprep.subr.mxu0 0.0
  %2041 = vmatpush1.msra.mxu0 0.0
  %2042 = vmatprep.subr.mxu0 0.0
  %2043 = vmatpush1.msra.mxu0 0.0
  %2044 = vmatprep.subr.mxu0 0.0
  %2045 = vmatpush1.msra.mxu0 0.0
  %2046 = vmatprep.subr.mxu0 0.0
  %2047 = vmatpush1.msra.mxu0 0.0
  %2048 = vmatprep.subr.mxu0 0.0
  %2049 = vmatpush1.msra.mxu0 0.0
  %2050 = vmatprep.subr.mxu0 0.0
  %2051 = vmatpush1.msra.mxu0 0.0
  %2052 = vmatprep.subr.mxu0 0.0
  %2053 = vmatpush1.msra.mxu0 0.0
  %2054 = vmatprep.subr.mxu0 0.0
  %2055 = vmatpush1.msra.mxu0 0.0
  %2056 = vmatprep.subr.mxu0 0.0
  %2057 = vmatpush1.msra.mxu0 0.0
  %2058 = vmatprep.subr.mxu0 0.0
  %2059 = vmatpush1.msra.mxu0 0.0
  %2060 = vmatprep.subr.mxu0 0.0
  %2061 = vmatpush1.msra.mxu0 0.0
  %2062 = vmatprep.subr.mxu0 0.0
  %2063 = vmatpush1.msra.mxu0 0.0
  %2064 = vmatprep.subr.mxu0 0.0
  %2065 = vmatpush1.msra.mxu0 0.0
  %2066 = vmatprep.subr.mxu0 0.0
  %2067 = vmatpush1.msra.mxu0 0.0
  %2068 = vmatprep.subr.mxu0 0.0
  %2069 = vmatpush1.msra.mxu0 0.0
  %2070 = vmatprep.subr.mxu0 0.0
  %2071 = vmatpush1.msra.mxu0 0.0
  %2072 = vmatprep.subr.mxu0 0.0
  %2073 = vmatpush1.msra.mxu0 0.0
  %2074 = vmatprep.subr.mxu0 0.0
  %2075 = vmatpush1.msra.mxu0 0.0
  %2076 = vmatprep.mubr.f32.mxu0 0.0
  %2077 = vmatmul.mubr.f32.gmra.mrb[0].mxu0 %v2007
  %v2078 = vpop.f32.mrb[0].mxu0
  %v2079 = vadd.f32 %v1127, %v2078
  %v2080 = vpop.f32.mrb[0].mxu0
  %2081 = vmatprep.mubr.f32.mxu0 0.0
  %2082 = vmatmul.mubr.f32.gmra.mrb[0].mxu0 %v2010
  %v2083 = vpop.f32.mrb[0].mxu0
  %v2084 = vadd.f32 %v1127, %v2083
  %v2085 = vpop.f32.mrb[0].mxu0
  %2086 = vdwg.mxu0
  %v2087 = vsel %vm46, %v2079, 0.0
  %2088 = vadd.xlane.f32.xlu0 %v2087
  %v2089 = vpop.xlane.xlu0 %2088
  %v2090 = vsel %vm46, %v2084, 0.0
  %2091 = vadd.xlane.f32.xlu0 %v2090
  %v2092 = vpop.xlane.xlu0 %2091
  %v2093 = vmul.f32 %v2089, %v1216
  %v2094 = vmul.f32 %v2092, %v1216
  %v2095 = vsub.f32 %v2079, %v2093
  %v2096 = vsub.f32 %v2084, %v2094
  %v2097 = vmul.f32 %v2095, %v2095
  %v2098 = vmul.f32 %v2096, %v2096
  %v2099 = vsel %vm46, %v2097, 0.0
  %2100 = vadd.xlane.f32.xlu0 %v2099
  %v2101 = vpop.xlane.xlu0 %2100
  %v2102 = vsel %vm46, %v2098, 0.0
  %2103 = vadd.xlane.f32.xlu0 %v2102
  %v2104 = vpop.xlane.xlu0 %2103
  %v2105 = vmul.f32 %v2101, %v1216
  %v2106 = vmul.f32 %v2104, %v1216
  %v2107 = vadd.f32 %v2105, 1e-05
  %v2108 = vadd.f32 %v2106, 1e-05
  %v2109 = vrsqrt.pop %v2107
  %v2110 = vrsqrt.pop %v2108
  %v2111 = vmul.f32 %v2095, %v2109
  %v2112 = vmul.f32 %v2096, %v2110
  %v2113 = vmul.f32 %v2111, %v1241
  %v2114 = vmul.f32 %v2112, %v1241
  %v2115 = vadd.f32 %v2113, %v1249
  %v2116 = vadd.f32 %v2114, %v1249
  %2117 = vrot.lane.b32.xlu0 %v1253, 16
  %v2118 = vpop.permute.xlu0 %2117
  %2119 = vrot.lane.b32.xlu0 %v1254, 16
  %v2120 = vpop.permute.xlu0 %2119
  %v2123 = vadd.f32 %v2115, %v2118
  %v2124 = vadd.f32 %v2116, %v2120
  %v2125 = vsel %vm46, %v1119, %v1116
  %v2126 = vsel %vm46, %v1120, %v1117
  %v2128 = vsel %vm55, %v2125, 0
  %v2131 = vsel %vm55, %v2126, 0
  %2133 = vmatprep.subr.mxu0 0.0
  %2134 = vmatpush1.msra.mxu0 %v1109
  %2135 = vmatprep.subr.mxu0 0.0
  %2136 = vmatpush1.msra.mxu0 %v1110
  %2137 = vmatprep.subr.mxu0 0.0
  %2138 = vmatpush1.msra.mxu0 %v1111
  %2139 = vmatprep.subr.mxu0 0.0
  %2140 = vmatpush1.msra.mxu0 %v1112
  %2141 = vmatprep.subr.mxu0 0.0
  %2142 = vmatpush1.msra.mxu0 0.0
  %2143 = vmatprep.subr.mxu0 0.0
  %2144 = vmatpush1.msra.mxu0 0.0
  %2145 = vmatprep.subr.mxu0 0.0
  %2146 = vmatpush1.msra.mxu0 0.0
  %2147 = vmatprep.subr.mxu0 0.0
  %2148 = vmatpush1.msra.mxu0 0.0
  %2149 = vmatprep.subr.mxu0 0.0
  %2150 = vmatpush1.msra.mxu0 0.0
  %2151 = vmatprep.subr.mxu0 0.0
  %2152 = vmatpush1.msra.mxu0 0.0
  %2153 = vmatprep.subr.mxu0 0.0
  %2154 = vmatpush1.msra.mxu0 0.0
  %2155 = vmatprep.subr.mxu0 0.0
  %2156 = vmatpush1.msra.mxu0 0.0
  %2157 = vmatprep.subr.mxu0 0.0
  %2158 = vmatpush1.msra.mxu0 0.0
  %2159 = vmatprep.subr.mxu0 0.0
  %2160 = vmatpush1.msra.mxu0 0.0
  %2161 = vmatprep.subr.mxu0 0.0
  %2162 = vmatpush1.msra.mxu0 0.0
  %2163 = vmatprep.subr.mxu0 0.0
  %2164 = vmatpush1.msra.mxu0 0.0
  %2165 = vmatprep.subr.mxu0 0.0
  %2166 = vmatpush1.msra.mxu0 0.0
  %2167 = vmatprep.subr.mxu0 0.0
  %2168 = vmatpush1.msra.mxu0 0.0
  %2169 = vmatprep.subr.mxu0 0.0
  %2170 = vmatpush1.msra.mxu0 0.0
  %2171 = vmatprep.subr.mxu0 0.0
  %2172 = vmatpush1.msra.mxu0 0.0
  %2173 = vmatprep.subr.mxu0 0.0
  %2174 = vmatpush1.msra.mxu0 0.0
  %2175 = vmatprep.subr.mxu0 0.0
  %2176 = vmatpush1.msra.mxu0 0.0
  %2177 = vmatprep.subr.mxu0 0.0
  %2178 = vmatpush1.msra.mxu0 0.0
  %2179 = vmatprep.subr.mxu0 0.0
  %2180 = vmatpush1.msra.mxu0 0.0
  %2181 = vmatprep.subr.mxu0 0.0
  %2182 = vmatpush1.msra.mxu0 0.0
  %2183 = vmatprep.subr.mxu0 0.0
  %2184 = vmatpush1.msra.mxu0 0.0
  %2185 = vmatprep.subr.mxu0 0.0
  %2186 = vmatpush1.msra.mxu0 0.0
  %2187 = vmatprep.subr.mxu0 0.0
  %2188 = vmatpush1.msra.mxu0 0.0
  %2189 = vmatprep.subr.mxu0 0.0
  %2190 = vmatpush1.msra.mxu0 0.0
  %2191 = vmatprep.subr.mxu0 0.0
  %2192 = vmatpush1.msra.mxu0 0.0
  %2193 = vmatprep.subr.mxu0 0.0
  %2194 = vmatpush1.msra.mxu0 0.0
  %2195 = vmatprep.subr.mxu0 0.0
  %2196 = vmatpush1.msra.mxu0 0.0
  %2197 = vmatprep.mubr.f32.mxu0 0.0
  %2198 = vmatmul.mubr.f32.gmra.mrb[0].mxu0 %v2128
  %v2199 = vpop.f32.mrb[0].mxu0
  %v2200 = vadd.f32 %v1127, %v2199
  %v2201 = vpop.f32.mrb[0].mxu0
  %2202 = vmatprep.mubr.f32.mxu0 0.0
  %2203 = vmatmul.mubr.f32.gmra.mrb[0].mxu0 %v2131
  %v2204 = vpop.f32.mrb[0].mxu0
  %v2205 = vadd.f32 %v1127, %v2204
  %v2206 = vpop.f32.mrb[0].mxu0
  %2207 = vdwg.mxu0
  %v2208 = vsel %vm46, %v2200, 0.0
  %2209 = vadd.xlane.f32.xlu0 %v2208
  %v2210 = vpop.xlane.xlu0 %2209
  %v2211 = vsel %vm46, %v2205, 0.0
  %2212 = vadd.xlane.f32.xlu0 %v2211
  %v2213 = vpop.xlane.xlu0 %2212
  %v2214 = vmul.f32 %v2210, %v1216
  %v2215 = vmul.f32 %v2213, %v1216
  %v2216 = vsub.f32 %v2200, %v2214
  %v2217 = vsub.f32 %v2205, %v2215
  %v2218 = vmul.f32 %v2216, %v2216
  %v2219 = vmul.f32 %v2217, %v2217
  %v2220 = vsel %vm46, %v2218, 0.0
  %2221 = vadd.xlane.f32.xlu0 %v2220
  %v2222 = vpop.xlane.xlu0 %2221
  %v2223 = vsel %vm46, %v2219, 0.0
  %2224 = vadd.xlane.f32.xlu0 %v2223
  %v2225 = vpop.xlane.xlu0 %2224
  %v2226 = vmul.f32 %v2222, %v1216
  %v2227 = vmul.f32 %v2225, %v1216
  %v2228 = vadd.f32 %v2226, 1e-05
  %v2229 = vadd.f32 %v2227, 1e-05
  %v2230 = vrsqrt.pop %v2228
  %v2231 = vrsqrt.pop %v2229
  %v2232 = vmul.f32 %v2216, %v2230
  %v2233 = vmul.f32 %v2217, %v2231
  %v2234 = vmul.f32 %v2232, %v1241
  %v2235 = vmul.f32 %v2233, %v1241
  %v2236 = vadd.f32 %v2234, %v1249
  %v2237 = vadd.f32 %v2235, %v1249
  %v2238 = vld [vmem:[%s0 + $0x8] sm:$0xff]
  %v2239 = vld [vmem:[%s0 + $0x18] sm:$0xff]
  %v2240 = vadd.f32 %v2236, %v2238
  %v2241 = vadd.f32 %v2237, %v2239
  %2244 = vrot.lane.b32.xlu0 %v1384, 16
  %v2245 = vpop.permute.xlu0 %2244
  %2246 = vrot.lane.b32.xlu0 %v1385, 16
  %v2247 = vpop.permute.xlu0 %2246
  %2252 = vrot.lane.b32.xlu0 %v1511, 32
  %v2253 = vpop.permute.xlu0 %2252
  %2254 = vrot.lane.b32.xlu0 %v1512, 32
  %v2255 = vpop.permute.xlu0 %2254
  %2260 = vrot.lane.b32.xlu0 %v1638, 48
  %v2261 = vpop.permute.xlu0 %2260
  %2262 = vrot.lane.b32.xlu0 %v1639, 48
  %v2263 = vpop.permute.xlu0 %2262
  %2268 = vrot.lane.b32.xlu0 %v1760, 64
  %v2269 = vpop.permute.xlu0 %2268
  %2270 = vrot.lane.b32.xlu0 %v1761, 64
  %v2271 = vpop.permute.xlu0 %2270
  %2276 = vrot.lane.b32.xlu0 %v1881, 80
  %v2277 = vpop.permute.xlu0 %2276
  %2278 = vrot.lane.b32.xlu0 %v1882, 80
  %v2279 = vpop.permute.xlu0 %2278
  %2284 = vrot.lane.b32.xlu0 %v2002, 96
  %v2285 = vpop.permute.xlu0 %2284
  %2286 = vrot.lane.b32.xlu0 %v2003, 96
  %v2287 = vpop.permute.xlu0 %2286
  %2292 = vrot.lane.b32.xlu0 %v2123, 112
  %v2293 = vpop.permute.xlu0 %2292
  %2294 = vrot.lane.b32.xlu0 %v2124, 112
  %v2295 = vpop.permute.xlu0 %2294
  %v2298 = vsel %vm46, %v1255, %v2245
  %v2299 = vsel %vm46, %v1256, %v2247
  %v2300 = vsel %vm55, %v2298, %v2253
  %v2301 = vsel %vm55, %v2299, %v2255
  %vm2302 = vcmask 392192
  %v2303 = vsel %vm2302, %v2300, %v2261
  %v2304 = vsel %vm2302, %v2301, %v2263
  %vm2305 = vcmask 523264
  %v2306 = vsel %vm2305, %v2303, %v2269
  %v2307 = vsel %vm2305, %v2304, %v2271
  %vm2308 = vcmask 654336
  %v2309 = vsel %vm2308, %v2306, %v2277
  %v2310 = vsel %vm2308, %v2307, %v2279
  %vm2311 = vcmask 785408
  %v2312 = vsel %vm2311, %v2309, %v2285
  %v2313 = vsel %vm2311, %v2310, %v2287
  %vm2314 = vcmask 916480
  %v2315 = vsel %vm2314, %v2312, %v2293
  %v2316 = vsel %vm2314, %v2313, %v2295
  %2317 = vst [vmem:[%s8] sm:$0xff] %v2315
  %2318 = vst.msk [vmem:[%s8 + $0x8] sm:$0xff] %vm46, %v2240
  %2319 = vst [vmem:[%s8 + $0x10] sm:$0xff] %v2316
  %2320 = vst.msk [vmem:[%s8 + $0x18] sm:$0xff] %vm46, %v2241
  // Predicated region
  $region41: #{dprnn_forward.9} parent=0 // pred_check
    _
  $region42: #{dprnn_forward.9} parent=0 // pred_check_branch
    %2322 = sbr.rel (0) target = $region44
  $region43: #{dprnn_forward.9} parent=0 // pred_region
    _
  $region44: #{dprnn_forward.9} parent=0 // pred_fallthru
    _
  // Predicated region
  $region45: #{dprnn_forward.9} parent=0 // pred_check
    _
  $region46: #{dprnn_forward.9} parent=0 // pred_check_branch
    %2324 = sbr.rel (0) target = $region48
  $region47: #{dprnn_forward.9} parent=0 // pred_region
    _
  $region48: #{dprnn_forward.9} parent=0 // pred_fallthru
    _

// kernel: dprnn_forward.8
$region0: #{dprnn_forward.8}
  #allocation0 [shape = 'u32[]', space=smem, size = 0x4, offset = 0x4, fixed_abs, tag = 'smem constant byte address 0x4 - core index']
  #allocation1 [shape = 'u32[144,128]{1,0:T(1,128)}', space=vmem, size = 0x12000, scoped, tag = 'internal scratch']
  #allocation2 [shape = 'f32[8,18,128]{2,1,0:T(8,128)}', space=vmem, size = 0x18000, scoped, tag = 'scratch operand']
  #allocation3 [shape = 'f32[8,18,32]{2,1,0:T(8,128)}', space=vmem, size = 0x18000, scoped, tag = 'scratch operand']
  %s0 = inlined_call_operand.vmem [shape: f32[18,128], index: 0, kind: input, shape index: {}]
  %s1 = inlined_call_operand.vmem [shape: f32[32,128], index: 1, kind: input, shape index: {}]
  %s2 = inlined_call_operand.vmem [shape: f32[1,128], index: 2, kind: input, shape index: {}]
  %s3 = inlined_call_operand.vmem [shape: f32[32,128], index: 3, kind: input, shape index: {}]
  %s4 = inlined_call_operand.vmem [shape: f32[32,16], index: 4, kind: input, shape index: {}]
  %s5 = inlined_call_operand.vmem [shape: f32[1,16], index: 5, kind: input, shape index: {}]
  %s6 = inlined_call_operand.vmem [shape: f32[1,16], index: 6, kind: input, shape index: {}]
  %s7 = inlined_call_operand.vmem [shape: f32[1,16], index: 7, kind: input, shape index: {}]
  %s8 = inlined_call_operand.vmem [shape: f32[18,128], index: 8, kind: output, shape index: {}]
  %s9 = sld [smem:[#allocation0]]
  $region42: #{dprnn_forward.8} parent=0
    _
  %s11 = ssub.s32 1, %s9
  %s12 = scalar_select 0, %s11, %s9
  // Predicated region
  $region2: #{dprnn_forward.8} parent=0 // pred_check
    _
  $region3: #{dprnn_forward.8} parent=0 // pred_check_branch
    %14 = sbr.rel (0) target = $region5
  $region4: #{dprnn_forward.8} parent=0 // pred_region
    _
  $region5: #{dprnn_forward.8} parent=0 // pred_fallthru
    _
  // Predicated region
  $region6: #{dprnn_forward.8} parent=0 // pred_check
    _
  $region7: #{dprnn_forward.8} parent=0 // pred_check_branch
    %16 = sbr.rel (0) target = $region9
  $region8: #{dprnn_forward.8} parent=0 // pred_region
    _
  $region9: #{dprnn_forward.8} parent=0 // pred_fallthru
    _
  // Predicated region
  $region10: #{dprnn_forward.8} parent=0 // pred_check
    _
  $region11: #{dprnn_forward.8} parent=0 // pred_check_branch
    %18 = sbr.rel (0) target = $region13
  $region12: #{dprnn_forward.8} parent=0 // pred_region
    _
  $region13: #{dprnn_forward.8} parent=0 // pred_fallthru
    _
  // Predicated region
  $region14: #{dprnn_forward.8} parent=0 // pred_check
    _
  $region15: #{dprnn_forward.8} parent=0 // pred_check_branch
    %20 = sbr.rel (0) target = $region17
  $region16: #{dprnn_forward.8} parent=0 // pred_region
    _
  $region17: #{dprnn_forward.8} parent=0 // pred_fallthru
    _
  // Predicated region
  $region18: #{dprnn_forward.8} parent=0 // pred_check
    _
  $region19: #{dprnn_forward.8} parent=0 // pred_check_branch
    %22 = sbr.rel (0) target = $region21
  $region20: #{dprnn_forward.8} parent=0 // pred_region
    _
  $region21: #{dprnn_forward.8} parent=0 // pred_fallthru
    _
  // Predicated region
  $region22: #{dprnn_forward.8} parent=0 // pred_check
    _
  $region23: #{dprnn_forward.8} parent=0 // pred_check_branch
    %24 = sbr.rel (0) target = $region25
  $region24: #{dprnn_forward.8} parent=0 // pred_region
    _
  $region25: #{dprnn_forward.8} parent=0 // pred_fallthru
    _
  // Predicated region
  $region26: #{dprnn_forward.8} parent=0 // pred_check
    _
  $region27: #{dprnn_forward.8} parent=0 // pred_check_branch
    %26 = sbr.rel (0) target = $region29
  $region28: #{dprnn_forward.8} parent=0 // pred_region
    _
  $region29: #{dprnn_forward.8} parent=0 // pred_fallthru
    _
  // Predicated region
  $region30: #{dprnn_forward.8} parent=0 // pred_check
    _
  $region31: #{dprnn_forward.8} parent=0 // pred_check_branch
    %28 = sbr.rel (0) target = $region33
  $region32: #{dprnn_forward.8} parent=0 // pred_region
    _
  $region33: #{dprnn_forward.8} parent=0 // pred_fallthru
    _
  %v29 = vld [vmem:[%s1] sm:$0xff]
  %v30 = vld [vmem:[%s1 + $0x8] sm:$0xff]
  %v31 = vld [vmem:[%s1 + $0x10] sm:$0xff]
  %v32 = vld [vmem:[%s1 + $0x18] sm:$0xff]
  %v33 = vld [vmem:[%s2] sm:$0x1]
  %v34 = vld [vmem:[%s0] sm:$0xff]
  %v35 = vld [vmem:[%s0 + $0x8] sm:$0xff]
  %v36 = vld [vmem:[%s0 + $0x10] sm:$0x3]
  %40 = vrot.lane.b32.xlu0 %v34, 32
  %v41 = vpop.permute.xlu0 %40
  %42 = vrot.lane.b32.xlu0 %v35, 32
  %v43 = vpop.permute.xlu0 %42
  %44 = vrot.lane.b32.xlu0 %v36, 32
  %v45 = vpop.permute.xlu0 %44
  %vm49 = vcmask 130048
  %v50 = vsel %vm49, %v34, %v41
  %v51 = vsel %vm49, %v35, %v43
  %v52 = vsel %vm49, %v36, %v45
  %v54 = vlaneseq
  %v55 = vshrl.u32 %v54, 7
  %v56 = vsub.s32 0, %v55
  %v57 = vrot.slane %v33, %v56
  %vm59 = vcmask 261120
  %v61 = vsel %vm59, %v50, 0
  %v64 = vsel %vm59, %v51, 0
  %v67 = vsel %vm59, %v52, 0
  %69 = vmatprep.subr.mxu0 0.0
  %70 = vmatpush1.msra.mxu0 %v29
  %71 = vmatprep.subr.mxu0 0.0
  %72 = vmatpush1.msra.mxu0 %v30
  %73 = vmatprep.subr.mxu0 0.0
  %74 = vmatpush1.msra.mxu0 %v31
  %75 = vmatprep.subr.mxu0 0.0
  %76 = vmatpush1.msra.mxu0 %v32
  %77 = vmatprep.subr.mxu0 0.0
  %78 = vmatpush1.msra.mxu0 0.0
  %79 = vmatprep.subr.mxu0 0.0
  %80 = vmatpush1.msra.mxu0 0.0
  %81 = vmatprep.subr.mxu0 0.0
  %82 = vmatpush1.msra.mxu0 0.0
  %83 = vmatprep.subr.mxu0 0.0
  %84 = vmatpush1.msra.mxu0 0.0
  %85 = vmatprep.subr.mxu0 0.0
  %86 = vmatpush1.msra.mxu0 0.0
  %87 = vmatprep.subr.mxu0 0.0
  %88 = vmatpush1.msra.mxu0 0.0
  %89 = vmatprep.subr.mxu0 0.0
  %90 = vmatpush1.msra.mxu0 0.0
  %91 = vmatprep.subr.mxu0 0.0
  %92 = vmatpush1.msra.mxu0 0.0
  %93 = vmatprep.subr.mxu0 0.0
  %94 = vmatpush1.msra.mxu0 0.0
  %95 = vmatprep.subr.mxu0 0.0
  %96 = vmatpush1.msra.mxu0 0.0
  %97 = vmatprep.subr.mxu0 0.0
  %98 = vmatpush1.msra.mxu0 0.0
  %99 = vmatprep.subr.mxu0 0.0
  %100 = vmatpush1.msra.mxu0 0.0
  %101 = vmatprep.subr.mxu0 0.0
  %102 = vmatpush1.msra.mxu0 0.0
  %103 = vmatprep.subr.mxu0 0.0
  %104 = vmatpush1.msra.mxu0 0.0
  %105 = vmatprep.subr.mxu0 0.0
  %106 = vmatpush1.msra.mxu0 0.0
  %107 = vmatprep.subr.mxu0 0.0
  %108 = vmatpush1.msra.mxu0 0.0
  %109 = vmatprep.subr.mxu0 0.0
  %110 = vmatpush1.msra.mxu0 0.0
  %111 = vmatprep.subr.mxu0 0.0
  %112 = vmatpush1.msra.mxu0 0.0
  %113 = vmatprep.subr.mxu0 0.0
  %114 = vmatpush1.msra.mxu0 0.0
  %115 = vmatprep.subr.mxu0 0.0
  %116 = vmatpush1.msra.mxu0 0.0
  %117 = vmatprep.subr.mxu0 0.0
  %118 = vmatpush1.msra.mxu0 0.0
  %119 = vmatprep.subr.mxu0 0.0
  %120 = vmatpush1.msra.mxu0 0.0
  %121 = vmatprep.subr.mxu0 0.0
  %122 = vmatpush1.msra.mxu0 0.0
  %123 = vmatprep.subr.mxu0 0.0
  %124 = vmatpush1.msra.mxu0 0.0
  %125 = vmatprep.subr.mxu0 0.0
  %126 = vmatpush1.msra.mxu0 0.0
  %127 = vmatprep.subr.mxu0 0.0
  %128 = vmatpush1.msra.mxu0 0.0
  %129 = vmatprep.subr.mxu0 0.0
  %130 = vmatpush1.msra.mxu0 0.0
  %131 = vmatprep.subr.mxu0 0.0
  %132 = vmatpush1.msra.mxu0 0.0
  %133 = vmatprep.mubr.f32.mxu0 0.0
  %134 = vmatmul.mubr.f32.gmra.mrb[0].mxu0 %v61
  %v135 = vpop.f32.mrb[0].mxu0
  %v136 = vadd.f32 %v57, %v135
  %v137 = vpop.f32.mrb[0].mxu0
  %138 = vmatprep.mubr.f32.mxu0 0.0
  %139 = vmatmul.mubr.f32.gmra.mrb[0].mxu0 %v64
  %v140 = vpop.f32.mrb[0].mxu0
  %v141 = vadd.f32 %v57, %v140
  %v142 = vpop.f32.mrb[0].mxu0
  %143 = vmatprep.mubr.f32.mxu0 0.0
  %144 = vmatmul.mubr.f32.gmra.mrb[0].mxu0 %v67
  %v145 = vpop.f32.mrb[0].mxu0
  %v146 = vadd.f32 %v57, %v145
  %v147 = vpop.f32.mrb[0].mxu0
  %148 = vdwg.mxu0
  %149 = vst [vmem:[#allocation2] sm:$0xff] %v136
  %150 = vst [vmem:[#allocation2 + $0x8] sm:$0xff] %v141
  %151 = vst [vmem:[#allocation2 + $0x10] sm:$0x3] %v146
  %v152 = vld [vmem:[%s0] sm:$0xff]
  %v153 = vld [vmem:[%s0 + $0x8] sm:$0xff]
  %v154 = vld [vmem:[%s0 + $0x10] sm:$0x3]
  %158 = vrot.lane.b32.xlu0 %v152, 112
  %v159 = vpop.permute.xlu0 %158
  %160 = vrot.lane.b32.xlu0 %v153, 112
  %v161 = vpop.permute.xlu0 %160
  %162 = vrot.lane.b32.xlu0 %v154, 112
  %v163 = vpop.permute.xlu0 %162
  %167 = vrot.lane.b32.xlu0 %v152, 48
  %v168 = vpop.permute.xlu0 %167
  %169 = vrot.lane.b32.xlu0 %v153, 48
  %v170 = vpop.permute.xlu0 %169
  %171 = vrot.lane.b32.xlu0 %v154, 48
  %v172 = vpop.permute.xlu0 %171
  %v176 = vsel %vm49, %v159, %v168
  %v177 = vsel %vm49, %v161, %v170
  %v178 = vsel %vm49, %v163, %v172
  %v180 = vsel %vm59, %v176, 0
  %v183 = vsel %vm59, %v177, 0
  %v186 = vsel %vm59, %v178, 0
  %188 = vmatprep.subr.mxu0 0.0
  %189 = vmatpush1.msra.mxu0 %v29
  %190 = vmatprep.subr.mxu0 0.0
  %191 = vmatpush1.msra.mxu0 %v30
  %192 = vmatprep.subr.mxu0 0.0
  %193 = vmatpush1.msra.mxu0 %v31
  %194 = vmatprep.subr.mxu0 0.0
  %195 = vmatpush1.msra.mxu0 %v32
  %196 = vmatprep.subr.mxu0 0.0
  %197 = vmatpush1.msra.mxu0 0.0
  %198 = vmatprep.subr.mxu0 0.0
  %199 = vmatpush1.msra.mxu0 0.0
  %200 = vmatprep.subr.mxu0 0.0
  %201 = vmatpush1.msra.mxu0 0.0
  %202 = vmatprep.subr.mxu0 0.0
  %203 = vmatpush1.msra.mxu0 0.0
  %204 = vmatprep.subr.mxu0 0.0
  %205 = vmatpush1.msra.mxu0 0.0
  %206 = vmatprep.subr.mxu0 0.0
  %207 = vmatpush1.msra.mxu0 0.0
  %208 = vmatprep.subr.mxu0 0.0
  %209 = vmatpush1.msra.mxu0 0.0
  %210 = vmatprep.subr.mxu0 0.0
  %211 = vmatpush1.msra.mxu0 0.0
  %212 = vmatprep.subr.mxu0 0.0
  %213 = vmatpush1.msra.mxu0 0.0
  %214 = vmatprep.subr.mxu0 0.0
  %215 = vmatpush1.msra.mxu0 0.0
  %216 = vmatprep.subr.mxu0 0.0
  %217 = vmatpush1.msra.mxu0 0.0
  %218 = vmatprep.subr.mxu0 0.0
  %219 = vmatpush1.msra.mxu0 0.0
  %220 = vmatprep.subr.mxu0 0.0
  %221 = vmatpush1.msra.mxu0 0.0
  %222 = vmatprep.subr.mxu0 0.0
  %223 = vmatpush1.msra.mxu0 0.0
  %224 = vmatprep.subr.mxu0 0.0
  %225 = vmatpush1.msra.mxu0 0.0
  %226 = vmatprep.subr.mxu0 0.0
  %227 = vmatpush1.msra.mxu0 0.0
  %228 = vmatprep.subr.mxu0 0.0
  %229 = vmatpush1.msra.mxu0 0.0
  %230 = vmatprep.subr.mxu0 0.0
  %231 = vmatpush1.msra.mxu0 0.0
  %232 = vmatprep.subr.mxu0 0.0
  %233 = vmatpush1.msra.mxu0 0.0
  %234 = vmatprep.subr.mxu0 0.0
  %235 = vmatpush1.msra.mxu0 0.0
  %236 = vmatprep.subr.mxu0 0.0
  %237 = vmatpush1.msra.mxu0 0.0
  %238 = vmatprep.subr.mxu0 0.0
  %239 = vmatpush1.msra.mxu0 0.0
  %240 = vmatprep.subr.mxu0 0.0
  %241 = vmatpush1.msra.mxu0 0.0
  %242 = vmatprep.subr.mxu0 0.0
  %243 = vmatpush1.msra.mxu0 0.0
  %244 = vmatprep.subr.mxu0 0.0
  %245 = vmatpush1.msra.mxu0 0.0
  %246 = vmatprep.subr.mxu0 0.0
  %247 = vmatpush1.msra.mxu0 0.0
  %248 = vmatprep.subr.mxu0 0.0
  %249 = vmatpush1.msra.mxu0 0.0
  %250 = vmatprep.subr.mxu0 0.0
  %251 = vmatpush1.msra.mxu0 0.0
  %252 = vmatprep.mubr.f32.mxu0 0.0
  %253 = vmatmul.mubr.f32.gmra.mrb[0].mxu0 %v180
  %v254 = vpop.f32.mrb[0].mxu0
  %v255 = vadd.f32 %v57, %v254
  %v256 = vpop.f32.mrb[0].mxu0
  %257 = vmatprep.mubr.f32.mxu0 0.0
  %258 = vmatmul.mubr.f32.gmra.mrb[0].mxu0 %v183
  %v259 = vpop.f32.mrb[0].mxu0
  %v260 = vadd.f32 %v57, %v259
  %v261 = vpop.f32.mrb[0].mxu0
  %262 = vmatprep.mubr.f32.mxu0 0.0
  %263 = vmatmul.mubr.f32.gmra.mrb[0].mxu0 %v186
  %v264 = vpop.f32.mrb[0].mxu0
  %v265 = vadd.f32 %v57, %v264
  %v266 = vpop.f32.mrb[0].mxu0
  %267 = vdwg.mxu0
  %s268 = scalar_lea.vmem [#allocation2], 24
  %269 = vst [vmem:[%s268] sm:$0xff] %v255
  %270 = vst [vmem:[%s268 + $0x8] sm:$0xff] %v260
  %271 = vst [vmem:[%s268 + $0x10] sm:$0x3] %v265
  %v272 = vld [vmem:[%s0] sm:$0xff]
  %v273 = vld [vmem:[%s0 + $0x8] sm:$0xff]
  %v274 = vld [vmem:[%s0 + $0x10] sm:$0x3]
  %278 = vrot.lane.b32.xlu0 %v272, 96
  %v279 = vpop.permute.xlu0 %278
  %280 = vrot.lane.b32.xlu0 %v273, 96
  %v281 = vpop.permute.xlu0 %280
  %282 = vrot.lane.b32.xlu0 %v274, 96
  %v283 = vpop.permute.xlu0 %282
  %287 = vrot.lane.b32.xlu0 %v272, 64
  %v288 = vpop.permute.xlu0 %287
  %289 = vrot.lane.b32.xlu0 %v273, 64
  %v290 = vpop.permute.xlu0 %289
  %291 = vrot.lane.b32.xlu0 %v274, 64
  %v292 = vpop.permute.xlu0 %291
  %v296 = vsel %vm49, %v279, %v288
  %v297 = vsel %vm49, %v281, %v290
  %v298 = vsel %vm49, %v283, %v292
  %v300 = vsel %vm59, %v296, 0
  %v303 = vsel %vm59, %v297, 0
  %v306 = vsel %vm59, %v298, 0
  %308 = vmatprep.subr.mxu0 0.0
  %309 = vmatpush1.msra.mxu0 %v29
  %310 = vmatprep.subr.mxu0 0.0
  %311 = vmatpush1.msra.mxu0 %v30
  %312 = vmatprep.subr.mxu0 0.0
  %313 = vmatpush1.msra.mxu0 %v31
  %314 = vmatprep.subr.mxu0 0.0
  %315 = vmatpush1.msra.mxu0 %v32
  %316 = vmatprep.subr.mxu0 0.0
  %317 = vmatpush1.msra.mxu0 0.0
  %318 = vmatprep.subr.mxu0 0.0
  %319 = vmatpush1.msra.mxu0 0.0
  %320 = vmatprep.subr.mxu0 0.0
  %321 = vmatpush1.msra.mxu0 0.0
  %322 = vmatprep.subr.mxu0 0.0
  %323 = vmatpush1.msra.mxu0 0.0
  %324 = vmatprep.subr.mxu0 0.0
  %325 = vmatpush1.msra.mxu0 0.0
  %326 = vmatprep.subr.mxu0 0.0
  %327 = vmatpush1.msra.mxu0 0.0
  %328 = vmatprep.subr.mxu0 0.0
  %329 = vmatpush1.msra.mxu0 0.0
  %330 = vmatprep.subr.mxu0 0.0
  %331 = vmatpush1.msra.mxu0 0.0
  %332 = vmatprep.subr.mxu0 0.0
  %333 = vmatpush1.msra.mxu0 0.0
  %334 = vmatprep.subr.mxu0 0.0
  %335 = vmatpush1.msra.mxu0 0.0
  %336 = vmatprep.subr.mxu0 0.0
  %337 = vmatpush1.msra.mxu0 0.0
  %338 = vmatprep.subr.mxu0 0.0
  %339 = vmatpush1.msra.mxu0 0.0
  %340 = vmatprep.subr.mxu0 0.0
  %341 = vmatpush1.msra.mxu0 0.0
  %342 = vmatprep.subr.mxu0 0.0
  %343 = vmatpush1.msra.mxu0 0.0
  %344 = vmatprep.subr.mxu0 0.0
  %345 = vmatpush1.msra.mxu0 0.0
  %346 = vmatprep.subr.mxu0 0.0
  %347 = vmatpush1.msra.mxu0 0.0
  %348 = vmatprep.subr.mxu0 0.0
  %349 = vmatpush1.msra.mxu0 0.0
  %350 = vmatprep.subr.mxu0 0.0
  %351 = vmatpush1.msra.mxu0 0.0
  %352 = vmatprep.subr.mxu0 0.0
  %353 = vmatpush1.msra.mxu0 0.0
  %354 = vmatprep.subr.mxu0 0.0
  %355 = vmatpush1.msra.mxu0 0.0
  %356 = vmatprep.subr.mxu0 0.0
  %357 = vmatpush1.msra.mxu0 0.0
  %358 = vmatprep.subr.mxu0 0.0
  %359 = vmatpush1.msra.mxu0 0.0
  %360 = vmatprep.subr.mxu0 0.0
  %361 = vmatpush1.msra.mxu0 0.0
  %362 = vmatprep.subr.mxu0 0.0
  %363 = vmatpush1.msra.mxu0 0.0
  %364 = vmatprep.subr.mxu0 0.0
  %365 = vmatpush1.msra.mxu0 0.0
  %366 = vmatprep.subr.mxu0 0.0
  %367 = vmatpush1.msra.mxu0 0.0
  %368 = vmatprep.subr.mxu0 0.0
  %369 = vmatpush1.msra.mxu0 0.0
  %370 = vmatprep.subr.mxu0 0.0
  %371 = vmatpush1.msra.mxu0 0.0
  %372 = vmatprep.mubr.f32.mxu0 0.0
  %373 = vmatmul.mubr.f32.gmra.mrb[0].mxu0 %v300
  %v374 = vpop.f32.mrb[0].mxu0
  %v375 = vadd.f32 %v57, %v374
  %v376 = vpop.f32.mrb[0].mxu0
  %377 = vmatprep.mubr.f32.mxu0 0.0
  %378 = vmatmul.mubr.f32.gmra.mrb[0].mxu0 %v303
  %v379 = vpop.f32.mrb[0].mxu0
  %v380 = vadd.f32 %v57, %v379
  %v381 = vpop.f32.mrb[0].mxu0
  %382 = vmatprep.mubr.f32.mxu0 0.0
  %383 = vmatmul.mubr.f32.gmra.mrb[0].mxu0 %v306
  %v384 = vpop.f32.mrb[0].mxu0
  %v385 = vadd.f32 %v57, %v384
  %v386 = vpop.f32.mrb[0].mxu0
  %387 = vdwg.mxu0
  %s388 = scalar_lea.vmem [#allocation2], 48
  %389 = vst [vmem:[%s388] sm:$0xff] %v375
  %390 = vst [vmem:[%s388 + $0x8] sm:$0xff] %v380
  %391 = vst [vmem:[%s388 + $0x10] sm:$0x3] %v385
  %v392 = vld [vmem:[%s0] sm:$0xff]
  %v393 = vld [vmem:[%s0 + $0x8] sm:$0xff]
  %v394 = vld [vmem:[%s0 + $0x10] sm:$0x3]
  %398 = vrot.lane.b32.xlu0 %v392, 80
  %v399 = vpop.permute.xlu0 %398
  %400 = vrot.lane.b32.xlu0 %v393, 80
  %v401 = vpop.permute.xlu0 %400
  %402 = vrot.lane.b32.xlu0 %v394, 80
  %v403 = vpop.permute.xlu0 %402
  %v408 = vsel %vm59, %v399, 0
  %v411 = vsel %vm59, %v401, 0
  %v414 = vsel %vm59, %v403, 0
  %416 = vmatprep.subr.mxu0 0.0
  %417 = vmatpush1.msra.mxu0 %v29
  %418 = vmatprep.subr.mxu0 0.0
  %419 = vmatpush1.msra.mxu0 %v30
  %420 = vmatprep.subr.mxu0 0.0
  %421 = vmatpush1.msra.mxu0 %v31
  %422 = vmatprep.subr.mxu0 0.0
  %423 = vmatpush1.msra.mxu0 %v32
  %424 = vmatprep.subr.mxu0 0.0
  %425 = vmatpush1.msra.mxu0 0.0
  %426 = vmatprep.subr.mxu0 0.0
  %427 = vmatpush1.msra.mxu0 0.0
  %428 = vmatprep.subr.mxu0 0.0
  %429 = vmatpush1.msra.mxu0 0.0
  %430 = vmatprep.subr.mxu0 0.0
  %431 = vmatpush1.msra.mxu0 0.0
  %432 = vmatprep.subr.mxu0 0.0
  %433 = vmatpush1.msra.mxu0 0.0
  %434 = vmatprep.subr.mxu0 0.0
  %435 = vmatpush1.msra.mxu0 0.0
  %436 = vmatprep.subr.mxu0 0.0
  %437 = vmatpush1.msra.mxu0 0.0
  %438 = vmatprep.subr.mxu0 0.0
  %439 = vmatpush1.msra.mxu0 0.0
  %440 = vmatprep.subr.mxu0 0.0
  %441 = vmatpush1.msra.mxu0 0.0
  %442 = vmatprep.subr.mxu0 0.0
  %443 = vmatpush1.msra.mxu0 0.0
  %444 = vmatprep.subr.mxu0 0.0
  %445 = vmatpush1.msra.mxu0 0.0
  %446 = vmatprep.subr.mxu0 0.0
  %447 = vmatpush1.msra.mxu0 0.0
  %448 = vmatprep.subr.mxu0 0.0
  %449 = vmatpush1.msra.mxu0 0.0
  %450 = vmatprep.subr.mxu0 0.0
  %451 = vmatpush1.msra.mxu0 0.0
  %452 = vmatprep.subr.mxu0 0.0
  %453 = vmatpush1.msra.mxu0 0.0
  %454 = vmatprep.subr.mxu0 0.0
  %455 = vmatpush1.msra.mxu0 0.0
  %456 = vmatprep.subr.mxu0 0.0
  %457 = vmatpush1.msra.mxu0 0.0
  %458 = vmatprep.subr.mxu0 0.0
  %459 = vmatpush1.msra.mxu0 0.0
  %460 = vmatprep.subr.mxu0 0.0
  %461 = vmatpush1.msra.mxu0 0.0
  %462 = vmatprep.subr.mxu0 0.0
  %463 = vmatpush1.msra.mxu0 0.0
  %464 = vmatprep.subr.mxu0 0.0
  %465 = vmatpush1.msra.mxu0 0.0
  %466 = vmatprep.subr.mxu0 0.0
  %467 = vmatpush1.msra.mxu0 0.0
  %468 = vmatprep.subr.mxu0 0.0
  %469 = vmatpush1.msra.mxu0 0.0
  %470 = vmatprep.subr.mxu0 0.0
  %471 = vmatpush1.msra.mxu0 0.0
  %472 = vmatprep.subr.mxu0 0.0
  %473 = vmatpush1.msra.mxu0 0.0
  %474 = vmatprep.subr.mxu0 0.0
  %475 = vmatpush1.msra.mxu0 0.0
  %476 = vmatprep.subr.mxu0 0.0
  %477 = vmatpush1.msra.mxu0 0.0
  %478 = vmatprep.subr.mxu0 0.0
  %479 = vmatpush1.msra.mxu0 0.0
  %480 = vmatprep.mubr.f32.mxu0 0.0
  %481 = vmatmul.mubr.f32.gmra.mrb[0].mxu0 %v408
  %v482 = vpop.f32.mrb[0].mxu0
  %v483 = vadd.f32 %v57, %v482
  %v484 = vpop.f32.mrb[0].mxu0
  %485 = vmatprep.mubr.f32.mxu0 0.0
  %486 = vmatmul.mubr.f32.gmra.mrb[0].mxu0 %v411
  %v487 = vpop.f32.mrb[0].mxu0
  %v488 = vadd.f32 %v57, %v487
  %v489 = vpop.f32.mrb[0].mxu0
  %490 = vmatprep.mubr.f32.mxu0 0.0
  %491 = vmatmul.mubr.f32.gmra.mrb[0].mxu0 %v414
  %v492 = vpop.f32.mrb[0].mxu0
  %v493 = vadd.f32 %v57, %v492
  %v494 = vpop.f32.mrb[0].mxu0
  %495 = vdwg.mxu0
  %s496 = scalar_lea.vmem [#allocation2], 72
  %497 = vst [vmem:[%s496] sm:$0xff] %v483
  %498 = vst [vmem:[%s496 + $0x8] sm:$0xff] %v488
  %499 = vst [vmem:[%s496 + $0x10] sm:$0x3] %v493
  %v500 = vld [vmem:[%s0] sm:$0xff]
  %v501 = vld [vmem:[%s0 + $0x8] sm:$0xff]
  %v502 = vld [vmem:[%s0 + $0x10] sm:$0x3]
  %506 = vrot.lane.b32.xlu0 %v500, 64
  %v507 = vpop.permute.xlu0 %506
  %508 = vrot.lane.b32.xlu0 %v501, 64
  %v509 = vpop.permute.xlu0 %508
  %510 = vrot.lane.b32.xlu0 %v502, 64
  %v511 = vpop.permute.xlu0 %510
  %515 = vrot.lane.b32.xlu0 %v500, 96
  %v516 = vpop.permute.xlu0 %515
  %517 = vrot.lane.b32.xlu0 %v501, 96
  %v518 = vpop.permute.xlu0 %517
  %519 = vrot.lane.b32.xlu0 %v502, 96
  %v520 = vpop.permute.xlu0 %519
  %v524 = vsel %vm49, %v507, %v516
  %v525 = vsel %vm49, %v509, %v518
  %v526 = vsel %vm49, %v511, %v520
  %v528 = vsel %vm59, %v524, 0
  %v531 = vsel %vm59, %v525, 0
  %v534 = vsel %vm59, %v526, 0
  %536 = vmatprep.subr.mxu0 0.0
  %537 = vmatpush1.msra.mxu0 %v29
  %538 = vmatprep.subr.mxu0 0.0
  %539 = vmatpush1.msra.mxu0 %v30
  %540 = vmatprep.subr.mxu0 0.0
  %541 = vmatpush1.msra.mxu0 %v31
  %542 = vmatprep.subr.mxu0 0.0
  %543 = vmatpush1.msra.mxu0 %v32
  %544 = vmatprep.subr.mxu0 0.0
  %545 = vmatpush1.msra.mxu0 0.0
  %546 = vmatprep.subr.mxu0 0.0
  %547 = vmatpush1.msra.mxu0 0.0
  %548 = vmatprep.subr.mxu0 0.0
  %549 = vmatpush1.msra.mxu0 0.0
  %550 = vmatprep.subr.mxu0 0.0
  %551 = vmatpush1.msra.mxu0 0.0
  %552 = vmatprep.subr.mxu0 0.0
  %553 = vmatpush1.msra.mxu0 0.0
  %554 = vmatprep.subr.mxu0 0.0
  %555 = vmatpush1.msra.mxu0 0.0
  %556 = vmatprep.subr.mxu0 0.0
  %557 = vmatpush1.msra.mxu0 0.0
  %558 = vmatprep.subr.mxu0 0.0
  %559 = vmatpush1.msra.mxu0 0.0
  %560 = vmatprep.subr.mxu0 0.0
  %561 = vmatpush1.msra.mxu0 0.0
  %562 = vmatprep.subr.mxu0 0.0
  %563 = vmatpush1.msra.mxu0 0.0
  %564 = vmatprep.subr.mxu0 0.0
  %565 = vmatpush1.msra.mxu0 0.0
  %566 = vmatprep.subr.mxu0 0.0
  %567 = vmatpush1.msra.mxu0 0.0
  %568 = vmatprep.subr.mxu0 0.0
  %569 = vmatpush1.msra.mxu0 0.0
  %570 = vmatprep.subr.mxu0 0.0
  %571 = vmatpush1.msra.mxu0 0.0
  %572 = vmatprep.subr.mxu0 0.0
  %573 = vmatpush1.msra.mxu0 0.0
  %574 = vmatprep.subr.mxu0 0.0
  %575 = vmatpush1.msra.mxu0 0.0
  %576 = vmatprep.subr.mxu0 0.0
  %577 = vmatpush1.msra.mxu0 0.0
  %578 = vmatprep.subr.mxu0 0.0
  %579 = vmatpush1.msra.mxu0 0.0
  %580 = vmatprep.subr.mxu0 0.0
  %581 = vmatpush1.msra.mxu0 0.0
  %582 = vmatprep.subr.mxu0 0.0
  %583 = vmatpush1.msra.mxu0 0.0
  %584 = vmatprep.subr.mxu0 0.0
  %585 = vmatpush1.msra.mxu0 0.0
  %586 = vmatprep.subr.mxu0 0.0
  %587 = vmatpush1.msra.mxu0 0.0
  %588 = vmatprep.subr.mxu0 0.0
  %589 = vmatpush1.msra.mxu0 0.0
  %590 = vmatprep.subr.mxu0 0.0
  %591 = vmatpush1.msra.mxu0 0.0
  %592 = vmatprep.subr.mxu0 0.0
  %593 = vmatpush1.msra.mxu0 0.0
  %594 = vmatprep.subr.mxu0 0.0
  %595 = vmatpush1.msra.mxu0 0.0
  %596 = vmatprep.subr.mxu0 0.0
  %597 = vmatpush1.msra.mxu0 0.0
  %598 = vmatprep.subr.mxu0 0.0
  %599 = vmatpush1.msra.mxu0 0.0
  %600 = vmatprep.mubr.f32.mxu0 0.0
  %601 = vmatmul.mubr.f32.gmra.mrb[0].mxu0 %v528
  %v602 = vpop.f32.mrb[0].mxu0
  %v603 = vadd.f32 %v57, %v602
  %v604 = vpop.f32.mrb[0].mxu0
  %605 = vmatprep.mubr.f32.mxu0 0.0
  %606 = vmatmul.mubr.f32.gmra.mrb[0].mxu0 %v531
  %v607 = vpop.f32.mrb[0].mxu0
  %v608 = vadd.f32 %v57, %v607
  %v609 = vpop.f32.mrb[0].mxu0
  %610 = vmatprep.mubr.f32.mxu0 0.0
  %611 = vmatmul.mubr.f32.gmra.mrb[0].mxu0 %v534
  %v612 = vpop.f32.mrb[0].mxu0
  %v613 = vadd.f32 %v57, %v612
  %v614 = vpop.f32.mrb[0].mxu0
  %615 = vdwg.mxu0
  %s616 = scalar_lea.vmem [#allocation2], 96
  %617 = vst [vmem:[%s616] sm:$0xff] %v603
  %618 = vst [vmem:[%s616 + $0x8] sm:$0xff] %v608
  %619 = vst [vmem:[%s616 + $0x10] sm:$0x3] %v613
  %v620 = vld [vmem:[%s0] sm:$0xff]
  %v621 = vld [vmem:[%s0 + $0x8] sm:$0xff]
  %v622 = vld [vmem:[%s0 + $0x10] sm:$0x3]
  %626 = vrot.lane.b32.xlu0 %v620, 48
  %v627 = vpop.permute.xlu0 %626
  %628 = vrot.lane.b32.xlu0 %v621, 48
  %v629 = vpop.permute.xlu0 %628
  %630 = vrot.lane.b32.xlu0 %v622, 48
  %v631 = vpop.permute.xlu0 %630
  %635 = vrot.lane.b32.xlu0 %v620, 112
  %v636 = vpop.permute.xlu0 %635
  %637 = vrot.lane.b32.xlu0 %v621, 112
  %v638 = vpop.permute.xlu0 %637
  %639 = vrot.lane.b32.xlu0 %v622, 112
  %v640 = vpop.permute.xlu0 %639
  %v644 = vsel %vm49, %v627, %v636
  %v645 = vsel %vm49, %v629, %v638
  %v646 = vsel %vm49, %v631, %v640
  %v648 = vsel %vm59, %v644, 0
  %v651 = vsel %vm59, %v645, 0
  %v654 = vsel %vm59, %v646, 0
  %656 = vmatprep.subr.mxu0 0.0
  %657 = vmatpush1.msra.mxu0 %v29
  %658 = vmatprep.subr.mxu0 0.0
  %659 = vmatpush1.msra.mxu0 %v30
  %660 = vmatprep.subr.mxu0 0.0
  %661 = vmatpush1.msra.mxu0 %v31
  %662 = vmatprep.subr.mxu0 0.0
  %663 = vmatpush1.msra.mxu0 %v32
  %664 = vmatprep.subr.mxu0 0.0
  %665 = vmatpush1.msra.mxu0 0.0
  %666 = vmatprep.subr.mxu0 0.0
  %667 = vmatpush1.msra.mxu0 0.0
  %668 = vmatprep.subr.mxu0 0.0
  %669 = vmatpush1.msra.mxu0 0.0
  %670 = vmatprep.subr.mxu0 0.0
  %671 = vmatpush1.msra.mxu0 0.0
  %672 = vmatprep.subr.mxu0 0.0
  %673 = vmatpush1.msra.mxu0 0.0
  %674 = vmatprep.subr.mxu0 0.0
  %675 = vmatpush1.msra.mxu0 0.0
  %676 = vmatprep.subr.mxu0 0.0
  %677 = vmatpush1.msra.mxu0 0.0
  %678 = vmatprep.subr.mxu0 0.0
  %679 = vmatpush1.msra.mxu0 0.0
  %680 = vmatprep.subr.mxu0 0.0
  %681 = vmatpush1.msra.mxu0 0.0
  %682 = vmatprep.subr.mxu0 0.0
  %683 = vmatpush1.msra.mxu0 0.0
  %684 = vmatprep.subr.mxu0 0.0
  %685 = vmatpush1.msra.mxu0 0.0
  %686 = vmatprep.subr.mxu0 0.0
  %687 = vmatpush1.msra.mxu0 0.0
  %688 = vmatprep.subr.mxu0 0.0
  %689 = vmatpush1.msra.mxu0 0.0
  %690 = vmatprep.subr.mxu0 0.0
  %691 = vmatpush1.msra.mxu0 0.0
  %692 = vmatprep.subr.mxu0 0.0
  %693 = vmatpush1.msra.mxu0 0.0
  %694 = vmatprep.subr.mxu0 0.0
  %695 = vmatpush1.msra.mxu0 0.0
  %696 = vmatprep.subr.mxu0 0.0
  %697 = vmatpush1.msra.mxu0 0.0
  %698 = vmatprep.subr.mxu0 0.0
  %699 = vmatpush1.msra.mxu0 0.0
  %700 = vmatprep.subr.mxu0 0.0
  %701 = vmatpush1.msra.mxu0 0.0
  %702 = vmatprep.subr.mxu0 0.0
  %703 = vmatpush1.msra.mxu0 0.0
  %704 = vmatprep.subr.mxu0 0.0
  %705 = vmatpush1.msra.mxu0 0.0
  %706 = vmatprep.subr.mxu0 0.0
  %707 = vmatpush1.msra.mxu0 0.0
  %708 = vmatprep.subr.mxu0 0.0
  %709 = vmatpush1.msra.mxu0 0.0
  %710 = vmatprep.subr.mxu0 0.0
  %711 = vmatpush1.msra.mxu0 0.0
  %712 = vmatprep.subr.mxu0 0.0
  %713 = vmatpush1.msra.mxu0 0.0
  %714 = vmatprep.subr.mxu0 0.0
  %715 = vmatpush1.msra.mxu0 0.0
  %716 = vmatprep.subr.mxu0 0.0
  %717 = vmatpush1.msra.mxu0 0.0
  %718 = vmatprep.subr.mxu0 0.0
  %719 = vmatpush1.msra.mxu0 0.0
  %720 = vmatprep.mubr.f32.mxu0 0.0
  %721 = vmatmul.mubr.f32.gmra.mrb[0].mxu0 %v648
  %v722 = vpop.f32.mrb[0].mxu0
  %v723 = vadd.f32 %v57, %v722
  %v724 = vpop.f32.mrb[0].mxu0
  %725 = vmatprep.mubr.f32.mxu0 0.0
  %726 = vmatmul.mubr.f32.gmra.mrb[0].mxu0 %v651
  %v727 = vpop.f32.mrb[0].mxu0
  %v728 = vadd.f32 %v57, %v727
  %v729 = vpop.f32.mrb[0].mxu0
  %730 = vmatprep.mubr.f32.mxu0 0.0
  %731 = vmatmul.mubr.f32.gmra.mrb[0].mxu0 %v654
  %v732 = vpop.f32.mrb[0].mxu0
  %v733 = vadd.f32 %v57, %v732
  %v734 = vpop.f32.mrb[0].mxu0
  %735 = vdwg.mxu0
  %s736 = scalar_lea.vmem [#allocation2], 120
  %737 = vst [vmem:[%s736] sm:$0xff] %v723
  %738 = vst [vmem:[%s736 + $0x8] sm:$0xff] %v728
  %739 = vst [vmem:[%s736 + $0x10] sm:$0x3] %v733
  %v740 = vld [vmem:[%s0] sm:$0xff]
  %v741 = vld [vmem:[%s0 + $0x8] sm:$0xff]
  %v742 = vld [vmem:[%s0 + $0x10] sm:$0x3]
  %746 = vrot.lane.b32.xlu0 %v740, 32
  %v747 = vpop.permute.xlu0 %746
  %748 = vrot.lane.b32.xlu0 %v741, 32
  %v749 = vpop.permute.xlu0 %748
  %750 = vrot.lane.b32.xlu0 %v742, 32
  %v751 = vpop.permute.xlu0 %750
  %v755 = vsel %vm49, %v747, %v740
  %v756 = vsel %vm49, %v749, %v741
  %v757 = vsel %vm49, %v751, %v742
  %v759 = vsel %vm59, %v755, 0
  %v762 = vsel %vm59, %v756, 0
  %v765 = vsel %vm59, %v757, 0
  %767 = vmatprep.subr.mxu0 0.0
  %768 = vmatpush1.msra.mxu0 %v29
  %769 = vmatprep.subr.mxu0 0.0
  %770 = vmatpush1.msra.mxu0 %v30
  %771 = vmatprep.subr.mxu0 0.0
  %772 = vmatpush1.msra.mxu0 %v31
  %773 = vmatprep.subr.mxu0 0.0
  %774 = vmatpush1.msra.mxu0 %v32
  %775 = vmatprep.subr.mxu0 0.0
  %776 = vmatpush1.msra.mxu0 0.0
  %777 = vmatprep.subr.mxu0 0.0
  %778 = vmatpush1.msra.mxu0 0.0
  %779 = vmatprep.subr.mxu0 0.0
  %780 = vmatpush1.msra.mxu0 0.0
  %781 = vmatprep.subr.mxu0 0.0
  %782 = vmatpush1.msra.mxu0 0.0
  %783 = vmatprep.subr.mxu0 0.0
  %784 = vmatpush1.msra.mxu0 0.0
  %785 = vmatprep.subr.mxu0 0.0
  %786 = vmatpush1.msra.mxu0 0.0
  %787 = vmatprep.subr.mxu0 0.0
  %788 = vmatpush1.msra.mxu0 0.0
  %789 = vmatprep.subr.mxu0 0.0
  %790 = vmatpush1.msra.mxu0 0.0
  %791 = vmatprep.subr.mxu0 0.0
  %792 = vmatpush1.msra.mxu0 0.0
  %793 = vmatprep.subr.mxu0 0.0
  %794 = vmatpush1.msra.mxu0 0.0
  %795 = vmatprep.subr.mxu0 0.0
  %796 = vmatpush1.msra.mxu0 0.0
  %797 = vmatprep.subr.mxu0 0.0
  %798 = vmatpush1.msra.mxu0 0.0
  %799 = vmatprep.subr.mxu0 0.0
  %800 = vmatpush1.msra.mxu0 0.0
  %801 = vmatprep.subr.mxu0 0.0
  %802 = vmatpush1.msra.mxu0 0.0
  %803 = vmatprep.subr.mxu0 0.0
  %804 = vmatpush1.msra.mxu0 0.0
  %805 = vmatprep.subr.mxu0 0.0
  %806 = vmatpush1.msra.mxu0 0.0
  %807 = vmatprep.subr.mxu0 0.0
  %808 = vmatpush1.msra.mxu0 0.0
  %809 = vmatprep.subr.mxu0 0.0
  %810 = vmatpush1.msra.mxu0 0.0
  %811 = vmatprep.subr.mxu0 0.0
  %812 = vmatpush1.msra.mxu0 0.0
  %813 = vmatprep.subr.mxu0 0.0
  %814 = vmatpush1.msra.mxu0 0.0
  %815 = vmatprep.subr.mxu0 0.0
  %816 = vmatpush1.msra.mxu0 0.0
  %817 = vmatprep.subr.mxu0 0.0
  %818 = vmatpush1.msra.mxu0 0.0
  %819 = vmatprep.subr.mxu0 0.0
  %820 = vmatpush1.msra.mxu0 0.0
  %821 = vmatprep.subr.mxu0 0.0
  %822 = vmatpush1.msra.mxu0 0.0
  %823 = vmatprep.subr.mxu0 0.0
  %824 = vmatpush1.msra.mxu0 0.0
  %825 = vmatprep.subr.mxu0 0.0
  %826 = vmatpush1.msra.mxu0 0.0
  %827 = vmatprep.subr.mxu0 0.0
  %828 = vmatpush1.msra.mxu0 0.0
  %829 = vmatprep.subr.mxu0 0.0
  %830 = vmatpush1.msra.mxu0 0.0
  %831 = vmatprep.mubr.f32.mxu0 0.0
  %832 = vmatmul.mubr.f32.gmra.mrb[0].mxu0 %v759
  %v833 = vpop.f32.mrb[0].mxu0
  %v834 = vadd.f32 %v57, %v833
  %v835 = vpop.f32.mrb[0].mxu0
  %836 = vmatprep.mubr.f32.mxu0 0.0
  %837 = vmatmul.mubr.f32.gmra.mrb[0].mxu0 %v762
  %v838 = vpop.f32.mrb[0].mxu0
  %v839 = vadd.f32 %v57, %v838
  %v840 = vpop.f32.mrb[0].mxu0
  %841 = vmatprep.mubr.f32.mxu0 0.0
  %842 = vmatmul.mubr.f32.gmra.mrb[0].mxu0 %v765
  %v843 = vpop.f32.mrb[0].mxu0
  %v844 = vadd.f32 %v57, %v843
  %v845 = vpop.f32.mrb[0].mxu0
  %846 = vdwg.mxu0
  %s847 = scalar_lea.vmem [#allocation2], 144
  %848 = vst [vmem:[%s847] sm:$0xff] %v834
  %849 = vst [vmem:[%s847 + $0x8] sm:$0xff] %v839
  %850 = vst [vmem:[%s847 + $0x10] sm:$0x3] %v844
  %v851 = vld [vmem:[%s0] sm:$0xff]
  %v852 = vld [vmem:[%s0 + $0x8] sm:$0xff]
  %v853 = vld [vmem:[%s0 + $0x10] sm:$0x3]
  %857 = vrot.lane.b32.xlu0 %v851, 16
  %v858 = vpop.permute.xlu0 %857
  %859 = vrot.lane.b32.xlu0 %v852, 16
  %v860 = vpop.permute.xlu0 %859
  %861 = vrot.lane.b32.xlu0 %v853, 16
  %v862 = vpop.permute.xlu0 %861
  %v867 = vsel %vm59, %v858, 0
  %v870 = vsel %vm59, %v860, 0
  %v873 = vsel %vm59, %v862, 0
  %875 = vmatprep.subr.mxu0 0.0
  %876 = vmatpush1.msra.mxu0 %v29
  %877 = vmatprep.subr.mxu0 0.0
  %878 = vmatpush1.msra.mxu0 %v30
  %879 = vmatprep.subr.mxu0 0.0
  %880 = vmatpush1.msra.mxu0 %v31
  %881 = vmatprep.subr.mxu0 0.0
  %882 = vmatpush1.msra.mxu0 %v32
  %883 = vmatprep.subr.mxu0 0.0
  %884 = vmatpush1.msra.mxu0 0.0
  %885 = vmatprep.subr.mxu0 0.0
  %886 = vmatpush1.msra.mxu0 0.0
  %887 = vmatprep.subr.mxu0 0.0
  %888 = vmatpush1.msra.mxu0 0.0
  %889 = vmatprep.subr.mxu0 0.0
  %890 = vmatpush1.msra.mxu0 0.0
  %891 = vmatprep.subr.mxu0 0.0
  %892 = vmatpush1.msra.mxu0 0.0
  %893 = vmatprep.subr.mxu0 0.0
  %894 = vmatpush1.msra.mxu0 0.0
  %895 = vmatprep.subr.mxu0 0.0
  %896 = vmatpush1.msra.mxu0 0.0
  %897 = vmatprep.subr.mxu0 0.0
  %898 = vmatpush1.msra.mxu0 0.0
  %899 = vmatprep.subr.mxu0 0.0
  %900 = vmatpush1.msra.mxu0 0.0
  %901 = vmatprep.subr.mxu0 0.0
  %902 = vmatpush1.msra.mxu0 0.0
  %903 = vmatprep.subr.mxu0 0.0
  %904 = vmatpush1.msra.mxu0 0.0
  %905 = vmatprep.subr.mxu0 0.0
  %906 = vmatpush1.msra.mxu0 0.0
  %907 = vmatprep.subr.mxu0 0.0
  %908 = vmatpush1.msra.mxu0 0.0
  %909 = vmatprep.subr.mxu0 0.0
  %910 = vmatpush1.msra.mxu0 0.0
  %911 = vmatprep.subr.mxu0 0.0
  %912 = vmatpush1.msra.mxu0 0.0
  %913 = vmatprep.subr.mxu0 0.0
  %914 = vmatpush1.msra.mxu0 0.0
  %915 = vmatprep.subr.mxu0 0.0
  %916 = vmatpush1.msra.mxu0 0.0
  %917 = vmatprep.subr.mxu0 0.0
  %918 = vmatpush1.msra.mxu0 0.0
  %919 = vmatprep.subr.mxu0 0.0
  %920 = vmatpush1.msra.mxu0 0.0
  %921 = vmatprep.subr.mxu0 0.0
  %922 = vmatpush1.msra.mxu0 0.0
  %923 = vmatprep.subr.mxu0 0.0
  %924 = vmatpush1.msra.mxu0 0.0
  %925 = vmatprep.subr.mxu0 0.0
  %926 = vmatpush1.msra.mxu0 0.0
  %927 = vmatprep.subr.mxu0 0.0
  %928 = vmatpush1.msra.mxu0 0.0
  %929 = vmatprep.subr.mxu0 0.0
  %930 = vmatpush1.msra.mxu0 0.0
  %931 = vmatprep.subr.mxu0 0.0
  %932 = vmatpush1.msra.mxu0 0.0
  %933 = vmatprep.subr.mxu0 0.0
  %934 = vmatpush1.msra.mxu0 0.0
  %935 = vmatprep.subr.mxu0 0.0
  %936 = vmatpush1.msra.mxu0 0.0
  %937 = vmatprep.subr.mxu0 0.0
  %938 = vmatpush1.msra.mxu0 0.0
  %939 = vmatprep.mubr.f32.mxu0 0.0
  %940 = vmatmul.mubr.f32.gmra.mrb[0].mxu0 %v867
  %v941 = vpop.f32.mrb[0].mxu0
  %v942 = vadd.f32 %v57, %v941
  %v943 = vpop.f32.mrb[0].mxu0
  %944 = vmatprep.mubr.f32.mxu0 0.0
  %945 = vmatmul.mubr.f32.gmra.mrb[0].mxu0 %v870
  %v946 = vpop.f32.mrb[0].mxu0
  %v947 = vadd.f32 %v57, %v946
  %v948 = vpop.f32.mrb[0].mxu0
  %949 = vmatprep.mubr.f32.mxu0 0.0
  %950 = vmatmul.mubr.f32.gmra.mrb[0].mxu0 %v873
  %v951 = vpop.f32.mrb[0].mxu0
  %v952 = vadd.f32 %v57, %v951
  %v953 = vpop.f32.mrb[0].mxu0
  %954 = vdwg.mxu0
  %s955 = scalar_lea.vmem [#allocation2], 168
  %956 = vst [vmem:[%s955] sm:$0xff] %v942
  %957 = vst [vmem:[%s955 + $0x8] sm:$0xff] %v947
  %958 = vst [vmem:[%s955 + $0x10] sm:$0x3] %v952
  %v959 = vld [vmem:[%s3] sm:$0xff]
  %v960 = vld [vmem:[%s3 + $0x8] sm:$0xff]
  %v961 = vld [vmem:[%s3 + $0x10] sm:$0xff]
  %v962 = vld [vmem:[%s3 + $0x18] sm:$0xff]
  %v963 = vld [vmem:[#allocation2] sm:$0xff]
  %v964 = vld [vmem:[#allocation2 + $0x8] sm:$0xff]
  %v965 = vld [vmem:[#allocation2 + $0x10] sm:$0x3]
  %v967 = vsel %vm59, 0.0, 0
  %969 = vmatprep.subr.mxu0 0.0
  %970 = vmatpush1.msra.mxu0 %v959
  %971 = vmatprep.subr.mxu0 0.0
  %972 = vmatpush1.msra.mxu0 %v960
  %973 = vmatprep.subr.mxu0 0.0
  %974 = vmatpush1.msra.mxu0 %v961
  %975 = vmatprep.subr.mxu0 0.0
  %976 = vmatpush1.msra.mxu0 %v962
  %977 = vmatprep.subr.mxu0 0.0
  %978 = vmatpush1.msra.mxu0 0.0
  %979 = vmatprep.subr.mxu0 0.0
  %980 = vmatpush1.msra.mxu0 0.0
  %981 = vmatprep.subr.mxu0 0.0
  %982 = vmatpush1.msra.mxu0 0.0
  %983 = vmatprep.subr.mxu0 0.0
  %984 = vmatpush1.msra.mxu0 0.0
  %985 = vmatprep.subr.mxu0 0.0
  %986 = vmatpush1.msra.mxu0 0.0
  %987 = vmatprep.subr.mxu0 0.0
  %988 = vmatpush1.msra.mxu0 0.0
  %989 = vmatprep.subr.mxu0 0.0
  %990 = vmatpush1.msra.mxu0 0.0
  %991 = vmatprep.subr.mxu0 0.0
  %992 = vmatpush1.msra.mxu0 0.0
  %993 = vmatprep.subr.mxu0 0.0
  %994 = vmatpush1.msra.mxu0 0.0
  %995 = vmatprep.subr.mxu0 0.0
  %996 = vmatpush1.msra.mxu0 0.0
  %997 = vmatprep.subr.mxu0 0.0
  %998 = vmatpush1.msra.mxu0 0.0
  %999 = vmatprep.subr.mxu0 0.0
  %1000 = vmatpush1.msra.mxu0 0.0
  %1001 = vmatprep.subr.mxu0 0.0
  %1002 = vmatpush1.msra.mxu0 0.0
  %1003 = vmatprep.subr.mxu0 0.0
  %1004 = vmatpush1.msra.mxu0 0.0
  %1005 = vmatprep.subr.mxu0 0.0
  %1006 = vmatpush1.msra.mxu0 0.0
  %1007 = vmatprep.subr.mxu0 0.0
  %1008 = vmatpush1.msra.mxu0 0.0
  %1009 = vmatprep.subr.mxu0 0.0
  %1010 = vmatpush1.msra.mxu0 0.0
  %1011 = vmatprep.subr.mxu0 0.0
  %1012 = vmatpush1.msra.mxu0 0.0
  %1013 = vmatprep.subr.mxu0 0.0
  %1014 = vmatpush1.msra.mxu0 0.0
  %1015 = vmatprep.subr.mxu0 0.0
  %1016 = vmatpush1.msra.mxu0 0.0
  %1017 = vmatprep.subr.mxu0 0.0
  %1018 = vmatpush1.msra.mxu0 0.0
  %1019 = vmatprep.subr.mxu0 0.0
  %1020 = vmatpush1.msra.mxu0 0.0
  %1021 = vmatprep.subr.mxu0 0.0
  %1022 = vmatpush1.msra.mxu0 0.0
  %1023 = vmatprep.subr.mxu0 0.0
  %1024 = vmatpush1.msra.mxu0 0.0
  %1025 = vmatprep.subr.mxu0 0.0
  %1026 = vmatpush1.msra.mxu0 0.0
  %1027 = vmatprep.subr.mxu0 0.0
  %1028 = vmatpush1.msra.mxu0 0.0
  %1029 = vmatprep.subr.mxu0 0.0
  %1030 = vmatpush1.msra.mxu0 0.0
  %1031 = vmatprep.subr.mxu0 0.0
  %1032 = vmatpush1.msra.mxu0 0.0
  %1033 = vmatprep.mubr.f32.mxu0 0.0
  %1034 = vmatmul.mubr.f32.gmra.mrb[0].mxu0 %v967
  %v1035 = vpop.f32.mrb[0].mxu0
  %v1036 = vadd.f32 0.0, %v1035
  %v1037 = vpop.f32.mrb[0].mxu0
  %1038 = vmatprep.mubr.f32.mxu0 0.0
  %1039 = vmatmul.mubr.f32.gmra.mrb[0].mxu0 %v967
  %v1040 = vpop.f32.mrb[0].mxu0
  %v1041 = vadd.f32 0.0, %v1040
  %v1042 = vpop.f32.mrb[0].mxu0
  %1043 = vmatprep.mubr.f32.mxu0 0.0
  %1044 = vmatmul.mubr.f32.gmra.mrb[0].mxu0 %v967
  %v1045 = vpop.f32.mrb[0].mxu0
  %v1046 = vadd.f32 0.0, %v1045
  %v1047 = vpop.f32.mrb[0].mxu0
  %1048 = vdwg.mxu0
  %v1049 = vadd.f32 %v963, %v1036
  %v1050 = vadd.f32 %v964, %v1041
  %v1051 = vadd.f32 %v965, %v1046
  %v1052 = vxor.u32 %v1049, 2147483648
  %v1053 = vxor.u32 %v1050, 2147483648
  %v1054 = vxor.u32 %v1051, 2147483648
  %v1055 = vmul.f32 %v1052, 1.442695
  %v1056 = vpow.pop %v1055
  %v1057 = vmul.f32 %v1053, 1.442695
  %v1058 = vpow.pop %v1057
  %v1059 = vmul.f32 %v1054, 1.442695
  %v1060 = vpow.pop %v1059
  %v1061 = vadd.f32 %v1056, 1.0
  %v1062 = vadd.f32 %v1058, 1.0
  %v1063 = vadd.f32 %v1060, 1.0
  %v1064 = vrcp.pop %v1061
  %v1065 = vmul.f32 1.0, %v1064
  %v1066 = vrcp.pop %v1062
  %v1067 = vmul.f32 1.0, %v1066
  %v1068 = vrcp.pop %v1063
  %v1069 = vmul.f32 1.0, %v1068
  %v1070 = vtanh.pop %v1049
  %v1071 = vtanh.pop %v1050
  %v1072 = vtanh.pop %v1051
  %v1073 = vmul.f32 %v1065, 0.0
  %v1074 = vmul.f32 %v1067, 0.0
  %v1075 = vmul.f32 %v1069, 0.0
  %1079 = vrot.lane.b32.xlu0 %v1070, 64
  %v1080 = vpop.permute.xlu0 %1079
  %1081 = vrot.lane.b32.xlu0 %v1071, 64
  %v1082 = vpop.permute.xlu0 %1081
  %1083 = vrot.lane.b32.xlu0 %v1072, 64
  %v1084 = vpop.permute.xlu0 %1083
  %v1088 = vmul.f32 %v1065, %v1080
  %v1089 = vmul.f32 %v1067, %v1082
  %v1090 = vmul.f32 %v1069, %v1084
  %1094 = vrot.lane.b32.xlu0 %v1088, 32
  %v1095 = vpop.permute.xlu0 %1094
  %1096 = vrot.lane.b32.xlu0 %v1089, 32
  %v1097 = vpop.permute.xlu0 %1096
  %1098 = vrot.lane.b32.xlu0 %v1090, 32
  %v1099 = vpop.permute.xlu0 %1098
  %v1103 = vadd.f32 %v1073, %v1095
  %v1104 = vadd.f32 %v1074, %v1097
  %v1105 = vadd.f32 %v1075, %v1099
  %v1106 = vtanh.pop %v1103
  %v1107 = vtanh.pop %v1104
  %v1108 = vtanh.pop %v1105
  %1112 = vrot.lane.b32.xlu0 %v1106, 64
  %v1113 = vpop.permute.xlu0 %1112
  %1114 = vrot.lane.b32.xlu0 %v1107, 64
  %v1115 = vpop.permute.xlu0 %1114
  %1116 = vrot.lane.b32.xlu0 %v1108, 64
  %v1117 = vpop.permute.xlu0 %1116
  %v1121 = vmul.f32 %v1065, %v1113
  %v1122 = vmul.f32 %v1067, %v1115
  %v1123 = vmul.f32 %v1069, %v1117
  %1127 = vrot.lane.b32.xlu0 %v1121, 32
  %v1128 = vpop.permute.xlu0 %1127
  %1129 = vrot.lane.b32.xlu0 %v1122, 32
  %v1130 = vpop.permute.xlu0 %1129
  %1131 = vrot.lane.b32.xlu0 %v1123, 32
  %v1132 = vpop.permute.xlu0 %1131
  %1136 = vst.msk [vmem:[#allocation3] sm:$0xff] %vm59, %v1128
  %1137 = vst.msk [vmem:[#allocation3 + $0x8] sm:$0xff] %vm59, %v1130
  %vm1138 = vcmask 254976
  %1139 = vst.msk [vmem:[#allocation3 + $0x10] sm:$0x3] %vm1138, %v1132
  %v1140 = vld [vmem:[%s268] sm:$0xff]
  %v1141 = vld [vmem:[%s268 + $0x8] sm:$0xff]
  %v1142 = vld [vmem:[%s268 + $0x10] sm:$0x3]
  %v1143 = vsel %vm59, %v1128, 0
  %v1145 = vsel %vm59, %v1130, 0
  %v1147 = vsel %vm59, %v1132, 0
  %1149 = vmatprep.subr.mxu0 0.0
  %1150 = vmatpush1.msra.mxu0 %v959
  %1151 = vmatprep.subr.mxu0 0.0
  %1152 = vmatpush1.msra.mxu0 %v960
  %1153 = vmatprep.subr.mxu0 0.0
  %1154 = vmatpush1.msra.mxu0 %v961
  %1155 = vmatprep.subr.mxu0 0.0
  %1156 = vmatpush1.msra.mxu0 %v962
  %1157 = vmatprep.subr.mxu0 0.0
  %1158 = vmatpush1.msra.mxu0 0.0
  %1159 = vmatprep.subr.mxu0 0.0
  %1160 = vmatpush1.msra.mxu0 0.0
  %1161 = vmatprep.subr.mxu0 0.0
  %1162 = vmatpush1.msra.mxu0 0.0
  %1163 = vmatprep.subr.mxu0 0.0
  %1164 = vmatpush1.msra.mxu0 0.0
  %1165 = vmatprep.subr.mxu0 0.0
  %1166 = vmatpush1.msra.mxu0 0.0
  %1167 = vmatprep.subr.mxu0 0.0
  %1168 = vmatpush1.msra.mxu0 0.0
  %1169 = vmatprep.subr.mxu0 0.0
  %1170 = vmatpush1.msra.mxu0 0.0
  %1171 = vmatprep.subr.mxu0 0.0
  %1172 = vmatpush1.msra.mxu0 0.0
  %1173 = vmatprep.subr.mxu0 0.0
  %1174 = vmatpush1.msra.mxu0 0.0
  %1175 = vmatprep.subr.mxu0 0.0
  %1176 = vmatpush1.msra.mxu0 0.0
  %1177 = vmatprep.subr.mxu0 0.0
  %1178 = vmatpush1.msra.mxu0 0.0
  %1179 = vmatprep.subr.mxu0 0.0
  %1180 = vmatpush1.msra.mxu0 0.0
  %1181 = vmatprep.subr.mxu0 0.0
  %1182 = vmatpush1.msra.mxu0 0.0
  %1183 = vmatprep.subr.mxu0 0.0
  %1184 = vmatpush1.msra.mxu0 0.0
  %1185 = vmatprep.subr.mxu0 0.0
  %1186 = vmatpush1.msra.mxu0 0.0
  %1187 = vmatprep.subr.mxu0 0.0
  %1188 = vmatpush1.msra.mxu0 0.0
  %1189 = vmatprep.subr.mxu0 0.0
  %1190 = vmatpush1.msra.mxu0 0.0
  %1191 = vmatprep.subr.mxu0 0.0
  %1192 = vmatpush1.msra.mxu0 0.0
  %1193 = vmatprep.subr.mxu0 0.0
  %1194 = vmatpush1.msra.mxu0 0.0
  %1195 = vmatprep.subr.mxu0 0.0
  %1196 = vmatpush1.msra.mxu0 0.0
  %1197 = vmatprep.subr.mxu0 0.0
  %1198 = vmatpush1.msra.mxu0 0.0
  %1199 = vmatprep.subr.mxu0 0.0
  %1200 = vmatpush1.msra.mxu0 0.0
  %1201 = vmatprep.subr.mxu0 0.0
  %1202 = vmatpush1.msra.mxu0 0.0
  %1203 = vmatprep.subr.mxu0 0.0
  %1204 = vmatpush1.msra.mxu0 0.0
  %1205 = vmatprep.subr.mxu0 0.0
  %1206 = vmatpush1.msra.mxu0 0.0
  %1207 = vmatprep.subr.mxu0 0.0
  %1208 = vmatpush1.msra.mxu0 0.0
  %1209 = vmatprep.subr.mxu0 0.0
  %1210 = vmatpush1.msra.mxu0 0.0
  %1211 = vmatprep.subr.mxu0 0.0
  %1212 = vmatpush1.msra.mxu0 0.0
  %1213 = vmatprep.mubr.f32.mxu0 0.0
  %1214 = vmatmul.mubr.f32.gmra.mrb[0].mxu0 %v1143
  %v1215 = vpop.f32.mrb[0].mxu0
  %v1216 = vadd.f32 0.0, %v1215
  %v1217 = vpop.f32.mrb[0].mxu0
  %1218 = vmatprep.mubr.f32.mxu0 0.0
  %1219 = vmatmul.mubr.f32.gmra.mrb[0].mxu0 %v1145
  %v1220 = vpop.f32.mrb[0].mxu0
  %v1221 = vadd.f32 0.0, %v1220
  %v1222 = vpop.f32.mrb[0].mxu0
  %1223 = vmatprep.mubr.f32.mxu0 0.0
  %1224 = vmatmul.mubr.f32.gmra.mrb[0].mxu0 %v1147
  %v1225 = vpop.f32.mrb[0].mxu0
  %v1226 = vadd.f32 0.0, %v1225
  %v1227 = vpop.f32.mrb[0].mxu0
  %1228 = vdwg.mxu0
  %v1229 = vadd.f32 %v1140, %v1216
  %v1230 = vadd.f32 %v1141, %v1221
  %v1231 = vadd.f32 %v1142, %v1226
  %v1232 = vxor.u32 %v1229, 2147483648
  %v1233 = vxor.u32 %v1230, 2147483648
  %v1234 = vxor.u32 %v1231, 2147483648
  %v1235 = vmul.f32 %v1232, 1.442695
  %v1236 = vpow.pop %v1235
  %v1237 = vmul.f32 %v1233, 1.442695
  %v1238 = vpow.pop %v1237
  %v1239 = vmul.f32 %v1234, 1.442695
  %v1240 = vpow.pop %v1239
  %v1241 = vadd.f32 %v1236, 1.0
  %v1242 = vadd.f32 %v1238, 1.0
  %v1243 = vadd.f32 %v1240, 1.0
  %v1244 = vrcp.pop %v1241
  %v1245 = vmul.f32 1.0, %v1244
  %v1246 = vrcp.pop %v1242
  %v1247 = vmul.f32 1.0, %v1246
  %v1248 = vrcp.pop %v1243
  %v1249 = vmul.f32 1.0, %v1248
  %v1250 = vtanh.pop %v1229
  %v1251 = vtanh.pop %v1230
  %v1252 = vtanh.pop %v1231
  %v1253 = vmul.f32 %v1245, %v1103
  %v1254 = vmul.f32 %v1247, %v1104
  %v1255 = vmul.f32 %v1249, %v1105
  %1259 = vrot.lane.b32.xlu0 %v1250, 64
  %v1260 = vpop.permute.xlu0 %1259
  %1261 = vrot.lane.b32.xlu0 %v1251, 64
  %v1262 = vpop.permute.xlu0 %1261
  %1263 = vrot.lane.b32.xlu0 %v1252, 64
  %v1264 = vpop.permute.xlu0 %1263
  %v1268 = vmul.f32 %v1245, %v1260
  %v1269 = vmul.f32 %v1247, %v1262
  %v1270 = vmul.f32 %v1249, %v1264
  %1274 = vrot.lane.b32.xlu0 %v1268, 32
  %v1275 = vpop.permute.xlu0 %1274
  %1276 = vrot.lane.b32.xlu0 %v1269, 32
  %v1277 = vpop.permute.xlu0 %1276
  %1278 = vrot.lane.b32.xlu0 %v1270, 32
  %v1279 = vpop.permute.xlu0 %1278
  %v1283 = vadd.f32 %v1253, %v1275
  %v1284 = vadd.f32 %v1254, %v1277
  %v1285 = vadd.f32 %v1255, %v1279
  %v1286 = vtanh.pop %v1283
  %v1287 = vtanh.pop %v1284
  %v1288 = vtanh.pop %v1285
  %1292 = vrot.lane.b32.xlu0 %v1286, 64
  %v1293 = vpop.permute.xlu0 %1292
  %1294 = vrot.lane.b32.xlu0 %v1287, 64
  %v1295 = vpop.permute.xlu0 %1294
  %1296 = vrot.lane.b32.xlu0 %v1288, 64
  %v1297 = vpop.permute.xlu0 %1296
  %v1301 = vmul.f32 %v1245, %v1293
  %v1302 = vmul.f32 %v1247, %v1295
  %v1303 = vmul.f32 %v1249, %v1297
  %1307 = vrot.lane.b32.xlu0 %v1301, 32
  %v1308 = vpop.permute.xlu0 %1307
  %1309 = vrot.lane.b32.xlu0 %v1302, 32
  %v1310 = vpop.permute.xlu0 %1309
  %1311 = vrot.lane.b32.xlu0 %v1303, 32
  %v1312 = vpop.permute.xlu0 %1311
  %s1316 = scalar_lea.vmem [#allocation3], 24
  %1317 = vst.msk [vmem:[%s1316] sm:$0xff] %vm59, %v1308
  %1318 = vst.msk [vmem:[%s1316 + $0x8] sm:$0xff] %vm59, %v1310
  %1319 = vst.msk [vmem:[%s1316 + $0x10] sm:$0x3] %vm1138, %v1312
  %v1320 = vld [vmem:[%s388] sm:$0xff]
  %v1321 = vld [vmem:[%s388 + $0x8] sm:$0xff]
  %v1322 = vld [vmem:[%s388 + $0x10] sm:$0x3]
  %v1323 = vsel %vm59, %v1308, 0
  %v1325 = vsel %vm59, %v1310, 0
  %v1327 = vsel %vm59, %v1312, 0
  %1329 = vmatprep.subr.mxu0 0.0
  %1330 = vmatpush1.msra.mxu0 %v959
  %1331 = vmatprep.subr.mxu0 0.0
  %1332 = vmatpush1.msra.mxu0 %v960
  %1333 = vmatprep.subr.mxu0 0.0
  %1334 = vmatpush1.msra.mxu0 %v961
  %1335 = vmatprep.subr.mxu0 0.0
  %1336 = vmatpush1.msra.mxu0 %v962
  %1337 = vmatprep.subr.mxu0 0.0
  %1338 = vmatpush1.msra.mxu0 0.0
  %1339 = vmatprep.subr.mxu0 0.0
  %1340 = vmatpush1.msra.mxu0 0.0
  %1341 = vmatprep.subr.mxu0 0.0
  %1342 = vmatpush1.msra.mxu0 0.0
  %1343 = vmatprep.subr.mxu0 0.0
  %1344 = vmatpush1.msra.mxu0 0.0
  %1345 = vmatprep.subr.mxu0 0.0
  %1346 = vmatpush1.msra.mxu0 0.0
  %1347 = vmatprep.subr.mxu0 0.0
  %1348 = vmatpush1.msra.mxu0 0.0
  %1349 = vmatprep.subr.mxu0 0.0
  %1350 = vmatpush1.msra.mxu0 0.0
  %1351 = vmatprep.subr.mxu0 0.0
  %1352 = vmatpush1.msra.mxu0 0.0
  %1353 = vmatprep.subr.mxu0 0.0
  %1354 = vmatpush1.msra.mxu0 0.0
  %1355 = vmatprep.subr.mxu0 0.0
  %1356 = vmatpush1.msra.mxu0 0.0
  %1357 = vmatprep.subr.mxu0 0.0
  %1358 = vmatpush1.msra.mxu0 0.0
  %1359 = vmatprep.subr.mxu0 0.0
  %1360 = vmatpush1.msra.mxu0 0.0
  %1361 = vmatprep.subr.mxu0 0.0
  %1362 = vmatpush1.msra.mxu0 0.0
  %1363 = vmatprep.subr.mxu0 0.0
  %1364 = vmatpush1.msra.mxu0 0.0
  %1365 = vmatprep.subr.mxu0 0.0
  %1366 = vmatpush1.msra.mxu0 0.0
  %1367 = vmatprep.subr.mxu0 0.0
  %1368 = vmatpush1.msra.mxu0 0.0
  %1369 = vmatprep.subr.mxu0 0.0
  %1370 = vmatpush1.msra.mxu0 0.0
  %1371 = vmatprep.subr.mxu0 0.0
  %1372 = vmatpush1.msra.mxu0 0.0
  %1373 = vmatprep.subr.mxu0 0.0
  %1374 = vmatpush1.msra.mxu0 0.0
  %1375 = vmatprep.subr.mxu0 0.0
  %1376 = vmatpush1.msra.mxu0 0.0
  %1377 = vmatprep.subr.mxu0 0.0
  %1378 = vmatpush1.msra.mxu0 0.0
  %1379 = vmatprep.subr.mxu0 0.0
  %1380 = vmatpush1.msra.mxu0 0.0
  %1381 = vmatprep.subr.mxu0 0.0
  %1382 = vmatpush1.msra.mxu0 0.0
  %1383 = vmatprep.subr.mxu0 0.0
  %1384 = vmatpush1.msra.mxu0 0.0
  %1385 = vmatprep.subr.mxu0 0.0
  %1386 = vmatpush1.msra.mxu0 0.0
  %1387 = vmatprep.subr.mxu0 0.0
  %1388 = vmatpush1.msra.mxu0 0.0
  %1389 = vmatprep.subr.mxu0 0.0
  %1390 = vmatpush1.msra.mxu0 0.0
  %1391 = vmatprep.subr.mxu0 0.0
  %1392 = vmatpush1.msra.mxu0 0.0
  %1393 = vmatprep.mubr.f32.mxu0 0.0
  %1394 = vmatmul.mubr.f32.gmra.mrb[0].mxu0 %v1323
  %v1395 = vpop.f32.mrb[0].mxu0
  %v1396 = vadd.f32 0.0, %v1395
  %v1397 = vpop.f32.mrb[0].mxu0
  %1398 = vmatprep.mubr.f32.mxu0 0.0
  %1399 = vmatmul.mubr.f32.gmra.mrb[0].mxu0 %v1325
  %v1400 = vpop.f32.mrb[0].mxu0
  %v1401 = vadd.f32 0.0, %v1400
  %v1402 = vpop.f32.mrb[0].mxu0
  %1403 = vmatprep.mubr.f32.mxu0 0.0
  %1404 = vmatmul.mubr.f32.gmra.mrb[0].mxu0 %v1327
  %v1405 = vpop.f32.mrb[0].mxu0
  %v1406 = vadd.f32 0.0, %v1405
  %v1407 = vpop.f32.mrb[0].mxu0
  %1408 = vdwg.mxu0
  %v1409 = vadd.f32 %v1320, %v1396
  %v1410 = vadd.f32 %v1321, %v1401
  %v1411 = vadd.f32 %v1322, %v1406
  %v1412 = vxor.u32 %v1409, 2147483648
  %v1413 = vxor.u32 %v1410, 2147483648
  %v1414 = vxor.u32 %v1411, 2147483648
  %v1415 = vmul.f32 %v1412, 1.442695
  %v1416 = vpow.pop %v1415
  %v1417 = vmul.f32 %v1413, 1.442695
  %v1418 = vpow.pop %v1417
  %v1419 = vmul.f32 %v1414, 1.442695
  %v1420 = vpow.pop %v1419
  %v1421 = vadd.f32 %v1416, 1.0
  %v1422 = vadd.f32 %v1418, 1.0
  %v1423 = vadd.f32 %v1420, 1.0
  %v1424 = vrcp.pop %v1421
  %v1425 = vmul.f32 1.0, %v1424
  %v1426 = vrcp.pop %v1422
  %v1427 = vmul.f32 1.0, %v1426
  %v1428 = vrcp.pop %v1423
  %v1429 = vmul.f32 1.0, %v1428
  %v1430 = vtanh.pop %v1409
  %v1431 = vtanh.pop %v1410
  %v1432 = vtanh.pop %v1411
  %v1433 = vmul.f32 %v1425, %v1283
  %v1434 = vmul.f32 %v1427, %v1284
  %v1435 = vmul.f32 %v1429, %v1285
  %1439 = vrot.lane.b32.xlu0 %v1430, 64
  %v1440 = vpop.permute.xlu0 %1439
  %1441 = vrot.lane.b32.xlu0 %v1431, 64
  %v1442 = vpop.permute.xlu0 %1441
  %1443 = vrot.lane.b32.xlu0 %v1432, 64
  %v1444 = vpop.permute.xlu0 %1443
  %v1448 = vmul.f32 %v1425, %v1440
  %v1449 = vmul.f32 %v1427, %v1442
  %v1450 = vmul.f32 %v1429, %v1444
  %1454 = vrot.lane.b32.xlu0 %v1448, 32
  %v1455 = vpop.permute.xlu0 %1454
  %1456 = vrot.lane.b32.xlu0 %v1449, 32
  %v1457 = vpop.permute.xlu0 %1456
  %1458 = vrot.lane.b32.xlu0 %v1450, 32
  %v1459 = vpop.permute.xlu0 %1458
  %v1463 = vadd.f32 %v1433, %v1455
  %v1464 = vadd.f32 %v1434, %v1457
  %v1465 = vadd.f32 %v1435, %v1459
  %v1466 = vtanh.pop %v1463
  %v1467 = vtanh.pop %v1464
  %v1468 = vtanh.pop %v1465
  %1472 = vrot.lane.b32.xlu0 %v1466, 64
  %v1473 = vpop.permute.xlu0 %1472
  %1474 = vrot.lane.b32.xlu0 %v1467, 64
  %v1475 = vpop.permute.xlu0 %1474
  %1476 = vrot.lane.b32.xlu0 %v1468, 64
  %v1477 = vpop.permute.xlu0 %1476
  %v1481 = vmul.f32 %v1425, %v1473
  %v1482 = vmul.f32 %v1427, %v1475
  %v1483 = vmul.f32 %v1429, %v1477
  %1487 = vrot.lane.b32.xlu0 %v1481, 32
  %v1488 = vpop.permute.xlu0 %1487
  %1489 = vrot.lane.b32.xlu0 %v1482, 32
  %v1490 = vpop.permute.xlu0 %1489
  %1491 = vrot.lane.b32.xlu0 %v1483, 32
  %v1492 = vpop.permute.xlu0 %1491
  %s1496 = scalar_lea.vmem [#allocation3], 48
  %1497 = vst.msk [vmem:[%s1496] sm:$0xff] %vm59, %v1488
  %1498 = vst.msk [vmem:[%s1496 + $0x8] sm:$0xff] %vm59, %v1490
  %1499 = vst.msk [vmem:[%s1496 + $0x10] sm:$0x3] %vm1138, %v1492
  %v1500 = vld [vmem:[%s496] sm:$0xff]
  %v1501 = vld [vmem:[%s496 + $0x8] sm:$0xff]
  %v1502 = vld [vmem:[%s496 + $0x10] sm:$0x3]
  %v1503 = vsel %vm59, %v1488, 0
  %v1505 = vsel %vm59, %v1490, 0
  %v1507 = vsel %vm59, %v1492, 0
  %1509 = vmatprep.subr.mxu0 0.0
  %1510 = vmatpush1.msra.mxu0 %v959
  %1511 = vmatprep.subr.mxu0 0.0
  %1512 = vmatpush1.msra.mxu0 %v960
  %1513 = vmatprep.subr.mxu0 0.0
  %1514 = vmatpush1.msra.mxu0 %v961
  %1515 = vmatprep.subr.mxu0 0.0
  %1516 = vmatpush1.msra.mxu0 %v962
  %1517 = vmatprep.subr.mxu0 0.0
  %1518 = vmatpush1.msra.mxu0 0.0
  %1519 = vmatprep.subr.mxu0 0.0
  %1520 = vmatpush1.msra.mxu0 0.0
  %1521 = vmatprep.subr.mxu0 0.0
  %1522 = vmatpush1.msra.mxu0 0.0
  %1523 = vmatprep.subr.mxu0 0.0
  %1524 = vmatpush1.msra.mxu0 0.0
  %1525 = vmatprep.subr.mxu0 0.0
  %1526 = vmatpush1.msra.mxu0 0.0
  %1527 = vmatprep.subr.mxu0 0.0
  %1528 = vmatpush1.msra.mxu0 0.0
  %1529 = vmatprep.subr.mxu0 0.0
  %1530 = vmatpush1.msra.mxu0 0.0
  %1531 = vmatprep.subr.mxu0 0.0
  %1532 = vmatpush1.msra.mxu0 0.0
  %1533 = vmatprep.subr.mxu0 0.0
  %1534 = vmatpush1.msra.mxu0 0.0
  %1535 = vmatprep.subr.mxu0 0.0
  %1536 = vmatpush1.msra.mxu0 0.0
  %1537 = vmatprep.subr.mxu0 0.0
  %1538 = vmatpush1.msra.mxu0 0.0
  %1539 = vmatprep.subr.mxu0 0.0
  %1540 = vmatpush1.msra.mxu0 0.0
  %1541 = vmatprep.subr.mxu0 0.0
  %1542 = vmatpush1.msra.mxu0 0.0
  %1543 = vmatprep.subr.mxu0 0.0
  %1544 = vmatpush1.msra.mxu0 0.0
  %1545 = vmatprep.subr.mxu0 0.0
  %1546 = vmatpush1.msra.mxu0 0.0
  %1547 = vmatprep.subr.mxu0 0.0
  %1548 = vmatpush1.msra.mxu0 0.0
  %1549 = vmatprep.subr.mxu0 0.0
  %1550 = vmatpush1.msra.mxu0 0.0
  %1551 = vmatprep.subr.mxu0 0.0
  %1552 = vmatpush1.msra.mxu0 0.0
  %1553 = vmatprep.subr.mxu0 0.0
  %1554 = vmatpush1.msra.mxu0 0.0
  %1555 = vmatprep.subr.mxu0 0.0
  %1556 = vmatpush1.msra.mxu0 0.0
  %1557 = vmatprep.subr.mxu0 0.0
  %1558 = vmatpush1.msra.mxu0 0.0
  %1559 = vmatprep.subr.mxu0 0.0
  %1560 = vmatpush1.msra.mxu0 0.0
  %1561 = vmatprep.subr.mxu0 0.0
  %1562 = vmatpush1.msra.mxu0 0.0
  %1563 = vmatprep.subr.mxu0 0.0
  %1564 = vmatpush1.msra.mxu0 0.0
  %1565 = vmatprep.subr.mxu0 0.0
  %1566 = vmatpush1.msra.mxu0 0.0
  %1567 = vmatprep.subr.mxu0 0.0
  %1568 = vmatpush1.msra.mxu0 0.0
  %1569 = vmatprep.subr.mxu0 0.0
  %1570 = vmatpush1.msra.mxu0 0.0
  %1571 = vmatprep.subr.mxu0 0.0
  %1572 = vmatpush1.msra.mxu0 0.0
  %1573 = vmatprep.mubr.f32.mxu0 0.0
  %1574 = vmatmul.mubr.f32.gmra.mrb[0].mxu0 %v1503
  %v1575 = vpop.f32.mrb[0].mxu0
  %v1576 = vadd.f32 0.0, %v1575
  %v1577 = vpop.f32.mrb[0].mxu0
  %1578 = vmatprep.mubr.f32.mxu0 0.0
  %1579 = vmatmul.mubr.f32.gmra.mrb[0].mxu0 %v1505
  %v1580 = vpop.f32.mrb[0].mxu0
  %v1581 = vadd.f32 0.0, %v1580
  %v1582 = vpop.f32.mrb[0].mxu0
  %1583 = vmatprep.mubr.f32.mxu0 0.0
  %1584 = vmatmul.mubr.f32.gmra.mrb[0].mxu0 %v1507
  %v1585 = vpop.f32.mrb[0].mxu0
  %v1586 = vadd.f32 0.0, %v1585
  %v1587 = vpop.f32.mrb[0].mxu0
  %1588 = vdwg.mxu0
  %v1589 = vadd.f32 %v1500, %v1576
  %v1590 = vadd.f32 %v1501, %v1581
  %v1591 = vadd.f32 %v1502, %v1586
  %v1592 = vxor.u32 %v1589, 2147483648
  %v1593 = vxor.u32 %v1590, 2147483648
  %v1594 = vxor.u32 %v1591, 2147483648
  %v1595 = vmul.f32 %v1592, 1.442695
  %v1596 = vpow.pop %v1595
  %v1597 = vmul.f32 %v1593, 1.442695
  %v1598 = vpow.pop %v1597
  %v1599 = vmul.f32 %v1594, 1.442695
  %v1600 = vpow.pop %v1599
  %v1601 = vadd.f32 %v1596, 1.0
  %v1602 = vadd.f32 %v1598, 1.0
  %v1603 = vadd.f32 %v1600, 1.0
  %v1604 = vrcp.pop %v1601
  %v1605 = vmul.f32 1.0, %v1604
  %v1606 = vrcp.pop %v1602
  %v1607 = vmul.f32 1.0, %v1606
  %v1608 = vrcp.pop %v1603
  %v1609 = vmul.f32 1.0, %v1608
  %v1610 = vtanh.pop %v1589
  %v1611 = vtanh.pop %v1590
  %v1612 = vtanh.pop %v1591
  %v1613 = vmul.f32 %v1605, %v1463
  %v1614 = vmul.f32 %v1607, %v1464
  %v1615 = vmul.f32 %v1609, %v1465
  %1619 = vrot.lane.b32.xlu0 %v1610, 64
  %v1620 = vpop.permute.xlu0 %1619
  %1621 = vrot.lane.b32.xlu0 %v1611, 64
  %v1622 = vpop.permute.xlu0 %1621
  %1623 = vrot.lane.b32.xlu0 %v1612, 64
  %v1624 = vpop.permute.xlu0 %1623
  %v1628 = vmul.f32 %v1605, %v1620
  %v1629 = vmul.f32 %v1607, %v1622
  %v1630 = vmul.f32 %v1609, %v1624
  %1634 = vrot.lane.b32.xlu0 %v1628, 32
  %v1635 = vpop.permute.xlu0 %1634
  %1636 = vrot.lane.b32.xlu0 %v1629, 32
  %v1637 = vpop.permute.xlu0 %1636
  %1638 = vrot.lane.b32.xlu0 %v1630, 32
  %v1639 = vpop.permute.xlu0 %1638
  %v1643 = vadd.f32 %v1613, %v1635
  %v1644 = vadd.f32 %v1614, %v1637
  %v1645 = vadd.f32 %v1615, %v1639
  %v1646 = vtanh.pop %v1643
  %v1647 = vtanh.pop %v1644
  %v1648 = vtanh.pop %v1645
  %1652 = vrot.lane.b32.xlu0 %v1646, 64
  %v1653 = vpop.permute.xlu0 %1652
  %1654 = vrot.lane.b32.xlu0 %v1647, 64
  %v1655 = vpop.permute.xlu0 %1654
  %1656 = vrot.lane.b32.xlu0 %v1648, 64
  %v1657 = vpop.permute.xlu0 %1656
  %v1661 = vmul.f32 %v1605, %v1653
  %v1662 = vmul.f32 %v1607, %v1655
  %v1663 = vmul.f32 %v1609, %v1657
  %1667 = vrot.lane.b32.xlu0 %v1661, 32
  %v1668 = vpop.permute.xlu0 %1667
  %1669 = vrot.lane.b32.xlu0 %v1662, 32
  %v1670 = vpop.permute.xlu0 %1669
  %1671 = vrot.lane.b32.xlu0 %v1663, 32
  %v1672 = vpop.permute.xlu0 %1671
  %s1676 = scalar_lea.vmem [#allocation3], 72
  %1677 = vst.msk [vmem:[%s1676] sm:$0xff] %vm59, %v1668
  %1678 = vst.msk [vmem:[%s1676 + $0x8] sm:$0xff] %vm59, %v1670
  %1679 = vst.msk [vmem:[%s1676 + $0x10] sm:$0x3] %vm1138, %v1672
  %v1680 = vld [vmem:[%s616] sm:$0xff]
  %v1681 = vld [vmem:[%s616 + $0x8] sm:$0xff]
  %v1682 = vld [vmem:[%s616 + $0x10] sm:$0x3]
  %v1683 = vsel %vm59, %v1668, 0
  %v1685 = vsel %vm59, %v1670, 0
  %v1687 = vsel %vm59, %v1672, 0
  %1689 = vmatprep.subr.mxu0 0.0
  %1690 = vmatpush1.msra.mxu0 %v959
  %1691 = vmatprep.subr.mxu0 0.0
  %1692 = vmatpush1.msra.mxu0 %v960
  %1693 = vmatprep.subr.mxu0 0.0
  %1694 = vmatpush1.msra.mxu0 %v961
  %1695 = vmatprep.subr.mxu0 0.0
  %1696 = vmatpush1.msra.mxu0 %v962
  %1697 = vmatprep.subr.mxu0 0.0
  %1698 = vmatpush1.msra.mxu0 0.0
  %1699 = vmatprep.subr.mxu0 0.0
  %1700 = vmatpush1.msra.mxu0 0.0
  %1701 = vmatprep.subr.mxu0 0.0
  %1702 = vmatpush1.msra.mxu0 0.0
  %1703 = vmatprep.subr.mxu0 0.0
  %1704 = vmatpush1.msra.mxu0 0.0
  %1705 = vmatprep.subr.mxu0 0.0
  %1706 = vmatpush1.msra.mxu0 0.0
  %1707 = vmatprep.subr.mxu0 0.0
  %1708 = vmatpush1.msra.mxu0 0.0
  %1709 = vmatprep.subr.mxu0 0.0
  %1710 = vmatpush1.msra.mxu0 0.0
  %1711 = vmatprep.subr.mxu0 0.0
  %1712 = vmatpush1.msra.mxu0 0.0
  %1713 = vmatprep.subr.mxu0 0.0
  %1714 = vmatpush1.msra.mxu0 0.0
  %1715 = vmatprep.subr.mxu0 0.0
  %1716 = vmatpush1.msra.mxu0 0.0
  %1717 = vmatprep.subr.mxu0 0.0
  %1718 = vmatpush1.msra.mxu0 0.0
  %1719 = vmatprep.subr.mxu0 0.0
  %1720 = vmatpush1.msra.mxu0 0.0
  %1721 = vmatprep.subr.mxu0 0.0
  %1722 = vmatpush1.msra.mxu0 0.0
  %1723 = vmatprep.subr.mxu0 0.0
  %1724 = vmatpush1.msra.mxu0 0.0
  %1725 = vmatprep.subr.mxu0 0.0
  %1726 = vmatpush1.msra.mxu0 0.0
  %1727 = vmatprep.subr.mxu0 0.0
  %1728 = vmatpush1.msra.mxu0 0.0
  %1729 = vmatprep.subr.mxu0 0.0
  %1730 = vmatpush1.msra.mxu0 0.0
  %1731 = vmatprep.subr.mxu0 0.0
  %1732 = vmatpush1.msra.mxu0 0.0
  %1733 = vmatprep.subr.mxu0 0.0
  %1734 = vmatpush1.msra.mxu0 0.0
  %1735 = vmatprep.subr.mxu0 0.0
  %1736 = vmatpush1.msra.mxu0 0.0
  %1737 = vmatprep.subr.mxu0 0.0
  %1738 = vmatpush1.msra.mxu0 0.0
  %1739 = vmatprep.subr.mxu0 0.0
  %1740 = vmatpush1.msra.mxu0 0.0
  %1741 = vmatprep.subr.mxu0 0.0
  %1742 = vmatpush1.msra.mxu0 0.0
  %1743 = vmatprep.subr.mxu0 0.0
  %1744 = vmatpush1.msra.mxu0 0.0
  %1745 = vmatprep.subr.mxu0 0.0
  %1746 = vmatpush1.msra.mxu0 0.0
  %1747 = vmatprep.subr.mxu0 0.0
  %1748 = vmatpush1.msra.mxu0 0.0
  %1749 = vmatprep.subr.mxu0 0.0
  %1750 = vmatpush1.msra.mxu0 0.0
  %1751 = vmatprep.subr.mxu0 0.0
  %1752 = vmatpush1.msra.mxu0 0.0
  %1753 = vmatprep.mubr.f32.mxu0 0.0
  %1754 = vmatmul.mubr.f32.gmra.mrb[0].mxu0 %v1683
  %v1755 = vpop.f32.mrb[0].mxu0
  %v1756 = vadd.f32 0.0, %v1755
  %v1757 = vpop.f32.mrb[0].mxu0
  %1758 = vmatprep.mubr.f32.mxu0 0.0
  %1759 = vmatmul.mubr.f32.gmra.mrb[0].mxu0 %v1685
  %v1760 = vpop.f32.mrb[0].mxu0
  %v1761 = vadd.f32 0.0, %v1760
  %v1762 = vpop.f32.mrb[0].mxu0
  %1763 = vmatprep.mubr.f32.mxu0 0.0
  %1764 = vmatmul.mubr.f32.gmra.mrb[0].mxu0 %v1687
  %v1765 = vpop.f32.mrb[0].mxu0
  %v1766 = vadd.f32 0.0, %v1765
  %v1767 = vpop.f32.mrb[0].mxu0
  %1768 = vdwg.mxu0
  %v1769 = vadd.f32 %v1680, %v1756
  %v1770 = vadd.f32 %v1681, %v1761
  %v1771 = vadd.f32 %v1682, %v1766
  %v1772 = vxor.u32 %v1769, 2147483648
  %v1773 = vxor.u32 %v1770, 2147483648
  %v1774 = vxor.u32 %v1771, 2147483648
  %v1775 = vmul.f32 %v1772, 1.442695
  %v1776 = vpow.pop %v1775
  %v1777 = vmul.f32 %v1773, 1.442695
  %v1778 = vpow.pop %v1777
  %v1779 = vmul.f32 %v1774, 1.442695
  %v1780 = vpow.pop %v1779
  %v1781 = vadd.f32 %v1776, 1.0
  %v1782 = vadd.f32 %v1778, 1.0
  %v1783 = vadd.f32 %v1780, 1.0
  %v1784 = vrcp.pop %v1781
  %v1785 = vmul.f32 1.0, %v1784
  %v1786 = vrcp.pop %v1782
  %v1787 = vmul.f32 1.0, %v1786
  %v1788 = vrcp.pop %v1783
  %v1789 = vmul.f32 1.0, %v1788
  %v1790 = vtanh.pop %v1769
  %v1791 = vtanh.pop %v1770
  %v1792 = vtanh.pop %v1771
  %v1793 = vmul.f32 %v1785, %v1643
  %v1794 = vmul.f32 %v1787, %v1644
  %v1795 = vmul.f32 %v1789, %v1645
  %1799 = vrot.lane.b32.xlu0 %v1790, 64
  %v1800 = vpop.permute.xlu0 %1799
  %1801 = vrot.lane.b32.xlu0 %v1791, 64
  %v1802 = vpop.permute.xlu0 %1801
  %1803 = vrot.lane.b32.xlu0 %v1792, 64
  %v1804 = vpop.permute.xlu0 %1803
  %v1808 = vmul.f32 %v1785, %v1800
  %v1809 = vmul.f32 %v1787, %v1802
  %v1810 = vmul.f32 %v1789, %v1804
  %1814 = vrot.lane.b32.xlu0 %v1808, 32
  %v1815 = vpop.permute.xlu0 %1814
  %1816 = vrot.lane.b32.xlu0 %v1809, 32
  %v1817 = vpop.permute.xlu0 %1816
  %1818 = vrot.lane.b32.xlu0 %v1810, 32
  %v1819 = vpop.permute.xlu0 %1818
  %v1823 = vadd.f32 %v1793, %v1815
  %v1824 = vadd.f32 %v1794, %v1817
  %v1825 = vadd.f32 %v1795, %v1819
  %v1826 = vtanh.pop %v1823
  %v1827 = vtanh.pop %v1824
  %v1828 = vtanh.pop %v1825
  %1832 = vrot.lane.b32.xlu0 %v1826, 64
  %v1833 = vpop.permute.xlu0 %1832
  %1834 = vrot.lane.b32.xlu0 %v1827, 64
  %v1835 = vpop.permute.xlu0 %1834
  %1836 = vrot.lane.b32.xlu0 %v1828, 64
  %v1837 = vpop.permute.xlu0 %1836
  %v1841 = vmul.f32 %v1785, %v1833
  %v1842 = vmul.f32 %v1787, %v1835
  %v1843 = vmul.f32 %v1789, %v1837
  %1847 = vrot.lane.b32.xlu0 %v1841, 32
  %v1848 = vpop.permute.xlu0 %1847
  %1849 = vrot.lane.b32.xlu0 %v1842, 32
  %v1850 = vpop.permute.xlu0 %1849
  %1851 = vrot.lane.b32.xlu0 %v1843, 32
  %v1852 = vpop.permute.xlu0 %1851
  %s1856 = scalar_lea.vmem [#allocation3], 96
  %1857 = vst.msk [vmem:[%s1856] sm:$0xff] %vm59, %v1848
  %1858 = vst.msk [vmem:[%s1856 + $0x8] sm:$0xff] %vm59, %v1850
  %1859 = vst.msk [vmem:[%s1856 + $0x10] sm:$0x3] %vm1138, %v1852
  %v1860 = vld [vmem:[%s736] sm:$0xff]
  %v1861 = vld [vmem:[%s736 + $0x8] sm:$0xff]
  %v1862 = vld [vmem:[%s736 + $0x10] sm:$0x3]
  %v1863 = vsel %vm59, %v1848, 0
  %v1865 = vsel %vm59, %v1850, 0
  %v1867 = vsel %vm59, %v1852, 0
  %1869 = vmatprep.subr.mxu0 0.0
  %1870 = vmatpush1.msra.mxu0 %v959
  %1871 = vmatprep.subr.mxu0 0.0
  %1872 = vmatpush1.msra.mxu0 %v960
  %1873 = vmatprep.subr.mxu0 0.0
  %1874 = vmatpush1.msra.mxu0 %v961
  %1875 = vmatprep.subr.mxu0 0.0
  %1876 = vmatpush1.msra.mxu0 %v962
  %1877 = vmatprep.subr.mxu0 0.0
  %1878 = vmatpush1.msra.mxu0 0.0
  %1879 = vmatprep.subr.mxu0 0.0
  %1880 = vmatpush1.msra.mxu0 0.0
  %1881 = vmatprep.subr.mxu0 0.0
  %1882 = vmatpush1.msra.mxu0 0.0
  %1883 = vmatprep.subr.mxu0 0.0
  %1884 = vmatpush1.msra.mxu0 0.0
  %1885 = vmatprep.subr.mxu0 0.0
  %1886 = vmatpush1.msra.mxu0 0.0
  %1887 = vmatprep.subr.mxu0 0.0
  %1888 = vmatpush1.msra.mxu0 0.0
  %1889 = vmatprep.subr.mxu0 0.0
  %1890 = vmatpush1.msra.mxu0 0.0
  %1891 = vmatprep.subr.mxu0 0.0
  %1892 = vmatpush1.msra.mxu0 0.0
  %1893 = vmatprep.subr.mxu0 0.0
  %1894 = vmatpush1.msra.mxu0 0.0
  %1895 = vmatprep.subr.mxu0 0.0
  %1896 = vmatpush1.msra.mxu0 0.0
  %1897 = vmatprep.subr.mxu0 0.0
  %1898 = vmatpush1.msra.mxu0 0.0
  %1899 = vmatprep.subr.mxu0 0.0
  %1900 = vmatpush1.msra.mxu0 0.0
  %1901 = vmatprep.subr.mxu0 0.0
  %1902 = vmatpush1.msra.mxu0 0.0
  %1903 = vmatprep.subr.mxu0 0.0
  %1904 = vmatpush1.msra.mxu0 0.0
  %1905 = vmatprep.subr.mxu0 0.0
  %1906 = vmatpush1.msra.mxu0 0.0
  %1907 = vmatprep.subr.mxu0 0.0
  %1908 = vmatpush1.msra.mxu0 0.0
  %1909 = vmatprep.subr.mxu0 0.0
  %1910 = vmatpush1.msra.mxu0 0.0
  %1911 = vmatprep.subr.mxu0 0.0
  %1912 = vmatpush1.msra.mxu0 0.0
  %1913 = vmatprep.subr.mxu0 0.0
  %1914 = vmatpush1.msra.mxu0 0.0
  %1915 = vmatprep.subr.mxu0 0.0
  %1916 = vmatpush1.msra.mxu0 0.0
  %1917 = vmatprep.subr.mxu0 0.0
  %1918 = vmatpush1.msra.mxu0 0.0
  %1919 = vmatprep.subr.mxu0 0.0
  %1920 = vmatpush1.msra.mxu0 0.0
  %1921 = vmatprep.subr.mxu0 0.0
  %1922 = vmatpush1.msra.mxu0 0.0
  %1923 = vmatprep.subr.mxu0 0.0
  %1924 = vmatpush1.msra.mxu0 0.0
  %1925 = vmatprep.subr.mxu0 0.0
  %1926 = vmatpush1.msra.mxu0 0.0
  %1927 = vmatprep.subr.mxu0 0.0
  %1928 = vmatpush1.msra.mxu0 0.0
  %1929 = vmatprep.subr.mxu0 0.0
  %1930 = vmatpush1.msra.mxu0 0.0
  %1931 = vmatprep.subr.mxu0 0.0
  %1932 = vmatpush1.msra.mxu0 0.0
  %1933 = vmatprep.mubr.f32.mxu0 0.0
  %1934 = vmatmul.mubr.f32.gmra.mrb[0].mxu0 %v1863
  %v1935 = vpop.f32.mrb[0].mxu0
  %v1936 = vadd.f32 0.0, %v1935
  %v1937 = vpop.f32.mrb[0].mxu0
  %1938 = vmatprep.mubr.f32.mxu0 0.0
  %1939 = vmatmul.mubr.f32.gmra.mrb[0].mxu0 %v1865
  %v1940 = vpop.f32.mrb[0].mxu0
  %v1941 = vadd.f32 0.0, %v1940
  %v1942 = vpop.f32.mrb[0].mxu0
  %1943 = vmatprep.mubr.f32.mxu0 0.0
  %1944 = vmatmul.mubr.f32.gmra.mrb[0].mxu0 %v1867
  %v1945 = vpop.f32.mrb[0].mxu0
  %v1946 = vadd.f32 0.0, %v1945
  %v1947 = vpop.f32.mrb[0].mxu0
  %1948 = vdwg.mxu0
  %v1949 = vadd.f32 %v1860, %v1936
  %v1950 = vadd.f32 %v1861, %v1941
  %v1951 = vadd.f32 %v1862, %v1946
  %v1952 = vxor.u32 %v1949, 2147483648
  %v1953 = vxor.u32 %v1950, 2147483648
  %v1954 = vxor.u32 %v1951, 2147483648
  %v1955 = vmul.f32 %v1952, 1.442695
  %v1956 = vpow.pop %v1955
  %v1957 = vmul.f32 %v1953, 1.442695
  %v1958 = vpow.pop %v1957
  %v1959 = vmul.f32 %v1954, 1.442695
  %v1960 = vpow.pop %v1959
  %v1961 = vadd.f32 %v1956, 1.0
  %v1962 = vadd.f32 %v1958, 1.0
  %v1963 = vadd.f32 %v1960, 1.0
  %v1964 = vrcp.pop %v1961
  %v1965 = vmul.f32 1.0, %v1964
  %v1966 = vrcp.pop %v1962
  %v1967 = vmul.f32 1.0, %v1966
  %v1968 = vrcp.pop %v1963
  %v1969 = vmul.f32 1.0, %v1968
  %v1970 = vtanh.pop %v1949
  %v1971 = vtanh.pop %v1950
  %v1972 = vtanh.pop %v1951
  %v1973 = vmul.f32 %v1965, %v1823
  %v1974 = vmul.f32 %v1967, %v1824
  %v1975 = vmul.f32 %v1969, %v1825
  %1979 = vrot.lane.b32.xlu0 %v1970, 64
  %v1980 = vpop.permute.xlu0 %1979
  %1981 = vrot.lane.b32.xlu0 %v1971, 64
  %v1982 = vpop.permute.xlu0 %1981
  %1983 = vrot.lane.b32.xlu0 %v1972, 64
  %v1984 = vpop.permute.xlu0 %1983
  %v1988 = vmul.f32 %v1965, %v1980
  %v1989 = vmul.f32 %v1967, %v1982
  %v1990 = vmul.f32 %v1969, %v1984
  %1994 = vrot.lane.b32.xlu0 %v1988, 32
  %v1995 = vpop.permute.xlu0 %1994
  %1996 = vrot.lane.b32.xlu0 %v1989, 32
  %v1997 = vpop.permute.xlu0 %1996
  %1998 = vrot.lane.b32.xlu0 %v1990, 32
  %v1999 = vpop.permute.xlu0 %1998
  %v2003 = vadd.f32 %v1973, %v1995
  %v2004 = vadd.f32 %v1974, %v1997
  %v2005 = vadd.f32 %v1975, %v1999
  %v2006 = vtanh.pop %v2003
  %v2007 = vtanh.pop %v2004
  %v2008 = vtanh.pop %v2005
  %2012 = vrot.lane.b32.xlu0 %v2006, 64
  %v2013 = vpop.permute.xlu0 %2012
  %2014 = vrot.lane.b32.xlu0 %v2007, 64
  %v2015 = vpop.permute.xlu0 %2014
  %2016 = vrot.lane.b32.xlu0 %v2008, 64
  %v2017 = vpop.permute.xlu0 %2016
  %v2021 = vmul.f32 %v1965, %v2013
  %v2022 = vmul.f32 %v1967, %v2015
  %v2023 = vmul.f32 %v1969, %v2017
  %2027 = vrot.lane.b32.xlu0 %v2021, 32
  %v2028 = vpop.permute.xlu0 %2027
  %2029 = vrot.lane.b32.xlu0 %v2022, 32
  %v2030 = vpop.permute.xlu0 %2029
  %2031 = vrot.lane.b32.xlu0 %v2023, 32
  %v2032 = vpop.permute.xlu0 %2031
  %s2036 = scalar_lea.vmem [#allocation3], 120
  %2037 = vst.msk [vmem:[%s2036] sm:$0xff] %vm59, %v2028
  %2038 = vst.msk [vmem:[%s2036 + $0x8] sm:$0xff] %vm59, %v2030
  %2039 = vst.msk [vmem:[%s2036 + $0x10] sm:$0x3] %vm1138, %v2032
  %v2040 = vld [vmem:[%s847] sm:$0xff]
  %v2041 = vld [vmem:[%s847 + $0x8] sm:$0xff]
  %v2042 = vld [vmem:[%s847 + $0x10] sm:$0x3]
  %v2043 = vsel %vm59, %v2028, 0
  %v2045 = vsel %vm59, %v2030, 0
  %v2047 = vsel %vm59, %v2032, 0
  %2049 = vmatprep.subr.mxu0 0.0
  %2050 = vmatpush1.msra.mxu0 %v959
  %2051 = vmatprep.subr.mxu0 0.0
  %2052 = vmatpush1.msra.mxu0 %v960
  %2053 = vmatprep.subr.mxu0 0.0
  %2054 = vmatpush1.msra.mxu0 %v961
  %2055 = vmatprep.subr.mxu0 0.0
  %2056 = vmatpush1.msra.mxu0 %v962
  %2057 = vmatprep.subr.mxu0 0.0
  %2058 = vmatpush1.msra.mxu0 0.0
  %2059 = vmatprep.subr.mxu0 0.0
  %2060 = vmatpush1.msra.mxu0 0.0
  %2061 = vmatprep.subr.mxu0 0.0
  %2062 = vmatpush1.msra.mxu0 0.0
  %2063 = vmatprep.subr.mxu0 0.0
  %2064 = vmatpush1.msra.mxu0 0.0
  %2065 = vmatprep.subr.mxu0 0.0
  %2066 = vmatpush1.msra.mxu0 0.0
  %2067 = vmatprep.subr.mxu0 0.0
  %2068 = vmatpush1.msra.mxu0 0.0
  %2069 = vmatprep.subr.mxu0 0.0
  %2070 = vmatpush1.msra.mxu0 0.0
  %2071 = vmatprep.subr.mxu0 0.0
  %2072 = vmatpush1.msra.mxu0 0.0
  %2073 = vmatprep.subr.mxu0 0.0
  %2074 = vmatpush1.msra.mxu0 0.0
  %2075 = vmatprep.subr.mxu0 0.0
  %2076 = vmatpush1.msra.mxu0 0.0
  %2077 = vmatprep.subr.mxu0 0.0
  %2078 = vmatpush1.msra.mxu0 0.0
  %2079 = vmatprep.subr.mxu0 0.0
  %2080 = vmatpush1.msra.mxu0 0.0
  %2081 = vmatprep.subr.mxu0 0.0
  %2082 = vmatpush1.msra.mxu0 0.0
  %2083 = vmatprep.subr.mxu0 0.0
  %2084 = vmatpush1.msra.mxu0 0.0
  %2085 = vmatprep.subr.mxu0 0.0
  %2086 = vmatpush1.msra.mxu0 0.0
  %2087 = vmatprep.subr.mxu0 0.0
  %2088 = vmatpush1.msra.mxu0 0.0
  %2089 = vmatprep.subr.mxu0 0.0
  %2090 = vmatpush1.msra.mxu0 0.0
  %2091 = vmatprep.subr.mxu0 0.0
  %2092 = vmatpush1.msra.mxu0 0.0
  %2093 = vmatprep.subr.mxu0 0.0
  %2094 = vmatpush1.msra.mxu0 0.0
  %2095 = vmatprep.subr.mxu0 0.0
  %2096 = vmatpush1.msra.mxu0 0.0
  %2097 = vmatprep.subr.mxu0 0.0
  %2098 = vmatpush1.msra.mxu0 0.0
  %2099 = vmatprep.subr.mxu0 0.0
  %2100 = vmatpush1.msra.mxu0 0.0
  %2101 = vmatprep.subr.mxu0 0.0
  %2102 = vmatpush1.msra.mxu0 0.0
  %2103 = vmatprep.subr.mxu0 0.0
  %2104 = vmatpush1.msra.mxu0 0.0
  %2105 = vmatprep.subr.mxu0 0.0
  %2106 = vmatpush1.msra.mxu0 0.0
  %2107 = vmatprep.subr.mxu0 0.0
  %2108 = vmatpush1.msra.mxu0 0.0
  %2109 = vmatprep.subr.mxu0 0.0
  %2110 = vmatpush1.msra.mxu0 0.0
  %2111 = vmatprep.subr.mxu0 0.0
  %2112 = vmatpush1.msra.mxu0 0.0
  %2113 = vmatprep.mubr.f32.mxu0 0.0
  %2114 = vmatmul.mubr.f32.gmra.mrb[0].mxu0 %v2043
  %v2115 = vpop.f32.mrb[0].mxu0
  %v2116 = vadd.f32 0.0, %v2115
  %v2117 = vpop.f32.mrb[0].mxu0
  %2118 = vmatprep.mubr.f32.mxu0 0.0
  %2119 = vmatmul.mubr.f32.gmra.mrb[0].mxu0 %v2045
  %v2120 = vpop.f32.mrb[0].mxu0
  %v2121 = vadd.f32 0.0, %v2120
  %v2122 = vpop.f32.mrb[0].mxu0
  %2123 = vmatprep.mubr.f32.mxu0 0.0
  %2124 = vmatmul.mubr.f32.gmra.mrb[0].mxu0 %v2047
  %v2125 = vpop.f32.mrb[0].mxu0
  %v2126 = vadd.f32 0.0, %v2125
  %v2127 = vpop.f32.mrb[0].mxu0
  %2128 = vdwg.mxu0
  %v2129 = vadd.f32 %v2040, %v2116
  %v2130 = vadd.f32 %v2041, %v2121
  %v2131 = vadd.f32 %v2042, %v2126
  %v2132 = vxor.u32 %v2129, 2147483648
  %v2133 = vxor.u32 %v2130, 2147483648
  %v2134 = vxor.u32 %v2131, 2147483648
  %v2135 = vmul.f32 %v2132, 1.442695
  %v2136 = vpow.pop %v2135
  %v2137 = vmul.f32 %v2133, 1.442695
  %v2138 = vpow.pop %v2137
  %v2139 = vmul.f32 %v2134, 1.442695
  %v2140 = vpow.pop %v2139
  %v2141 = vadd.f32 %v2136, 1.0
  %v2142 = vadd.f32 %v2138, 1.0
  %v2143 = vadd.f32 %v2140, 1.0
  %v2144 = vrcp.pop %v2141
  %v2145 = vmul.f32 1.0, %v2144
  %v2146 = vrcp.pop %v2142
  %v2147 = vmul.f32 1.0, %v2146
  %v2148 = vrcp.pop %v2143
  %v2149 = vmul.f32 1.0, %v2148
  %v2150 = vtanh.pop %v2129
  %v2151 = vtanh.pop %v2130
  %v2152 = vtanh.pop %v2131
  %v2153 = vmul.f32 %v2145, %v2003
  %v2154 = vmul.f32 %v2147, %v2004
  %v2155 = vmul.f32 %v2149, %v2005
  %2159 = vrot.lane.b32.xlu0 %v2150, 64
  %v2160 = vpop.permute.xlu0 %2159
  %2161 = vrot.lane.b32.xlu0 %v2151, 64
  %v2162 = vpop.permute.xlu0 %2161
  %2163 = vrot.lane.b32.xlu0 %v2152, 64
  %v2164 = vpop.permute.xlu0 %2163
  %v2168 = vmul.f32 %v2145, %v2160
  %v2169 = vmul.f32 %v2147, %v2162
  %v2170 = vmul.f32 %v2149, %v2164
  %2174 = vrot.lane.b32.xlu0 %v2168, 32
  %v2175 = vpop.permute.xlu0 %2174
  %2176 = vrot.lane.b32.xlu0 %v2169, 32
  %v2177 = vpop.permute.xlu0 %2176
  %2178 = vrot.lane.b32.xlu0 %v2170, 32
  %v2179 = vpop.permute.xlu0 %2178
  %v2183 = vadd.f32 %v2153, %v2175
  %v2184 = vadd.f32 %v2154, %v2177
  %v2185 = vadd.f32 %v2155, %v2179
  %v2186 = vtanh.pop %v2183
  %v2187 = vtanh.pop %v2184
  %v2188 = vtanh.pop %v2185
  %2192 = vrot.lane.b32.xlu0 %v2186, 64
  %v2193 = vpop.permute.xlu0 %2192
  %2194 = vrot.lane.b32.xlu0 %v2187, 64
  %v2195 = vpop.permute.xlu0 %2194
  %2196 = vrot.lane.b32.xlu0 %v2188, 64
  %v2197 = vpop.permute.xlu0 %2196
  %v2201 = vmul.f32 %v2145, %v2193
  %v2202 = vmul.f32 %v2147, %v2195
  %v2203 = vmul.f32 %v2149, %v2197
  %2207 = vrot.lane.b32.xlu0 %v2201, 32
  %v2208 = vpop.permute.xlu0 %2207
  %2209 = vrot.lane.b32.xlu0 %v2202, 32
  %v2210 = vpop.permute.xlu0 %2209
  %2211 = vrot.lane.b32.xlu0 %v2203, 32
  %v2212 = vpop.permute.xlu0 %2211
  %s2216 = scalar_lea.vmem [#allocation3], 144
  %2217 = vst.msk [vmem:[%s2216] sm:$0xff] %vm59, %v2208
  %2218 = vst.msk [vmem:[%s2216 + $0x8] sm:$0xff] %vm59, %v2210
  %2219 = vst.msk [vmem:[%s2216 + $0x10] sm:$0x3] %vm1138, %v2212
  %v2220 = vld [vmem:[%s955] sm:$0xff]
  %v2221 = vld [vmem:[%s955 + $0x8] sm:$0xff]
  %v2222 = vld [vmem:[%s955 + $0x10] sm:$0x3]
  %v2223 = vsel %vm59, %v2208, 0
  %v2225 = vsel %vm59, %v2210, 0
  %v2227 = vsel %vm59, %v2212, 0
  %2229 = vmatprep.subr.mxu0 0.0
  %2230 = vmatpush1.msra.mxu0 %v959
  %2231 = vmatprep.subr.mxu0 0.0
  %2232 = vmatpush1.msra.mxu0 %v960
  %2233 = vmatprep.subr.mxu0 0.0
  %2234 = vmatpush1.msra.mxu0 %v961
  %2235 = vmatprep.subr.mxu0 0.0
  %2236 = vmatpush1.msra.mxu0 %v962
  %2237 = vmatprep.subr.mxu0 0.0
  %2238 = vmatpush1.msra.mxu0 0.0
  %2239 = vmatprep.subr.mxu0 0.0
  %2240 = vmatpush1.msra.mxu0 0.0
  %2241 = vmatprep.subr.mxu0 0.0
  %2242 = vmatpush1.msra.mxu0 0.0
  %2243 = vmatprep.subr.mxu0 0.0
  %2244 = vmatpush1.msra.mxu0 0.0
  %2245 = vmatprep.subr.mxu0 0.0
  %2246 = vmatpush1.msra.mxu0 0.0
  %2247 = vmatprep.subr.mxu0 0.0
  %2248 = vmatpush1.msra.mxu0 0.0
  %2249 = vmatprep.subr.mxu0 0.0
  %2250 = vmatpush1.msra.mxu0 0.0
  %2251 = vmatprep.subr.mxu0 0.0
  %2252 = vmatpush1.msra.mxu0 0.0
  %2253 = vmatprep.subr.mxu0 0.0
  %2254 = vmatpush1.msra.mxu0 0.0
  %2255 = vmatprep.subr.mxu0 0.0
  %2256 = vmatpush1.msra.mxu0 0.0
  %2257 = vmatprep.subr.mxu0 0.0
  %2258 = vmatpush1.msra.mxu0 0.0
  %2259 = vmatprep.subr.mxu0 0.0
  %2260 = vmatpush1.msra.mxu0 0.0
  %2261 = vmatprep.subr.mxu0 0.0
  %2262 = vmatpush1.msra.mxu0 0.0
  %2263 = vmatprep.subr.mxu0 0.0
  %2264 = vmatpush1.msra.mxu0 0.0
  %2265 = vmatprep.subr.mxu0 0.0
  %2266 = vmatpush1.msra.mxu0 0.0
  %2267 = vmatprep.subr.mxu0 0.0
  %2268 = vmatpush1.msra.mxu0 0.0
  %2269 = vmatprep.subr.mxu0 0.0
  %2270 = vmatpush1.msra.mxu0 0.0
  %2271 = vmatprep.subr.mxu0 0.0
  %2272 = vmatpush1.msra.mxu0 0.0
  %2273 = vmatprep.subr.mxu0 0.0
  %2274 = vmatpush1.msra.mxu0 0.0
  %2275 = vmatprep.subr.mxu0 0.0
  %2276 = vmatpush1.msra.mxu0 0.0
  %2277 = vmatprep.subr.mxu0 0.0
  %2278 = vmatpush1.msra.mxu0 0.0
  %2279 = vmatprep.subr.mxu0 0.0
  %2280 = vmatpush1.msra.mxu0 0.0
  %2281 = vmatprep.subr.mxu0 0.0
  %2282 = vmatpush1.msra.mxu0 0.0
  %2283 = vmatprep.subr.mxu0 0.0
  %2284 = vmatpush1.msra.mxu0 0.0
  %2285 = vmatprep.subr.mxu0 0.0
  %2286 = vmatpush1.msra.mxu0 0.0
  %2287 = vmatprep.subr.mxu0 0.0
  %2288 = vmatpush1.msra.mxu0 0.0
  %2289 = vmatprep.subr.mxu0 0.0
  %2290 = vmatpush1.msra.mxu0 0.0
  %2291 = vmatprep.subr.mxu0 0.0
  %2292 = vmatpush1.msra.mxu0 0.0
  %2293 = vmatprep.mubr.f32.mxu0 0.0
  %2294 = vmatmul.mubr.f32.gmra.mrb[0].mxu0 %v2223
  %v2295 = vpop.f32.mrb[0].mxu0
  %v2296 = vadd.f32 0.0, %v2295
  %v2297 = vpop.f32.mrb[0].mxu0
  %2298 = vmatprep.mubr.f32.mxu0 0.0
  %2299 = vmatmul.mubr.f32.gmra.mrb[0].mxu0 %v2225
  %v2300 = vpop.f32.mrb[0].mxu0
  %v2301 = vadd.f32 0.0, %v2300
  %v2302 = vpop.f32.mrb[0].mxu0
  %2303 = vmatprep.mubr.f32.mxu0 0.0
  %2304 = vmatmul.mubr.f32.gmra.mrb[0].mxu0 %v2227
  %v2305 = vpop.f32.mrb[0].mxu0
  %v2306 = vadd.f32 0.0, %v2305
  %v2307 = vpop.f32.mrb[0].mxu0
  %2308 = vdwg.mxu0
  %v2309 = vadd.f32 %v2220, %v2296
  %v2310 = vadd.f32 %v2221, %v2301
  %v2311 = vadd.f32 %v2222, %v2306
  %v2312 = vxor.u32 %v2309, 2147483648
  %v2313 = vxor.u32 %v2310, 2147483648
  %v2314 = vxor.u32 %v2311, 2147483648
  %v2315 = vmul.f32 %v2312, 1.442695
  %v2316 = vpow.pop %v2315
  %v2317 = vmul.f32 %v2313, 1.442695
  %v2318 = vpow.pop %v2317
  %v2319 = vmul.f32 %v2314, 1.442695
  %v2320 = vpow.pop %v2319
  %v2321 = vadd.f32 %v2316, 1.0
  %v2322 = vadd.f32 %v2318, 1.0
  %v2323 = vadd.f32 %v2320, 1.0
  %v2324 = vrcp.pop %v2321
  %v2325 = vmul.f32 1.0, %v2324
  %v2326 = vrcp.pop %v2322
  %v2327 = vmul.f32 1.0, %v2326
  %v2328 = vrcp.pop %v2323
  %v2329 = vmul.f32 1.0, %v2328
  %v2330 = vtanh.pop %v2309
  %v2331 = vtanh.pop %v2310
  %v2332 = vtanh.pop %v2311
  %v2333 = vmul.f32 %v2325, %v2183
  %v2334 = vmul.f32 %v2327, %v2184
  %v2335 = vmul.f32 %v2329, %v2185
  %2339 = vrot.lane.b32.xlu0 %v2330, 64
  %v2340 = vpop.permute.xlu0 %2339
  %2341 = vrot.lane.b32.xlu0 %v2331, 64
  %v2342 = vpop.permute.xlu0 %2341
  %2343 = vrot.lane.b32.xlu0 %v2332, 64
  %v2344 = vpop.permute.xlu0 %2343
  %v2348 = vmul.f32 %v2325, %v2340
  %v2349 = vmul.f32 %v2327, %v2342
  %v2350 = vmul.f32 %v2329, %v2344
  %2354 = vrot.lane.b32.xlu0 %v2348, 32
  %v2355 = vpop.permute.xlu0 %2354
  %2356 = vrot.lane.b32.xlu0 %v2349, 32
  %v2357 = vpop.permute.xlu0 %2356
  %2358 = vrot.lane.b32.xlu0 %v2350, 32
  %v2359 = vpop.permute.xlu0 %2358
  %v2363 = vadd.f32 %v2333, %v2355
  %v2364 = vadd.f32 %v2334, %v2357
  %v2365 = vadd.f32 %v2335, %v2359
  %v2366 = vtanh.pop %v2363
  %v2367 = vtanh.pop %v2364
  %v2368 = vtanh.pop %v2365
  %2372 = vrot.lane.b32.xlu0 %v2366, 64
  %v2373 = vpop.permute.xlu0 %2372
  %2374 = vrot.lane.b32.xlu0 %v2367, 64
  %v2375 = vpop.permute.xlu0 %2374
  %2376 = vrot.lane.b32.xlu0 %v2368, 64
  %v2377 = vpop.permute.xlu0 %2376
  %v2381 = vmul.f32 %v2325, %v2373
  %v2382 = vmul.f32 %v2327, %v2375
  %v2383 = vmul.f32 %v2329, %v2377
  %2387 = vrot.lane.b32.xlu0 %v2381, 32
  %v2388 = vpop.permute.xlu0 %2387
  %2389 = vrot.lane.b32.xlu0 %v2382, 32
  %v2390 = vpop.permute.xlu0 %2389
  %2391 = vrot.lane.b32.xlu0 %v2383, 32
  %v2392 = vpop.permute.xlu0 %2391
  %s2396 = scalar_lea.vmem [#allocation3], 168
  %2397 = vst.msk [vmem:[%s2396] sm:$0xff] %vm59, %v2388
  %2398 = vst.msk [vmem:[%s2396 + $0x8] sm:$0xff] %vm59, %v2390
  %2399 = vst.msk [vmem:[%s2396 + $0x10] sm:$0x3] %vm1138, %v2392
  %v2400 = vld [vmem:[%s4] sm:$0xff]
  %v2401 = vld [vmem:[%s4 + $0x8] sm:$0xff]
  %v2402 = vld [vmem:[%s4 + $0x10] sm:$0xff]
  %v2403 = vld [vmem:[%s4 + $0x18] sm:$0xff]
  %v2404 = vld [vmem:[%s5] sm:$0x1]
  %v2405 = vld [vmem:[%s6] sm:$0x1]
  %v2406 = vld [vmem:[%s7] sm:$0x1]
  %v2407 = vld [vmem:[#allocation3] sm:$0xff]
  %v2408 = vld [vmem:[#allocation3 + $0x8] sm:$0xff]
  %v2409 = vld [vmem:[#allocation3 + $0x10] sm:$0x3]
  %v2410 = vld [vmem:[%s2396] sm:$0xff]
  %v2411 = vld [vmem:[%s2396 + $0x8] sm:$0xff]
  %v2412 = vld [vmem:[%s2396 + $0x10] sm:$0x3]
  %v2413 = vsel %vm49, %v2407, %v2410
  %v2414 = vsel %vm49, %v2408, %v2411
  %v2415 = vsel %vm49, %v2409, %v2412
  %v2417 = vlaneseq
  %v2418 = vshrl.u32 %v2417, 7
  %v2419 = vsub.s32 0, %v2418
  %v2420 = vrot.slane %v2404, %v2419
  %v2423 = vsel %vm59, %v2413, 0
  %v2426 = vsel %vm59, %v2414, 0
  %v2429 = vsel %vm59, %v2415, 0
  %2431 = vmatprep.subr.mxu0 0.0
  %2432 = vmatpush1.msra.mxu0 %v2400
  %2433 = vmatprep.subr.mxu0 0.0
  %2434 = vmatpush1.msra.mxu0 %v2401
  %2435 = vmatprep.subr.mxu0 0.0
  %2436 = vmatpush1.msra.mxu0 %v2402
  %2437 = vmatprep.subr.mxu0 0.0
  %2438 = vmatpush1.msra.mxu0 %v2403
  %2439 = vmatprep.subr.mxu0 0.0
  %2440 = vmatpush1.msra.mxu0 0.0
  %2441 = vmatprep.subr.mxu0 0.0
  %2442 = vmatpush1.msra.mxu0 0.0
  %2443 = vmatprep.subr.mxu0 0.0
  %2444 = vmatpush1.msra.mxu0 0.0
  %2445 = vmatprep.subr.mxu0 0.0
  %2446 = vmatpush1.msra.mxu0 0.0
  %2447 = vmatprep.subr.mxu0 0.0
  %2448 = vmatpush1.msra.mxu0 0.0
  %2449 = vmatprep.subr.mxu0 0.0
  %2450 = vmatpush1.msra.mxu0 0.0
  %2451 = vmatprep.subr.mxu0 0.0
  %2452 = vmatpush1.msra.mxu0 0.0
  %2453 = vmatprep.subr.mxu0 0.0
  %2454 = vmatpush1.msra.mxu0 0.0
  %2455 = vmatprep.subr.mxu0 0.0
  %2456 = vmatpush1.msra.mxu0 0.0
  %2457 = vmatprep.subr.mxu0 0.0
  %2458 = vmatpush1.msra.mxu0 0.0
  %2459 = vmatprep.subr.mxu0 0.0
  %2460 = vmatpush1.msra.mxu0 0.0
  %2461 = vmatprep.subr.mxu0 0.0
  %2462 = vmatpush1.msra.mxu0 0.0
  %2463 = vmatprep.subr.mxu0 0.0
  %2464 = vmatpush1.msra.mxu0 0.0
  %2465 = vmatprep.subr.mxu0 0.0
  %2466 = vmatpush1.msra.mxu0 0.0
  %2467 = vmatprep.subr.mxu0 0.0
  %2468 = vmatpush1.msra.mxu0 0.0
  %2469 = vmatprep.subr.mxu0 0.0
  %2470 = vmatpush1.msra.mxu0 0.0
  %2471 = vmatprep.subr.mxu0 0.0
  %2472 = vmatpush1.msra.mxu0 0.0
  %2473 = vmatprep.subr.mxu0 0.0
  %2474 = vmatpush1.msra.mxu0 0.0
  %2475 = vmatprep.subr.mxu0 0.0
  %2476 = vmatpush1.msra.mxu0 0.0
  %2477 = vmatprep.subr.mxu0 0.0
  %2478 = vmatpush1.msra.mxu0 0.0
  %2479 = vmatprep.subr.mxu0 0.0
  %2480 = vmatpush1.msra.mxu0 0.0
  %2481 = vmatprep.subr.mxu0 0.0
  %2482 = vmatpush1.msra.mxu0 0.0
  %2483 = vmatprep.subr.mxu0 0.0
  %2484 = vmatpush1.msra.mxu0 0.0
  %2485 = vmatprep.subr.mxu0 0.0
  %2486 = vmatpush1.msra.mxu0 0.0
  %2487 = vmatprep.subr.mxu0 0.0
  %2488 = vmatpush1.msra.mxu0 0.0
  %2489 = vmatprep.subr.mxu0 0.0
  %2490 = vmatpush1.msra.mxu0 0.0
  %2491 = vmatprep.subr.mxu0 0.0
  %2492 = vmatpush1.msra.mxu0 0.0
  %2493 = vmatprep.subr.mxu0 0.0
  %2494 = vmatpush1.msra.mxu0 0.0
  %2495 = vmatprep.mubr.f32.mxu0 0.0
  %2496 = vmatmul.mubr.f32.gmra.mrb[0].mxu0 %v2423
  %v2497 = vpop.f32.mrb[0].mxu0
  %v2498 = vadd.f32 %v2420, %v2497
  %v2499 = vpop.f32.mrb[0].mxu0
  %2500 = vmatprep.mubr.f32.mxu0 0.0
  %2501 = vmatmul.mubr.f32.gmra.mrb[0].mxu0 %v2426
  %v2502 = vpop.f32.mrb[0].mxu0
  %v2503 = vadd.f32 %v2420, %v2502
  %v2504 = vpop.f32.mrb[0].mxu0
  %2505 = vmatprep.mubr.f32.mxu0 0.0
  %2506 = vmatmul.mubr.f32.gmra.mrb[0].mxu0 %v2429
  %v2507 = vpop.f32.mrb[0].mxu0
  %v2508 = vadd.f32 %v2420, %v2507
  %v2509 = vpop.f32.mrb[0].mxu0
  %2510 = vdwg.mxu0
  %v2511 = vsel %vm49, %v2498, 0.0
  %2512 = vadd.xlane.f32.xlu0 %v2511
  %v2513 = vpop.xlane.xlu0 %2512
  %v2514 = vsel %vm49, %v2503, 0.0
  %2515 = vadd.xlane.f32.xlu0 %v2514
  %v2516 = vpop.xlane.xlu0 %2515
  %vm2517 = vcmask 123904
  %v2518 = vsel %vm2517, %v2508, 0.0
  %2519 = vadd.xlane.f32.xlu0 %v2518
  %v2520 = vpop.xlane.xlu0 %2519
  %v2521 = vrcp.pop 16.0
  %v2522 = vmul.f32 %v2513, %v2521
  %v2523 = vmul.f32 %v2516, %v2521
  %v2524 = vmul.f32 %v2520, %v2521
  %v2525 = vsub.f32 %v2498, %v2522
  %v2526 = vsub.f32 %v2503, %v2523
  %v2527 = vsub.f32 %v2508, %v2524
  %v2528 = vmul.f32 %v2525, %v2525
  %v2529 = vmul.f32 %v2526, %v2526
  %v2530 = vmul.f32 %v2527, %v2527
  %v2531 = vsel %vm49, %v2528, 0.0
  %2532 = vadd.xlane.f32.xlu0 %v2531
  %v2533 = vpop.xlane.xlu0 %2532
  %v2534 = vsel %vm49, %v2529, 0.0
  %2535 = vadd.xlane.f32.xlu0 %v2534
  %v2536 = vpop.xlane.xlu0 %2535
  %v2537 = vsel %vm2517, %v2530, 0.0
  %2538 = vadd.xlane.f32.xlu0 %v2537
  %v2539 = vpop.xlane.xlu0 %2538
  %v2540 = vmul.f32 %v2533, %v2521
  %v2541 = vmul.f32 %v2536, %v2521
  %v2542 = vmul.f32 %v2539, %v2521
  %v2543 = vadd.f32 %v2540, 1e-05
  %v2544 = vadd.f32 %v2541, 1e-05
  %v2545 = vadd.f32 %v2542, 1e-05
  %v2546 = vrsqrt.pop %v2543
  %v2547 = vrsqrt.pop %v2544
  %v2548 = vrsqrt.pop %v2545
  %v2549 = vmul.f32 %v2525, %v2546
  %v2550 = vmul.f32 %v2526, %v2547
  %v2551 = vmul.f32 %v2527, %v2548
  %v2553 = vlaneseq
  %v2554 = vshrl.u32 %v2553, 7
  %v2555 = vsub.s32 0, %v2554
  %v2556 = vrot.slane %v2405, %v2555
  %v2558 = vmul.f32 %v2549, %v2556
  %v2559 = vmul.f32 %v2550, %v2556
  %v2560 = vmul.f32 %v2551, %v2556
  %v2562 = vlaneseq
  %v2563 = vshrl.u32 %v2562, 7
  %v2564 = vsub.s32 0, %v2563
  %v2565 = vrot.slane %v2406, %v2564
  %v2567 = vadd.f32 %v2558, %v2565
  %v2568 = vadd.f32 %v2559, %v2565
  %v2569 = vadd.f32 %v2560, %v2565
  %v2570 = vld [vmem:[%s0] sm:$0xff]
  %v2571 = vld [vmem:[%s0 + $0x8] sm:$0xff]
  %v2572 = vld [vmem:[%s0 + $0x10] sm:$0x3]
  %v2573 = vadd.f32 %v2567, %v2570
  %v2574 = vadd.f32 %v2568, %v2571
  %v2575 = vadd.f32 %v2569, %v2572
  %v2576 = vld [vmem:[%s1316] sm:$0xff]
  %v2577 = vld [vmem:[%s1316 + $0x8] sm:$0xff]
  %v2578 = vld [vmem:[%s1316 + $0x10] sm:$0x3]
  %v2579 = vld [vmem:[%s2216] sm:$0xff]
  %v2580 = vld [vmem:[%s2216 + $0x8] sm:$0xff]
  %v2581 = vld [vmem:[%s2216 + $0x10] sm:$0x3]
  %v2582 = vsel %vm49, %v2576, %v2579
  %v2583 = vsel %vm49, %v2577, %v2580
  %v2584 = vsel %vm49, %v2578, %v2581
  %v2586 = vsel %vm59, %v2582, 0
  %v2589 = vsel %vm59, %v2583, 0
  %v2592 = vsel %vm59, %v2584, 0
  %2594 = vmatprep.subr.mxu0 0.0
  %2595 = vmatpush1.msra.mxu0 %v2400
  %2596 = vmatprep.subr.mxu0 0.0
  %2597 = vmatpush1.msra.mxu0 %v2401
  %2598 = vmatprep.subr.mxu0 0.0
  %2599 = vmatpush1.msra.mxu0 %v2402
  %2600 = vmatprep.subr.mxu0 0.0
  %2601 = vmatpush1.msra.mxu0 %v2403
  %2602 = vmatprep.subr.mxu0 0.0
  %2603 = vmatpush1.msra.mxu0 0.0
  %2604 = vmatprep.subr.mxu0 0.0
  %2605 = vmatpush1.msra.mxu0 0.0
  %2606 = vmatprep.subr.mxu0 0.0
  %2607 = vmatpush1.msra.mxu0 0.0
  %2608 = vmatprep.subr.mxu0 0.0
  %2609 = vmatpush1.msra.mxu0 0.0
  %2610 = vmatprep.subr.mxu0 0.0
  %2611 = vmatpush1.msra.mxu0 0.0
  %2612 = vmatprep.subr.mxu0 0.0
  %2613 = vmatpush1.msra.mxu0 0.0
  %2614 = vmatprep.subr.mxu0 0.0
  %2615 = vmatpush1.msra.mxu0 0.0
  %2616 = vmatprep.subr.mxu0 0.0
  %2617 = vmatpush1.msra.mxu0 0.0
  %2618 = vmatprep.subr.mxu0 0.0
  %2619 = vmatpush1.msra.mxu0 0.0
  %2620 = vmatprep.subr.mxu0 0.0
  %2621 = vmatpush1.msra.mxu0 0.0
  %2622 = vmatprep.subr.mxu0 0.0
  %2623 = vmatpush1.msra.mxu0 0.0
  %2624 = vmatprep.subr.mxu0 0.0
  %2625 = vmatpush1.msra.mxu0 0.0
  %2626 = vmatprep.subr.mxu0 0.0
  %2627 = vmatpush1.msra.mxu0 0.0
  %2628 = vmatprep.subr.mxu0 0.0
  %2629 = vmatpush1.msra.mxu0 0.0
  %2630 = vmatprep.subr.mxu0 0.0
  %2631 = vmatpush1.msra.mxu0 0.0
  %2632 = vmatprep.subr.mxu0 0.0
  %2633 = vmatpush1.msra.mxu0 0.0
  %2634 = vmatprep.subr.mxu0 0.0
  %2635 = vmatpush1.msra.mxu0 0.0
  %2636 = vmatprep.subr.mxu0 0.0
  %2637 = vmatpush1.msra.mxu0 0.0
  %2638 = vmatprep.subr.mxu0 0.0
  %2639 = vmatpush1.msra.mxu0 0.0
  %2640 = vmatprep.subr.mxu0 0.0
  %2641 = vmatpush1.msra.mxu0 0.0
  %2642 = vmatprep.subr.mxu0 0.0
  %2643 = vmatpush1.msra.mxu0 0.0
  %2644 = vmatprep.subr.mxu0 0.0
  %2645 = vmatpush1.msra.mxu0 0.0
  %2646 = vmatprep.subr.mxu0 0.0
  %2647 = vmatpush1.msra.mxu0 0.0
  %2648 = vmatprep.subr.mxu0 0.0
  %2649 = vmatpush1.msra.mxu0 0.0
  %2650 = vmatprep.subr.mxu0 0.0
  %2651 = vmatpush1.msra.mxu0 0.0
  %2652 = vmatprep.subr.mxu0 0.0
  %2653 = vmatpush1.msra.mxu0 0.0
  %2654 = vmatprep.subr.mxu0 0.0
  %2655 = vmatpush1.msra.mxu0 0.0
  %2656 = vmatprep.subr.mxu0 0.0
  %2657 = vmatpush1.msra.mxu0 0.0
  %2658 = vmatprep.mubr.f32.mxu0 0.0
  %2659 = vmatmul.mubr.f32.gmra.mrb[0].mxu0 %v2586
  %v2660 = vpop.f32.mrb[0].mxu0
  %v2661 = vadd.f32 %v2420, %v2660
  %v2662 = vpop.f32.mrb[0].mxu0
  %2663 = vmatprep.mubr.f32.mxu0 0.0
  %2664 = vmatmul.mubr.f32.gmra.mrb[0].mxu0 %v2589
  %v2665 = vpop.f32.mrb[0].mxu0
  %v2666 = vadd.f32 %v2420, %v2665
  %v2667 = vpop.f32.mrb[0].mxu0
  %2668 = vmatprep.mubr.f32.mxu0 0.0
  %2669 = vmatmul.mubr.f32.gmra.mrb[0].mxu0 %v2592
  %v2670 = vpop.f32.mrb[0].mxu0
  %v2671 = vadd.f32 %v2420, %v2670
  %v2672 = vpop.f32.mrb[0].mxu0
  %2673 = vdwg.mxu0
  %v2674 = vsel %vm49, %v2661, 0.0
  %2675 = vadd.xlane.f32.xlu0 %v2674
  %v2676 = vpop.xlane.xlu0 %2675
  %v2677 = vsel %vm49, %v2666, 0.0
  %2678 = vadd.xlane.f32.xlu0 %v2677
  %v2679 = vpop.xlane.xlu0 %2678
  %v2680 = vsel %vm2517, %v2671, 0.0
  %2681 = vadd.xlane.f32.xlu0 %v2680
  %v2682 = vpop.xlane.xlu0 %2681
  %v2683 = vmul.f32 %v2676, %v2521
  %v2684 = vmul.f32 %v2679, %v2521
  %v2685 = vmul.f32 %v2682, %v2521
  %v2686 = vsub.f32 %v2661, %v2683
  %v2687 = vsub.f32 %v2666, %v2684
  %v2688 = vsub.f32 %v2671, %v2685
  %v2689 = vmul.f32 %v2686, %v2686
  %v2690 = vmul.f32 %v2687, %v2687
  %v2691 = vmul.f32 %v2688, %v2688
  %v2692 = vsel %vm49, %v2689, 0.0
  %2693 = vadd.xlane.f32.xlu0 %v2692
  %v2694 = vpop.xlane.xlu0 %2693
  %v2695 = vsel %vm49, %v2690, 0.0
  %2696 = vadd.xlane.f32.xlu0 %v2695
  %v2697 = vpop.xlane.xlu0 %2696
  %v2698 = vsel %vm2517, %v2691, 0.0
  %2699 = vadd.xlane.f32.xlu0 %v2698
  %v2700 = vpop.xlane.xlu0 %2699
  %v2701 = vmul.f32 %v2694, %v2521
  %v2702 = vmul.f32 %v2697, %v2521
  %v2703 = vmul.f32 %v2700, %v2521
  %v2704 = vadd.f32 %v2701, 1e-05
  %v2705 = vadd.f32 %v2702, 1e-05
  %v2706 = vadd.f32 %v2703, 1e-05
  %v2707 = vrsqrt.pop %v2704
  %v2708 = vrsqrt.pop %v2705
  %v2709 = vrsqrt.pop %v2706
  %v2710 = vmul.f32 %v2686, %v2707
  %v2711 = vmul.f32 %v2687, %v2708
  %v2712 = vmul.f32 %v2688, %v2709
  %v2713 = vmul.f32 %v2710, %v2556
  %v2714 = vmul.f32 %v2711, %v2556
  %v2715 = vmul.f32 %v2712, %v2556
  %v2716 = vadd.f32 %v2713, %v2565
  %v2717 = vadd.f32 %v2714, %v2565
  %v2718 = vadd.f32 %v2715, %v2565
  %2722 = vrot.lane.b32.xlu0 %v2570, 112
  %v2723 = vpop.permute.xlu0 %2722
  %2724 = vrot.lane.b32.xlu0 %v2571, 112
  %v2725 = vpop.permute.xlu0 %2724
  %2726 = vrot.lane.b32.xlu0 %v2572, 112
  %v2727 = vpop.permute.xlu0 %2726
  %v2731 = vadd.f32 %v2716, %v2723
  %v2732 = vadd.f32 %v2717, %v2725
  %v2733 = vadd.f32 %v2718, %v2727
  %v2734 = vld [vmem:[%s1496] sm:$0xff]
  %v2735 = vld [vmem:[%s1496 + $0x8] sm:$0xff]
  %v2736 = vld [vmem:[%s1496 + $0x10] sm:$0x3]
  %v2737 = vld [vmem:[%s2036] sm:$0xff]
  %v2738 = vld [vmem:[%s2036 + $0x8] sm:$0xff]
  %v2739 = vld [vmem:[%s2036 + $0x10] sm:$0x3]
  %v2740 = vsel %vm49, %v2734, %v2737
  %v2741 = vsel %vm49, %v2735, %v2738
  %v2742 = vsel %vm49, %v2736, %v2739
  %v2744 = vsel %vm59, %v2740, 0
  %v2747 = vsel %vm59, %v2741, 0
  %v2750 = vsel %vm59, %v2742, 0
  %2752 = vmatprep.subr.mxu0 0.0
  %2753 = vmatpush1.msra.mxu0 %v2400
  %2754 = vmatprep.subr.mxu0 0.0
  %2755 = vmatpush1.msra.mxu0 %v2401
  %2756 = vmatprep.subr.mxu0 0.0
  %2757 = vmatpush1.msra.mxu0 %v2402
  %2758 = vmatprep.subr.mxu0 0.0
  %2759 = vmatpush1.msra.mxu0 %v2403
  %2760 = vmatprep.subr.mxu0 0.0
  %2761 = vmatpush1.msra.mxu0 0.0
  %2762 = vmatprep.subr.mxu0 0.0
  %2763 = vmatpush1.msra.mxu0 0.0
  %2764 = vmatprep.subr.mxu0 0.0
  %2765 = vmatpush1.msra.mxu0 0.0
  %2766 = vmatprep.subr.mxu0 0.0
  %2767 = vmatpush1.msra.mxu0 0.0
  %2768 = vmatprep.subr.mxu0 0.0
  %2769 = vmatpush1.msra.mxu0 0.0
  %2770 = vmatprep.subr.mxu0 0.0
  %2771 = vmatpush1.msra.mxu0 0.0
  %2772 = vmatprep.subr.mxu0 0.0
  %2773 = vmatpush1.msra.mxu0 0.0
  %2774 = vmatprep.subr.mxu0 0.0
  %2775 = vmatpush1.msra.mxu0 0.0
  %2776 = vmatprep.subr.mxu0 0.0
  %2777 = vmatpush1.msra.mxu0 0.0
  %2778 = vmatprep.subr.mxu0 0.0
  %2779 = vmatpush1.msra.mxu0 0.0
  %2780 = vmatprep.subr.mxu0 0.0
  %2781 = vmatpush1.msra.mxu0 0.0
  %2782 = vmatprep.subr.mxu0 0.0
  %2783 = vmatpush1.msra.mxu0 0.0
  %2784 = vmatprep.subr.mxu0 0.0
  %2785 = vmatpush1.msra.mxu0 0.0
  %2786 = vmatprep.subr.mxu0 0.0
  %2787 = vmatpush1.msra.mxu0 0.0
  %2788 = vmatprep.subr.mxu0 0.0
  %2789 = vmatpush1.msra.mxu0 0.0
  %2790 = vmatprep.subr.mxu0 0.0
  %2791 = vmatpush1.msra.mxu0 0.0
  %2792 = vmatprep.subr.mxu0 0.0
  %2793 = vmatpush1.msra.mxu0 0.0
  %2794 = vmatprep.subr.mxu0 0.0
  %2795 = vmatpush1.msra.mxu0 0.0
  %2796 = vmatprep.subr.mxu0 0.0
  %2797 = vmatpush1.msra.mxu0 0.0
  %2798 = vmatprep.subr.mxu0 0.0
  %2799 = vmatpush1.msra.mxu0 0.0
  %2800 = vmatprep.subr.mxu0 0.0
  %2801 = vmatpush1.msra.mxu0 0.0
  %2802 = vmatprep.subr.mxu0 0.0
  %2803 = vmatpush1.msra.mxu0 0.0
  %2804 = vmatprep.subr.mxu0 0.0
  %2805 = vmatpush1.msra.mxu0 0.0
  %2806 = vmatprep.subr.mxu0 0.0
  %2807 = vmatpush1.msra.mxu0 0.0
  %2808 = vmatprep.subr.mxu0 0.0
  %2809 = vmatpush1.msra.mxu0 0.0
  %2810 = vmatprep.subr.mxu0 0.0
  %2811 = vmatpush1.msra.mxu0 0.0
  %2812 = vmatprep.subr.mxu0 0.0
  %2813 = vmatpush1.msra.mxu0 0.0
  %2814 = vmatprep.subr.mxu0 0.0
  %2815 = vmatpush1.msra.mxu0 0.0
  %2816 = vmatprep.mubr.f32.mxu0 0.0
  %2817 = vmatmul.mubr.f32.gmra.mrb[0].mxu0 %v2744
  %v2818 = vpop.f32.mrb[0].mxu0
  %v2819 = vadd.f32 %v2420, %v2818
  %v2820 = vpop.f32.mrb[0].mxu0
  %2821 = vmatprep.mubr.f32.mxu0 0.0
  %2822 = vmatmul.mubr.f32.gmra.mrb[0].mxu0 %v2747
  %v2823 = vpop.f32.mrb[0].mxu0
  %v2824 = vadd.f32 %v2420, %v2823
  %v2825 = vpop.f32.mrb[0].mxu0
  %2826 = vmatprep.mubr.f32.mxu0 0.0
  %2827 = vmatmul.mubr.f32.gmra.mrb[0].mxu0 %v2750
  %v2828 = vpop.f32.mrb[0].mxu0
  %v2829 = vadd.f32 %v2420, %v2828
  %v2830 = vpop.f32.mrb[0].mxu0
  %2831 = vdwg.mxu0
  %v2832 = vsel %vm49, %v2819, 0.0
  %2833 = vadd.xlane.f32.xlu0 %v2832
  %v2834 = vpop.xlane.xlu0 %2833
  %v2835 = vsel %vm49, %v2824, 0.0
  %2836 = vadd.xlane.f32.xlu0 %v2835
  %v2837 = vpop.xlane.xlu0 %2836
  %v2838 = vsel %vm2517, %v2829, 0.0
  %2839 = vadd.xlane.f32.xlu0 %v2838
  %v2840 = vpop.xlane.xlu0 %2839
  %v2841 = vmul.f32 %v2834, %v2521
  %v2842 = vmul.f32 %v2837, %v2521
  %v2843 = vmul.f32 %v2840, %v2521
  %v2844 = vsub.f32 %v2819, %v2841
  %v2845 = vsub.f32 %v2824, %v2842
  %v2846 = vsub.f32 %v2829, %v2843
  %v2847 = vmul.f32 %v2844, %v2844
  %v2848 = vmul.f32 %v2845, %v2845
  %v2849 = vmul.f32 %v2846, %v2846
  %v2850 = vsel %vm49, %v2847, 0.0
  %2851 = vadd.xlane.f32.xlu0 %v2850
  %v2852 = vpop.xlane.xlu0 %2851
  %v2853 = vsel %vm49, %v2848, 0.0
  %2854 = vadd.xlane.f32.xlu0 %v2853
  %v2855 = vpop.xlane.xlu0 %2854
  %v2856 = vsel %vm2517, %v2849, 0.0
  %2857 = vadd.xlane.f32.xlu0 %v2856
  %v2858 = vpop.xlane.xlu0 %2857
  %v2859 = vmul.f32 %v2852, %v2521
  %v2860 = vmul.f32 %v2855, %v2521
  %v2861 = vmul.f32 %v2858, %v2521
  %v2862 = vadd.f32 %v2859, 1e-05
  %v2863 = vadd.f32 %v2860, 1e-05
  %v2864 = vadd.f32 %v2861, 1e-05
  %v2865 = vrsqrt.pop %v2862
  %v2866 = vrsqrt.pop %v2863
  %v2867 = vrsqrt.pop %v2864
  %v2868 = vmul.f32 %v2844, %v2865
  %v2869 = vmul.f32 %v2845, %v2866
  %v2870 = vmul.f32 %v2846, %v2867
  %v2871 = vmul.f32 %v2868, %v2556
  %v2872 = vmul.f32 %v2869, %v2556
  %v2873 = vmul.f32 %v2870, %v2556
  %v2874 = vadd.f32 %v2871, %v2565
  %v2875 = vadd.f32 %v2872, %v2565
  %v2876 = vadd.f32 %v2873, %v2565
  %2877 = vrot.lane.b32.xlu0 %v2570, 96
  %v2878 = vpop.permute.xlu0 %2877
  %2879 = vrot.lane.b32.xlu0 %v2571, 96
  %v2880 = vpop.permute.xlu0 %2879
  %2881 = vrot.lane.b32.xlu0 %v2572, 96
  %v2882 = vpop.permute.xlu0 %2881
  %v2886 = vadd.f32 %v2874, %v2878
  %v2887 = vadd.f32 %v2875, %v2880
  %v2888 = vadd.f32 %v2876, %v2882
  %v2889 = vld [vmem:[%s1676] sm:$0xff]
  %v2890 = vld [vmem:[%s1676 + $0x8] sm:$0xff]
  %v2891 = vld [vmem:[%s1676 + $0x10] sm:$0x3]
  %v2892 = vld [vmem:[%s1856] sm:$0xff]
  %v2893 = vld [vmem:[%s1856 + $0x8] sm:$0xff]
  %v2894 = vld [vmem:[%s1856 + $0x10] sm:$0x3]
  %v2895 = vsel %vm49, %v2889, %v2892
  %v2896 = vsel %vm49, %v2890, %v2893
  %v2897 = vsel %vm49, %v2891, %v2894
  %v2899 = vsel %vm59, %v2895, 0
  %v2902 = vsel %vm59, %v2896, 0
  %v2905 = vsel %vm59, %v2897, 0
  %2907 = vmatprep.subr.mxu0 0.0
  %2908 = vmatpush1.msra.mxu0 %v2400
  %2909 = vmatprep.subr.mxu0 0.0
  %2910 = vmatpush1.msra.mxu0 %v2401
  %2911 = vmatprep.subr.mxu0 0.0
  %2912 = vmatpush1.msra.mxu0 %v2402
  %2913 = vmatprep.subr.mxu0 0.0
  %2914 = vmatpush1.msra.mxu0 %v2403
  %2915 = vmatprep.subr.mxu0 0.0
  %2916 = vmatpush1.msra.mxu0 0.0
  %2917 = vmatprep.subr.mxu0 0.0
  %2918 = vmatpush1.msra.mxu0 0.0
  %2919 = vmatprep.subr.mxu0 0.0
  %2920 = vmatpush1.msra.mxu0 0.0
  %2921 = vmatprep.subr.mxu0 0.0
  %2922 = vmatpush1.msra.mxu0 0.0
  %2923 = vmatprep.subr.mxu0 0.0
  %2924 = vmatpush1.msra.mxu0 0.0
  %2925 = vmatprep.subr.mxu0 0.0
  %2926 = vmatpush1.msra.mxu0 0.0
  %2927 = vmatprep.subr.mxu0 0.0
  %2928 = vmatpush1.msra.mxu0 0.0
  %2929 = vmatprep.subr.mxu0 0.0
  %2930 = vmatpush1.msra.mxu0 0.0
  %2931 = vmatprep.subr.mxu0 0.0
  %2932 = vmatpush1.msra.mxu0 0.0
  %2933 = vmatprep.subr.mxu0 0.0
  %2934 = vmatpush1.msra.mxu0 0.0
  %2935 = vmatprep.subr.mxu0 0.0
  %2936 = vmatpush1.msra.mxu0 0.0
  %2937 = vmatprep.subr.mxu0 0.0
  %2938 = vmatpush1.msra.mxu0 0.0
  %2939 = vmatprep.subr.mxu0 0.0
  %2940 = vmatpush1.msra.mxu0 0.0
  %2941 = vmatprep.subr.mxu0 0.0
  %2942 = vmatpush1.msra.mxu0 0.0
  %2943 = vmatprep.subr.mxu0 0.0
  %2944 = vmatpush1.msra.mxu0 0.0
  %2945 = vmatprep.subr.mxu0 0.0
  %2946 = vmatpush1.msra.mxu0 0.0
  %2947 = vmatprep.subr.mxu0 0.0
  %2948 = vmatpush1.msra.mxu0 0.0
  %2949 = vmatprep.subr.mxu0 0.0
  %2950 = vmatpush1.msra.mxu0 0.0
  %2951 = vmatprep.subr.mxu0 0.0
  %2952 = vmatpush1.msra.mxu0 0.0
  %2953 = vmatprep.subr.mxu0 0.0
  %2954 = vmatpush1.msra.mxu0 0.0
  %2955 = vmatprep.subr.mxu0 0.0
  %2956 = vmatpush1.msra.mxu0 0.0
  %2957 = vmatprep.subr.mxu0 0.0
  %2958 = vmatpush1.msra.mxu0 0.0
  %2959 = vmatprep.subr.mxu0 0.0
  %2960 = vmatpush1.msra.mxu0 0.0
  %2961 = vmatprep.subr.mxu0 0.0
  %2962 = vmatpush1.msra.mxu0 0.0
  %2963 = vmatprep.subr.mxu0 0.0
  %2964 = vmatpush1.msra.mxu0 0.0
  %2965 = vmatprep.subr.mxu0 0.0
  %2966 = vmatpush1.msra.mxu0 0.0
  %2967 = vmatprep.subr.mxu0 0.0
  %2968 = vmatpush1.msra.mxu0 0.0
  %2969 = vmatprep.subr.mxu0 0.0
  %2970 = vmatpush1.msra.mxu0 0.0
  %2971 = vmatprep.mubr.f32.mxu0 0.0
  %2972 = vmatmul.mubr.f32.gmra.mrb[0].mxu0 %v2899
  %v2973 = vpop.f32.mrb[0].mxu0
  %v2974 = vadd.f32 %v2420, %v2973
  %v2975 = vpop.f32.mrb[0].mxu0
  %2976 = vmatprep.mubr.f32.mxu0 0.0
  %2977 = vmatmul.mubr.f32.gmra.mrb[0].mxu0 %v2902
  %v2978 = vpop.f32.mrb[0].mxu0
  %v2979 = vadd.f32 %v2420, %v2978
  %v2980 = vpop.f32.mrb[0].mxu0
  %2981 = vmatprep.mubr.f32.mxu0 0.0
  %2982 = vmatmul.mubr.f32.gmra.mrb[0].mxu0 %v2905
  %v2983 = vpop.f32.mrb[0].mxu0
  %v2984 = vadd.f32 %v2420, %v2983
  %v2985 = vpop.f32.mrb[0].mxu0
  %2986 = vdwg.mxu0
  %v2987 = vsel %vm49, %v2974, 0.0
  %2988 = vadd.xlane.f32.xlu0 %v2987
  %v2989 = vpop.xlane.xlu0 %2988
  %v2990 = vsel %vm49, %v2979, 0.0
  %2991 = vadd.xlane.f32.xlu0 %v2990
  %v2992 = vpop.xlane.xlu0 %2991
  %v2993 = vsel %vm2517, %v2984, 0.0
  %2994 = vadd.xlane.f32.xlu0 %v2993
  %v2995 = vpop.xlane.xlu0 %2994
  %v2996 = vmul.f32 %v2989, %v2521
  %v2997 = vmul.f32 %v2992, %v2521
  %v2998 = vmul.f32 %v2995, %v2521
  %v2999 = vsub.f32 %v2974, %v2996
  %v3000 = vsub.f32 %v2979, %v2997
  %v3001 = vsub.f32 %v2984, %v2998
  %v3002 = vmul.f32 %v2999, %v2999
  %v3003 = vmul.f32 %v3000, %v3000
  %v3004 = vmul.f32 %v3001, %v3001
  %v3005 = vsel %vm49, %v3002, 0.0
  %3006 = vadd.xlane.f32.xlu0 %v3005
  %v3007 = vpop.xlane.xlu0 %3006
  %v3008 = vsel %vm49, %v3003, 0.0
  %3009 = vadd.xlane.f32.xlu0 %v3008
  %v3010 = vpop.xlane.xlu0 %3009
  %v3011 = vsel %vm2517, %v3004, 0.0
  %3012 = vadd.xlane.f32.xlu0 %v3011
  %v3013 = vpop.xlane.xlu0 %3012
  %v3014 = vmul.f32 %v3007, %v2521
  %v3015 = vmul.f32 %v3010, %v2521
  %v3016 = vmul.f32 %v3013, %v2521
  %v3017 = vadd.f32 %v3014, 1e-05
  %v3018 = vadd.f32 %v3015, 1e-05
  %v3019 = vadd.f32 %v3016, 1e-05
  %v3020 = vrsqrt.pop %v3017
  %v3021 = vrsqrt.pop %v3018
  %v3022 = vrsqrt.pop %v3019
  %v3023 = vmul.f32 %v2999, %v3020
  %v3024 = vmul.f32 %v3000, %v3021
  %v3025 = vmul.f32 %v3001, %v3022
  %v3026 = vmul.f32 %v3023, %v2556
  %v3027 = vmul.f32 %v3024, %v2556
  %v3028 = vmul.f32 %v3025, %v2556
  %v3029 = vadd.f32 %v3026, %v2565
  %v3030 = vadd.f32 %v3027, %v2565
  %v3031 = vadd.f32 %v3028, %v2565
  %3032 = vrot.lane.b32.xlu0 %v2570, 80
  %v3033 = vpop.permute.xlu0 %3032
  %3034 = vrot.lane.b32.xlu0 %v2571, 80
  %v3035 = vpop.permute.xlu0 %3034
  %3036 = vrot.lane.b32.xlu0 %v2572, 80
  %v3037 = vpop.permute.xlu0 %3036
  %v3041 = vadd.f32 %v3029, %v3033
  %v3042 = vadd.f32 %v3030, %v3035
  %v3043 = vadd.f32 %v3031, %v3037
  %v3044 = vsel %vm49, %v2892, %v2889
  %v3045 = vsel %vm49, %v2893, %v2890
  %v3046 = vsel %vm49, %v2894, %v2891
  %v3048 = vsel %vm59, %v3044, 0
  %v3051 = vsel %vm59, %v3045, 0
  %v3054 = vsel %vm59, %v3046, 0
  %3056 = vmatprep.subr.mxu0 0.0
  %3057 = vmatpush1.msra.mxu0 %v2400
  %3058 = vmatprep.subr.mxu0 0.0
  %3059 = vmatpush1.msra.mxu0 %v2401
  %3060 = vmatprep.subr.mxu0 0.0
  %3061 = vmatpush1.msra.mxu0 %v2402
  %3062 = vmatprep.subr.mxu0 0.0
  %3063 = vmatpush1.msra.mxu0 %v2403
  %3064 = vmatprep.subr.mxu0 0.0
  %3065 = vmatpush1.msra.mxu0 0.0
  %3066 = vmatprep.subr.mxu0 0.0
  %3067 = vmatpush1.msra.mxu0 0.0
  %3068 = vmatprep.subr.mxu0 0.0
  %3069 = vmatpush1.msra.mxu0 0.0
  %3070 = vmatprep.subr.mxu0 0.0
  %3071 = vmatpush1.msra.mxu0 0.0
  %3072 = vmatprep.subr.mxu0 0.0
  %3073 = vmatpush1.msra.mxu0 0.0
  %3074 = vmatprep.subr.mxu0 0.0
  %3075 = vmatpush1.msra.mxu0 0.0
  %3076 = vmatprep.subr.mxu0 0.0
  %3077 = vmatpush1.msra.mxu0 0.0
  %3078 = vmatprep.subr.mxu0 0.0
  %3079 = vmatpush1.msra.mxu0 0.0
  %3080 = vmatprep.subr.mxu0 0.0
  %3081 = vmatpush1.msra.mxu0 0.0
  %3082 = vmatprep.subr.mxu0 0.0
  %3083 = vmatpush1.msra.mxu0 0.0
  %3084 = vmatprep.subr.mxu0 0.0
  %3085 = vmatpush1.msra.mxu0 0.0
  %3086 = vmatprep.subr.mxu0 0.0
  %3087 = vmatpush1.msra.mxu0 0.0
  %3088 = vmatprep.subr.mxu0 0.0
  %3089 = vmatpush1.msra.mxu0 0.0
  %3090 = vmatprep.subr.mxu0 0.0
  %3091 = vmatpush1.msra.mxu0 0.0
  %3092 = vmatprep.subr.mxu0 0.0
  %3093 = vmatpush1.msra.mxu0 0.0
  %3094 = vmatprep.subr.mxu0 0.0
  %3095 = vmatpush1.msra.mxu0 0.0
  %3096 = vmatprep.subr.mxu0 0.0
  %3097 = vmatpush1.msra.mxu0 0.0
  %3098 = vmatprep.subr.mxu0 0.0
  %3099 = vmatpush1.msra.mxu0 0.0
  %3100 = vmatprep.subr.mxu0 0.0
  %3101 = vmatpush1.msra.mxu0 0.0
  %3102 = vmatprep.subr.mxu0 0.0
  %3103 = vmatpush1.msra.mxu0 0.0
  %3104 = vmatprep.subr.mxu0 0.0
  %3105 = vmatpush1.msra.mxu0 0.0
  %3106 = vmatprep.subr.mxu0 0.0
  %3107 = vmatpush1.msra.mxu0 0.0
  %3108 = vmatprep.subr.mxu0 0.0
  %3109 = vmatpush1.msra.mxu0 0.0
  %3110 = vmatprep.subr.mxu0 0.0
  %3111 = vmatpush1.msra.mxu0 0.0
  %3112 = vmatprep.subr.mxu0 0.0
  %3113 = vmatpush1.msra.mxu0 0.0
  %3114 = vmatprep.subr.mxu0 0.0
  %3115 = vmatpush1.msra.mxu0 0.0
  %3116 = vmatprep.subr.mxu0 0.0
  %3117 = vmatpush1.msra.mxu0 0.0
  %3118 = vmatprep.subr.mxu0 0.0
  %3119 = vmatpush1.msra.mxu0 0.0
  %3120 = vmatprep.mubr.f32.mxu0 0.0
  %3121 = vmatmul.mubr.f32.gmra.mrb[0].mxu0 %v3048
  %v3122 = vpop.f32.mrb[0].mxu0
  %v3123 = vadd.f32 %v2420, %v3122
  %v3124 = vpop.f32.mrb[0].mxu0
  %3125 = vmatprep.mubr.f32.mxu0 0.0
  %3126 = vmatmul.mubr.f32.gmra.mrb[0].mxu0 %v3051
  %v3127 = vpop.f32.mrb[0].mxu0
  %v3128 = vadd.f32 %v2420, %v3127
  %v3129 = vpop.f32.mrb[0].mxu0
  %3130 = vmatprep.mubr.f32.mxu0 0.0
  %3131 = vmatmul.mubr.f32.gmra.mrb[0].mxu0 %v3054
  %v3132 = vpop.f32.mrb[0].mxu0
  %v3133 = vadd.f32 %v2420, %v3132
  %v3134 = vpop.f32.mrb[0].mxu0
  %3135 = vdwg.mxu0
  %v3136 = vsel %vm49, %v3123, 0.0
  %3137 = vadd.xlane.f32.xlu0 %v3136
  %v3138 = vpop.xlane.xlu0 %3137
  %v3139 = vsel %vm49, %v3128, 0.0
  %3140 = vadd.xlane.f32.xlu0 %v3139
  %v3141 = vpop.xlane.xlu0 %3140
  %v3142 = vsel %vm2517, %v3133, 0.0
  %3143 = vadd.xlane.f32.xlu0 %v3142
  %v3144 = vpop.xlane.xlu0 %3143
  %v3145 = vmul.f32 %v3138, %v2521
  %v3146 = vmul.f32 %v3141, %v2521
  %v3147 = vmul.f32 %v3144, %v2521
  %v3148 = vsub.f32 %v3123, %v3145
  %v3149 = vsub.f32 %v3128, %v3146
  %v3150 = vsub.f32 %v3133, %v3147
  %v3151 = vmul.f32 %v3148, %v3148
  %v3152 = vmul.f32 %v3149, %v3149
  %v3153 = vmul.f32 %v3150, %v3150
  %v3154 = vsel %vm49, %v3151, 0.0
  %3155 = vadd.xlane.f32.xlu0 %v3154
  %v3156 = vpop.xlane.xlu0 %3155
  %v3157 = vsel %vm49, %v3152, 0.0
  %3158 = vadd.xlane.f32.xlu0 %v3157
  %v3159 = vpop.xlane.xlu0 %3158
  %v3160 = vsel %vm2517, %v3153, 0.0
  %3161 = vadd.xlane.f32.xlu0 %v3160
  %v3162 = vpop.xlane.xlu0 %3161
  %v3163 = vmul.f32 %v3156, %v2521
  %v3164 = vmul.f32 %v3159, %v2521
  %v3165 = vmul.f32 %v3162, %v2521
  %v3166 = vadd.f32 %v3163, 1e-05
  %v3167 = vadd.f32 %v3164, 1e-05
  %v3168 = vadd.f32 %v3165, 1e-05
  %v3169 = vrsqrt.pop %v3166
  %v3170 = vrsqrt.pop %v3167
  %v3171 = vrsqrt.pop %v3168
  %v3172 = vmul.f32 %v3148, %v3169
  %v3173 = vmul.f32 %v3149, %v3170
  %v3174 = vmul.f32 %v3150, %v3171
  %v3175 = vmul.f32 %v3172, %v2556
  %v3176 = vmul.f32 %v3173, %v2556
  %v3177 = vmul.f32 %v3174, %v2556
  %v3178 = vadd.f32 %v3175, %v2565
  %v3179 = vadd.f32 %v3176, %v2565
  %v3180 = vadd.f32 %v3177, %v2565
  %3181 = vrot.lane.b32.xlu0 %v2570, 64
  %v3182 = vpop.permute.xlu0 %3181
  %3183 = vrot.lane.b32.xlu0 %v2571, 64
  %v3184 = vpop.permute.xlu0 %3183
  %3185 = vrot.lane.b32.xlu0 %v2572, 64
  %v3186 = vpop.permute.xlu0 %3185
  %v3190 = vadd.f32 %v3178, %v3182
  %v3191 = vadd.f32 %v3179, %v3184
  %v3192 = vadd.f32 %v3180, %v3186
  %v3193 = vsel %vm49, %v2737, %v2734
  %v3194 = vsel %vm49, %v2738, %v2735
  %v3195 = vsel %vm49, %v2739, %v2736
  %v3197 = vsel %vm59, %v3193, 0
  %v3200 = vsel %vm59, %v3194, 0
  %v3203 = vsel %vm59, %v3195, 0
  %3205 = vmatprep.subr.mxu0 0.0
  %3206 = vmatpush1.msra.mxu0 %v2400
  %3207 = vmatprep.subr.mxu0 0.0
  %3208 = vmatpush1.msra.mxu0 %v2401
  %3209 = vmatprep.subr.mxu0 0.0
  %3210 = vmatpush1.msra.mxu0 %v2402
  %3211 = vmatprep.subr.mxu0 0.0
  %3212 = vmatpush1.msra.mxu0 %v2403
  %3213 = vmatprep.subr.mxu0 0.0
  %3214 = vmatpush1.msra.mxu0 0.0
  %3215 = vmatprep.subr.mxu0 0.0
  %3216 = vmatpush1.msra.mxu0 0.0
  %3217 = vmatprep.subr.mxu0 0.0
  %3218 = vmatpush1.msra.mxu0 0.0
  %3219 = vmatprep.subr.mxu0 0.0
  %3220 = vmatpush1.msra.mxu0 0.0
  %3221 = vmatprep.subr.mxu0 0.0
  %3222 = vmatpush1.msra.mxu0 0.0
  %3223 = vmatprep.subr.mxu0 0.0
  %3224 = vmatpush1.msra.mxu0 0.0
  %3225 = vmatprep.subr.mxu0 0.0
  %3226 = vmatpush1.msra.mxu0 0.0
  %3227 = vmatprep.subr.mxu0 0.0
  %3228 = vmatpush1.msra.mxu0 0.0
  %3229 = vmatprep.subr.mxu0 0.0
  %3230 = vmatpush1.msra.mxu0 0.0
  %3231 = vmatprep.subr.mxu0 0.0
  %3232 = vmatpush1.msra.mxu0 0.0
  %3233 = vmatprep.subr.mxu0 0.0
  %3234 = vmatpush1.msra.mxu0 0.0
  %3235 = vmatprep.subr.mxu0 0.0
  %3236 = vmatpush1.msra.mxu0 0.0
  %3237 = vmatprep.subr.mxu0 0.0
  %3238 = vmatpush1.msra.mxu0 0.0
  %3239 = vmatprep.subr.mxu0 0.0
  %3240 = vmatpush1.msra.mxu0 0.0
  %3241 = vmatprep.subr.mxu0 0.0
  %3242 = vmatpush1.msra.mxu0 0.0
  %3243 = vmatprep.subr.mxu0 0.0
  %3244 = vmatpush1.msra.mxu0 0.0
  %3245 = vmatprep.subr.mxu0 0.0
  %3246 = vmatpush1.msra.mxu0 0.0
  %3247 = vmatprep.subr.mxu0 0.0
  %3248 = vmatpush1.msra.mxu0 0.0
  %3249 = vmatprep.subr.mxu0 0.0
  %3250 = vmatpush1.msra.mxu0 0.0
  %3251 = vmatprep.subr.mxu0 0.0
  %3252 = vmatpush1.msra.mxu0 0.0
  %3253 = vmatprep.subr.mxu0 0.0
  %3254 = vmatpush1.msra.mxu0 0.0
  %3255 = vmatprep.subr.mxu0 0.0
  %3256 = vmatpush1.msra.mxu0 0.0
  %3257 = vmatprep.subr.mxu0 0.0
  %3258 = vmatpush1.msra.mxu0 0.0
  %3259 = vmatprep.subr.mxu0 0.0
  %3260 = vmatpush1.msra.mxu0 0.0
  %3261 = vmatprep.subr.mxu0 0.0
  %3262 = vmatpush1.msra.mxu0 0.0
  %3263 = vmatprep.subr.mxu0 0.0
  %3264 = vmatpush1.msra.mxu0 0.0
  %3265 = vmatprep.subr.mxu0 0.0
  %3266 = vmatpush1.msra.mxu0 0.0
  %3267 = vmatprep.subr.mxu0 0.0
  %3268 = vmatpush1.msra.mxu0 0.0
  %3269 = vmatprep.mubr.f32.mxu0 0.0
  %3270 = vmatmul.mubr.f32.gmra.mrb[0].mxu0 %v3197
  %v3271 = vpop.f32.mrb[0].mxu0
  %v3272 = vadd.f32 %v2420, %v3271
  %v3273 = vpop.f32.mrb[0].mxu0
  %3274 = vmatprep.mubr.f32.mxu0 0.0
  %3275 = vmatmul.mubr.f32.gmra.mrb[0].mxu0 %v3200
  %v3276 = vpop.f32.mrb[0].mxu0
  %v3277 = vadd.f32 %v2420, %v3276
  %v3278 = vpop.f32.mrb[0].mxu0
  %3279 = vmatprep.mubr.f32.mxu0 0.0
  %3280 = vmatmul.mubr.f32.gmra.mrb[0].mxu0 %v3203
  %v3281 = vpop.f32.mrb[0].mxu0
  %v3282 = vadd.f32 %v2420, %v3281
  %v3283 = vpop.f32.mrb[0].mxu0
  %3284 = vdwg.mxu0
  %v3285 = vsel %vm49, %v3272, 0.0
  %3286 = vadd.xlane.f32.xlu0 %v3285
  %v3287 = vpop.xlane.xlu0 %3286
  %v3288 = vsel %vm49, %v3277, 0.0
  %3289 = vadd.xlane.f32.xlu0 %v3288
  %v3290 = vpop.xlane.xlu0 %3289
  %v3291 = vsel %vm2517, %v3282, 0.0
  %3292 = vadd.xlane.f32.xlu0 %v3291
  %v3293 = vpop.xlane.xlu0 %3292
  %v3294 = vmul.f32 %v3287, %v2521
  %v3295 = vmul.f32 %v3290, %v2521
  %v3296 = vmul.f32 %v3293, %v2521
  %v3297 = vsub.f32 %v3272, %v3294
  %v3298 = vsub.f32 %v3277, %v3295
  %v3299 = vsub.f32 %v3282, %v3296
  %v3300 = vmul.f32 %v3297, %v3297
  %v3301 = vmul.f32 %v3298, %v3298
  %v3302 = vmul.f32 %v3299, %v3299
  %v3303 = vsel %vm49, %v3300, 0.0
  %3304 = vadd.xlane.f32.xlu0 %v3303
  %v3305 = vpop.xlane.xlu0 %3304
  %v3306 = vsel %vm49, %v3301, 0.0
  %3307 = vadd.xlane.f32.xlu0 %v3306
  %v3308 = vpop.xlane.xlu0 %3307
  %v3309 = vsel %vm2517, %v3302, 0.0
  %3310 = vadd.xlane.f32.xlu0 %v3309
  %v3311 = vpop.xlane.xlu0 %3310
  %v3312 = vmul.f32 %v3305, %v2521
  %v3313 = vmul.f32 %v3308, %v2521
  %v3314 = vmul.f32 %v3311, %v2521
  %v3315 = vadd.f32 %v3312, 1e-05
  %v3316 = vadd.f32 %v3313, 1e-05
  %v3317 = vadd.f32 %v3314, 1e-05
  %v3318 = vrsqrt.pop %v3315
  %v3319 = vrsqrt.pop %v3316
  %v3320 = vrsqrt.pop %v3317
  %v3321 = vmul.f32 %v3297, %v3318
  %v3322 = vmul.f32 %v3298, %v3319
  %v3323 = vmul.f32 %v3299, %v3320
  %v3324 = vmul.f32 %v3321, %v2556
  %v3325 = vmul.f32 %v3322, %v2556
  %v3326 = vmul.f32 %v3323, %v2556
  %v3327 = vadd.f32 %v3324, %v2565
  %v3328 = vadd.f32 %v3325, %v2565
  %v3329 = vadd.f32 %v3326, %v2565
  %3330 = vrot.lane.b32.xlu0 %v2570, 48
  %v3331 = vpop.permute.xlu0 %3330
  %3332 = vrot.lane.b32.xlu0 %v2571, 48
  %v3333 = vpop.permute.xlu0 %3332
  %3334 = vrot.lane.b32.xlu0 %v2572, 48
  %v3335 = vpop.permute.xlu0 %3334
  %v3339 = vadd.f32 %v3327, %v3331
  %v3340 = vadd.f32 %v3328, %v3333
  %v3341 = vadd.f32 %v3329, %v3335
  %v3342 = vsel %vm49, %v2579, %v2576
  %v3343 = vsel %vm49, %v2580, %v2577
  %v3344 = vsel %vm49, %v2581, %v2578
  %v3346 = vsel %vm59, %v3342, 0
  %v3349 = vsel %vm59, %v3343, 0
  %v3352 = vsel %vm59, %v3344, 0
  %3354 = vmatprep.subr.mxu0 0.0
  %3355 = vmatpush1.msra.mxu0 %v2400
  %3356 = vmatprep.subr.mxu0 0.0
  %3357 = vmatpush1.msra.mxu0 %v2401
  %3358 = vmatprep.subr.mxu0 0.0
  %3359 = vmatpush1.msra.mxu0 %v2402
  %3360 = vmatprep.subr.mxu0 0.0
  %3361 = vmatpush1.msra.mxu0 %v2403
  %3362 = vmatprep.subr.mxu0 0.0
  %3363 = vmatpush1.msra.mxu0 0.0
  %3364 = vmatprep.subr.mxu0 0.0
  %3365 = vmatpush1.msra.mxu0 0.0
  %3366 = vmatprep.subr.mxu0 0.0
  %3367 = vmatpush1.msra.mxu0 0.0
  %3368 = vmatprep.subr.mxu0 0.0
  %3369 = vmatpush1.msra.mxu0 0.0
  %3370 = vmatprep.subr.mxu0 0.0
  %3371 = vmatpush1.msra.mxu0 0.0
  %3372 = vmatprep.subr.mxu0 0.0
  %3373 = vmatpush1.msra.mxu0 0.0
  %3374 = vmatprep.subr.mxu0 0.0
  %3375 = vmatpush1.msra.mxu0 0.0
  %3376 = vmatprep.subr.mxu0 0.0
  %3377 = vmatpush1.msra.mxu0 0.0
  %3378 = vmatprep.subr.mxu0 0.0
  %3379 = vmatpush1.msra.mxu0 0.0
  %3380 = vmatprep.subr.mxu0 0.0
  %3381 = vmatpush1.msra.mxu0 0.0
  %3382 = vmatprep.subr.mxu0 0.0
  %3383 = vmatpush1.msra.mxu0 0.0
  %3384 = vmatprep.subr.mxu0 0.0
  %3385 = vmatpush1.msra.mxu0 0.0
  %3386 = vmatprep.subr.mxu0 0.0
  %3387 = vmatpush1.msra.mxu0 0.0
  %3388 = vmatprep.subr.mxu0 0.0
  %3389 = vmatpush1.msra.mxu0 0.0
  %3390 = vmatprep.subr.mxu0 0.0
  %3391 = vmatpush1.msra.mxu0 0.0
  %3392 = vmatprep.subr.mxu0 0.0
  %3393 = vmatpush1.msra.mxu0 0.0
  %3394 = vmatprep.subr.mxu0 0.0
  %3395 = vmatpush1.msra.mxu0 0.0
  %3396 = vmatprep.subr.mxu0 0.0
  %3397 = vmatpush1.msra.mxu0 0.0
  %3398 = vmatprep.subr.mxu0 0.0
  %3399 = vmatpush1.msra.mxu0 0.0
  %3400 = vmatprep.subr.mxu0 0.0
  %3401 = vmatpush1.msra.mxu0 0.0
  %3402 = vmatprep.subr.mxu0 0.0
  %3403 = vmatpush1.msra.mxu0 0.0
  %3404 = vmatprep.subr.mxu0 0.0
  %3405 = vmatpush1.msra.mxu0 0.0
  %3406 = vmatprep.subr.mxu0 0.0
  %3407 = vmatpush1.msra.mxu0 0.0
  %3408 = vmatprep.subr.mxu0 0.0
  %3409 = vmatpush1.msra.mxu0 0.0
  %3410 = vmatprep.subr.mxu0 0.0
  %3411 = vmatpush1.msra.mxu0 0.0
  %3412 = vmatprep.subr.mxu0 0.0
  %3413 = vmatpush1.msra.mxu0 0.0
  %3414 = vmatprep.subr.mxu0 0.0
  %3415 = vmatpush1.msra.mxu0 0.0
  %3416 = vmatprep.subr.mxu0 0.0
  %3417 = vmatpush1.msra.mxu0 0.0
  %3418 = vmatprep.mubr.f32.mxu0 0.0
  %3419 = vmatmul.mubr.f32.gmra.mrb[0].mxu0 %v3346
  %v3420 = vpop.f32.mrb[0].mxu0
  %v3421 = vadd.f32 %v2420, %v3420
  %v3422 = vpop.f32.mrb[0].mxu0
  %3423 = vmatprep.mubr.f32.mxu0 0.0
  %3424 = vmatmul.mubr.f32.gmra.mrb[0].mxu0 %v3349
  %v3425 = vpop.f32.mrb[0].mxu0
  %v3426 = vadd.f32 %v2420, %v3425
  %v3427 = vpop.f32.mrb[0].mxu0
  %3428 = vmatprep.mubr.f32.mxu0 0.0
  %3429 = vmatmul.mubr.f32.gmra.mrb[0].mxu0 %v3352
  %v3430 = vpop.f32.mrb[0].mxu0
  %v3431 = vadd.f32 %v2420, %v3430
  %v3432 = vpop.f32.mrb[0].mxu0
  %3433 = vdwg.mxu0
  %v3434 = vsel %vm49, %v3421, 0.0
  %3435 = vadd.xlane.f32.xlu0 %v3434
  %v3436 = vpop.xlane.xlu0 %3435
  %v3437 = vsel %vm49, %v3426, 0.0
  %3438 = vadd.xlane.f32.xlu0 %v3437
  %v3439 = vpop.xlane.xlu0 %3438
  %v3440 = vsel %vm2517, %v3431, 0.0
  %3441 = vadd.xlane.f32.xlu0 %v3440
  %v3442 = vpop.xlane.xlu0 %3441
  %v3443 = vmul.f32 %v3436, %v2521
  %v3444 = vmul.f32 %v3439, %v2521
  %v3445 = vmul.f32 %v3442, %v2521
  %v3446 = vsub.f32 %v3421, %v3443
  %v3447 = vsub.f32 %v3426, %v3444
  %v3448 = vsub.f32 %v3431, %v3445
  %v3449 = vmul.f32 %v3446, %v3446
  %v3450 = vmul.f32 %v3447, %v3447
  %v3451 = vmul.f32 %v3448, %v3448
  %v3452 = vsel %vm49, %v3449, 0.0
  %3453 = vadd.xlane.f32.xlu0 %v3452
  %v3454 = vpop.xlane.xlu0 %3453
  %v3455 = vsel %vm49, %v3450, 0.0
  %3456 = vadd.xlane.f32.xlu0 %v3455
  %v3457 = vpop.xlane.xlu0 %3456
  %v3458 = vsel %vm2517, %v3451, 0.0
  %3459 = vadd.xlane.f32.xlu0 %v3458
  %v3460 = vpop.xlane.xlu0 %3459
  %v3461 = vmul.f32 %v3454, %v2521
  %v3462 = vmul.f32 %v3457, %v2521
  %v3463 = vmul.f32 %v3460, %v2521
  %v3464 = vadd.f32 %v3461, 1e-05
  %v3465 = vadd.f32 %v3462, 1e-05
  %v3466 = vadd.f32 %v3463, 1e-05
  %v3467 = vrsqrt.pop %v3464
  %v3468 = vrsqrt.pop %v3465
  %v3469 = vrsqrt.pop %v3466
  %v3470 = vmul.f32 %v3446, %v3467
  %v3471 = vmul.f32 %v3447, %v3468
  %v3472 = vmul.f32 %v3448, %v3469
  %v3473 = vmul.f32 %v3470, %v2556
  %v3474 = vmul.f32 %v3471, %v2556
  %v3475 = vmul.f32 %v3472, %v2556
  %v3476 = vadd.f32 %v3473, %v2565
  %v3477 = vadd.f32 %v3474, %v2565
  %v3478 = vadd.f32 %v3475, %v2565
  %3479 = vrot.lane.b32.xlu0 %v2570, 32
  %v3480 = vpop.permute.xlu0 %3479
  %3481 = vrot.lane.b32.xlu0 %v2571, 32
  %v3482 = vpop.permute.xlu0 %3481
  %3483 = vrot.lane.b32.xlu0 %v2572, 32
  %v3484 = vpop.permute.xlu0 %3483
  %v3488 = vadd.f32 %v3476, %v3480
  %v3489 = vadd.f32 %v3477, %v3482
  %v3490 = vadd.f32 %v3478, %v3484
  %v3491 = vsel %vm49, %v2410, %v2407
  %v3492 = vsel %vm49, %v2411, %v2408
  %v3493 = vsel %vm49, %v2412, %v2409
  %v3495 = vsel %vm59, %v3491, 0
  %v3498 = vsel %vm59, %v3492, 0
  %v3501 = vsel %vm59, %v3493, 0
  %3503 = vmatprep.subr.mxu0 0.0
  %3504 = vmatpush1.msra.mxu0 %v2400
  %3505 = vmatprep.subr.mxu0 0.0
  %3506 = vmatpush1.msra.mxu0 %v2401
  %3507 = vmatprep.subr.mxu0 0.0
  %3508 = vmatpush1.msra.mxu0 %v2402
  %3509 = vmatprep.subr.mxu0 0.0
  %3510 = vmatpush1.msra.mxu0 %v2403
  %3511 = vmatprep.subr.mxu0 0.0
  %3512 = vmatpush1.msra.mxu0 0.0
  %3513 = vmatprep.subr.mxu0 0.0
  %3514 = vmatpush1.msra.mxu0 0.0
  %3515 = vmatprep.subr.mxu0 0.0
  %3516 = vmatpush1.msra.mxu0 0.0
  %3517 = vmatprep.subr.mxu0 0.0
  %3518 = vmatpush1.msra.mxu0 0.0
  %3519 = vmatprep.subr.mxu0 0.0
  %3520 = vmatpush1.msra.mxu0 0.0
  %3521 = vmatprep.subr.mxu0 0.0
  %3522 = vmatpush1.msra.mxu0 0.0
  %3523 = vmatprep.subr.mxu0 0.0
  %3524 = vmatpush1.msra.mxu0 0.0
  %3525 = vmatprep.subr.mxu0 0.0
  %3526 = vmatpush1.msra.mxu0 0.0
  %3527 = vmatprep.subr.mxu0 0.0
  %3528 = vmatpush1.msra.mxu0 0.0
  %3529 = vmatprep.subr.mxu0 0.0
  %3530 = vmatpush1.msra.mxu0 0.0
  %3531 = vmatprep.subr.mxu0 0.0
  %3532 = vmatpush1.msra.mxu0 0.0
  %3533 = vmatprep.subr.mxu0 0.0
  %3534 = vmatpush1.msra.mxu0 0.0
  %3535 = vmatprep.subr.mxu0 0.0
  %3536 = vmatpush1.msra.mxu0 0.0
  %3537 = vmatprep.subr.mxu0 0.0
  %3538 = vmatpush1.msra.mxu0 0.0
  %3539 = vmatprep.subr.mxu0 0.0
  %3540 = vmatpush1.msra.mxu0 0.0
  %3541 = vmatprep.subr.mxu0 0.0
  %3542 = vmatpush1.msra.mxu0 0.0
  %3543 = vmatprep.subr.mxu0 0.0
  %3544 = vmatpush1.msra.mxu0 0.0
  %3545 = vmatprep.subr.mxu0 0.0
  %3546 = vmatpush1.msra.mxu0 0.0
  %3547 = vmatprep.subr.mxu0 0.0
  %3548 = vmatpush1.msra.mxu0 0.0
  %3549 = vmatprep.subr.mxu0 0.0
  %3550 = vmatpush1.msra.mxu0 0.0
  %3551 = vmatprep.subr.mxu0 0.0
  %3552 = vmatpush1.msra.mxu0 0.0
  %3553 = vmatprep.subr.mxu0 0.0
  %3554 = vmatpush1.msra.mxu0 0.0
  %3555 = vmatprep.subr.mxu0 0.0
  %3556 = vmatpush1.msra.mxu0 0.0
  %3557 = vmatprep.subr.mxu0 0.0
  %3558 = vmatpush1.msra.mxu0 0.0
  %3559 = vmatprep.subr.mxu0 0.0
  %3560 = vmatpush1.msra.mxu0 0.0
  %3561 = vmatprep.subr.mxu0 0.0
  %3562 = vmatpush1.msra.mxu0 0.0
  %3563 = vmatprep.subr.mxu0 0.0
  %3564 = vmatpush1.msra.mxu0 0.0
  %3565 = vmatprep.subr.mxu0 0.0
  %3566 = vmatpush1.msra.mxu0 0.0
  %3567 = vmatprep.mubr.f32.mxu0 0.0
  %3568 = vmatmul.mubr.f32.gmra.mrb[0].mxu0 %v3495
  %v3569 = vpop.f32.mrb[0].mxu0
  %v3570 = vadd.f32 %v2420, %v3569
  %v3571 = vpop.f32.mrb[0].mxu0
  %3572 = vmatprep.mubr.f32.mxu0 0.0
  %3573 = vmatmul.mubr.f32.gmra.mrb[0].mxu0 %v3498
  %v3574 = vpop.f32.mrb[0].mxu0
  %v3575 = vadd.f32 %v2420, %v3574
  %v3576 = vpop.f32.mrb[0].mxu0
  %3577 = vmatprep.mubr.f32.mxu0 0.0
  %3578 = vmatmul.mubr.f32.gmra.mrb[0].mxu0 %v3501
  %v3579 = vpop.f32.mrb[0].mxu0
  %v3580 = vadd.f32 %v2420, %v3579
  %v3581 = vpop.f32.mrb[0].mxu0
  %3582 = vdwg.mxu0
  %v3583 = vsel %vm49, %v3570, 0.0
  %3584 = vadd.xlane.f32.xlu0 %v3583
  %v3585 = vpop.xlane.xlu0 %3584
  %v3586 = vsel %vm49, %v3575, 0.0
  %3587 = vadd.xlane.f32.xlu0 %v3586
  %v3588 = vpop.xlane.xlu0 %3587
  %v3589 = vsel %vm2517, %v3580, 0.0
  %3590 = vadd.xlane.f32.xlu0 %v3589
  %v3591 = vpop.xlane.xlu0 %3590
  %v3592 = vmul.f32 %v3585, %v2521
  %v3593 = vmul.f32 %v3588, %v2521
  %v3594 = vmul.f32 %v3591, %v2521
  %v3595 = vsub.f32 %v3570, %v3592
  %v3596 = vsub.f32 %v3575, %v3593
  %v3597 = vsub.f32 %v3580, %v3594
  %v3598 = vmul.f32 %v3595, %v3595
  %v3599 = vmul.f32 %v3596, %v3596
  %v3600 = vmul.f32 %v3597, %v3597
  %v3601 = vsel %vm49, %v3598, 0.0
  %3602 = vadd.xlane.f32.xlu0 %v3601
  %v3603 = vpop.xlane.xlu0 %3602
  %v3604 = vsel %vm49, %v3599, 0.0
  %3605 = vadd.xlane.f32.xlu0 %v3604
  %v3606 = vpop.xlane.xlu0 %3605
  %v3607 = vsel %vm2517, %v3600, 0.0
  %3608 = vadd.xlane.f32.xlu0 %v3607
  %v3609 = vpop.xlane.xlu0 %3608
  %v3610 = vmul.f32 %v3603, %v2521
  %v3611 = vmul.f32 %v3606, %v2521
  %v3612 = vmul.f32 %v3609, %v2521
  %v3613 = vadd.f32 %v3610, 1e-05
  %v3614 = vadd.f32 %v3611, 1e-05
  %v3615 = vadd.f32 %v3612, 1e-05
  %v3616 = vrsqrt.pop %v3613
  %v3617 = vrsqrt.pop %v3614
  %v3618 = vrsqrt.pop %v3615
  %v3619 = vmul.f32 %v3595, %v3616
  %v3620 = vmul.f32 %v3596, %v3617
  %v3621 = vmul.f32 %v3597, %v3618
  %v3622 = vmul.f32 %v3619, %v2556
  %v3623 = vmul.f32 %v3620, %v2556
  %v3624 = vmul.f32 %v3621, %v2556
  %v3625 = vadd.f32 %v3622, %v2565
  %v3626 = vadd.f32 %v3623, %v2565
  %v3627 = vadd.f32 %v3624, %v2565
  %3628 = vrot.lane.b32.xlu0 %v2570, 16
  %v3629 = vpop.permute.xlu0 %3628
  %3630 = vrot.lane.b32.xlu0 %v2571, 16
  %v3631 = vpop.permute.xlu0 %3630
  %3632 = vrot.lane.b32.xlu0 %v2572, 16
  %v3633 = vpop.permute.xlu0 %3632
  %v3637 = vadd.f32 %v3625, %v3629
  %v3638 = vadd.f32 %v3626, %v3631
  %v3639 = vadd.f32 %v3627, %v3633
  %3643 = vrot.lane.b32.xlu0 %v2731, 16
  %v3644 = vpop.permute.xlu0 %3643
  %3645 = vrot.lane.b32.xlu0 %v2732, 16
  %v3646 = vpop.permute.xlu0 %3645
  %3647 = vrot.lane.b32.xlu0 %v2733, 16
  %v3648 = vpop.permute.xlu0 %3647
  %3655 = vrot.lane.b32.xlu0 %v2886, 32
  %v3656 = vpop.permute.xlu0 %3655
  %3657 = vrot.lane.b32.xlu0 %v2887, 32
  %v3658 = vpop.permute.xlu0 %3657
  %3659 = vrot.lane.b32.xlu0 %v2888, 32
  %v3660 = vpop.permute.xlu0 %3659
  %3667 = vrot.lane.b32.xlu0 %v3041, 48
  %v3668 = vpop.permute.xlu0 %3667
  %3669 = vrot.lane.b32.xlu0 %v3042, 48
  %v3670 = vpop.permute.xlu0 %3669
  %3671 = vrot.lane.b32.xlu0 %v3043, 48
  %v3672 = vpop.permute.xlu0 %3671
  %3679 = vrot.lane.b32.xlu0 %v3190, 64
  %v3680 = vpop.permute.xlu0 %3679
  %3681 = vrot.lane.b32.xlu0 %v3191, 64
  %v3682 = vpop.permute.xlu0 %3681
  %3683 = vrot.lane.b32.xlu0 %v3192, 64
  %v3684 = vpop.permute.xlu0 %3683
  %3691 = vrot.lane.b32.xlu0 %v3339, 80
  %v3692 = vpop.permute.xlu0 %3691
  %3693 = vrot.lane.b32.xlu0 %v3340, 80
  %v3694 = vpop.permute.xlu0 %3693
  %3695 = vrot.lane.b32.xlu0 %v3341, 80
  %v3696 = vpop.permute.xlu0 %3695
  %3703 = vrot.lane.b32.xlu0 %v3488, 96
  %v3704 = vpop.permute.xlu0 %3703
  %3705 = vrot.lane.b32.xlu0 %v3489, 96
  %v3706 = vpop.permute.xlu0 %3705
  %3707 = vrot.lane.b32.xlu0 %v3490, 96
  %v3708 = vpop.permute.xlu0 %3707
  %3715 = vrot.lane.b32.xlu0 %v3637, 112
  %v3716 = vpop.permute.xlu0 %3715
  %3717 = vrot.lane.b32.xlu0 %v3638, 112
  %v3718 = vpop.permute.xlu0 %3717
  %3719 = vrot.lane.b32.xlu0 %v3639, 112
  %v3720 = vpop.permute.xlu0 %3719
  %v3724 = vsel %vm49, %v2573, %v3644
  %v3725 = vsel %vm49, %v2574, %v3646
  %v3726 = vsel %vm49, %v2575, %v3648
  %v3727 = vsel %vm59, %v3724, %v3656
  %v3728 = vsel %vm59, %v3725, %v3658
  %v3729 = vsel %vm59, %v3726, %v3660
  %vm3730 = vcmask 392192
  %v3731 = vsel %vm3730, %v3727, %v3668
  %v3732 = vsel %vm3730, %v3728, %v3670
  %v3733 = vsel %vm3730, %v3729, %v3672
  %vm3734 = vcmask 523264
  %v3735 = vsel %vm3734, %v3731, %v3680
  %v3736 = vsel %vm3734, %v3732, %v3682
  %v3737 = vsel %vm3734, %v3733, %v3684
  %vm3738 = vcmask 654336
  %v3739 = vsel %vm3738, %v3735, %v3692
  %v3740 = vsel %vm3738, %v3736, %v3694
  %v3741 = vsel %vm3738, %v3737, %v3696
  %vm3742 = vcmask 785408
  %v3743 = vsel %vm3742, %v3739, %v3704
  %v3744 = vsel %vm3742, %v3740, %v3706
  %v3745 = vsel %vm3742, %v3741, %v3708
  %vm3746 = vcmask 916480
  %v3747 = vsel %vm3746, %v3743, %v3716
  %v3748 = vsel %vm3746, %v3744, %v3718
  %v3749 = vsel %vm3746, %v3745, %v3720
  %3750 = vst [vmem:[%s8] sm:$0xff] %v3747
  %3751 = vst [vmem:[%s8 + $0x8] sm:$0xff] %v3748
  %3752 = vst [vmem:[%s8 + $0x10] sm:$0x3] %v3749
  // Predicated region
  $region34: #{dprnn_forward.8} parent=0 // pred_check
    _
  $region35: #{dprnn_forward.8} parent=0 // pred_check_branch
    %3754 = sbr.rel (0) target = $region37
  $region36: #{dprnn_forward.8} parent=0 // pred_region
    _
  $region37: #{dprnn_forward.8} parent=0 // pred_fallthru
    _
  // Predicated region
  $region38: #{dprnn_forward.8} parent=0 // pred_check
    _
  $region39: #{dprnn_forward.8} parent=0 // pred_check_branch
    %3756 = sbr.rel (0) target = $region41
  $region40: #{dprnn_forward.8} parent=0 // pred_region
    _
  $region41: #{dprnn_forward.8} parent=0 // pred_fallthru
    _

// kernel: dprnn_forward.13
$region0: #{dprnn_forward.13}
  #allocation0 [shape = 'u32[]', space=smem, size = 0x4, offset = 0x4, fixed_abs, tag = 'smem constant byte address 0x4 - core index']
  #allocation1 [shape = 'u32[144,128]{1,0:T(1,128)}', space=vmem, size = 0x12000, scoped, tag = 'internal scratch']
  %s0 = inlined_call_operand.vmem [shape: f32[128,16], index: 0, kind: input, shape index: {}]
  %s1 = inlined_call_operand.vmem [shape: f32[128,16], index: 1, kind: input, shape index: {}]
  %s2 = inlined_call_operand.vmem [shape: f32[16,32], index: 2, kind: input, shape index: {}]
  %s3 = inlined_call_operand.vmem [shape: f32[1,32], index: 3, kind: input, shape index: {}]
  %s4 = inlined_call_operand.vmem [shape: f32[16,4], index: 4, kind: input, shape index: {}]
  %s5 = inlined_call_operand.vmem [shape: f32[128,4], index: 5, kind: output, shape index: {}]
  %s6 = sld [smem:[#allocation0]]
  $region53: #{dprnn_forward.13} parent=0
    _
  %s8 = ssub.s32 1, %s6
  %s9 = scalar_select 0, %s8, %s6
  loop: start=0, step=1, limit=4
  $region2: #{dprnn_forward.13} parent=0 // loop_pre_header
    _
  $region3: #{dprnn_forward.13} parent=0 // loop_header
    %s11 = sphi 0, %s15
    %p12 = scmp.ge.s32.totalorder %s11, 4
    %s21 = sphi 0, %s23
    %s24 = sphi 0, %s21
    %s25 = sphi 0, %s24
    %s41 = sphi 0, %s25
    %s47 = sphi 0, %s49
    %s50 = sphi 0, %s47
    %s51 = sphi 0, %s50
    %s67 = sphi 0, %s51
    %s71 = sphi 0, %s71
    %s73 = sphi 0, %s71
    %s74 = sphi 0, %s73
    %s88 = sphi 0, %s74
    %s92 = sphi 0, %s92
    %s94 = sphi 0, %s92
    %s95 = sphi 0, %s94
    %s109 = sphi 0, %s95
    %s113 = sphi 0, %s113
    %s115 = sphi 0, %s113
    %s116 = sphi 0, %s115
    %s130 = sphi 0, %s116
    %s136 = sphi 0, %s138
    %s139 = sphi 0, %s136
    %s140 = sphi 0, %s139
    %s156 = sphi 0, %s140
  $region4: #{dprnn_forward.13} parent=0 // loop_header_branch
    %14 = sbr.rel (%p12) target = $region8
  $region5: #{dprnn_forward.13} parent=0 // loop_body
    %s16 = ssub.s32 %s11, 1
    %s17 = ssub.s32 %s11, 2
    %s18 = sadd.s32 %s11, 1
    %s19 = ssub.s32 %s11, %s18
    %p20 = scmp.eq.s32.totalorder %s19, 0
    %s22 = sadd.s32 %s21, 1
    %s23 = scalar_select %p20, %s21, %s22
    %p26 = pneg %p20
    %p27 = scmp.eq.s32.totalorder %s11, 1
    %p28 = por %p26, %p27
    %p29 = scmp.ne.s32.totalorder %s21, %s24
    %p30 = scmp.eq.s32.totalorder %s11, 0
    %p31 = por %p29, %p30
    %p32 = scmp.ne.s32.totalorder %s21, %s24
    %p33 = scmp.eq.s32.totalorder %s16, 1
    %p34 = por %p32, %p33
    %p35 = scmp.ne.s32.totalorder %s24, %s25
    %p36 = scmp.eq.s32.totalorder %s16, 0
    %p37 = por %p35, %p36
    %p38 = scmp.ne.s32.totalorder %s24, %s25
    %p39 = scmp.eq.s32.totalorder %s17, 1
    %p40 = por %p38, %p39
    %p42 = scmp.ne.s32.totalorder %s25, %s41
    %p43 = scmp.eq.s32.totalorder %s17, 0
    %p44 = por %p42, %p43
    %s45 = ssub.s32 %s11, %s18
    %p46 = scmp.eq.s32.totalorder %s45, 0
    %s48 = sadd.s32 %s47, 1
    %s49 = scalar_select %p46, %s47, %s48
    %p52 = pneg %p46
    %p53 = scmp.eq.s32.totalorder %s11, 1
    %p54 = por %p52, %p53
    %p55 = scmp.ne.s32.totalorder %s47, %s50
    %p56 = scmp.eq.s32.totalorder %s11, 0
    %p57 = por %p55, %p56
    %p58 = scmp.ne.s32.totalorder %s47, %s50
    %p59 = scmp.eq.s32.totalorder %s16, 1
    %p60 = por %p58, %p59
    %p61 = scmp.ne.s32.totalorder %s50, %s51
    %p62 = scmp.eq.s32.totalorder %s16, 0
    %p63 = por %p61, %p62
    %p64 = scmp.ne.s32.totalorder %s50, %s51
    %p65 = scmp.eq.s32.totalorder %s17, 1
    %p66 = por %p64, %p65
    %p68 = scmp.ne.s32.totalorder %s51, %s67
    %p69 = scmp.eq.s32.totalorder %s17, 0
    %p70 = por %p68, %p69
    %s72 = sadd.s32 %s71, 1
    %p75 = scmp.eq.s32.totalorder %s11, 1
    %p76 = scmp.ne.s32.totalorder %s71, %s73
    %p77 = scmp.eq.s32.totalorder %s11, 0
    %p78 = por %p76, %p77
    %p79 = scmp.ne.s32.totalorder %s71, %s73
    %p80 = scmp.eq.s32.totalorder %s16, 1
    %p81 = por %p79, %p80
    %p82 = scmp.ne.s32.totalorder %s73, %s74
    %p83 = scmp.eq.s32.totalorder %s16, 0
    %p84 = por %p82, %p83
    %p85 = scmp.ne.s32.totalorder %s73, %s74
    %p86 = scmp.eq.s32.totalorder %s17, 1
    %p87 = por %p85, %p86
    %p89 = scmp.ne.s32.totalorder %s74, %s88
    %p90 = scmp.eq.s32.totalorder %s17, 0
    %p91 = por %p89, %p90
    %s93 = sadd.s32 %s92, 1
    %p96 = scmp.eq.s32.totalorder %s11, 1
    %p97 = scmp.ne.s32.totalorder %s92, %s94
    %p98 = scmp.eq.s32.totalorder %s11, 0
    %p99 = por %p97, %p98
    %p100 = scmp.ne.s32.totalorder %s92, %s94
    %p101 = scmp.eq.s32.totalorder %s16, 1
    %p102 = por %p100, %p101
    %p103 = scmp.ne.s32.totalorder %s94, %s95
    %p104 = scmp.eq.s32.totalorder %s16, 0
    %p105 = por %p103, %p104
    %p106 = scmp.ne.s32.totalorder %s94, %s95
    %p107 = scmp.eq.s32.totalorder %s17, 1
    %p108 = por %p106, %p107
    %p110 = scmp.ne.s32.totalorder %s95, %s109
    %p111 = scmp.eq.s32.totalorder %s17, 0
    %p112 = por %p110, %p111
    %s114 = sadd.s32 %s113, 1
    %p117 = scmp.eq.s32.totalorder %s11, 1
    %p118 = scmp.ne.s32.totalorder %s113, %s115
    %p119 = scmp.eq.s32.totalorder %s11, 0
    %p120 = por %p118, %p119
    %p121 = scmp.ne.s32.totalorder %s113, %s115
    %p122 = scmp.eq.s32.totalorder %s16, 1
    %p123 = por %p121, %p122
    %p124 = scmp.ne.s32.totalorder %s115, %s116
    %p125 = scmp.eq.s32.totalorder %s16, 0
    %p126 = por %p124, %p125
    %p127 = scmp.ne.s32.totalorder %s115, %s116
    %p128 = scmp.eq.s32.totalorder %s17, 1
    %p129 = por %p127, %p128
    %p131 = scmp.ne.s32.totalorder %s116, %s130
    %p132 = scmp.eq.s32.totalorder %s17, 0
    %p133 = por %p131, %p132
    %s134 = ssub.s32 %s11, %s18
    %p135 = scmp.eq.s32.totalorder %s134, 0
    %s137 = sadd.s32 %s136, 1
    %s138 = scalar_select %p135, %s136, %s137
    %p141 = pneg %p135
    %p142 = scmp.eq.s32.totalorder %s11, 1
    %p143 = por %p141, %p142
    %p144 = scmp.ne.s32.totalorder %s136, %s139
    %p145 = scmp.eq.s32.totalorder %s11, 0
    %p146 = por %p144, %p145
    %p147 = scmp.ne.s32.totalorder %s136, %s139
    %p148 = scmp.eq.s32.totalorder %s16, 1
    %p149 = por %p147, %p148
    %p150 = scmp.ne.s32.totalorder %s139, %s140
    %p151 = scmp.eq.s32.totalorder %s16, 0
    %p152 = por %p150, %p151
    %p153 = scmp.ne.s32.totalorder %s139, %s140
    %p154 = scmp.eq.s32.totalorder %s17, 1
    %p155 = por %p153, %p154
    %p157 = scmp.ne.s32.totalorder %s140, %s156
    %p158 = scmp.eq.s32.totalorder %s17, 0
    %p159 = por %p157, %p158
    %p160 = scmp.le.s32.totalorder 1, %s11
    %p161 = scmp.lt.s32.totalorder %s11, 3
    %p162 = pnand %p160, %p161
    %p163 = pneg %p162
    // Predicated region
    $region9: #{dprnn_forward.13} parent=5 // pred_check
      _
    $region10: #{dprnn_forward.13} parent=5 // pred_check_branch
      %165 = sbr.rel (%p162) target = $region12
    $region11: #{dprnn_forward.13} parent=5 // pred_region
      %s166 = ssub.s32 %s11, 1
      // Predicated region
      $region13: #{dprnn_forward.13} parent=11 // pred_check
        %p167 = pneg %p84
      $region14: #{dprnn_forward.13} parent=11 // pred_check_branch
        %169 = sbr.rel (%p167) target = $region16
      $region15: #{dprnn_forward.13} parent=11 // pred_region
        _
      $region16: #{dprnn_forward.13} parent=11 // pred_fallthru
        _
      // Predicated region
      $region17: #{dprnn_forward.13} parent=11 // pred_check
        %p170 = pneg %p105
      $region18: #{dprnn_forward.13} parent=11 // pred_check_branch
        %172 = sbr.rel (%p170) target = $region20
      $region19: #{dprnn_forward.13} parent=11 // pred_region
        _
      $region20: #{dprnn_forward.13} parent=11 // pred_fallthru
        _
      // Predicated region
      $region21: #{dprnn_forward.13} parent=11 // pred_check
        %p173 = pneg %p126
      $region22: #{dprnn_forward.13} parent=11 // pred_check_branch
        %175 = sbr.rel (%p173) target = $region24
      $region23: #{dprnn_forward.13} parent=11 // pred_region
        _
      $region24: #{dprnn_forward.13} parent=11 // pred_fallthru
        _
    $region12: #{dprnn_forward.13} parent=5 // pred_fallthru
      _
    %p176 = scmp.lt.s32.totalorder %s11, 2
    // Predicated region
    $region25: #{dprnn_forward.13} parent=5 // pred_check
      %p177 = pneg %p176
    $region26: #{dprnn_forward.13} parent=5 // pred_check_branch
      %179 = sbr.rel (%p177) target = $region28
    $region27: #{dprnn_forward.13} parent=5 // pred_region
      // Predicated region
      $region29: #{dprnn_forward.13} parent=27 // pred_check
        %p180 = pneg %p31
      $region30: #{dprnn_forward.13} parent=27 // pred_check_branch
        %182 = sbr.rel (%p180) target = $region32
      $region31: #{dprnn_forward.13} parent=27 // pred_region
        %s183 = smul.u32 8, %s11
        %p184 = scmp.lt.s32.totalorder %s183, 15
        %s185 = scalar_select %p184, %s183, 15
        %s186 = smul.addr %s185, 8
        %s187 = scalar_lea.vmem %s0, %s186
        %s188 = smul.u32 8, %s11
      $region32: #{dprnn_forward.13} parent=27 // pred_fallthru
        _
      // Predicated region
      $region33: #{dprnn_forward.13} parent=27 // pred_check
        %p189 = pneg %p57
      $region34: #{dprnn_forward.13} parent=27 // pred_check_branch
        %191 = sbr.rel (%p189) target = $region36
      $region35: #{dprnn_forward.13} parent=27 // pred_region
        %s192 = smul.u32 8, %s11
        %p193 = scmp.lt.s32.totalorder %s192, 15
        %s194 = scalar_select %p193, %s192, 15
        %s195 = smul.addr %s194, 8
        %s196 = scalar_lea.vmem %s1, %s195
        %s197 = smul.u32 8, %s11
      $region36: #{dprnn_forward.13} parent=27 // pred_fallthru
        _
    $region28: #{dprnn_forward.13} parent=5 // pred_fallthru
      _
    %p198 = scmp.le.s32.totalorder 1, %s11
    %p199 = scmp.lt.s32.totalorder %s11, 3
    %p200 = pnand %p198, %p199
    %p201 = pneg %p200
    // Predicated region
    $region37: #{dprnn_forward.13} parent=5 // pred_check
      _
    $region38: #{dprnn_forward.13} parent=5 // pred_check_branch
      %203 = sbr.rel (%p200) target = $region40
    $region39: #{dprnn_forward.13} parent=5 // pred_region
      %s204 = ssub.s32 %s11, 1
      %s205 = smul.u32 8, %s16
      %p206 = scmp.lt.s32.totalorder %s205, 15
      %s207 = scalar_select %p206, %s205, 15
      %s208 = smul.addr %s207, 8
      %s209 = scalar_lea.vmem %s0, %s208
      %p210 = pneg %p37
      %p211 = pneg %p34
      %s212 = smul.u32 8, %s16
      %p213 = scmp.lt.s32.totalorder %s212, 15
      %s214 = scalar_select %p213, %s212, 15
      %s215 = smul.addr %s214, 8
      %s216 = scalar_lea.vmem %s1, %s215
      %p217 = pneg %p63
      %p218 = pneg %p60
      %p219 = pneg %p84
      %p220 = pneg %p81
      %p221 = pneg %p105
      %p222 = pneg %p102
      %p223 = pneg %p126
      %p224 = pneg %p123
      %p225 = pneg %p152
      %p226 = pneg %p149
      %s227 = smul.u32 8, %s16
      %p228 = scmp.lt.s32.totalorder %s227, 15
      %s229 = scalar_select %p228, %s227, 15
      %s230 = smul.addr %s229, 8
      %s231 = scalar_lea.vmem %s5, %s230
      %s232 = smul.u32 8, %s16
      %p233 = scmp.lt.s32.totalorder %s232, 15
      %s234 = scalar_select %p233, %s232, 15
      %s235 = smul.addr %s234, 8
      %s236 = scalar_lea.vmem %s0, %s235
      %s237 = smul.u32 8, %s16
      %s238 = smul.u32 8, %s16
      %p239 = scmp.lt.s32.totalorder %s238, 15
      %s240 = scalar_select %p239, %s238, 15
      %s241 = smul.addr %s240, 8
      %s242 = scalar_lea.vmem %s1, %s241
      %s243 = smul.u32 8, %s16
      %s244 = smul.u32 8, %s16
      %p245 = scmp.lt.s32.totalorder %s244, 15
      %s246 = scalar_select %p245, %s244, 15
      %s247 = smul.addr %s246, 8
      %s248 = scalar_lea.vmem %s5, %s247
      %s249 = smul.u32 8, %s16
      %v250 = vld [vmem:[%s236] sm:$0xff]
      %v251 = vld [vmem:[%s236 + $0x8] sm:$0xff]
      %v252 = vld [vmem:[%s236 + $0x10] sm:$0xff]
      %v253 = vld [vmem:[%s236 + $0x18] sm:$0xff]
      %v254 = vld [vmem:[%s236 + $0x20] sm:$0xff]
      %v255 = vld [vmem:[%s236 + $0x28] sm:$0xff]
      %v256 = vld [vmem:[%s236 + $0x30] sm:$0xff]
      %v257 = vld [vmem:[%s236 + $0x38] sm:$0xff]
      %v258 = vld [vmem:[%s2] sm:$0xff]
      %v259 = vld [vmem:[%s2 + $0x8] sm:$0xff]
      %v260 = vld [vmem:[%s3] sm:$0x1]
      %v262 = vlaneseq
      %v263 = vshrl.u32 %v262, 7
      %v264 = vsub.s32 0, %v263
      %v265 = vrot.slane %v260, %v264
      %vm267 = vcmask 130048
      %v269 = vsel %vm267, %v250, 0
      %v272 = vsel %vm267, %v251, 0
      %v275 = vsel %vm267, %v252, 0
      %v278 = vsel %vm267, %v253, 0
      %v281 = vsel %vm267, %v254, 0
      %v284 = vsel %vm267, %v255, 0
      %v287 = vsel %vm267, %v256, 0
      %v290 = vsel %vm267, %v257, 0
      %292 = vmatprep.subr.mxu0 0.0
      %293 = vmatpush1.msra.mxu0 %v258
      %294 = vmatprep.subr.mxu0 0.0
      %295 = vmatpush1.msra.mxu0 %v259
      %296 = vmatprep.subr.mxu0 0.0
      %297 = vmatpush1.msra.mxu0 0.0
      %298 = vmatprep.subr.mxu0 0.0
      %299 = vmatpush1.msra.mxu0 0.0
      %300 = vmatprep.subr.mxu0 0.0
      %301 = vmatpush1.msra.mxu0 0.0
      %302 = vmatprep.subr.mxu0 0.0
      %303 = vmatpush1.msra.mxu0 0.0
      %304 = vmatprep.subr.mxu0 0.0
      %305 = vmatpush1.msra.mxu0 0.0
      %306 = vmatprep.subr.mxu0 0.0
      %307 = vmatpush1.msra.mxu0 0.0
      %308 = vmatprep.subr.mxu0 0.0
      %309 = vmatpush1.msra.mxu0 0.0
      %310 = vmatprep.subr.mxu0 0.0
      %311 = vmatpush1.msra.mxu0 0.0
      %312 = vmatprep.subr.mxu0 0.0
      %313 = vmatpush1.msra.mxu0 0.0
      %314 = vmatprep.subr.mxu0 0.0
      %315 = vmatpush1.msra.mxu0 0.0
      %316 = vmatprep.subr.mxu0 0.0
      %317 = vmatpush1.msra.mxu0 0.0
      %318 = vmatprep.subr.mxu0 0.0
      %319 = vmatpush1.msra.mxu0 0.0
      %320 = vmatprep.subr.mxu0 0.0
      %321 = vmatpush1.msra.mxu0 0.0
      %322 = vmatprep.subr.mxu0 0.0
      %323 = vmatpush1.msra.mxu0 0.0
      %324 = vmatprep.subr.mxu0 0.0
      %325 = vmatpush1.msra.mxu0 0.0
      %326 = vmatprep.subr.mxu0 0.0
      %327 = vmatpush1.msra.mxu0 0.0
      %328 = vmatprep.subr.mxu0 0.0
      %329 = vmatpush1.msra.mxu0 0.0
      %330 = vmatprep.subr.mxu0 0.0
      %331 = vmatpush1.msra.mxu0 0.0
      %332 = vmatprep.subr.mxu0 0.0
      %333 = vmatpush1.msra.mxu0 0.0
      %334 = vmatprep.subr.mxu0 0.0
      %335 = vmatpush1.msra.mxu0 0.0
      %336 = vmatprep.subr.mxu0 0.0
      %337 = vmatpush1.msra.mxu0 0.0
      %338 = vmatprep.subr.mxu0 0.0
      %339 = vmatpush1.msra.mxu0 0.0
      %340 = vmatprep.subr.mxu0 0.0
      %341 = vmatpush1.msra.mxu0 0.0
      %342 = vmatprep.subr.mxu0 0.0
      %343 = vmatpush1.msra.mxu0 0.0
      %344 = vmatprep.subr.mxu0 0.0
      %345 = vmatpush1.msra.mxu0 0.0
      %346 = vmatprep.subr.mxu0 0.0
      %347 = vmatpush1.msra.mxu0 0.0
      %348 = vmatprep.subr.mxu0 0.0
      %349 = vmatpush1.msra.mxu0 0.0
      %350 = vmatprep.subr.mxu0 0.0
      %351 = vmatpush1.msra.mxu0 0.0
      %352 = vmatprep.subr.mxu0 0.0
      %353 = vmatpush1.msra.mxu0 0.0
      %354 = vmatprep.subr.mxu0 0.0
      %355 = vmatpush1.msra.mxu0 0.0
      %356 = vmatprep.mubr.f32.mxu0 0.0
      %357 = vmatmul.mubr.f32.gmra.mrb[0].mxu0 %v269
      %v358 = vpop.f32.mrb[0].mxu0
      %v359 = vadd.f32 %v265, %v358
      %v360 = vpop.f32.mrb[0].mxu0
      %361 = vmatprep.mubr.f32.mxu0 0.0
      %362 = vmatmul.mubr.f32.gmra.mrb[0].mxu0 %v272
      %v363 = vpop.f32.mrb[0].mxu0
      %v364 = vadd.f32 %v265, %v363
      %v365 = vpop.f32.mrb[0].mxu0
      %366 = vmatprep.mubr.f32.mxu0 0.0
      %367 = vmatmul.mubr.f32.gmra.mrb[0].mxu0 %v275
      %v368 = vpop.f32.mrb[0].mxu0
      %v369 = vadd.f32 %v265, %v368
      %v370 = vpop.f32.mrb[0].mxu0
      %371 = vmatprep.mubr.f32.mxu0 0.0
      %372 = vmatmul.mubr.f32.gmra.mrb[0].mxu0 %v278
      %v373 = vpop.f32.mrb[0].mxu0
      %v374 = vadd.f32 %v265, %v373
      %v375 = vpop.f32.mrb[0].mxu0
      %376 = vmatprep.mubr.f32.mxu0 0.0
      %377 = vmatmul.mubr.f32.gmra.mrb[0].mxu0 %v281
      %v378 = vpop.f32.mrb[0].mxu0
      %v379 = vadd.f32 %v265, %v378
      %v380 = vpop.f32.mrb[0].mxu0
      %381 = vmatprep.mubr.f32.mxu0 0.0
      %382 = vmatmul.mubr.f32.gmra.mrb[0].mxu0 %v284
      %v383 = vpop.f32.mrb[0].mxu0
      %v384 = vadd.f32 %v265, %v383
      %v385 = vpop.f32.mrb[0].mxu0
      %386 = vmatprep.mubr.f32.mxu0 0.0
      %387 = vmatmul.mubr.f32.gmra.mrb[0].mxu0 %v287
      %v388 = vpop.f32.mrb[0].mxu0
      %v389 = vadd.f32 %v265, %v388
      %v390 = vpop.f32.mrb[0].mxu0
      %391 = vmatprep.mubr.f32.mxu0 0.0
      %392 = vmatmul.mubr.f32.gmra.mrb[0].mxu0 %v290
      %v393 = vpop.f32.mrb[0].mxu0
      %v394 = vadd.f32 %v265, %v393
      %v395 = vpop.f32.mrb[0].mxu0
      %396 = vdwg.mxu0
      %v397 = vxor.u32 %v359, 2147483648
      %v398 = vxor.u32 %v364, 2147483648
      %v399 = vxor.u32 %v369, 2147483648
      %v400 = vxor.u32 %v374, 2147483648
      %v401 = vxor.u32 %v379, 2147483648
      %v402 = vxor.u32 %v384, 2147483648
      %v403 = vxor.u32 %v389, 2147483648
      %v404 = vxor.u32 %v394, 2147483648
      %v405 = vmul.f32 %v397, 1.442695
      %v406 = vpow.pop %v405
      %v407 = vmul.f32 %v398, 1.442695
      %v408 = vpow.pop %v407
      %v409 = vmul.f32 %v399, 1.442695
      %v410 = vpow.pop %v409
      %v411 = vmul.f32 %v400, 1.442695
      %v412 = vpow.pop %v411
      %v413 = vmul.f32 %v401, 1.442695
      %v414 = vpow.pop %v413
      %v415 = vmul.f32 %v402, 1.442695
      %v416 = vpow.pop %v415
      %v417 = vmul.f32 %v403, 1.442695
      %v418 = vpow.pop %v417
      %v419 = vmul.f32 %v404, 1.442695
      %v420 = vpow.pop %v419
      %v421 = vadd.f32 %v406, 1.0
      %v422 = vadd.f32 %v408, 1.0
      %v423 = vadd.f32 %v410, 1.0
      %v424 = vadd.f32 %v412, 1.0
      %v425 = vadd.f32 %v414, 1.0
      %v426 = vadd.f32 %v416, 1.0
      %v427 = vadd.f32 %v418, 1.0
      %v428 = vadd.f32 %v420, 1.0
      %v429 = vrcp.pop %v421
      %v430 = vmul.f32 1.0, %v429
      %v431 = vrcp.pop %v422
      %v432 = vmul.f32 1.0, %v431
      %v433 = vrcp.pop %v423
      %v434 = vmul.f32 1.0, %v433
      %v435 = vrcp.pop %v424
      %v436 = vmul.f32 1.0, %v435
      %v437 = vrcp.pop %v425
      %v438 = vmul.f32 1.0, %v437
      %v439 = vrcp.pop %v426
      %v440 = vmul.f32 1.0, %v439
      %v441 = vrcp.pop %v427
      %v442 = vmul.f32 1.0, %v441
      %v443 = vrcp.pop %v428
      %v444 = vmul.f32 1.0, %v443
      %453 = vrot.lane.b32.xlu0 %v430, 112
      %v454 = vpop.permute.xlu0 %453
      %455 = vrot.lane.b32.xlu0 %v432, 112
      %v456 = vpop.permute.xlu0 %455
      %457 = vrot.lane.b32.xlu0 %v434, 112
      %v458 = vpop.permute.xlu0 %457
      %459 = vrot.lane.b32.xlu0 %v436, 112
      %v460 = vpop.permute.xlu0 %459
      %461 = vrot.lane.b32.xlu0 %v438, 112
      %v462 = vpop.permute.xlu0 %461
      %463 = vrot.lane.b32.xlu0 %v440, 112
      %v464 = vpop.permute.xlu0 %463
      %465 = vrot.lane.b32.xlu0 %v442, 112
      %v466 = vpop.permute.xlu0 %465
      %467 = vrot.lane.b32.xlu0 %v444, 112
      %v468 = vpop.permute.xlu0 %467
      %v477 = vmul.f32 %v359, %v454
      %v478 = vmul.f32 %v364, %v456
      %v479 = vmul.f32 %v369, %v458
      %v480 = vmul.f32 %v374, %v460
      %v481 = vmul.f32 %v379, %v462
      %v482 = vmul.f32 %v384, %v464
      %v483 = vmul.f32 %v389, %v466
      %v484 = vmul.f32 %v394, %v468
      %v485 = vmax.f32 %v477, 0.0
      %v486 = vmax.f32 %v478, 0.0
      %v487 = vmax.f32 %v479, 0.0
      %v488 = vmax.f32 %v480, 0.0
      %v489 = vmax.f32 %v481, 0.0
      %v490 = vmax.f32 %v482, 0.0
      %v491 = vmax.f32 %v483, 0.0
      %v492 = vmax.f32 %v484, 0.0
      %v493 = vld [vmem:[%s242] sm:$0xff]
      %v494 = vld [vmem:[%s242 + $0x8] sm:$0xff]
      %v495 = vld [vmem:[%s242 + $0x10] sm:$0xff]
      %v496 = vld [vmem:[%s242 + $0x18] sm:$0xff]
      %v497 = vld [vmem:[%s242 + $0x20] sm:$0xff]
      %v498 = vld [vmem:[%s242 + $0x28] sm:$0xff]
      %v499 = vld [vmem:[%s242 + $0x30] sm:$0xff]
      %v500 = vld [vmem:[%s242 + $0x38] sm:$0xff]
      %v501 = vmul.f32 %v485, %v493
      %v502 = vmul.f32 %v486, %v494
      %v503 = vmul.f32 %v487, %v495
      %v504 = vmul.f32 %v488, %v496
      %v505 = vmul.f32 %v489, %v497
      %v506 = vmul.f32 %v490, %v498
      %v507 = vmul.f32 %v491, %v499
      %v508 = vmul.f32 %v492, %v500
      %v509 = vld [vmem:[%s4] sm:$0xff]
      %v510 = vld [vmem:[%s4 + $0x8] sm:$0xff]
      %v512 = vsel %vm267, %v501, 0
      %v515 = vsel %vm267, %v502, 0
      %v518 = vsel %vm267, %v503, 0
      %v521 = vsel %vm267, %v504, 0
      %v524 = vsel %vm267, %v505, 0
      %v527 = vsel %vm267, %v506, 0
      %v530 = vsel %vm267, %v507, 0
      %v533 = vsel %vm267, %v508, 0
      %535 = vmatprep.subr.mxu0 0.0
      %536 = vmatpush1.msra.mxu0 %v509
      %537 = vmatprep.subr.mxu0 0.0
      %538 = vmatpush1.msra.mxu0 %v510
      %539 = vmatprep.subr.mxu0 0.0
      %540 = vmatpush1.msra.mxu0 0.0
      %541 = vmatprep.subr.mxu0 0.0
      %542 = vmatpush1.msra.mxu0 0.0
      %543 = vmatprep.subr.mxu0 0.0
      %544 = vmatpush1.msra.mxu0 0.0
      %545 = vmatprep.subr.mxu0 0.0
      %546 = vmatpush1.msra.mxu0 0.0
      %547 = vmatprep.subr.mxu0 0.0
      %548 = vmatpush1.msra.mxu0 0.0
      %549 = vmatprep.subr.mxu0 0.0
      %550 = vmatpush1.msra.mxu0 0.0
      %551 = vmatprep.subr.mxu0 0.0
      %552 = vmatpush1.msra.mxu0 0.0
      %553 = vmatprep.subr.mxu0 0.0
      %554 = vmatpush1.msra.mxu0 0.0
      %555 = vmatprep.subr.mxu0 0.0
      %556 = vmatpush1.msra.mxu0 0.0
      %557 = vmatprep.subr.mxu0 0.0
      %558 = vmatpush1.msra.mxu0 0.0
      %559 = vmatprep.subr.mxu0 0.0
      %560 = vmatpush1.msra.mxu0 0.0
      %561 = vmatprep.subr.mxu0 0.0
      %562 = vmatpush1.msra.mxu0 0.0
      %563 = vmatprep.subr.mxu0 0.0
      %564 = vmatpush1.msra.mxu0 0.0
      %565 = vmatprep.subr.mxu0 0.0
      %566 = vmatpush1.msra.mxu0 0.0
      %567 = vmatprep.subr.mxu0 0.0
      %568 = vmatpush1.msra.mxu0 0.0
      %569 = vmatprep.subr.mxu0 0.0
      %570 = vmatpush1.msra.mxu0 0.0
      %571 = vmatprep.subr.mxu0 0.0
      %572 = vmatpush1.msra.mxu0 0.0
      %573 = vmatprep.subr.mxu0 0.0
      %574 = vmatpush1.msra.mxu0 0.0
      %575 = vmatprep.subr.mxu0 0.0
      %576 = vmatpush1.msra.mxu0 0.0
      %577 = vmatprep.subr.mxu0 0.0
      %578 = vmatpush1.msra.mxu0 0.0
      %579 = vmatprep.subr.mxu0 0.0
      %580 = vmatpush1.msra.mxu0 0.0
      %581 = vmatprep.subr.mxu0 0.0
      %582 = vmatpush1.msra.mxu0 0.0
      %583 = vmatprep.subr.mxu0 0.0
      %584 = vmatpush1.msra.mxu0 0.0
      %585 = vmatprep.subr.mxu0 0.0
      %586 = vmatpush1.msra.mxu0 0.0
      %587 = vmatprep.subr.mxu0 0.0
      %588 = vmatpush1.msra.mxu0 0.0
      %589 = vmatprep.subr.mxu0 0.0
      %590 = vmatpush1.msra.mxu0 0.0
      %591 = vmatprep.subr.mxu0 0.0
      %592 = vmatpush1.msra.mxu0 0.0
      %593 = vmatprep.subr.mxu0 0.0
      %594 = vmatpush1.msra.mxu0 0.0
      %595 = vmatprep.subr.mxu0 0.0
      %596 = vmatpush1.msra.mxu0 0.0
      %597 = vmatprep.subr.mxu0 0.0
      %598 = vmatpush1.msra.mxu0 0.0
      %599 = vmatprep.mubr.f32.mxu0 0.0
      %600 = vmatmul.mubr.f32.gmra.mrb[0].mxu0 %v512
      %v601 = vpop.f32.mrb[0].mxu0
      %v602 = vadd.f32 0.0, %v601
      %v603 = vpop.f32.mrb[0].mxu0
      %604 = vmatprep.mubr.f32.mxu0 0.0
      %605 = vmatmul.mubr.f32.gmra.mrb[0].mxu0 %v515
      %v606 = vpop.f32.mrb[0].mxu0
      %v607 = vadd.f32 0.0, %v606
      %v608 = vpop.f32.mrb[0].mxu0
      %609 = vmatprep.mubr.f32.mxu0 0.0
      %610 = vmatmul.mubr.f32.gmra.mrb[0].mxu0 %v518
      %v611 = vpop.f32.mrb[0].mxu0
      %v612 = vadd.f32 0.0, %v611
      %v613 = vpop.f32.mrb[0].mxu0
      %614 = vmatprep.mubr.f32.mxu0 0.0
      %615 = vmatmul.mubr.f32.gmra.mrb[0].mxu0 %v521
      %v616 = vpop.f32.mrb[0].mxu0
      %v617 = vadd.f32 0.0, %v616
      %v618 = vpop.f32.mrb[0].mxu0
      %619 = vmatprep.mubr.f32.mxu0 0.0
      %620 = vmatmul.mubr.f32.gmra.mrb[0].mxu0 %v524
      %v621 = vpop.f32.mrb[0].mxu0
      %v622 = vadd.f32 0.0, %v621
      %v623 = vpop.f32.mrb[0].mxu0
      %624 = vmatprep.mubr.f32.mxu0 0.0
      %625 = vmatmul.mubr.f32.gmra.mrb[0].mxu0 %v527
      %v626 = vpop.f32.mrb[0].mxu0
      %v627 = vadd.f32 0.0, %v626
      %v628 = vpop.f32.mrb[0].mxu0
      %629 = vmatprep.mubr.f32.mxu0 0.0
      %630 = vmatmul.mubr.f32.gmra.mrb[0].mxu0 %v530
      %v631 = vpop.f32.mrb[0].mxu0
      %v632 = vadd.f32 0.0, %v631
      %v633 = vpop.f32.mrb[0].mxu0
      %634 = vmatprep.mubr.f32.mxu0 0.0
      %635 = vmatmul.mubr.f32.gmra.mrb[0].mxu0 %v533
      %v636 = vpop.f32.mrb[0].mxu0
      %v637 = vadd.f32 0.0, %v636
      %v638 = vpop.f32.mrb[0].mxu0
      %639 = vdwg.mxu0
      %vm640 = vcmask 31744
      %641 = vst.msk [vmem:[%s248] sm:$0xff] %vm640, %v602
      %642 = vst.msk [vmem:[%s248 + $0x8] sm:$0xff] %vm640, %v607
      %643 = vst.msk [vmem:[%s248 + $0x10] sm:$0xff] %vm640, %v612
      %644 = vst.msk [vmem:[%s248 + $0x18] sm:$0xff] %vm640, %v617
      %645 = vst.msk [vmem:[%s248 + $0x20] sm:$0xff] %vm640, %v622
      %646 = vst.msk [vmem:[%s248 + $0x28] sm:$0xff] %vm640, %v627
      %647 = vst.msk [vmem:[%s248 + $0x30] sm:$0xff] %vm640, %v632
      %648 = vst.msk [vmem:[%s248 + $0x38] sm:$0xff] %vm640, %v637
      %s649 = smul.u32 8, %s16
      %p650 = scmp.lt.s32.totalorder %s649, 15
      %s651 = scalar_select %p650, %s649, 15
      %s652 = smul.addr %s651, 8
      %s653 = scalar_lea.vmem %s5, %s652
      // Predicated region
      $region41: #{dprnn_forward.13} parent=39 // pred_check
        %p654 = pneg %p149
      $region42: #{dprnn_forward.13} parent=39 // pred_check_branch
        %656 = sbr.rel (%p654) target = $region44
      $region43: #{dprnn_forward.13} parent=39 // pred_region
        %s657 = smul.u32 8, %s16
      $region44: #{dprnn_forward.13} parent=39 // pred_fallthru
        _
    $region40: #{dprnn_forward.13} parent=5 // pred_fallthru
      _
    %p658 = scmp.le.s32.totalorder 2, %s11
    // Predicated region
    $region45: #{dprnn_forward.13} parent=5 // pred_check
      %p659 = pneg %p658
    $region46: #{dprnn_forward.13} parent=5 // pred_check_branch
      %661 = sbr.rel (%p659) target = $region48
    $region47: #{dprnn_forward.13} parent=5 // pred_region
      %s662 = ssub.s32 %s11, 2
      // Predicated region
      $region49: #{dprnn_forward.13} parent=47 // pred_check
        %p663 = pneg %p155
      $region50: #{dprnn_forward.13} parent=47 // pred_check_branch
        %665 = sbr.rel (%p663) target = $region52
      $region51: #{dprnn_forward.13} parent=47 // pred_region
        %s666 = smul.u32 8, %s17
        %p667 = scmp.lt.s32.totalorder %s666, 15
        %s668 = scalar_select %p667, %s666, 15
        %s669 = smul.addr %s668, 8
        %s670 = scalar_lea.vmem %s5, %s669
      $region52: #{dprnn_forward.13} parent=47 // pred_fallthru
        _
    $region48: #{dprnn_forward.13} parent=5 // pred_fallthru
      _
  $region6: #{dprnn_forward.13} parent=0 // loop_footer
    %s15 = sadd.s32 1, %s11
  $region7: #{dprnn_forward.13} parent=0 // loop_footer_branch
    %10 = sbr.rel target = $region3
  $region8: #{dprnn_forward.13} parent=0 // loop_exit
    _

</llo_original>
